<compile_context>
chip_gen: v7x
topology: tpu7x:2x2x1
jax: 0.10.0
libtpu: 0.0.40
codegen_flags: <defaults>
</compile_context>

<pallas_src>
import functools

import jax
import jax.numpy as jnp
from jax.experimental import pallas as pl
from jax.experimental.pallas import tpu as pltpu


def _round_up(x, m):
    return (x + m - 1) // m * m


# ---------------------------------------------------------------------------
# Parameters (synthetic, deterministic) — same structure as the PyTorch module.
# ---------------------------------------------------------------------------
def init_params(key):
    k = jax.random.split(key, 8)
    scale = 0.1
    return {
        "enc": [
            dict(w=scale * jax.random.normal(k[0], (3, 3, 4, 8), jnp.float32),
                 b=scale * jax.random.normal(k[1], (8,), jnp.float32),
                 stride=2, pad=1),
            dict(w=scale * jax.random.normal(k[2], (3, 3, 8, 16), jnp.float32),
                 b=scale * jax.random.normal(k[3], (16,), jnp.float32),
                 stride=2, pad=1),
        ],
        # Decoder ('resize'): reversed encoder order, channels reversed.
        "dec": [
            dict(w=scale * jax.random.normal(k[4], (3, 3, 16, 8), jnp.float32),
                 b=scale * jax.random.normal(k[5], (8,), jnp.float32),
                 scale=2),
            dict(w=scale * jax.random.normal(k[6], (3, 3, 8, 4), jnp.float32),
                 b=scale * jax.random.normal(k[7], (4,), jnp.float32),
                 scale=2),
        ],
    }


# ---------------------------------------------------------------------------
# Parameter-time preprocessing: lower every layer to a dense linear operator.
# (Plain JAX; runs once on the weights, NOT on the per-call input path.)
# ---------------------------------------------------------------------------
def _conv_nchw(x, w_hwio, stride, pad):
    return jax.lax.conv_general_dilated(
        x, w_hwio, window_strides=(stride, stride),
        padding=[(pad, pad), (pad, pad)],
        dimension_numbers=("NCHW", "HWIO", "NCHW"),
        precision=jax.lax.Precision.HIGHEST)


def _upsample_nchw(x, scale):
    return jnp.repeat(jnp.repeat(x, scale, axis=2), scale, axis=3)


def _layer_operator(apply_fn, in_chw):
    """Exact (in_feat, out_feat) matrix of a linear layer via identity probing.

    `apply_fn` maps an NCHW batch (B, C, H, W) -> (B, Cout, OH, OW) linearly
    (no bias).  Flattening on both sides is NCHW row-major (c*H*W + h*W + w).
    """
    c, h, w = in_chw
    nin = c * h * w
    basis = jnp.eye(nin, dtype=jnp.float32).reshape(nin, c, h, w)
    out = apply_fn(basis)
    out_chw = out.shape[1:]
    return out.reshape(nin, -1), out_chw


def build_dense_operators(params, in_chw=(4, 16, 16)):
    """Returns ([(W_i, bias_row_i)] in f32, final_chw) for the 4 layers."""
    ops = []
    shape = in_chw
    for lyr in params["enc"]:
        fn = functools.partial(_conv_nchw, w_hwio=lyr["w"],
                               stride=lyr["stride"], pad=lyr["pad"])
        m, shape = _layer_operator(fn, shape)
        cout, oh, ow = shape
        bias = jnp.repeat(lyr["b"], oh * ow).reshape(1, cout * oh * ow)
        ops.append((m, bias))
    for lyr in params["dec"]:
        pad = lyr["w"].shape[0] // 2
        fn = lambda x, lyr=lyr, pad=pad: _conv_nchw(
            _upsample_nchw(x, lyr["scale"]), lyr["w"], stride=1, pad=pad)
        m, shape = _layer_operator(fn, shape)
        cout, oh, ow = shape
        bias = jnp.repeat(lyr["b"], oh * ow).reshape(1, cout * oh * ow)
        ops.append((m, bias))
    return ops, shape


def cast_operators_bf16(dense_ops):
    """bf16 operator matrices (halve the dominant HBM weight stream);
    biases stay f32 (tiny, and keeps the VPU adds in f32)."""
    return [(m.astype(jnp.bfloat16), b) for m, b in dense_ops]


# ---------------------------------------------------------------------------
# Single fused Pallas kernel: the whole autoencoder forward pass for one
# (batch_tile, 1024) activation slab.  Weights are VMEM-resident bf16.
# ---------------------------------------------------------------------------
def _fused_autoencoder_kernel(noise_ref, x_ref,
                              w1_ref, b1_ref, w2_ref, b2_ref,
                              w3_ref, b3_ref, w4_ref, b4_ref,
                              o_ref):
    def mxu(h, w_ref):
        # bf16 x bf16 MXU matmul, f32 accumulation; everything else stays f32.
        return jnp.dot(h.astype(jnp.bfloat16), w_ref[...],
                       preferred_element_type=jnp.float32)

    # Encoder: conv -> sigmoid, twice (each conv is a precomputed dense matmul).
    h = x_ref[...]
    h = jax.nn.sigmoid(mxu(h, w1_ref) + b1_ref[...])
    h = jax.nn.sigmoid(mxu(h, w2_ref) + b2_ref[...])
    # Scalar latent-space noise (SMEM scalar), matching Normal(0, std).sample().
    h = h + noise_ref[0]
    # Decoder: dec0 -> sigmoid -> dec1; no final activation (activate_dec=False).
    h = jax.nn.sigmoid(mxu(h, w3_ref) + b3_ref[...])
    out = mxu(h, w4_ref) + b4_ref[...]
    o_ref[...] = out.astype(o_ref.dtype)   # lane-dense (batch_tile, 1024) store


# ---------------------------------------------------------------------------
# Wrapper: batch-tiled grid, weights resident via constant index maps.
# ---------------------------------------------------------------------------
def fused_autoencoder_forward(x_nchw, dense_ops, out_chw, noise_scalar,
                              *, batch_tile=256):
    """x_nchw: (N, C, H, W) float32 -> (N, *out_chw) float32."""
    n, c, h, w = x_nchw.shape
    in_feat = c * h * w
    x2d = x_nchw.reshape(n, in_feat)                 # NCHW flatten — no transpose
    (w1, b1), (w2, b2), (w3, b3), (w4, b4) = dense_ops
    out_feat = w4.shape[1]

    # Pad batch to a sublane multiple and tile it over the grid; weights use a
    # constant block index so they are DMA'd once and stay VMEM-resident.
    tb = min(batch_tile, _round_up(n, 8))
    n_pad = _round_up(n, tb)
    if n_pad != n:
        x2d = jnp.pad(x2d, ((0, n_pad - n), (0, 0)))
    n_tiles = n_pad // tb

    noise = jnp.asarray(noise_scalar, jnp.float32).reshape(1)

    flops = 2 * n_pad * sum(int(m.shape[0]) * int(m.shape[1])
                            for m, _ in dense_ops)
    transcendentals = n_pad * sum(int(b.shape[1]) for _, b in dense_ops[:-1])
    bytes_accessed = (4 * x2d.size + 4 * n_pad * out_feat
                      + sum(m.size * m.dtype.itemsize + b.size * b.dtype.itemsize
                            for m, b in dense_ops))

    def act_spec(feat):
        return pl.BlockSpec((tb, feat), lambda i: (i, 0))

    def call(single_buffer_weights):
        # Single-buffer the resident operators: there is never a different
        # weight block to prefetch, so extra buffers only burn VMEM.
        extra = ({"pipeline_mode": pl.Buffered(1)}
                 if single_buffer_weights else {})

        def resident(shape):
            return pl.BlockSpec(shape, lambda i: (0, 0), **extra)

        return pl.pallas_call(
            _fused_autoencoder_kernel,
            out_shape=jax.ShapeDtypeStruct((n_pad, out_feat), jnp.float32),
            grid=(n_tiles,),
            in_specs=[
                pl.BlockSpec((1,), lambda i: (0,),
                             memory_space=pltpu.MemorySpace.SMEM),  # noise scalar
                act_spec(in_feat),
                resident(w1.shape), resident(b1.shape),
                resident(w2.shape), resident(b2.shape),
                resident(w3.shape), resident(b3.shape),
                resident(w4.shape), resident(b4.shape),
            ],
            out_specs=act_spec(out_feat),
            compiler_params=pltpu.CompilerParams(
                dimension_semantics=("parallel",),      # megacore-shard batch tiles
                vmem_limit_bytes=48 * 1024 * 1024),
            cost_estimate=pl.CostEstimate(flops=flops,
                                          transcendentals=transcendentals,
                                          bytes_accessed=bytes_accessed),
        )(noise, x2d, w1, b1, w2, b2, w3, b3, w4, b4)

    try:
        out2d = call(True)
    except Exception:
        # Conservative fallback if pipeline_mode/Buffered(1) is not supported.
        out2d = call(False)

    return out2d[:n].reshape((n,) + tuple(out_chw))


# ---------------------------------------------------------------------------
# References for correctness cross-checks (plain JAX).
# ---------------------------------------------------------------------------
def reference_forward(x_nchw, params, noise_scalar, activate_dec=False):
    """Exact f32 conv/upsample reference of the original module."""
    x = x_nchw
    for lyr in params["enc"]:
        x = _conv_nchw(x, lyr["w"], lyr["stride"], lyr["pad"])
        x = jax.nn.sigmoid(x + lyr["b"][None, :, None, None])
    x = x + noise_scalar
    n_dec = len(params["dec"])
    for i, lyr in enumerate(params["dec"]):
        pad = lyr["w"].shape[0] // 2
        x = _conv_nchw(_upsample_nchw(x, lyr["scale"]), lyr["w"], 1, pad)
        x = x + lyr["b"][None, :, None, None]
        if i < n_dec - 1 or activate_dec:
            x = jax.nn.sigmoid(x)
    return x


def dense_reference_forward(x2d, dense_ops, noise_scalar):
    """Plain-JAX mirror of the kernel math (same bf16 ops, f32 accumulation)."""
    (w1, b1), (w2, b2), (w3, b3), (w4, b4) = dense_ops

    def mm(h, w):
        return jnp.dot(h.astype(w.dtype), w, preferred_element_type=jnp.float32)

    h = jax.nn.sigmoid(mm(x2d, w1) + b1)
    h = jax.nn.sigmoid(mm(h, w2) + b2)
    h = h + noise_scalar
    h = jax.nn.sigmoid(mm(h, w3) + b3)
    return mm(h, w4) + b4


if __name__ == "__main__":
    key = jax.random.PRNGKey(0)
    pkey, xkey, nkey = jax.random.split(key, 3)

    params = init_params(pkey)
    dense_ops_f32, out_chw = build_dense_operators(params, in_chw=(4, 16, 16))
    dense_ops = cast_operators_bf16(dense_ops_f32)

    x = jax.random.normal(xkey, (2, 4, 16, 16), jnp.float32)   # NCHW

    noise_stddev = 0.0
    noise_scalar = jax.random.normal(nkey, ()) * noise_stddev  # scalar draw, as torch

    recons = fused_autoencoder_forward(x, dense_ops, out_chw, noise_scalar)
    recons = jax.block_until_ready(recons)

    assert recons.shape == (2, 4, 16, 16), recons.shape
    assert recons.dtype == jnp.float32
    assert bool(jnp.all(jnp.isfinite(recons)))

    # Tight check: same bf16 operators in plain JAX (kernel-equivalent math).
    n = x.shape[0]
    ref_bf16 = dense_reference_forward(
        x.reshape(n, -1), dense_ops, noise_scalar).reshape((n,) + tuple(out_chw))
    assert bool(jnp.allclose(recons, ref_bf16, atol=1e-3, rtol=1e-3)), \
        float(jnp.max(jnp.abs(recons - ref_bf16)))

    # Fidelity check vs. the exact f32 conv reference (tolerance reflects the
    # deliberate bf16 weight/activation quantization of the MXU inputs).
    ref_f32 = reference_forward(x, params, noise_scalar, activate_dec=False)
    assert bool(jnp.allclose(recons, ref_f32, atol=5e-2, rtol=5e-2)), \
        float(jnp.max(jnp.abs(recons - ref_f32)))

    print("KERNEL_OK")
</pallas_src>

<mosaic_0001>
module attributes {stable_mosaic.version = 11 : i64} {
  func.func @_fused_autoencoder_kernel(%arg0: i32, %arg1: memref<1xf32, #tpu.memory_space<smem>>, %arg2: memref<8x1024xf32, #tpu.memory_space<vmem>>, %arg3: memref<1024x512xbf16, #tpu.memory_space<vmem>>, %arg4: memref<1x512xf32, #tpu.memory_space<vmem>>, %arg5: memref<512x256xbf16, #tpu.memory_space<vmem>>, %arg6: memref<1x256xf32, #tpu.memory_space<vmem>>, %arg7: memref<256x512xbf16, #tpu.memory_space<vmem>>, %arg8: memref<1x512xf32, #tpu.memory_space<vmem>>, %arg9: memref<512x1024xbf16, #tpu.memory_space<vmem>>, %arg10: memref<1x1024xf32, #tpu.memory_space<vmem>>, %arg11: memref<8x1024xf32, #tpu.memory_space<vmem>>) attributes {dimension_semantics = [#tpu.dimension_semantics<parallel>], iteration_bounds = array<i64: 1>, scalar_prefetch = 0 : i64, scratch_operands = 0 : i64, tpu.core_type = #tpu.core_type<tc>, window_params = [{transform_indices = @transform_0, window_bounds = array<i64: 1>}, {transform_indices = @transform_1, window_bounds = array<i64: 8, 1024>}, {pipeline_mode = #tpu.pipeline_mode<synchronous>, transform_indices = @transform_2, window_bounds = array<i64: 1024, 512>}, {pipeline_mode = #tpu.pipeline_mode<synchronous>, transform_indices = @transform_3, window_bounds = array<i64: 1, 512>}, {pipeline_mode = #tpu.pipeline_mode<synchronous>, transform_indices = @transform_4, window_bounds = array<i64: 512, 256>}, {pipeline_mode = #tpu.pipeline_mode<synchronous>, transform_indices = @transform_5, window_bounds = array<i64: 1, 256>}, {pipeline_mode = #tpu.pipeline_mode<synchronous>, transform_indices = @transform_6, window_bounds = array<i64: 256, 512>}, {pipeline_mode = #tpu.pipeline_mode<synchronous>, transform_indices = @transform_7, window_bounds = array<i64: 1, 512>}, {pipeline_mode = #tpu.pipeline_mode<synchronous>, transform_indices = @transform_8, window_bounds = array<i64: 512, 1024>}, {pipeline_mode = #tpu.pipeline_mode<synchronous>, transform_indices = @transform_9, window_bounds = array<i64: 1, 1024>}, {transform_indices = @transform_10, window_bounds = array<i64: 8, 1024>}]} {
    %c0 = arith.constant 0 : index
    %c0_0 = arith.constant 0 : index
    %0 = vector.load %arg2[%c0, %c0_0] : memref<8x1024xf32, #tpu.memory_space<vmem>>, vector<8x1024xf32>
    %1 = arith.truncf %0 : vector<8x1024xf32> to vector<8x1024xbf16>
    %c0_1 = arith.constant 0 : index
    %c0_2 = arith.constant 0 : index
    %2 = vector.load %arg3[%c0_1, %c0_2] : memref<1024x512xbf16, #tpu.memory_space<vmem>>, vector<1024x512xbf16>
    %cst = arith.constant dense<0.000000e+00> : vector<8x512xf32>
    %3 = tpu.matmul %1, %2, %cst {dimension_numbers = #tpu.dot_dimension_numbers<[1], [0], [0], [1], [0, 0, 1, 1], [], []>} : vector<8x1024xbf16>, vector<1024x512xbf16>, vector<8x512xf32> -> vector<8x512xf32>
    %c0_3 = arith.constant 0 : index
    %c0_4 = arith.constant 0 : index
    %4 = vector.load %arg4[%c0_3, %c0_4] : memref<1x512xf32, #tpu.memory_space<vmem>>, vector<1x512xf32>
    %5 = vector.broadcast %4 : vector<1x512xf32> to vector<8x512xf32>
    %6 = arith.addf %3, %5 : vector<8x512xf32>
    %7 = arith.negf %6 : vector<8x512xf32>
    %8 = math.exp %7 : vector<8x512xf32>
    %cst_5 = arith.constant 1.000000e+00 : f32
    %9 = vector.broadcast %cst_5 : f32 to vector<8x512xf32>
    %10 = arith.addf %9, %8 : vector<8x512xf32>
    %11 = arith.divf %9, %10 : vector<8x512xf32>
    %12 = arith.truncf %11 : vector<8x512xf32> to vector<8x512xbf16>
    %c0_6 = arith.constant 0 : index
    %c0_7 = arith.constant 0 : index
    %13 = vector.load %arg5[%c0_6, %c0_7] : memref<512x256xbf16, #tpu.memory_space<vmem>>, vector<512x256xbf16>
    %cst_8 = arith.constant dense<0.000000e+00> : vector<8x256xf32>
    %14 = tpu.matmul %12, %13, %cst_8 {dimension_numbers = #tpu.dot_dimension_numbers<[1], [0], [0], [1], [0, 0, 1, 1], [], []>} : vector<8x512xbf16>, vector<512x256xbf16>, vector<8x256xf32> -> vector<8x256xf32>
    %c0_9 = arith.constant 0 : index
    %c0_10 = arith.constant 0 : index
    %15 = vector.load %arg6[%c0_9, %c0_10] : memref<1x256xf32, #tpu.memory_space<vmem>>, vector<1x256xf32>
    %16 = vector.broadcast %15 : vector<1x256xf32> to vector<8x256xf32>
    %17 = arith.addf %14, %16 : vector<8x256xf32>
    %18 = arith.negf %17 : vector<8x256xf32>
    %19 = math.exp %18 : vector<8x256xf32>
    %cst_11 = arith.constant 1.000000e+00 : f32
    %20 = vector.broadcast %cst_11 : f32 to vector<8x256xf32>
    %21 = arith.addf %20, %19 : vector<8x256xf32>
    %22 = arith.divf %20, %21 : vector<8x256xf32>
    %c0_12 = arith.constant 0 : index
    %23 = memref.load %arg1[%c0_12] : memref<1xf32, #tpu.memory_space<smem>>
    %24 = vector.broadcast %23 : f32 to vector<8x256xf32>
    %25 = arith.addf %22, %24 : vector<8x256xf32>
    %26 = arith.truncf %25 : vector<8x256xf32> to vector<8x256xbf16>
    %c0_13 = arith.constant 0 : index
    %c0_14 = arith.constant 0 : index
    %27 = vector.load %arg7[%c0_13, %c0_14] : memref<256x512xbf16, #tpu.memory_space<vmem>>, vector<256x512xbf16>
    %cst_15 = arith.constant dense<0.000000e+00> : vector<8x512xf32>
    %28 = tpu.matmul %26, %27, %cst_15 {dimension_numbers = #tpu.dot_dimension_numbers<[1], [0], [0], [1], [0, 0, 1, 1], [], []>} : vector<8x256xbf16>, vector<256x512xbf16>, vector<8x512xf32> -> vector<8x512xf32>
    %c0_16 = arith.constant 0 : index
    %c0_17 = arith.constant 0 : index
    %29 = vector.load %arg8[%c0_16, %c0_17] : memref<1x512xf32, #tpu.memory_space<vmem>>, vector<1x512xf32>
    %30 = vector.broadcast %29 : vector<1x512xf32> to vector<8x512xf32>
    %31 = arith.addf %28, %30 : vector<8x512xf32>
    %32 = arith.negf %31 : vector<8x512xf32>
    %33 = math.exp %32 : vector<8x512xf32>
    %cst_18 = arith.constant 1.000000e+00 : f32
    %34 = vector.broadcast %cst_18 : f32 to vector<8x512xf32>
    %35 = arith.addf %34, %33 : vector<8x512xf32>
    %36 = arith.divf %34, %35 : vector<8x512xf32>
    %37 = arith.truncf %36 : vector<8x512xf32> to vector<8x512xbf16>
    %c0_19 = arith.constant 0 : index
    %c0_20 = arith.constant 0 : index
    %38 = vector.load %arg9[%c0_19, %c0_20] : memref<512x1024xbf16, #tpu.memory_space<vmem>>, vector<512x1024xbf16>
    %cst_21 = arith.constant dense<0.000000e+00> : vector<8x1024xf32>
    %39 = tpu.matmul %37, %38, %cst_21 {dimension_numbers = #tpu.dot_dimension_numbers<[1], [0], [0], [1], [0, 0, 1, 1], [], []>} : vector<8x512xbf16>, vector<512x1024xbf16>, vector<8x1024xf32> -> vector<8x1024xf32>
    %c0_22 = arith.constant 0 : index
    %c0_23 = arith.constant 0 : index
    %40 = vector.load %arg10[%c0_22, %c0_23] : memref<1x1024xf32, #tpu.memory_space<vmem>>, vector<1x1024xf32>
    %41 = vector.broadcast %40 : vector<1x1024xf32> to vector<8x1024xf32>
    %42 = arith.addf %39, %41 : vector<8x1024xf32>
    %c0_24 = arith.constant 0 : index
    %c0_25 = arith.constant 0 : index
    %43 = vector.load %arg11[%c0_24, %c0_25] : memref<8x1024xf32, #tpu.memory_space<vmem>>, vector<8x1024xf32>
    tpu.vector_store %arg11[%c0_24, %c0_25], %42 {strides = array<i32>} : memref<8x1024xf32, #tpu.memory_space<vmem>>, vector<8x1024xf32>,
    return
  }
  func.func @transform_0(%arg0: i32) -> i32 {
    %c0_i32 = arith.constant 0 : i32
    %c0_i32_0 = arith.constant 0 : i32
    return %c0_i32 : i32
  }
  func.func @transform_1(%arg0: i32) -> (i32, i32) {
    %c0_i32 = arith.constant 0 : i32
    %c0_i32_0 = arith.constant 0 : i32
    return %arg0, %c0_i32 : i32, i32
  }
  func.func @transform_2(%arg0: i32) -> (i32, i32) {
    %c0_i32 = arith.constant 0 : i32
    %c0_i32_0 = arith.constant 0 : i32
    %c0_i32_1 = arith.constant 0 : i32
    return %c0_i32, %c0_i32_0 : i32, i32
  }
  func.func @transform_3(%arg0: i32) -> (i32, i32) {
    %c0_i32 = arith.constant 0 : i32
    %c0_i32_0 = arith.constant 0 : i32
    %c0_i32_1 = arith.constant 0 : i32
    return %c0_i32, %c0_i32_0 : i32, i32
  }
  func.func @transform_4(%arg0: i32) -> (i32, i32) {
    %c0_i32 = arith.constant 0 : i32
    %c0_i32_0 = arith.constant 0 : i32
    %c0_i32_1 = arith.constant 0 : i32
    return %c0_i32, %c0_i32_0 : i32, i32
  }
  func.func @transform_5(%arg0: i32) -> (i32, i32) {
    %c0_i32 = arith.constant 0 : i32
    %c0_i32_0 = arith.constant 0 : i32
    %c0_i32_1 = arith.constant 0 : i32
    return %c0_i32, %c0_i32_0 : i32, i32
  }
  func.func @transform_6(%arg0: i32) -> (i32, i32) {
    %c0_i32 = arith.constant 0 : i32
    %c0_i32_0 = arith.constant 0 : i32
    %c0_i32_1 = arith.constant 0 : i32
    return %c0_i32, %c0_i32_0 : i32, i32
  }
  func.func @transform_7(%arg0: i32) -> (i32, i32) {
    %c0_i32 = arith.constant 0 : i32
    %c0_i32_0 = arith.constant 0 : i32
    %c0_i32_1 = arith.constant 0 : i32
    return %c0_i32, %c0_i32_0 : i32, i32
  }
  func.func @transform_8(%arg0: i32) -> (i32, i32) {
    %c0_i32 = arith.constant 0 : i32
    %c0_i32_0 = arith.constant 0 : i32
    %c0_i32_1 = arith.constant 0 : i32
    return %c0_i32, %c0_i32_0 : i32, i32
  }
  func.func @transform_9(%arg0: i32) -> (i32, i32) {
    %c0_i32 = arith.constant 0 : i32
    %c0_i32_0 = arith.constant 0 : i32
    %c0_i32_1 = arith.constant 0 : i32
    return %c0_i32, %c0_i32_0 : i32, i32
  }
  func.func @transform_10(%arg0: i32) -> (i32, i32) {
    %c0_i32 = arith.constant 0 : i32
    %c0_i32_0 = arith.constant 0 : i32
    return %arg0, %c0_i32 : i32, i32
  }
}

module attributes {stable_mosaic.version = 11 : i64} {
  func.func @_fused_autoencoder_kernel(%arg0: i32, %arg1: memref<1xf32, #tpu.memory_space<smem>>, %arg2: memref<8x1024xf32, #tpu.memory_space<vmem>>, %arg3: memref<1024x512xbf16, #tpu.memory_space<vmem>>, %arg4: memref<1x512xf32, #tpu.memory_space<vmem>>, %arg5: memref<512x256xbf16, #tpu.memory_space<vmem>>, %arg6: memref<1x256xf32, #tpu.memory_space<vmem>>, %arg7: memref<256x512xbf16, #tpu.memory_space<vmem>>, %arg8: memref<1x512xf32, #tpu.memory_space<vmem>>, %arg9: memref<512x1024xbf16, #tpu.memory_space<vmem>>, %arg10: memref<1x1024xf32, #tpu.memory_space<vmem>>, %arg11: memref<8x1024xf32, #tpu.memory_space<vmem>>) attributes {dimension_semantics = [#tpu.dimension_semantics<parallel>], iteration_bounds = array<i64: 1>, scalar_prefetch = 0 : i64, scratch_operands = 0 : i64, tpu.core_type = #tpu.core_type<tc>, window_params = [{transform_indices = @transform_0, window_bounds = array<i64: 1>}, {transform_indices = @transform_1, window_bounds = array<i64: 8, 1024>}, {pipeline_mode = #tpu.pipeline_mode<synchronous>, transform_indices = @transform_2, window_bounds = array<i64: 1024, 512>}, {pipeline_mode = #tpu.pipeline_mode<synchronous>, transform_indices = @transform_3, window_bounds = array<i64: 1, 512>}, {pipeline_mode = #tpu.pipeline_mode<synchronous>, transform_indices = @transform_4, window_bounds = array<i64: 512, 256>}, {pipeline_mode = #tpu.pipeline_mode<synchronous>, transform_indices = @transform_5, window_bounds = array<i64: 1, 256>}, {pipeline_mode = #tpu.pipeline_mode<synchronous>, transform_indices = @transform_6, window_bounds = array<i64: 256, 512>}, {pipeline_mode = #tpu.pipeline_mode<synchronous>, transform_indices = @transform_7, window_bounds = array<i64: 1, 512>}, {pipeline_mode = #tpu.pipeline_mode<synchronous>, transform_indices = @transform_8, window_bounds = array<i64: 512, 1024>}, {pipeline_mode = #tpu.pipeline_mode<synchronous>, transform_indices = @transform_9, window_bounds = array<i64: 1, 1024>}, {transform_indices = @transform_10, window_bounds = array<i64: 8, 1024>}]} {
    %c0 = arith.constant 0 : index
    %c0_0 = arith.constant 0 : index
    %0 = vector.load %arg2[%c0, %c0_0] : memref<8x1024xf32, #tpu.memory_space<vmem>>, vector<8x1024xf32>
    %1 = arith.truncf %0 : vector<8x1024xf32> to vector<8x1024xbf16>
    %c0_1 = arith.constant 0 : index
    %c0_2 = arith.constant 0 : index
    %2 = vector.load %arg3[%c0_1, %c0_2] : memref<1024x512xbf16, #tpu.memory_space<vmem>>, vector<1024x512xbf16>
    %cst = arith.constant dense<0.000000e+00> : vector<8x512xf32>
    %3 = tpu.matmul %1, %2, %cst {dimension_numbers = #tpu.dot_dimension_numbers<[1], [0], [0], [1], [0, 0, 1, 1], [], []>} : vector<8x1024xbf16>, vector<1024x512xbf16>, vector<8x512xf32> -> vector<8x512xf32>
    %c0_3 = arith.constant 0 : index
    %c0_4 = arith.constant 0 : index
    %4 = vector.load %arg4[%c0_3, %c0_4] : memref<1x512xf32, #tpu.memory_space<vmem>>, vector<1x512xf32>
    %5 = vector.broadcast %4 : vector<1x512xf32> to vector<8x512xf32>
    %6 = arith.addf %3, %5 : vector<8x512xf32>
    %7 = arith.negf %6 : vector<8x512xf32>
    %8 = math.exp %7 : vector<8x512xf32>
    %cst_5 = arith.constant 1.000000e+00 : f32
    %9 = vector.broadcast %cst_5 : f32 to vector<8x512xf32>
    %10 = arith.addf %9, %8 : vector<8x512xf32>
    %11 = arith.divf %9, %10 : vector<8x512xf32>
    %12 = arith.truncf %11 : vector<8x512xf32> to vector<8x512xbf16>
    %c0_6 = arith.constant 0 : index
    %c0_7 = arith.constant 0 : index
    %13 = vector.load %arg5[%c0_6, %c0_7] : memref<512x256xbf16, #tpu.memory_space<vmem>>, vector<512x256xbf16>
    %cst_8 = arith.constant dense<0.000000e+00> : vector<8x256xf32>
    %14 = tpu.matmul %12, %13, %cst_8 {dimension_numbers = #tpu.dot_dimension_numbers<[1], [0], [0], [1], [0, 0, 1, 1], [], []>} : vector<8x512xbf16>, vector<512x256xbf16>, vector<8x256xf32> -> vector<8x256xf32>
    %c0_9 = arith.constant 0 : index
    %c0_10 = arith.constant 0 : index
    %15 = vector.load %arg6[%c0_9, %c0_10] : memref<1x256xf32, #tpu.memory_space<vmem>>, vector<1x256xf32>
    %16 = vector.broadcast %15 : vector<1x256xf32> to vector<8x256xf32>
    %17 = arith.addf %14, %16 : vector<8x256xf32>
    %18 = arith.negf %17 : vector<8x256xf32>
    %19 = math.exp %18 : vector<8x256xf32>
    %cst_11 = arith.constant 1.000000e+00 : f32
    %20 = vector.broadcast %cst_11 : f32 to vector<8x256xf32>
    %21 = arith.addf %20, %19 : vector<8x256xf32>
    %22 = arith.divf %20, %21 : vector<8x256xf32>
    %c0_12 = arith.constant 0 : index
    %23 = memref.load %arg1[%c0_12] : memref<1xf32, #tpu.memory_space<smem>>
    %24 = vector.broadcast %23 : f32 to vector<8x256xf32>
    %25 = arith.addf %22, %24 : vector<8x256xf32>
    %26 = arith.truncf %25 : vector<8x256xf32> to vector<8x256xbf16>
    %c0_13 = arith.constant 0 : index
    %c0_14 = arith.constant 0 : index
    %27 = vector.load %arg7[%c0_13, %c0_14] : memref<256x512xbf16, #tpu.memory_space<vmem>>, vector<256x512xbf16>
    %cst_15 = arith.constant dense<0.000000e+00> : vector<8x512xf32>
    %28 = tpu.matmul %26, %27, %cst_15 {dimension_numbers = #tpu.dot_dimension_numbers<[1], [0], [0], [1], [0, 0, 1, 1], [], []>} : vector<8x256xbf16>, vector<256x512xbf16>, vector<8x512xf32> -> vector<8x512xf32>
    %c0_16 = arith.constant 0 : index
    %c0_17 = arith.constant 0 : index
    %29 = vector.load %arg8[%c0_16, %c0_17] : memref<1x512xf32, #tpu.memory_space<vmem>>, vector<1x512xf32>
    %30 = vector.broadcast %29 : vector<1x512xf32> to vector<8x512xf32>
    %31 = arith.addf %28, %30 : vector<8x512xf32>
    %32 = arith.negf %31 : vector<8x512xf32>
    %33 = math.exp %32 : vector<8x512xf32>
    %cst_18 = arith.constant 1.000000e+00 : f32
    %34 = vector.broadcast %cst_18 : f32 to vector<8x512xf32>
    %35 = arith.addf %34, %33 : vector<8x512xf32>
    %36 = arith.divf %34, %35 : vector<8x512xf32>
    %37 = arith.truncf %36 : vector<8x512xf32> to vector<8x512xbf16>
    %c0_19 = arith.constant 0 : index
    %c0_20 = arith.constant 0 : index
    %38 = vector.load %arg9[%c0_19, %c0_20] : memref<512x1024xbf16, #tpu.memory_space<vmem>>, vector<512x1024xbf16>
    %cst_21 = arith.constant dense<0.000000e+00> : vector<8x1024xf32>
    %39 = tpu.matmul %37, %38, %cst_21 {dimension_numbers = #tpu.dot_dimension_numbers<[1], [0], [0], [1], [0, 0, 1, 1], [], []>} : vector<8x512xbf16>, vector<512x1024xbf16>, vector<8x1024xf32> -> vector<8x1024xf32>
    %c0_22 = arith.constant 0 : index
    %c0_23 = arith.constant 0 : index
    %40 = vector.load %arg10[%c0_22, %c0_23] : memref<1x1024xf32, #tpu.memory_space<vmem>>, vector<1x1024xf32>
    %41 = vector.broadcast %40 : vector<1x1024xf32> to vector<8x1024xf32>
    %42 = arith.addf %39, %41 : vector<8x1024xf32>
    %c0_24 = arith.constant 0 : index
    %c0_25 = arith.constant 0 : index
    %43 = vector.load %arg11[%c0_24, %c0_25] : memref<8x1024xf32, #tpu.memory_space<vmem>>, vector<8x1024xf32>
    tpu.vector_store %arg11[%c0_24, %c0_25], %42 {strides = array<i32>} : memref<8x1024xf32, #tpu.memory_space<vmem>>, vector<8x1024xf32>,
    return
  }
  func.func @transform_0(%arg0: i32) -> i32 {
    %c0_i32 = arith.constant 0 : i32
    %c0_i32_0 = arith.constant 0 : i32
    return %c0_i32 : i32
  }
  func.func @transform_1(%arg0: i32) -> (i32, i32) {
    %c0_i32 = arith.constant 0 : i32
    %c0_i32_0 = arith.constant 0 : i32
    return %arg0, %c0_i32 : i32, i32
  }
  func.func @transform_2(%arg0: i32) -> (i32, i32) {
    %c0_i32 = arith.constant 0 : i32
    %c0_i32_0 = arith.constant 0 : i32
    %c0_i32_1 = arith.constant 0 : i32
    return %c0_i32, %c0_i32_0 : i32, i32
  }
  func.func @transform_3(%arg0: i32) -> (i32, i32) {
    %c0_i32 = arith.constant 0 : i32
    %c0_i32_0 = arith.constant 0 : i32
    %c0_i32_1 = arith.constant 0 : i32
    return %c0_i32, %c0_i32_0 : i32, i32
  }
  func.func @transform_4(%arg0: i32) -> (i32, i32) {
    %c0_i32 = arith.constant 0 : i32
    %c0_i32_0 = arith.constant 0 : i32
    %c0_i32_1 = arith.constant 0 : i32
    return %c0_i32, %c0_i32_0 : i32, i32
  }
  func.func @transform_5(%arg0: i32) -> (i32, i32) {
    %c0_i32 = arith.constant 0 : i32
    %c0_i32_0 = arith.constant 0 : i32
    %c0_i32_1 = arith.constant 0 : i32
    return %c0_i32, %c0_i32_0 : i32, i32
  }
  func.func @transform_6(%arg0: i32) -> (i32, i32) {
    %c0_i32 = arith.constant 0 : i32
    %c0_i32_0 = arith.constant 0 : i32
    %c0_i32_1 = arith.constant 0 : i32
    return %c0_i32, %c0_i32_0 : i32, i32
  }
  func.func @transform_7(%arg0: i32) -> (i32, i32) {
    %c0_i32 = arith.constant 0 : i32
    %c0_i32_0 = arith.constant 0 : i32
    %c0_i32_1 = arith.constant 0 : i32
    return %c0_i32, %c0_i32_0 : i32, i32
  }
  func.func @transform_8(%arg0: i32) -> (i32, i32) {
    %c0_i32 = arith.constant 0 : i32
    %c0_i32_0 = arith.constant 0 : i32
    %c0_i32_1 = arith.constant 0 : i32
    return %c0_i32, %c0_i32_0 : i32, i32
  }
  func.func @transform_9(%arg0: i32) -> (i32, i32) {
    %c0_i32 = arith.constant 0 : i32
    %c0_i32_0 = arith.constant 0 : i32
    %c0_i32_1 = arith.constant 0 : i32
    return %c0_i32, %c0_i32_0 : i32, i32
  }
  func.func @transform_10(%arg0: i32) -> (i32, i32) {
    %c0_i32 = arith.constant 0 : i32
    %c0_i32_0 = arith.constant 0 : i32
    return %arg0, %c0_i32 : i32, i32
  }
}

</mosaic_0001>

<llo_original>
// kernel: tpu_custom_call.1
$region0: #{tpu_custom_call.1}
  #allocation0 [shape = 'u32[]', space=smem, size = 0x4, offset = 0x4, fixed_abs, tag = 'smem constant byte address 0x4 - core index']
  #allocation1 [shape = 'u32[144,128]{1,0:T(1,128)}', space=vmem, size = 0x12000, scoped, tag = 'internal scratch']
  #allocation2 [shape = 'f32[1]{0:T(128)S(6)}', space=smem, size = 0x200, scoped, tag = 'scoped memory for tpu_custom_call.1']
  %s0 = inlined_call_operand.<no memory space> [shape: f32[1], index: 0, kind: input, shape index: {}]
  %s1 = inlined_call_operand.hbm [shape: f32[8,1024], index: 1, kind: input, shape index: {}]
  %s2 = inlined_call_operand.hbm [shape: bf16[1024,512], index: 2, kind: input, shape index: {}]
  %s3 = inlined_call_operand.vmem [shape: f32[1,512], index: 3, kind: input, shape index: {}]
  %s4 = inlined_call_operand.hbm [shape: bf16[512,256], index: 4, kind: input, shape index: {}]
  %s5 = inlined_call_operand.vmem [shape: f32[1,256], index: 5, kind: input, shape index: {}]
  %s6 = inlined_call_operand.hbm [shape: bf16[256,512], index: 6, kind: input, shape index: {}]
  %s7 = inlined_call_operand.vmem [shape: f32[1,512], index: 7, kind: input, shape index: {}]
  %s8 = inlined_call_operand.hbm [shape: bf16[512,1024], index: 8, kind: input, shape index: {}]
  %s9 = inlined_call_operand.vmem [shape: f32[1,1024], index: 9, kind: input, shape index: {}]
  %s10 = inlined_call_operand.hbm [shape: f32[8,1024], index: 10, kind: output, shape index: {}]
  %s11 = sld [smem:[#allocation0]]
  $region70: #{tpu_custom_call.1} parent=0
    _
  %s13 = ssub.s32 1, %s11
  %s14 = scalar_select 0, %s13, %s11
  %15 = sst [smem:[#allocation2]] %s0
  $region1: #{tpu_custom_call.1} parent=0
    #allocation3 [shape = 'u8[32768]{0}', space=vmem, size = 0x8000, scoped, tag = 'input window, operand 1, single buffered']
    #allocation4 [shape = 's32[1]{0}', space=sflag, size = 0x4, scoped, tag = 'scoped memory for tpu_custom_call.1']
    #allocation5 [shape = 's32[1]{0}', space=sflag, size = 0x4, scoped, tag = 'scoped memory for tpu_custom_call.1']
    #allocation6 [shape = 'u8[1048576]{0}', space=vmem, size = 0x100000, scoped, tag = 'input window, operand 2, single buffered']
    #allocation7 [shape = 's32[1]{0}', space=sflag, size = 0x4, scoped, tag = 'scoped memory for tpu_custom_call.1']
    #allocation8 [shape = 'u8[262144]{0}', space=vmem, size = 0x40000, scoped, tag = 'input window, operand 4, single buffered']
    #allocation9 [shape = 'u8[262144]{0}', space=vmem, size = 0x40000, scoped, tag = 'input window, operand 6, single buffered']
    #allocation10 [shape = 's32[1]{0}', space=sflag, size = 0x4, scoped, tag = 'scoped memory for tpu_custom_call.1']
    #allocation11 [shape = 'u8[1048576]{0}', space=vmem, size = 0x100000, scoped, tag = 'input window, operand 8, single buffered']
    #allocation12 [shape = 'u8[32768]{0}', space=vmem, size = 0x8000, scoped, tag = 'output window, operand 0, single buffered']
    %16 = vsyncpa [#allocation4], 0
    %17 = vsyncpa [#allocation7], 0
    %18 = vsyncpa [#allocation10], 0
    %19 = vsyncpa [#allocation5], 0
    // Predicated region
    $region2: #{tpu_custom_call.1} parent=1 // pred_check
      _
    $region3: #{tpu_custom_call.1} parent=1 // pred_check_branch
      %21 = sbr.rel (0) target = $region5
    $region4: #{tpu_custom_call.1} parent=1 // pred_region
      _
    $region5: #{tpu_custom_call.1} parent=1 // pred_fallthru
      _
    // Predicated region
    $region6: #{tpu_custom_call.1} parent=1 // pred_check
      _
    $region7: #{tpu_custom_call.1} parent=1 // pred_check_branch
      %23 = sbr.rel (0) target = $region9
    $region8: #{tpu_custom_call.1} parent=1 // pred_region
      %s25 = ssub.s32 1024, 1024
      %26 = vsyncadd [#allocation4], %s25
      %s28 = sshll.u32 [#allocation3], 4
      %s29 = int_to_ptr.vmem [resolvable:$true] %s28
      %31 = dma.hbm_to_vmem [thread:$0]  %s1, 1024, %s29, [#allocation4]
    $region9: #{tpu_custom_call.1} parent=1 // pred_fallthru
      _
    // Predicated region
    $region10: #{tpu_custom_call.1} parent=1 // pred_check
      _
    $region11: #{tpu_custom_call.1} parent=1 // pred_check_branch
      %33 = sbr.rel (0) target = $region13
    $region12: #{tpu_custom_call.1} parent=1 // pred_region
      %s35 = ssub.s32 32768, 32768
      %36 = vsyncadd [#allocation7], %s35
      %s37 = sshll.u32 [#allocation6], 4
      %s38 = int_to_ptr.vmem [resolvable:$true] %s37
      %43 = dma.hbm_to_vmem [thread:$0]  %s2, 32768, %s38, [#allocation7], 256, 256, 16
    $region13: #{tpu_custom_call.1} parent=1 // pred_fallthru
      _
    // Predicated region
    $region14: #{tpu_custom_call.1} parent=1 // pred_check
      _
    $region15: #{tpu_custom_call.1} parent=1 // pred_check_branch
      %45 = sbr.rel (0) target = $region17
    $region16: #{tpu_custom_call.1} parent=1 // pred_region
      _
    $region17: #{tpu_custom_call.1} parent=1 // pred_fallthru
      _
    // Predicated region
    $region18: #{tpu_custom_call.1} parent=1 // pred_check
      _
    $region19: #{tpu_custom_call.1} parent=1 // pred_check_branch
      %47 = sbr.rel (0) target = $region21
    $region20: #{tpu_custom_call.1} parent=1 // pred_region
      %s49 = ssub.s32 8192, 8192
      %50 = vsyncadd [#allocation7], %s49
      %s51 = sshll.u32 [#allocation8], 4
      %s52 = int_to_ptr.vmem [resolvable:$true] %s51
      %57 = dma.hbm_to_vmem [thread:$0]  %s4, 8192, %s52, [#allocation7], 128, 128, 8
    $region21: #{tpu_custom_call.1} parent=1 // pred_fallthru
      _
    // Predicated region
    $region22: #{tpu_custom_call.1} parent=1 // pred_check
      _
    $region23: #{tpu_custom_call.1} parent=1 // pred_check_branch
      %59 = sbr.rel (0) target = $region25
    $region24: #{tpu_custom_call.1} parent=1 // pred_region
      _
    $region25: #{tpu_custom_call.1} parent=1 // pred_fallthru
      _
    // Predicated region
    $region26: #{tpu_custom_call.1} parent=1 // pred_check
      _
    $region27: #{tpu_custom_call.1} parent=1 // pred_check_branch
      %61 = sbr.rel (0) target = $region29
    $region28: #{tpu_custom_call.1} parent=1 // pred_region
      %s63 = ssub.s32 8192, 8192
      %64 = vsyncadd [#allocation10], %s63
      %s65 = sshll.u32 [#allocation9], 4
      %s66 = int_to_ptr.vmem [resolvable:$true] %s65
      %71 = dma.hbm_to_vmem [thread:$0]  %s6, 8192, %s66, [#allocation10], 256, 256, 16
    $region29: #{tpu_custom_call.1} parent=1 // pred_fallthru
      _
    // Predicated region
    $region30: #{tpu_custom_call.1} parent=1 // pred_check
      _
    $region31: #{tpu_custom_call.1} parent=1 // pred_check_branch
      %73 = sbr.rel (0) target = $region33
    $region32: #{tpu_custom_call.1} parent=1 // pred_region
      _
    $region33: #{tpu_custom_call.1} parent=1 // pred_fallthru
      _
    // Predicated region
    $region34: #{tpu_custom_call.1} parent=1 // pred_check
      _
    $region35: #{tpu_custom_call.1} parent=1 // pred_check_branch
      %75 = sbr.rel (0) target = $region37
    $region36: #{tpu_custom_call.1} parent=1 // pred_region
      %s77 = ssub.s32 32768, 32768
      %78 = vsyncadd [#allocation10], %s77
      %s79 = sshll.u32 [#allocation11], 4
      %s80 = int_to_ptr.vmem [resolvable:$true] %s79
      %85 = dma.hbm_to_vmem [thread:$0]  %s8, 32768, %s80, [#allocation10], 512, 512, 32
    $region37: #{tpu_custom_call.1} parent=1 // pred_fallthru
      _
    // Predicated region
    $region38: #{tpu_custom_call.1} parent=1 // pred_check
      _
    $region39: #{tpu_custom_call.1} parent=1 // pred_check_branch
      %87 = sbr.rel (0) target = $region41
    $region40: #{tpu_custom_call.1} parent=1 // pred_region
      _
    $region41: #{tpu_custom_call.1} parent=1 // pred_fallthru
      _
    // Predicated region
    $region42: #{tpu_custom_call.1} parent=1 // pred_check
      _
    $region43: #{tpu_custom_call.1} parent=1 // pred_check_branch
      %89 = sbr.rel (0) target = $region45
    $region44: #{tpu_custom_call.1} parent=1 // pred_region
      %90 = dma.done [#allocation4], 1024
    $region45: #{tpu_custom_call.1} parent=1 // pred_fallthru
      _
    // Predicated region
    $region46: #{tpu_custom_call.1} parent=1 // pred_check
      _
    $region47: #{tpu_custom_call.1} parent=1 // pred_check_branch
      %92 = sbr.rel (0) target = $region49
    $region48: #{tpu_custom_call.1} parent=1 // pred_region
      %93 = dma.done [#allocation7], 32768
    $region49: #{tpu_custom_call.1} parent=1 // pred_fallthru
      _
    // Predicated region
    $region50: #{tpu_custom_call.1} parent=1 // pred_check
      _
    $region51: #{tpu_custom_call.1} parent=1 // pred_check_branch
      %95 = sbr.rel (0) target = $region53
    $region52: #{tpu_custom_call.1} parent=1 // pred_region
      %96 = dma.done [#allocation7], 8192
    $region53: #{tpu_custom_call.1} parent=1 // pred_fallthru
      _
    // Predicated region
    $region54: #{tpu_custom_call.1} parent=1 // pred_check
      _
    $region55: #{tpu_custom_call.1} parent=1 // pred_check_branch
      %98 = sbr.rel (0) target = $region57
    $region56: #{tpu_custom_call.1} parent=1 // pred_region
      %99 = dma.done [#allocation10], 8192
    $region57: #{tpu_custom_call.1} parent=1 // pred_fallthru
      _
    // Predicated region
    $region58: #{tpu_custom_call.1} parent=1 // pred_check
      _
    $region59: #{tpu_custom_call.1} parent=1 // pred_check_branch
      %101 = sbr.rel (0) target = $region61
    $region60: #{tpu_custom_call.1} parent=1 // pred_region
      %102 = dma.done [#allocation10], 32768
    $region61: #{tpu_custom_call.1} parent=1 // pred_fallthru
      _
    %v103 = vld [vmem:[#allocation3] sm:$0xff]
    %v104 = vld [vmem:[#allocation3 + $0x8] sm:$0xff]
    %v105 = vld [vmem:[#allocation3 + $0x10] sm:$0xff]
    %v106 = vld [vmem:[#allocation3 + $0x18] sm:$0xff]
    %v107 = vld [vmem:[#allocation3 + $0x20] sm:$0xff]
    %v108 = vld [vmem:[#allocation3 + $0x28] sm:$0xff]
    %v109 = vld [vmem:[#allocation3 + $0x30] sm:$0xff]
    %v110 = vld [vmem:[#allocation3 + $0x38] sm:$0xff]
    %v111 = vpack.c.bf16 %v103, %v103
    %v112 = vpack.c.bf16 %v104, %v104
    %v113 = vpack.c.bf16 %v105, %v105
    %v114 = vpack.c.bf16 %v106, %v106
    %v115 = vpack.c.bf16 %v107, %v107
    %v116 = vpack.c.bf16 %v108, %v108
    %v117 = vpack.c.bf16 %v109, %v109
    %v118 = vpack.c.bf16 %v110, %v110
    %v119 = vld [vmem:[#allocation6] sm:$0xff]
    %v120 = vld [vmem:[#allocation6 + $0x8] sm:$0xff]
    %v121 = vld [vmem:[#allocation6 + $0x10] sm:$0xff]
    %v122 = vld [vmem:[#allocation6 + $0x18] sm:$0xff]
    %v123 = vld [vmem:[#allocation6 + $0x20] sm:$0xff]
    %v124 = vld [vmem:[#allocation6 + $0x28] sm:$0xff]
    %v125 = vld [vmem:[#allocation6 + $0x30] sm:$0xff]
    %v126 = vld [vmem:[#allocation6 + $0x38] sm:$0xff]
    %v127 = vld [vmem:[#allocation6 + $0x40] sm:$0xff]
    %v128 = vld [vmem:[#allocation6 + $0x48] sm:$0xff]
    %v129 = vld [vmem:[#allocation6 + $0x50] sm:$0xff]
    %v130 = vld [vmem:[#allocation6 + $0x58] sm:$0xff]
    %v131 = vld [vmem:[#allocation6 + $0x60] sm:$0xff]
    %v132 = vld [vmem:[#allocation6 + $0x68] sm:$0xff]
    %v133 = vld [vmem:[#allocation6 + $0x70] sm:$0xff]
    %v134 = vld [vmem:[#allocation6 + $0x78] sm:$0xff]
    %v135 = vld [vmem:[#allocation6 + $0x80] sm:$0xff]
    %v136 = vld [vmem:[#allocation6 + $0x88] sm:$0xff]
    %v137 = vld [vmem:[#allocation6 + $0x90] sm:$0xff]
    %v138 = vld [vmem:[#allocation6 + $0x98] sm:$0xff]
    %v139 = vld [vmem:[#allocation6 + $0xa0] sm:$0xff]
    %v140 = vld [vmem:[#allocation6 + $0xa8] sm:$0xff]
    %v141 = vld [vmem:[#allocation6 + $0xb0] sm:$0xff]
    %v142 = vld [vmem:[#allocation6 + $0xb8] sm:$0xff]
    %v143 = vld [vmem:[#allocation6 + $0xc0] sm:$0xff]
    %v144 = vld [vmem:[#allocation6 + $0xc8] sm:$0xff]
    %v145 = vld [vmem:[#allocation6 + $0xd0] sm:$0xff]
    %v146 = vld [vmem:[#allocation6 + $0xd8] sm:$0xff]
    %v147 = vld [vmem:[#allocation6 + $0xe0] sm:$0xff]
    %v148 = vld [vmem:[#allocation6 + $0xe8] sm:$0xff]
    %v149 = vld [vmem:[#allocation6 + $0xf0] sm:$0xff]
    %v150 = vld [vmem:[#allocation6 + $0xf8] sm:$0xff]
    %v151 = vld [vmem:[#allocation6 + $0x100] sm:$0xff]
    %v152 = vld [vmem:[#allocation6 + $0x108] sm:$0xff]
    %v153 = vld [vmem:[#allocation6 + $0x110] sm:$0xff]
    %v154 = vld [vmem:[#allocation6 + $0x118] sm:$0xff]
    %v155 = vld [vmem:[#allocation6 + $0x120] sm:$0xff]
    %v156 = vld [vmem:[#allocation6 + $0x128] sm:$0xff]
    %v157 = vld [vmem:[#allocation6 + $0x130] sm:$0xff]
    %v158 = vld [vmem:[#allocation6 + $0x138] sm:$0xff]
    %v159 = vld [vmem:[#allocation6 + $0x140] sm:$0xff]
    %v160 = vld [vmem:[#allocation6 + $0x148] sm:$0xff]
    %v161 = vld [vmem:[#allocation6 + $0x150] sm:$0xff]
    %v162 = vld [vmem:[#allocation6 + $0x158] sm:$0xff]
    %v163 = vld [vmem:[#allocation6 + $0x160] sm:$0xff]
    %v164 = vld [vmem:[#allocation6 + $0x168] sm:$0xff]
    %v165 = vld [vmem:[#allocation6 + $0x170] sm:$0xff]
    %v166 = vld [vmem:[#allocation6 + $0x178] sm:$0xff]
    %v167 = vld [vmem:[#allocation6 + $0x180] sm:$0xff]
    %v168 = vld [vmem:[#allocation6 + $0x188] sm:$0xff]
    %v169 = vld [vmem:[#allocation6 + $0x190] sm:$0xff]
    %v170 = vld [vmem:[#allocation6 + $0x198] sm:$0xff]
    %v171 = vld [vmem:[#allocation6 + $0x1a0] sm:$0xff]
    %v172 = vld [vmem:[#allocation6 + $0x1a8] sm:$0xff]
    %v173 = vld [vmem:[#allocation6 + $0x1b0] sm:$0xff]
    %v174 = vld [vmem:[#allocation6 + $0x1b8] sm:$0xff]
    %v175 = vld [vmem:[#allocation6 + $0x1c0] sm:$0xff]
    %v176 = vld [vmem:[#allocation6 + $0x1c8] sm:$0xff]
    %v177 = vld [vmem:[#allocation6 + $0x1d0] sm:$0xff]
    %v178 = vld [vmem:[#allocation6 + $0x1d8] sm:$0xff]
    %v179 = vld [vmem:[#allocation6 + $0x1e0] sm:$0xff]
    %v180 = vld [vmem:[#allocation6 + $0x1e8] sm:$0xff]
    %v181 = vld [vmem:[#allocation6 + $0x1f0] sm:$0xff]
    %v182 = vld [vmem:[#allocation6 + $0x1f8] sm:$0xff]
    %v183 = vld [vmem:[#allocation6 + $0x200] sm:$0xff]
    %v184 = vld [vmem:[#allocation6 + $0x208] sm:$0xff]
    %v185 = vld [vmem:[#allocation6 + $0x210] sm:$0xff]
    %v186 = vld [vmem:[#allocation6 + $0x218] sm:$0xff]
    %v187 = vld [vmem:[#allocation6 + $0x220] sm:$0xff]
    %v188 = vld [vmem:[#allocation6 + $0x228] sm:$0xff]
    %v189 = vld [vmem:[#allocation6 + $0x230] sm:$0xff]
    %v190 = vld [vmem:[#allocation6 + $0x238] sm:$0xff]
    %v191 = vld [vmem:[#allocation6 + $0x240] sm:$0xff]
    %v192 = vld [vmem:[#allocation6 + $0x248] sm:$0xff]
    %v193 = vld [vmem:[#allocation6 + $0x250] sm:$0xff]
    %v194 = vld [vmem:[#allocation6 + $0x258] sm:$0xff]
    %v195 = vld [vmem:[#allocation6 + $0x260] sm:$0xff]
    %v196 = vld [vmem:[#allocation6 + $0x268] sm:$0xff]
    %v197 = vld [vmem:[#allocation6 + $0x270] sm:$0xff]
    %v198 = vld [vmem:[#allocation6 + $0x278] sm:$0xff]
    %v199 = vld [vmem:[#allocation6 + $0x280] sm:$0xff]
    %v200 = vld [vmem:[#allocation6 + $0x288] sm:$0xff]
    %v201 = vld [vmem:[#allocation6 + $0x290] sm:$0xff]
    %v202 = vld [vmem:[#allocation6 + $0x298] sm:$0xff]
    %v203 = vld [vmem:[#allocation6 + $0x2a0] sm:$0xff]
    %v204 = vld [vmem:[#allocation6 + $0x2a8] sm:$0xff]
    %v205 = vld [vmem:[#allocation6 + $0x2b0] sm:$0xff]
    %v206 = vld [vmem:[#allocation6 + $0x2b8] sm:$0xff]
    %v207 = vld [vmem:[#allocation6 + $0x2c0] sm:$0xff]
    %v208 = vld [vmem:[#allocation6 + $0x2c8] sm:$0xff]
    %v209 = vld [vmem:[#allocation6 + $0x2d0] sm:$0xff]
    %v210 = vld [vmem:[#allocation6 + $0x2d8] sm:$0xff]
    %v211 = vld [vmem:[#allocation6 + $0x2e0] sm:$0xff]
    %v212 = vld [vmem:[#allocation6 + $0x2e8] sm:$0xff]
    %v213 = vld [vmem:[#allocation6 + $0x2f0] sm:$0xff]
    %v214 = vld [vmem:[#allocation6 + $0x2f8] sm:$0xff]
    %v215 = vld [vmem:[#allocation6 + $0x300] sm:$0xff]
    %v216 = vld [vmem:[#allocation6 + $0x308] sm:$0xff]
    %v217 = vld [vmem:[#allocation6 + $0x310] sm:$0xff]
    %v218 = vld [vmem:[#allocation6 + $0x318] sm:$0xff]
    %v219 = vld [vmem:[#allocation6 + $0x320] sm:$0xff]
    %v220 = vld [vmem:[#allocation6 + $0x328] sm:$0xff]
    %v221 = vld [vmem:[#allocation6 + $0x330] sm:$0xff]
    %v222 = vld [vmem:[#allocation6 + $0x338] sm:$0xff]
    %v223 = vld [vmem:[#allocation6 + $0x340] sm:$0xff]
    %v224 = vld [vmem:[#allocation6 + $0x348] sm:$0xff]
    %v225 = vld [vmem:[#allocation6 + $0x350] sm:$0xff]
    %v226 = vld [vmem:[#allocation6 + $0x358] sm:$0xff]
    %v227 = vld [vmem:[#allocation6 + $0x360] sm:$0xff]
    %v228 = vld [vmem:[#allocation6 + $0x368] sm:$0xff]
    %v229 = vld [vmem:[#allocation6 + $0x370] sm:$0xff]
    %v230 = vld [vmem:[#allocation6 + $0x378] sm:$0xff]
    %v231 = vld [vmem:[#allocation6 + $0x380] sm:$0xff]
    %v232 = vld [vmem:[#allocation6 + $0x388] sm:$0xff]
    %v233 = vld [vmem:[#allocation6 + $0x390] sm:$0xff]
    %v234 = vld [vmem:[#allocation6 + $0x398] sm:$0xff]
    %v235 = vld [vmem:[#allocation6 + $0x3a0] sm:$0xff]
    %v236 = vld [vmem:[#allocation6 + $0x3a8] sm:$0xff]
    %v237 = vld [vmem:[#allocation6 + $0x3b0] sm:$0xff]
    %v238 = vld [vmem:[#allocation6 + $0x3b8] sm:$0xff]
    %v239 = vld [vmem:[#allocation6 + $0x3c0] sm:$0xff]
    %v240 = vld [vmem:[#allocation6 + $0x3c8] sm:$0xff]
    %v241 = vld [vmem:[#allocation6 + $0x3d0] sm:$0xff]
    %v242 = vld [vmem:[#allocation6 + $0x3d8] sm:$0xff]
    %v243 = vld [vmem:[#allocation6 + $0x3e0] sm:$0xff]
    %v244 = vld [vmem:[#allocation6 + $0x3e8] sm:$0xff]
    %v245 = vld [vmem:[#allocation6 + $0x3f0] sm:$0xff]
    %v246 = vld [vmem:[#allocation6 + $0x3f8] sm:$0xff]
    %v247 = vld [vmem:[#allocation6 + $0x400] sm:$0xff]
    %v248 = vld [vmem:[#allocation6 + $0x408] sm:$0xff]
    %v249 = vld [vmem:[#allocation6 + $0x410] sm:$0xff]
    %v250 = vld [vmem:[#allocation6 + $0x418] sm:$0xff]
    %v251 = vld [vmem:[#allocation6 + $0x420] sm:$0xff]
    %v252 = vld [vmem:[#allocation6 + $0x428] sm:$0xff]
    %v253 = vld [vmem:[#allocation6 + $0x430] sm:$0xff]
    %v254 = vld [vmem:[#allocation6 + $0x438] sm:$0xff]
    %v255 = vld [vmem:[#allocation6 + $0x440] sm:$0xff]
    %v256 = vld [vmem:[#allocation6 + $0x448] sm:$0xff]
    %v257 = vld [vmem:[#allocation6 + $0x450] sm:$0xff]
    %v258 = vld [vmem:[#allocation6 + $0x458] sm:$0xff]
    %v259 = vld [vmem:[#allocation6 + $0x460] sm:$0xff]
    %v260 = vld [vmem:[#allocation6 + $0x468] sm:$0xff]
    %v261 = vld [vmem:[#allocation6 + $0x470] sm:$0xff]
    %v262 = vld [vmem:[#allocation6 + $0x478] sm:$0xff]
    %v263 = vld [vmem:[#allocation6 + $0x480] sm:$0xff]
    %v264 = vld [vmem:[#allocation6 + $0x488] sm:$0xff]
    %v265 = vld [vmem:[#allocation6 + $0x490] sm:$0xff]
    %v266 = vld [vmem:[#allocation6 + $0x498] sm:$0xff]
    %v267 = vld [vmem:[#allocation6 + $0x4a0] sm:$0xff]
    %v268 = vld [vmem:[#allocation6 + $0x4a8] sm:$0xff]
    %v269 = vld [vmem:[#allocation6 + $0x4b0] sm:$0xff]
    %v270 = vld [vmem:[#allocation6 + $0x4b8] sm:$0xff]
    %v271 = vld [vmem:[#allocation6 + $0x4c0] sm:$0xff]
    %v272 = vld [vmem:[#allocation6 + $0x4c8] sm:$0xff]
    %v273 = vld [vmem:[#allocation6 + $0x4d0] sm:$0xff]
    %v274 = vld [vmem:[#allocation6 + $0x4d8] sm:$0xff]
    %v275 = vld [vmem:[#allocation6 + $0x4e0] sm:$0xff]
    %v276 = vld [vmem:[#allocation6 + $0x4e8] sm:$0xff]
    %v277 = vld [vmem:[#allocation6 + $0x4f0] sm:$0xff]
    %v278 = vld [vmem:[#allocation6 + $0x4f8] sm:$0xff]
    %v279 = vld [vmem:[#allocation6 + $0x500] sm:$0xff]
    %v280 = vld [vmem:[#allocation6 + $0x508] sm:$0xff]
    %v281 = vld [vmem:[#allocation6 + $0x510] sm:$0xff]
    %v282 = vld [vmem:[#allocation6 + $0x518] sm:$0xff]
    %v283 = vld [vmem:[#allocation6 + $0x520] sm:$0xff]
    %v284 = vld [vmem:[#allocation6 + $0x528] sm:$0xff]
    %v285 = vld [vmem:[#allocation6 + $0x530] sm:$0xff]
    %v286 = vld [vmem:[#allocation6 + $0x538] sm:$0xff]
    %v287 = vld [vmem:[#allocation6 + $0x540] sm:$0xff]
    %v288 = vld [vmem:[#allocation6 + $0x548] sm:$0xff]
    %v289 = vld [vmem:[#allocation6 + $0x550] sm:$0xff]
    %v290 = vld [vmem:[#allocation6 + $0x558] sm:$0xff]
    %v291 = vld [vmem:[#allocation6 + $0x560] sm:$0xff]
    %v292 = vld [vmem:[#allocation6 + $0x568] sm:$0xff]
    %v293 = vld [vmem:[#allocation6 + $0x570] sm:$0xff]
    %v294 = vld [vmem:[#allocation6 + $0x578] sm:$0xff]
    %v295 = vld [vmem:[#allocation6 + $0x580] sm:$0xff]
    %v296 = vld [vmem:[#allocation6 + $0x588] sm:$0xff]
    %v297 = vld [vmem:[#allocation6 + $0x590] sm:$0xff]
    %v298 = vld [vmem:[#allocation6 + $0x598] sm:$0xff]
    %v299 = vld [vmem:[#allocation6 + $0x5a0] sm:$0xff]
    %v300 = vld [vmem:[#allocation6 + $0x5a8] sm:$0xff]
    %v301 = vld [vmem:[#allocation6 + $0x5b0] sm:$0xff]
    %v302 = vld [vmem:[#allocation6 + $0x5b8] sm:$0xff]
    %v303 = vld [vmem:[#allocation6 + $0x5c0] sm:$0xff]
    %v304 = vld [vmem:[#allocation6 + $0x5c8] sm:$0xff]
    %v305 = vld [vmem:[#allocation6 + $0x5d0] sm:$0xff]
    %v306 = vld [vmem:[#allocation6 + $0x5d8] sm:$0xff]
    %v307 = vld [vmem:[#allocation6 + $0x5e0] sm:$0xff]
    %v308 = vld [vmem:[#allocation6 + $0x5e8] sm:$0xff]
    %v309 = vld [vmem:[#allocation6 + $0x5f0] sm:$0xff]
    %v310 = vld [vmem:[#allocation6 + $0x5f8] sm:$0xff]
    %v311 = vld [vmem:[#allocation6 + $0x600] sm:$0xff]
    %v312 = vld [vmem:[#allocation6 + $0x608] sm:$0xff]
    %v313 = vld [vmem:[#allocation6 + $0x610] sm:$0xff]
    %v314 = vld [vmem:[#allocation6 + $0x618] sm:$0xff]
    %v315 = vld [vmem:[#allocation6 + $0x620] sm:$0xff]
    %v316 = vld [vmem:[#allocation6 + $0x628] sm:$0xff]
    %v317 = vld [vmem:[#allocation6 + $0x630] sm:$0xff]
    %v318 = vld [vmem:[#allocation6 + $0x638] sm:$0xff]
    %v319 = vld [vmem:[#allocation6 + $0x640] sm:$0xff]
    %v320 = vld [vmem:[#allocation6 + $0x648] sm:$0xff]
    %v321 = vld [vmem:[#allocation6 + $0x650] sm:$0xff]
    %v322 = vld [vmem:[#allocation6 + $0x658] sm:$0xff]
    %v323 = vld [vmem:[#allocation6 + $0x660] sm:$0xff]
    %v324 = vld [vmem:[#allocation6 + $0x668] sm:$0xff]
    %v325 = vld [vmem:[#allocation6 + $0x670] sm:$0xff]
    %v326 = vld [vmem:[#allocation6 + $0x678] sm:$0xff]
    %v327 = vld [vmem:[#allocation6 + $0x680] sm:$0xff]
    %v328 = vld [vmem:[#allocation6 + $0x688] sm:$0xff]
    %v329 = vld [vmem:[#allocation6 + $0x690] sm:$0xff]
    %v330 = vld [vmem:[#allocation6 + $0x698] sm:$0xff]
    %v331 = vld [vmem:[#allocation6 + $0x6a0] sm:$0xff]
    %v332 = vld [vmem:[#allocation6 + $0x6a8] sm:$0xff]
    %v333 = vld [vmem:[#allocation6 + $0x6b0] sm:$0xff]
    %v334 = vld [vmem:[#allocation6 + $0x6b8] sm:$0xff]
    %v335 = vld [vmem:[#allocation6 + $0x6c0] sm:$0xff]
    %v336 = vld [vmem:[#allocation6 + $0x6c8] sm:$0xff]
    %v337 = vld [vmem:[#allocation6 + $0x6d0] sm:$0xff]
    %v338 = vld [vmem:[#allocation6 + $0x6d8] sm:$0xff]
    %v339 = vld [vmem:[#allocation6 + $0x6e0] sm:$0xff]
    %v340 = vld [vmem:[#allocation6 + $0x6e8] sm:$0xff]
    %v341 = vld [vmem:[#allocation6 + $0x6f0] sm:$0xff]
    %v342 = vld [vmem:[#allocation6 + $0x6f8] sm:$0xff]
    %v343 = vld [vmem:[#allocation6 + $0x700] sm:$0xff]
    %v344 = vld [vmem:[#allocation6 + $0x708] sm:$0xff]
    %v345 = vld [vmem:[#allocation6 + $0x710] sm:$0xff]
    %v346 = vld [vmem:[#allocation6 + $0x718] sm:$0xff]
    %v347 = vld [vmem:[#allocation6 + $0x720] sm:$0xff]
    %v348 = vld [vmem:[#allocation6 + $0x728] sm:$0xff]
    %v349 = vld [vmem:[#allocation6 + $0x730] sm:$0xff]
    %v350 = vld [vmem:[#allocation6 + $0x738] sm:$0xff]
    %v351 = vld [vmem:[#allocation6 + $0x740] sm:$0xff]
    %v352 = vld [vmem:[#allocation6 + $0x748] sm:$0xff]
    %v353 = vld [vmem:[#allocation6 + $0x750] sm:$0xff]
    %v354 = vld [vmem:[#allocation6 + $0x758] sm:$0xff]
    %v355 = vld [vmem:[#allocation6 + $0x760] sm:$0xff]
    %v356 = vld [vmem:[#allocation6 + $0x768] sm:$0xff]
    %v357 = vld [vmem:[#allocation6 + $0x770] sm:$0xff]
    %v358 = vld [vmem:[#allocation6 + $0x778] sm:$0xff]
    %v359 = vld [vmem:[#allocation6 + $0x780] sm:$0xff]
    %v360 = vld [vmem:[#allocation6 + $0x788] sm:$0xff]
    %v361 = vld [vmem:[#allocation6 + $0x790] sm:$0xff]
    %v362 = vld [vmem:[#allocation6 + $0x798] sm:$0xff]
    %v363 = vld [vmem:[#allocation6 + $0x7a0] sm:$0xff]
    %v364 = vld [vmem:[#allocation6 + $0x7a8] sm:$0xff]
    %v365 = vld [vmem:[#allocation6 + $0x7b0] sm:$0xff]
    %v366 = vld [vmem:[#allocation6 + $0x7b8] sm:$0xff]
    %v367 = vld [vmem:[#allocation6 + $0x7c0] sm:$0xff]
    %v368 = vld [vmem:[#allocation6 + $0x7c8] sm:$0xff]
    %v369 = vld [vmem:[#allocation6 + $0x7d0] sm:$0xff]
    %v370 = vld [vmem:[#allocation6 + $0x7d8] sm:$0xff]
    %v371 = vld [vmem:[#allocation6 + $0x7e0] sm:$0xff]
    %v372 = vld [vmem:[#allocation6 + $0x7e8] sm:$0xff]
    %v373 = vld [vmem:[#allocation6 + $0x7f0] sm:$0xff]
    %v374 = vld [vmem:[#allocation6 + $0x7f8] sm:$0xff]
    %v375 = vld [vmem:[%s3] sm:$0xf]
    %v377 = vlaneseq
    %v378 = vshrl.u32 %v377, 7
    %v379 = vsub.s32 0, %v378
    %v380 = vrot.slane %v375, %v379
    %v381 = vlaneseq
    %v382 = vshrl.u32 %v381, 7
    %v383 = vsub.s32 1, %v382
    %v384 = vrot.slane %v375, %v383
    %v385 = vlaneseq
    %v386 = vshrl.u32 %v385, 7
    %v387 = vsub.s32 2, %v386
    %v388 = vrot.slane %v375, %v387
    %v389 = vlaneseq
    %v390 = vshrl.u32 %v389, 7
    %v391 = vsub.s32 3, %v390
    %v392 = vrot.slane %v375, %v391
    %v653 = vunpack.c.l.b16 %v119
    %v654 = vunpack.c.h.b16 %v119
    %v655 = vunpack.c.l.b16 %v120
    %v656 = vunpack.c.h.b16 %v120
    %v657 = vunpack.c.l.b16 %v121
    %v658 = vunpack.c.h.b16 %v121
    %v659 = vunpack.c.l.b16 %v122
    %v660 = vunpack.c.h.b16 %v122
    %v661 = vunpack.c.l.b16 %v123
    %v662 = vunpack.c.h.b16 %v123
    %v663 = vunpack.c.l.b16 %v124
    %v664 = vunpack.c.h.b16 %v124
    %v665 = vunpack.c.l.b16 %v125
    %v666 = vunpack.c.h.b16 %v125
    %v667 = vunpack.c.l.b16 %v126
    %v668 = vunpack.c.h.b16 %v126
    %v669 = vunpack.c.l.b16 %v127
    %v670 = vunpack.c.h.b16 %v127
    %v671 = vunpack.c.l.b16 %v128
    %v672 = vunpack.c.h.b16 %v128
    %v673 = vunpack.c.l.b16 %v129
    %v674 = vunpack.c.h.b16 %v129
    %v675 = vunpack.c.l.b16 %v130
    %v676 = vunpack.c.h.b16 %v130
    %v677 = vunpack.c.l.b16 %v131
    %v678 = vunpack.c.h.b16 %v131
    %v679 = vunpack.c.l.b16 %v132
    %v680 = vunpack.c.h.b16 %v132
    %v681 = vunpack.c.l.b16 %v133
    %v682 = vunpack.c.h.b16 %v133
    %v683 = vunpack.c.l.b16 %v134
    %v684 = vunpack.c.h.b16 %v134
    %v685 = vunpack.c.l.b16 %v135
    %v686 = vunpack.c.h.b16 %v135
    %v687 = vunpack.c.l.b16 %v136
    %v688 = vunpack.c.h.b16 %v136
    %v689 = vunpack.c.l.b16 %v137
    %v690 = vunpack.c.h.b16 %v137
    %v691 = vunpack.c.l.b16 %v138
    %v692 = vunpack.c.h.b16 %v138
    %v693 = vunpack.c.l.b16 %v139
    %v694 = vunpack.c.h.b16 %v139
    %v695 = vunpack.c.l.b16 %v140
    %v696 = vunpack.c.h.b16 %v140
    %v697 = vunpack.c.l.b16 %v141
    %v698 = vunpack.c.h.b16 %v141
    %v699 = vunpack.c.l.b16 %v142
    %v700 = vunpack.c.h.b16 %v142
    %v701 = vunpack.c.l.b16 %v143
    %v702 = vunpack.c.h.b16 %v143
    %v703 = vunpack.c.l.b16 %v144
    %v704 = vunpack.c.h.b16 %v144
    %v705 = vunpack.c.l.b16 %v145
    %v706 = vunpack.c.h.b16 %v145
    %v707 = vunpack.c.l.b16 %v146
    %v708 = vunpack.c.h.b16 %v146
    %v709 = vunpack.c.l.b16 %v147
    %v710 = vunpack.c.h.b16 %v147
    %v711 = vunpack.c.l.b16 %v148
    %v712 = vunpack.c.h.b16 %v148
    %v713 = vunpack.c.l.b16 %v149
    %v714 = vunpack.c.h.b16 %v149
    %v715 = vunpack.c.l.b16 %v150
    %v716 = vunpack.c.h.b16 %v150
    %v717 = vunpack.c.l.b16 %v151
    %v718 = vunpack.c.h.b16 %v151
    %v719 = vunpack.c.l.b16 %v152
    %v720 = vunpack.c.h.b16 %v152
    %v721 = vunpack.c.l.b16 %v153
    %v722 = vunpack.c.h.b16 %v153
    %v723 = vunpack.c.l.b16 %v154
    %v724 = vunpack.c.h.b16 %v154
    %v725 = vunpack.c.l.b16 %v155
    %v726 = vunpack.c.h.b16 %v155
    %v727 = vunpack.c.l.b16 %v156
    %v728 = vunpack.c.h.b16 %v156
    %v729 = vunpack.c.l.b16 %v157
    %v730 = vunpack.c.h.b16 %v157
    %v731 = vunpack.c.l.b16 %v158
    %v732 = vunpack.c.h.b16 %v158
    %v733 = vunpack.c.l.b16 %v159
    %v734 = vunpack.c.h.b16 %v159
    %v735 = vunpack.c.l.b16 %v160
    %v736 = vunpack.c.h.b16 %v160
    %v737 = vunpack.c.l.b16 %v161
    %v738 = vunpack.c.h.b16 %v161
    %v739 = vunpack.c.l.b16 %v162
    %v740 = vunpack.c.h.b16 %v162
    %v741 = vunpack.c.l.b16 %v163
    %v742 = vunpack.c.h.b16 %v163
    %v743 = vunpack.c.l.b16 %v164
    %v744 = vunpack.c.h.b16 %v164
    %v745 = vunpack.c.l.b16 %v165
    %v746 = vunpack.c.h.b16 %v165
    %v747 = vunpack.c.l.b16 %v166
    %v748 = vunpack.c.h.b16 %v166
    %v749 = vunpack.c.l.b16 %v167
    %v750 = vunpack.c.h.b16 %v167
    %v751 = vunpack.c.l.b16 %v168
    %v752 = vunpack.c.h.b16 %v168
    %v753 = vunpack.c.l.b16 %v169
    %v754 = vunpack.c.h.b16 %v169
    %v755 = vunpack.c.l.b16 %v170
    %v756 = vunpack.c.h.b16 %v170
    %v757 = vunpack.c.l.b16 %v171
    %v758 = vunpack.c.h.b16 %v171
    %v759 = vunpack.c.l.b16 %v172
    %v760 = vunpack.c.h.b16 %v172
    %v761 = vunpack.c.l.b16 %v173
    %v762 = vunpack.c.h.b16 %v173
    %v763 = vunpack.c.l.b16 %v174
    %v764 = vunpack.c.h.b16 %v174
    %v765 = vunpack.c.l.b16 %v175
    %v766 = vunpack.c.h.b16 %v175
    %v767 = vunpack.c.l.b16 %v176
    %v768 = vunpack.c.h.b16 %v176
    %v769 = vunpack.c.l.b16 %v177
    %v770 = vunpack.c.h.b16 %v177
    %v771 = vunpack.c.l.b16 %v178
    %v772 = vunpack.c.h.b16 %v178
    %v773 = vunpack.c.l.b16 %v179
    %v774 = vunpack.c.h.b16 %v179
    %v775 = vunpack.c.l.b16 %v180
    %v776 = vunpack.c.h.b16 %v180
    %v777 = vunpack.c.l.b16 %v181
    %v778 = vunpack.c.h.b16 %v181
    %v779 = vunpack.c.l.b16 %v182
    %v780 = vunpack.c.h.b16 %v182
    %v781 = vunpack.c.l.b16 %v183
    %v782 = vunpack.c.h.b16 %v183
    %v783 = vunpack.c.l.b16 %v184
    %v784 = vunpack.c.h.b16 %v184
    %v785 = vunpack.c.l.b16 %v185
    %v786 = vunpack.c.h.b16 %v185
    %v787 = vunpack.c.l.b16 %v186
    %v788 = vunpack.c.h.b16 %v186
    %v789 = vunpack.c.l.b16 %v187
    %v790 = vunpack.c.h.b16 %v187
    %v791 = vunpack.c.l.b16 %v188
    %v792 = vunpack.c.h.b16 %v188
    %v793 = vunpack.c.l.b16 %v189
    %v794 = vunpack.c.h.b16 %v189
    %v795 = vunpack.c.l.b16 %v190
    %v796 = vunpack.c.h.b16 %v190
    %v797 = vunpack.c.l.b16 %v191
    %v798 = vunpack.c.h.b16 %v191
    %v799 = vunpack.c.l.b16 %v192
    %v800 = vunpack.c.h.b16 %v192
    %v801 = vunpack.c.l.b16 %v193
    %v802 = vunpack.c.h.b16 %v193
    %v803 = vunpack.c.l.b16 %v194
    %v804 = vunpack.c.h.b16 %v194
    %v805 = vunpack.c.l.b16 %v195
    %v806 = vunpack.c.h.b16 %v195
    %v807 = vunpack.c.l.b16 %v196
    %v808 = vunpack.c.h.b16 %v196
    %v809 = vunpack.c.l.b16 %v197
    %v810 = vunpack.c.h.b16 %v197
    %v811 = vunpack.c.l.b16 %v198
    %v812 = vunpack.c.h.b16 %v198
    %v813 = vunpack.c.l.b16 %v199
    %v814 = vunpack.c.h.b16 %v199
    %v815 = vunpack.c.l.b16 %v200
    %v816 = vunpack.c.h.b16 %v200
    %v817 = vunpack.c.l.b16 %v201
    %v818 = vunpack.c.h.b16 %v201
    %v819 = vunpack.c.l.b16 %v202
    %v820 = vunpack.c.h.b16 %v202
    %v821 = vunpack.c.l.b16 %v203
    %v822 = vunpack.c.h.b16 %v203
    %v823 = vunpack.c.l.b16 %v204
    %v824 = vunpack.c.h.b16 %v204
    %v825 = vunpack.c.l.b16 %v205
    %v826 = vunpack.c.h.b16 %v205
    %v827 = vunpack.c.l.b16 %v206
    %v828 = vunpack.c.h.b16 %v206
    %v829 = vunpack.c.l.b16 %v207
    %v830 = vunpack.c.h.b16 %v207
    %v831 = vunpack.c.l.b16 %v208
    %v832 = vunpack.c.h.b16 %v208
    %v833 = vunpack.c.l.b16 %v209
    %v834 = vunpack.c.h.b16 %v209
    %v835 = vunpack.c.l.b16 %v210
    %v836 = vunpack.c.h.b16 %v210
    %v837 = vunpack.c.l.b16 %v211
    %v838 = vunpack.c.h.b16 %v211
    %v839 = vunpack.c.l.b16 %v212
    %v840 = vunpack.c.h.b16 %v212
    %v841 = vunpack.c.l.b16 %v213
    %v842 = vunpack.c.h.b16 %v213
    %v843 = vunpack.c.l.b16 %v214
    %v844 = vunpack.c.h.b16 %v214
    %v845 = vunpack.c.l.b16 %v215
    %v846 = vunpack.c.h.b16 %v215
    %v847 = vunpack.c.l.b16 %v216
    %v848 = vunpack.c.h.b16 %v216
    %v849 = vunpack.c.l.b16 %v217
    %v850 = vunpack.c.h.b16 %v217
    %v851 = vunpack.c.l.b16 %v218
    %v852 = vunpack.c.h.b16 %v218
    %v853 = vunpack.c.l.b16 %v219
    %v854 = vunpack.c.h.b16 %v219
    %v855 = vunpack.c.l.b16 %v220
    %v856 = vunpack.c.h.b16 %v220
    %v857 = vunpack.c.l.b16 %v221
    %v858 = vunpack.c.h.b16 %v221
    %v859 = vunpack.c.l.b16 %v222
    %v860 = vunpack.c.h.b16 %v222
    %v861 = vunpack.c.l.b16 %v223
    %v862 = vunpack.c.h.b16 %v223
    %v863 = vunpack.c.l.b16 %v224
    %v864 = vunpack.c.h.b16 %v224
    %v865 = vunpack.c.l.b16 %v225
    %v866 = vunpack.c.h.b16 %v225
    %v867 = vunpack.c.l.b16 %v226
    %v868 = vunpack.c.h.b16 %v226
    %v869 = vunpack.c.l.b16 %v227
    %v870 = vunpack.c.h.b16 %v227
    %v871 = vunpack.c.l.b16 %v228
    %v872 = vunpack.c.h.b16 %v228
    %v873 = vunpack.c.l.b16 %v229
    %v874 = vunpack.c.h.b16 %v229
    %v875 = vunpack.c.l.b16 %v230
    %v876 = vunpack.c.h.b16 %v230
    %v877 = vunpack.c.l.b16 %v231
    %v878 = vunpack.c.h.b16 %v231
    %v879 = vunpack.c.l.b16 %v232
    %v880 = vunpack.c.h.b16 %v232
    %v881 = vunpack.c.l.b16 %v233
    %v882 = vunpack.c.h.b16 %v233
    %v883 = vunpack.c.l.b16 %v234
    %v884 = vunpack.c.h.b16 %v234
    %v885 = vunpack.c.l.b16 %v235
    %v886 = vunpack.c.h.b16 %v235
    %v887 = vunpack.c.l.b16 %v236
    %v888 = vunpack.c.h.b16 %v236
    %v889 = vunpack.c.l.b16 %v237
    %v890 = vunpack.c.h.b16 %v237
    %v891 = vunpack.c.l.b16 %v238
    %v892 = vunpack.c.h.b16 %v238
    %v893 = vunpack.c.l.b16 %v239
    %v894 = vunpack.c.h.b16 %v239
    %v895 = vunpack.c.l.b16 %v240
    %v896 = vunpack.c.h.b16 %v240
    %v897 = vunpack.c.l.b16 %v241
    %v898 = vunpack.c.h.b16 %v241
    %v899 = vunpack.c.l.b16 %v242
    %v900 = vunpack.c.h.b16 %v242
    %v901 = vunpack.c.l.b16 %v243
    %v902 = vunpack.c.h.b16 %v243
    %v903 = vunpack.c.l.b16 %v244
    %v904 = vunpack.c.h.b16 %v244
    %v905 = vunpack.c.l.b16 %v245
    %v906 = vunpack.c.h.b16 %v245
    %v907 = vunpack.c.l.b16 %v246
    %v908 = vunpack.c.h.b16 %v246
    %v909 = vunpack.c.l.b16 %v247
    %v910 = vunpack.c.h.b16 %v247
    %v911 = vunpack.c.l.b16 %v248
    %v912 = vunpack.c.h.b16 %v248
    %v913 = vunpack.c.l.b16 %v249
    %v914 = vunpack.c.h.b16 %v249
    %v915 = vunpack.c.l.b16 %v250
    %v916 = vunpack.c.h.b16 %v250
    %v917 = vunpack.c.l.b16 %v251
    %v918 = vunpack.c.h.b16 %v251
    %v919 = vunpack.c.l.b16 %v252
    %v920 = vunpack.c.h.b16 %v252
    %v921 = vunpack.c.l.b16 %v253
    %v922 = vunpack.c.h.b16 %v253
    %v923 = vunpack.c.l.b16 %v254
    %v924 = vunpack.c.h.b16 %v254
    %v925 = vunpack.c.l.b16 %v255
    %v926 = vunpack.c.h.b16 %v255
    %v927 = vunpack.c.l.b16 %v256
    %v928 = vunpack.c.h.b16 %v256
    %v929 = vunpack.c.l.b16 %v257
    %v930 = vunpack.c.h.b16 %v257
    %v931 = vunpack.c.l.b16 %v258
    %v932 = vunpack.c.h.b16 %v258
    %v933 = vunpack.c.l.b16 %v259
    %v934 = vunpack.c.h.b16 %v259
    %v935 = vunpack.c.l.b16 %v260
    %v936 = vunpack.c.h.b16 %v260
    %v937 = vunpack.c.l.b16 %v261
    %v938 = vunpack.c.h.b16 %v261
    %v939 = vunpack.c.l.b16 %v262
    %v940 = vunpack.c.h.b16 %v262
    %v941 = vunpack.c.l.b16 %v263
    %v942 = vunpack.c.h.b16 %v263
    %v943 = vunpack.c.l.b16 %v264
    %v944 = vunpack.c.h.b16 %v264
    %v945 = vunpack.c.l.b16 %v265
    %v946 = vunpack.c.h.b16 %v265
    %v947 = vunpack.c.l.b16 %v266
    %v948 = vunpack.c.h.b16 %v266
    %v949 = vunpack.c.l.b16 %v267
    %v950 = vunpack.c.h.b16 %v267
    %v951 = vunpack.c.l.b16 %v268
    %v952 = vunpack.c.h.b16 %v268
    %v953 = vunpack.c.l.b16 %v269
    %v954 = vunpack.c.h.b16 %v269
    %v955 = vunpack.c.l.b16 %v270
    %v956 = vunpack.c.h.b16 %v270
    %v957 = vunpack.c.l.b16 %v271
    %v958 = vunpack.c.h.b16 %v271
    %v959 = vunpack.c.l.b16 %v272
    %v960 = vunpack.c.h.b16 %v272
    %v961 = vunpack.c.l.b16 %v273
    %v962 = vunpack.c.h.b16 %v273
    %v963 = vunpack.c.l.b16 %v274
    %v964 = vunpack.c.h.b16 %v274
    %v965 = vunpack.c.l.b16 %v275
    %v966 = vunpack.c.h.b16 %v275
    %v967 = vunpack.c.l.b16 %v276
    %v968 = vunpack.c.h.b16 %v276
    %v969 = vunpack.c.l.b16 %v277
    %v970 = vunpack.c.h.b16 %v277
    %v971 = vunpack.c.l.b16 %v278
    %v972 = vunpack.c.h.b16 %v278
    %v973 = vunpack.c.l.b16 %v279
    %v974 = vunpack.c.h.b16 %v279
    %v975 = vunpack.c.l.b16 %v280
    %v976 = vunpack.c.h.b16 %v280
    %v977 = vunpack.c.l.b16 %v281
    %v978 = vunpack.c.h.b16 %v281
    %v979 = vunpack.c.l.b16 %v282
    %v980 = vunpack.c.h.b16 %v282
    %v981 = vunpack.c.l.b16 %v283
    %v982 = vunpack.c.h.b16 %v283
    %v983 = vunpack.c.l.b16 %v284
    %v984 = vunpack.c.h.b16 %v284
    %v985 = vunpack.c.l.b16 %v285
    %v986 = vunpack.c.h.b16 %v285
    %v987 = vunpack.c.l.b16 %v286
    %v988 = vunpack.c.h.b16 %v286
    %v989 = vunpack.c.l.b16 %v287
    %v990 = vunpack.c.h.b16 %v287
    %v991 = vunpack.c.l.b16 %v288
    %v992 = vunpack.c.h.b16 %v288
    %v993 = vunpack.c.l.b16 %v289
    %v994 = vunpack.c.h.b16 %v289
    %v995 = vunpack.c.l.b16 %v290
    %v996 = vunpack.c.h.b16 %v290
    %v997 = vunpack.c.l.b16 %v291
    %v998 = vunpack.c.h.b16 %v291
    %v999 = vunpack.c.l.b16 %v292
    %v1000 = vunpack.c.h.b16 %v292
    %v1001 = vunpack.c.l.b16 %v293
    %v1002 = vunpack.c.h.b16 %v293
    %v1003 = vunpack.c.l.b16 %v294
    %v1004 = vunpack.c.h.b16 %v294
    %v1005 = vunpack.c.l.b16 %v295
    %v1006 = vunpack.c.h.b16 %v295
    %v1007 = vunpack.c.l.b16 %v296
    %v1008 = vunpack.c.h.b16 %v296
    %v1009 = vunpack.c.l.b16 %v297
    %v1010 = vunpack.c.h.b16 %v297
    %v1011 = vunpack.c.l.b16 %v298
    %v1012 = vunpack.c.h.b16 %v298
    %v1013 = vunpack.c.l.b16 %v299
    %v1014 = vunpack.c.h.b16 %v299
    %v1015 = vunpack.c.l.b16 %v300
    %v1016 = vunpack.c.h.b16 %v300
    %v1017 = vunpack.c.l.b16 %v301
    %v1018 = vunpack.c.h.b16 %v301
    %v1019 = vunpack.c.l.b16 %v302
    %v1020 = vunpack.c.h.b16 %v302
    %v1021 = vunpack.c.l.b16 %v303
    %v1022 = vunpack.c.h.b16 %v303
    %v1023 = vunpack.c.l.b16 %v304
    %v1024 = vunpack.c.h.b16 %v304
    %v1025 = vunpack.c.l.b16 %v305
    %v1026 = vunpack.c.h.b16 %v305
    %v1027 = vunpack.c.l.b16 %v306
    %v1028 = vunpack.c.h.b16 %v306
    %v1029 = vunpack.c.l.b16 %v307
    %v1030 = vunpack.c.h.b16 %v307
    %v1031 = vunpack.c.l.b16 %v308
    %v1032 = vunpack.c.h.b16 %v308
    %v1033 = vunpack.c.l.b16 %v309
    %v1034 = vunpack.c.h.b16 %v309
    %v1035 = vunpack.c.l.b16 %v310
    %v1036 = vunpack.c.h.b16 %v310
    %v1037 = vunpack.c.l.b16 %v311
    %v1038 = vunpack.c.h.b16 %v311
    %v1039 = vunpack.c.l.b16 %v312
    %v1040 = vunpack.c.h.b16 %v312
    %v1041 = vunpack.c.l.b16 %v313
    %v1042 = vunpack.c.h.b16 %v313
    %v1043 = vunpack.c.l.b16 %v314
    %v1044 = vunpack.c.h.b16 %v314
    %v1045 = vunpack.c.l.b16 %v315
    %v1046 = vunpack.c.h.b16 %v315
    %v1047 = vunpack.c.l.b16 %v316
    %v1048 = vunpack.c.h.b16 %v316
    %v1049 = vunpack.c.l.b16 %v317
    %v1050 = vunpack.c.h.b16 %v317
    %v1051 = vunpack.c.l.b16 %v318
    %v1052 = vunpack.c.h.b16 %v318
    %v1053 = vunpack.c.l.b16 %v319
    %v1054 = vunpack.c.h.b16 %v319
    %v1055 = vunpack.c.l.b16 %v320
    %v1056 = vunpack.c.h.b16 %v320
    %v1057 = vunpack.c.l.b16 %v321
    %v1058 = vunpack.c.h.b16 %v321
    %v1059 = vunpack.c.l.b16 %v322
    %v1060 = vunpack.c.h.b16 %v322
    %v1061 = vunpack.c.l.b16 %v323
    %v1062 = vunpack.c.h.b16 %v323
    %v1063 = vunpack.c.l.b16 %v324
    %v1064 = vunpack.c.h.b16 %v324
    %v1065 = vunpack.c.l.b16 %v325
    %v1066 = vunpack.c.h.b16 %v325
    %v1067 = vunpack.c.l.b16 %v326
    %v1068 = vunpack.c.h.b16 %v326
    %v1069 = vunpack.c.l.b16 %v327
    %v1070 = vunpack.c.h.b16 %v327
    %v1071 = vunpack.c.l.b16 %v328
    %v1072 = vunpack.c.h.b16 %v328
    %v1073 = vunpack.c.l.b16 %v329
    %v1074 = vunpack.c.h.b16 %v329
    %v1075 = vunpack.c.l.b16 %v330
    %v1076 = vunpack.c.h.b16 %v330
    %v1077 = vunpack.c.l.b16 %v331
    %v1078 = vunpack.c.h.b16 %v331
    %v1079 = vunpack.c.l.b16 %v332
    %v1080 = vunpack.c.h.b16 %v332
    %v1081 = vunpack.c.l.b16 %v333
    %v1082 = vunpack.c.h.b16 %v333
    %v1083 = vunpack.c.l.b16 %v334
    %v1084 = vunpack.c.h.b16 %v334
    %v1085 = vunpack.c.l.b16 %v335
    %v1086 = vunpack.c.h.b16 %v335
    %v1087 = vunpack.c.l.b16 %v336
    %v1088 = vunpack.c.h.b16 %v336
    %v1089 = vunpack.c.l.b16 %v337
    %v1090 = vunpack.c.h.b16 %v337
    %v1091 = vunpack.c.l.b16 %v338
    %v1092 = vunpack.c.h.b16 %v338
    %v1093 = vunpack.c.l.b16 %v339
    %v1094 = vunpack.c.h.b16 %v339
    %v1095 = vunpack.c.l.b16 %v340
    %v1096 = vunpack.c.h.b16 %v340
    %v1097 = vunpack.c.l.b16 %v341
    %v1098 = vunpack.c.h.b16 %v341
    %v1099 = vunpack.c.l.b16 %v342
    %v1100 = vunpack.c.h.b16 %v342
    %v1101 = vunpack.c.l.b16 %v343
    %v1102 = vunpack.c.h.b16 %v343
    %v1103 = vunpack.c.l.b16 %v344
    %v1104 = vunpack.c.h.b16 %v344
    %v1105 = vunpack.c.l.b16 %v345
    %v1106 = vunpack.c.h.b16 %v345
    %v1107 = vunpack.c.l.b16 %v346
    %v1108 = vunpack.c.h.b16 %v346
    %v1109 = vunpack.c.l.b16 %v347
    %v1110 = vunpack.c.h.b16 %v347
    %v1111 = vunpack.c.l.b16 %v348
    %v1112 = vunpack.c.h.b16 %v348
    %v1113 = vunpack.c.l.b16 %v349
    %v1114 = vunpack.c.h.b16 %v349
    %v1115 = vunpack.c.l.b16 %v350
    %v1116 = vunpack.c.h.b16 %v350
    %v1117 = vunpack.c.l.b16 %v351
    %v1118 = vunpack.c.h.b16 %v351
    %v1119 = vunpack.c.l.b16 %v352
    %v1120 = vunpack.c.h.b16 %v352
    %v1121 = vunpack.c.l.b16 %v353
    %v1122 = vunpack.c.h.b16 %v353
    %v1123 = vunpack.c.l.b16 %v354
    %v1124 = vunpack.c.h.b16 %v354
    %v1125 = vunpack.c.l.b16 %v355
    %v1126 = vunpack.c.h.b16 %v355
    %v1127 = vunpack.c.l.b16 %v356
    %v1128 = vunpack.c.h.b16 %v356
    %v1129 = vunpack.c.l.b16 %v357
    %v1130 = vunpack.c.h.b16 %v357
    %v1131 = vunpack.c.l.b16 %v358
    %v1132 = vunpack.c.h.b16 %v358
    %v1133 = vunpack.c.l.b16 %v359
    %v1134 = vunpack.c.h.b16 %v359
    %v1135 = vunpack.c.l.b16 %v360
    %v1136 = vunpack.c.h.b16 %v360
    %v1137 = vunpack.c.l.b16 %v361
    %v1138 = vunpack.c.h.b16 %v361
    %v1139 = vunpack.c.l.b16 %v362
    %v1140 = vunpack.c.h.b16 %v362
    %v1141 = vunpack.c.l.b16 %v363
    %v1142 = vunpack.c.h.b16 %v363
    %v1143 = vunpack.c.l.b16 %v364
    %v1144 = vunpack.c.h.b16 %v364
    %v1145 = vunpack.c.l.b16 %v365
    %v1146 = vunpack.c.h.b16 %v365
    %v1147 = vunpack.c.l.b16 %v366
    %v1148 = vunpack.c.h.b16 %v366
    %v1149 = vunpack.c.l.b16 %v367
    %v1150 = vunpack.c.h.b16 %v367
    %v1151 = vunpack.c.l.b16 %v368
    %v1152 = vunpack.c.h.b16 %v368
    %v1153 = vunpack.c.l.b16 %v369
    %v1154 = vunpack.c.h.b16 %v369
    %v1155 = vunpack.c.l.b16 %v370
    %v1156 = vunpack.c.h.b16 %v370
    %v1157 = vunpack.c.l.b16 %v371
    %v1158 = vunpack.c.h.b16 %v371
    %v1159 = vunpack.c.l.b16 %v372
    %v1160 = vunpack.c.h.b16 %v372
    %v1161 = vunpack.c.l.b16 %v373
    %v1162 = vunpack.c.h.b16 %v373
    %v1163 = vunpack.c.l.b16 %v374
    %v1164 = vunpack.c.h.b16 %v374
    %v1165 = vpack.c.b16 %v657, %v653
    %v1166 = vpack.c.b16 %v658, %v654
    %v1167 = vpack.c.b16 %v659, %v655
    %v1168 = vpack.c.b16 %v660, %v656
    %v1169 = vpack.c.b16 %v665, %v661
    %v1170 = vpack.c.b16 %v666, %v662
    %v1171 = vpack.c.b16 %v667, %v663
    %v1172 = vpack.c.b16 %v668, %v664
    %v1173 = vpack.c.b16 %v673, %v669
    %v1174 = vpack.c.b16 %v674, %v670
    %v1175 = vpack.c.b16 %v675, %v671
    %v1176 = vpack.c.b16 %v676, %v672
    %v1177 = vpack.c.b16 %v681, %v677
    %v1178 = vpack.c.b16 %v682, %v678
    %v1179 = vpack.c.b16 %v683, %v679
    %v1180 = vpack.c.b16 %v684, %v680
    %v1181 = vpack.c.b16 %v689, %v685
    %v1182 = vpack.c.b16 %v690, %v686
    %v1183 = vpack.c.b16 %v691, %v687
    %v1184 = vpack.c.b16 %v692, %v688
    %v1185 = vpack.c.b16 %v697, %v693
    %v1186 = vpack.c.b16 %v698, %v694
    %v1187 = vpack.c.b16 %v699, %v695
    %v1188 = vpack.c.b16 %v700, %v696
    %v1189 = vpack.c.b16 %v705, %v701
    %v1190 = vpack.c.b16 %v706, %v702
    %v1191 = vpack.c.b16 %v707, %v703
    %v1192 = vpack.c.b16 %v708, %v704
    %v1193 = vpack.c.b16 %v713, %v709
    %v1194 = vpack.c.b16 %v714, %v710
    %v1195 = vpack.c.b16 %v715, %v711
    %v1196 = vpack.c.b16 %v716, %v712
    %v1197 = vpack.c.b16 %v721, %v717
    %v1198 = vpack.c.b16 %v722, %v718
    %v1199 = vpack.c.b16 %v723, %v719
    %v1200 = vpack.c.b16 %v724, %v720
    %v1201 = vpack.c.b16 %v729, %v725
    %v1202 = vpack.c.b16 %v730, %v726
    %v1203 = vpack.c.b16 %v731, %v727
    %v1204 = vpack.c.b16 %v732, %v728
    %v1205 = vpack.c.b16 %v737, %v733
    %v1206 = vpack.c.b16 %v738, %v734
    %v1207 = vpack.c.b16 %v739, %v735
    %v1208 = vpack.c.b16 %v740, %v736
    %v1209 = vpack.c.b16 %v745, %v741
    %v1210 = vpack.c.b16 %v746, %v742
    %v1211 = vpack.c.b16 %v747, %v743
    %v1212 = vpack.c.b16 %v748, %v744
    %v1213 = vpack.c.b16 %v753, %v749
    %v1214 = vpack.c.b16 %v754, %v750
    %v1215 = vpack.c.b16 %v755, %v751
    %v1216 = vpack.c.b16 %v756, %v752
    %v1217 = vpack.c.b16 %v761, %v757
    %v1218 = vpack.c.b16 %v762, %v758
    %v1219 = vpack.c.b16 %v763, %v759
    %v1220 = vpack.c.b16 %v764, %v760
    %v1221 = vpack.c.b16 %v769, %v765
    %v1222 = vpack.c.b16 %v770, %v766
    %v1223 = vpack.c.b16 %v771, %v767
    %v1224 = vpack.c.b16 %v772, %v768
    %v1225 = vpack.c.b16 %v777, %v773
    %v1226 = vpack.c.b16 %v778, %v774
    %v1227 = vpack.c.b16 %v779, %v775
    %v1228 = vpack.c.b16 %v780, %v776
    %v1229 = vpack.c.b16 %v785, %v781
    %v1230 = vpack.c.b16 %v786, %v782
    %v1231 = vpack.c.b16 %v787, %v783
    %v1232 = vpack.c.b16 %v788, %v784
    %v1233 = vpack.c.b16 %v793, %v789
    %v1234 = vpack.c.b16 %v794, %v790
    %v1235 = vpack.c.b16 %v795, %v791
    %v1236 = vpack.c.b16 %v796, %v792
    %v1237 = vpack.c.b16 %v801, %v797
    %v1238 = vpack.c.b16 %v802, %v798
    %v1239 = vpack.c.b16 %v803, %v799
    %v1240 = vpack.c.b16 %v804, %v800
    %v1241 = vpack.c.b16 %v809, %v805
    %v1242 = vpack.c.b16 %v810, %v806
    %v1243 = vpack.c.b16 %v811, %v807
    %v1244 = vpack.c.b16 %v812, %v808
    %v1245 = vpack.c.b16 %v817, %v813
    %v1246 = vpack.c.b16 %v818, %v814
    %v1247 = vpack.c.b16 %v819, %v815
    %v1248 = vpack.c.b16 %v820, %v816
    %v1249 = vpack.c.b16 %v825, %v821
    %v1250 = vpack.c.b16 %v826, %v822
    %v1251 = vpack.c.b16 %v827, %v823
    %v1252 = vpack.c.b16 %v828, %v824
    %v1253 = vpack.c.b16 %v833, %v829
    %v1254 = vpack.c.b16 %v834, %v830
    %v1255 = vpack.c.b16 %v835, %v831
    %v1256 = vpack.c.b16 %v836, %v832
    %v1257 = vpack.c.b16 %v841, %v837
    %v1258 = vpack.c.b16 %v842, %v838
    %v1259 = vpack.c.b16 %v843, %v839
    %v1260 = vpack.c.b16 %v844, %v840
    %v1261 = vpack.c.b16 %v849, %v845
    %v1262 = vpack.c.b16 %v850, %v846
    %v1263 = vpack.c.b16 %v851, %v847
    %v1264 = vpack.c.b16 %v852, %v848
    %v1265 = vpack.c.b16 %v857, %v853
    %v1266 = vpack.c.b16 %v858, %v854
    %v1267 = vpack.c.b16 %v859, %v855
    %v1268 = vpack.c.b16 %v860, %v856
    %v1269 = vpack.c.b16 %v865, %v861
    %v1270 = vpack.c.b16 %v866, %v862
    %v1271 = vpack.c.b16 %v867, %v863
    %v1272 = vpack.c.b16 %v868, %v864
    %v1273 = vpack.c.b16 %v873, %v869
    %v1274 = vpack.c.b16 %v874, %v870
    %v1275 = vpack.c.b16 %v875, %v871
    %v1276 = vpack.c.b16 %v876, %v872
    %v1277 = vpack.c.b16 %v881, %v877
    %v1278 = vpack.c.b16 %v882, %v878
    %v1279 = vpack.c.b16 %v883, %v879
    %v1280 = vpack.c.b16 %v884, %v880
    %v1281 = vpack.c.b16 %v889, %v885
    %v1282 = vpack.c.b16 %v890, %v886
    %v1283 = vpack.c.b16 %v891, %v887
    %v1284 = vpack.c.b16 %v892, %v888
    %v1285 = vpack.c.b16 %v897, %v893
    %v1286 = vpack.c.b16 %v898, %v894
    %v1287 = vpack.c.b16 %v899, %v895
    %v1288 = vpack.c.b16 %v900, %v896
    %v1289 = vpack.c.b16 %v905, %v901
    %v1290 = vpack.c.b16 %v906, %v902
    %v1291 = vpack.c.b16 %v907, %v903
    %v1292 = vpack.c.b16 %v908, %v904
    %v1293 = vpack.c.b16 %v913, %v909
    %v1294 = vpack.c.b16 %v914, %v910
    %v1295 = vpack.c.b16 %v915, %v911
    %v1296 = vpack.c.b16 %v916, %v912
    %v1297 = vpack.c.b16 %v921, %v917
    %v1298 = vpack.c.b16 %v922, %v918
    %v1299 = vpack.c.b16 %v923, %v919
    %v1300 = vpack.c.b16 %v924, %v920
    %v1301 = vpack.c.b16 %v929, %v925
    %v1302 = vpack.c.b16 %v930, %v926
    %v1303 = vpack.c.b16 %v931, %v927
    %v1304 = vpack.c.b16 %v932, %v928
    %v1305 = vpack.c.b16 %v937, %v933
    %v1306 = vpack.c.b16 %v938, %v934
    %v1307 = vpack.c.b16 %v939, %v935
    %v1308 = vpack.c.b16 %v940, %v936
    %v1309 = vpack.c.b16 %v945, %v941
    %v1310 = vpack.c.b16 %v946, %v942
    %v1311 = vpack.c.b16 %v947, %v943
    %v1312 = vpack.c.b16 %v948, %v944
    %v1313 = vpack.c.b16 %v953, %v949
    %v1314 = vpack.c.b16 %v954, %v950
    %v1315 = vpack.c.b16 %v955, %v951
    %v1316 = vpack.c.b16 %v956, %v952
    %v1317 = vpack.c.b16 %v961, %v957
    %v1318 = vpack.c.b16 %v962, %v958
    %v1319 = vpack.c.b16 %v963, %v959
    %v1320 = vpack.c.b16 %v964, %v960
    %v1321 = vpack.c.b16 %v969, %v965
    %v1322 = vpack.c.b16 %v970, %v966
    %v1323 = vpack.c.b16 %v971, %v967
    %v1324 = vpack.c.b16 %v972, %v968
    %v1325 = vpack.c.b16 %v977, %v973
    %v1326 = vpack.c.b16 %v978, %v974
    %v1327 = vpack.c.b16 %v979, %v975
    %v1328 = vpack.c.b16 %v980, %v976
    %v1329 = vpack.c.b16 %v985, %v981
    %v1330 = vpack.c.b16 %v986, %v982
    %v1331 = vpack.c.b16 %v987, %v983
    %v1332 = vpack.c.b16 %v988, %v984
    %v1333 = vpack.c.b16 %v993, %v989
    %v1334 = vpack.c.b16 %v994, %v990
    %v1335 = vpack.c.b16 %v995, %v991
    %v1336 = vpack.c.b16 %v996, %v992
    %v1337 = vpack.c.b16 %v1001, %v997
    %v1338 = vpack.c.b16 %v1002, %v998
    %v1339 = vpack.c.b16 %v1003, %v999
    %v1340 = vpack.c.b16 %v1004, %v1000
    %v1341 = vpack.c.b16 %v1009, %v1005
    %v1342 = vpack.c.b16 %v1010, %v1006
    %v1343 = vpack.c.b16 %v1011, %v1007
    %v1344 = vpack.c.b16 %v1012, %v1008
    %v1345 = vpack.c.b16 %v1017, %v1013
    %v1346 = vpack.c.b16 %v1018, %v1014
    %v1347 = vpack.c.b16 %v1019, %v1015
    %v1348 = vpack.c.b16 %v1020, %v1016
    %v1349 = vpack.c.b16 %v1025, %v1021
    %v1350 = vpack.c.b16 %v1026, %v1022
    %v1351 = vpack.c.b16 %v1027, %v1023
    %v1352 = vpack.c.b16 %v1028, %v1024
    %v1353 = vpack.c.b16 %v1033, %v1029
    %v1354 = vpack.c.b16 %v1034, %v1030
    %v1355 = vpack.c.b16 %v1035, %v1031
    %v1356 = vpack.c.b16 %v1036, %v1032
    %v1357 = vpack.c.b16 %v1041, %v1037
    %v1358 = vpack.c.b16 %v1042, %v1038
    %v1359 = vpack.c.b16 %v1043, %v1039
    %v1360 = vpack.c.b16 %v1044, %v1040
    %v1361 = vpack.c.b16 %v1049, %v1045
    %v1362 = vpack.c.b16 %v1050, %v1046
    %v1363 = vpack.c.b16 %v1051, %v1047
    %v1364 = vpack.c.b16 %v1052, %v1048
    %v1365 = vpack.c.b16 %v1057, %v1053
    %v1366 = vpack.c.b16 %v1058, %v1054
    %v1367 = vpack.c.b16 %v1059, %v1055
    %v1368 = vpack.c.b16 %v1060, %v1056
    %v1369 = vpack.c.b16 %v1065, %v1061
    %v1370 = vpack.c.b16 %v1066, %v1062
    %v1371 = vpack.c.b16 %v1067, %v1063
    %v1372 = vpack.c.b16 %v1068, %v1064
    %v1373 = vpack.c.b16 %v1073, %v1069
    %v1374 = vpack.c.b16 %v1074, %v1070
    %v1375 = vpack.c.b16 %v1075, %v1071
    %v1376 = vpack.c.b16 %v1076, %v1072
    %v1377 = vpack.c.b16 %v1081, %v1077
    %v1378 = vpack.c.b16 %v1082, %v1078
    %v1379 = vpack.c.b16 %v1083, %v1079
    %v1380 = vpack.c.b16 %v1084, %v1080
    %v1381 = vpack.c.b16 %v1089, %v1085
    %v1382 = vpack.c.b16 %v1090, %v1086
    %v1383 = vpack.c.b16 %v1091, %v1087
    %v1384 = vpack.c.b16 %v1092, %v1088
    %v1385 = vpack.c.b16 %v1097, %v1093
    %v1386 = vpack.c.b16 %v1098, %v1094
    %v1387 = vpack.c.b16 %v1099, %v1095
    %v1388 = vpack.c.b16 %v1100, %v1096
    %v1389 = vpack.c.b16 %v1105, %v1101
    %v1390 = vpack.c.b16 %v1106, %v1102
    %v1391 = vpack.c.b16 %v1107, %v1103
    %v1392 = vpack.c.b16 %v1108, %v1104
    %v1393 = vpack.c.b16 %v1113, %v1109
    %v1394 = vpack.c.b16 %v1114, %v1110
    %v1395 = vpack.c.b16 %v1115, %v1111
    %v1396 = vpack.c.b16 %v1116, %v1112
    %v1397 = vpack.c.b16 %v1121, %v1117
    %v1398 = vpack.c.b16 %v1122, %v1118
    %v1399 = vpack.c.b16 %v1123, %v1119
    %v1400 = vpack.c.b16 %v1124, %v1120
    %v1401 = vpack.c.b16 %v1129, %v1125
    %v1402 = vpack.c.b16 %v1130, %v1126
    %v1403 = vpack.c.b16 %v1131, %v1127
    %v1404 = vpack.c.b16 %v1132, %v1128
    %v1405 = vpack.c.b16 %v1137, %v1133
    %v1406 = vpack.c.b16 %v1138, %v1134
    %v1407 = vpack.c.b16 %v1139, %v1135
    %v1408 = vpack.c.b16 %v1140, %v1136
    %v1409 = vpack.c.b16 %v1145, %v1141
    %v1410 = vpack.c.b16 %v1146, %v1142
    %v1411 = vpack.c.b16 %v1147, %v1143
    %v1412 = vpack.c.b16 %v1148, %v1144
    %v1413 = vpack.c.b16 %v1153, %v1149
    %v1414 = vpack.c.b16 %v1154, %v1150
    %v1415 = vpack.c.b16 %v1155, %v1151
    %v1416 = vpack.c.b16 %v1156, %v1152
    %v1417 = vpack.c.b16 %v1161, %v1157
    %v1418 = vpack.c.b16 %v1162, %v1158
    %v1419 = vpack.c.b16 %v1163, %v1159
    %v1420 = vpack.c.b16 %v1164, %v1160
    %1677 = vmatprep.subr.bf16.mxu0 %v1166
    %1678 = vmatpush1.bf16.msra.mxu0 %v1165
    %1679 = vmatprep.subr.bf16.mxu0 %v1170
    %1680 = vmatpush1.bf16.msra.mxu0 %v1169
    %1681 = vmatprep.subr.bf16.mxu0 %v1174
    %1682 = vmatpush1.bf16.msra.mxu0 %v1173
    %1683 = vmatprep.subr.bf16.mxu0 %v1178
    %1684 = vmatpush1.bf16.msra.mxu0 %v1177
    %1685 = vmatprep.subr.bf16.mxu0 %v1182
    %1686 = vmatpush1.bf16.msra.mxu0 %v1181
    %1687 = vmatprep.subr.bf16.mxu0 %v1186
    %1688 = vmatpush1.bf16.msra.mxu0 %v1185
    %1689 = vmatprep.subr.bf16.mxu0 %v1190
    %1690 = vmatpush1.bf16.msra.mxu0 %v1189
    %1691 = vmatprep.subr.bf16.mxu0 %v1194
    %1692 = vmatpush1.bf16.msra.mxu0 %v1193
    %1693 = vmatprep.subr.bf16.mxu0 %v1198
    %1694 = vmatpush1.bf16.msra.mxu0 %v1197
    %1695 = vmatprep.subr.bf16.mxu0 %v1202
    %1696 = vmatpush1.bf16.msra.mxu0 %v1201
    %1697 = vmatprep.subr.bf16.mxu0 %v1206
    %1698 = vmatpush1.bf16.msra.mxu0 %v1205
    %1699 = vmatprep.subr.bf16.mxu0 %v1210
    %1700 = vmatpush1.bf16.msra.mxu0 %v1209
    %1701 = vmatprep.subr.bf16.mxu0 %v1214
    %1702 = vmatpush1.bf16.msra.mxu0 %v1213
    %1703 = vmatprep.subr.bf16.mxu0 %v1218
    %1704 = vmatpush1.bf16.msra.mxu0 %v1217
    %1705 = vmatprep.subr.bf16.mxu0 %v1222
    %1706 = vmatpush1.bf16.msra.mxu0 %v1221
    %1707 = vmatprep.subr.bf16.mxu0 %v1226
    %1708 = vmatpush1.bf16.msra.mxu0 %v1225
    %1709 = vmatprep.mubr.bf16.mxu0 %v112
    %1710 = vmatmul.mubr.bf16.gmra.mrb[0].mxu0 %v111
    %v1711 = vpop.f32.mrb[0].mxu0
    %v1712 = vadd.f32 %v380, %v1711
    %v1713 = vpop.f32.mrb[0].mxu0
    %v1714 = vadd.f32 %v384, %v1713
    %v1715 = vpop.f32.mrb[0].mxu0
    %v1716 = vpop.f32.mrb[0].mxu0
    %1717 = vdwg.mxu0
    %1718 = vmatprep.subr.bf16.mxu0 %v1230
    %1719 = vmatpush1.bf16.msra.mxu0 %v1229
    %1720 = vmatprep.subr.bf16.mxu0 %v1234
    %1721 = vmatpush1.bf16.msra.mxu0 %v1233
    %1722 = vmatprep.subr.bf16.mxu0 %v1238
    %1723 = vmatpush1.bf16.msra.mxu0 %v1237
    %1724 = vmatprep.subr.bf16.mxu0 %v1242
    %1725 = vmatpush1.bf16.msra.mxu0 %v1241
    %1726 = vmatprep.subr.bf16.mxu0 %v1246
    %1727 = vmatpush1.bf16.msra.mxu0 %v1245
    %1728 = vmatprep.subr.bf16.mxu0 %v1250
    %1729 = vmatpush1.bf16.msra.mxu0 %v1249
    %1730 = vmatprep.subr.bf16.mxu0 %v1254
    %1731 = vmatpush1.bf16.msra.mxu0 %v1253
    %1732 = vmatprep.subr.bf16.mxu0 %v1258
    %1733 = vmatpush1.bf16.msra.mxu0 %v1257
    %1734 = vmatprep.subr.bf16.mxu0 %v1262
    %1735 = vmatpush1.bf16.msra.mxu0 %v1261
    %1736 = vmatprep.subr.bf16.mxu0 %v1266
    %1737 = vmatpush1.bf16.msra.mxu0 %v1265
    %1738 = vmatprep.subr.bf16.mxu0 %v1270
    %1739 = vmatpush1.bf16.msra.mxu0 %v1269
    %1740 = vmatprep.subr.bf16.mxu0 %v1274
    %1741 = vmatpush1.bf16.msra.mxu0 %v1273
    %1742 = vmatprep.subr.bf16.mxu0 %v1278
    %1743 = vmatpush1.bf16.msra.mxu0 %v1277
    %1744 = vmatprep.subr.bf16.mxu0 %v1282
    %1745 = vmatpush1.bf16.msra.mxu0 %v1281
    %1746 = vmatprep.subr.bf16.mxu0 %v1286
    %1747 = vmatpush1.bf16.msra.mxu0 %v1285
    %1748 = vmatprep.subr.bf16.mxu0 %v1290
    %1749 = vmatpush1.bf16.msra.mxu0 %v1289
    %1750 = vmatprep.mubr.bf16.mxu0 %v114
    %1751 = vmatmul.mubr.bf16.gmra.mrb[0].mxu0 %v113
    %v1752 = vpop.f32.mrb[0].mxu0
    %v1753 = vadd.f32 %v1712, %v1752
    %v1754 = vpop.f32.mrb[0].mxu0
    %v1755 = vadd.f32 %v1714, %v1754
    %v1756 = vpop.f32.mrb[0].mxu0
    %v1757 = vpop.f32.mrb[0].mxu0
    %1758 = vdwg.mxu0
    %1759 = vmatprep.subr.bf16.mxu0 %v1294
    %1760 = vmatpush1.bf16.msra.mxu0 %v1293
    %1761 = vmatprep.subr.bf16.mxu0 %v1298
    %1762 = vmatpush1.bf16.msra.mxu0 %v1297
    %1763 = vmatprep.subr.bf16.mxu0 %v1302
    %1764 = vmatpush1.bf16.msra.mxu0 %v1301
    %1765 = vmatprep.subr.bf16.mxu0 %v1306
    %1766 = vmatpush1.bf16.msra.mxu0 %v1305
    %1767 = vmatprep.subr.bf16.mxu0 %v1310
    %1768 = vmatpush1.bf16.msra.mxu0 %v1309
    %1769 = vmatprep.subr.bf16.mxu0 %v1314
    %1770 = vmatpush1.bf16.msra.mxu0 %v1313
    %1771 = vmatprep.subr.bf16.mxu0 %v1318
    %1772 = vmatpush1.bf16.msra.mxu0 %v1317
    %1773 = vmatprep.subr.bf16.mxu0 %v1322
    %1774 = vmatpush1.bf16.msra.mxu0 %v1321
    %1775 = vmatprep.subr.bf16.mxu0 %v1326
    %1776 = vmatpush1.bf16.msra.mxu0 %v1325
    %1777 = vmatprep.subr.bf16.mxu0 %v1330
    %1778 = vmatpush1.bf16.msra.mxu0 %v1329
    %1779 = vmatprep.subr.bf16.mxu0 %v1334
    %1780 = vmatpush1.bf16.msra.mxu0 %v1333
    %1781 = vmatprep.subr.bf16.mxu0 %v1338
    %1782 = vmatpush1.bf16.msra.mxu0 %v1337
    %1783 = vmatprep.subr.bf16.mxu0 %v1342
    %1784 = vmatpush1.bf16.msra.mxu0 %v1341
    %1785 = vmatprep.subr.bf16.mxu0 %v1346
    %1786 = vmatpush1.bf16.msra.mxu0 %v1345
    %1787 = vmatprep.subr.bf16.mxu0 %v1350
    %1788 = vmatpush1.bf16.msra.mxu0 %v1349
    %1789 = vmatprep.subr.bf16.mxu0 %v1354
    %1790 = vmatpush1.bf16.msra.mxu0 %v1353
    %1791 = vmatprep.mubr.bf16.mxu0 %v116
    %1792 = vmatmul.mubr.bf16.gmra.mrb[0].mxu0 %v115
    %v1793 = vpop.f32.mrb[0].mxu0
    %v1794 = vadd.f32 %v1753, %v1793
    %v1795 = vpop.f32.mrb[0].mxu0
    %v1796 = vadd.f32 %v1755, %v1795
    %v1797 = vpop.f32.mrb[0].mxu0
    %v1798 = vpop.f32.mrb[0].mxu0
    %1799 = vdwg.mxu0
    %1800 = vmatprep.subr.bf16.mxu0 %v1358
    %1801 = vmatpush1.bf16.msra.mxu0 %v1357
    %1802 = vmatprep.subr.bf16.mxu0 %v1362
    %1803 = vmatpush1.bf16.msra.mxu0 %v1361
    %1804 = vmatprep.subr.bf16.mxu0 %v1366
    %1805 = vmatpush1.bf16.msra.mxu0 %v1365
    %1806 = vmatprep.subr.bf16.mxu0 %v1370
    %1807 = vmatpush1.bf16.msra.mxu0 %v1369
    %1808 = vmatprep.subr.bf16.mxu0 %v1374
    %1809 = vmatpush1.bf16.msra.mxu0 %v1373
    %1810 = vmatprep.subr.bf16.mxu0 %v1378
    %1811 = vmatpush1.bf16.msra.mxu0 %v1377
    %1812 = vmatprep.subr.bf16.mxu0 %v1382
    %1813 = vmatpush1.bf16.msra.mxu0 %v1381
    %1814 = vmatprep.subr.bf16.mxu0 %v1386
    %1815 = vmatpush1.bf16.msra.mxu0 %v1385
    %1816 = vmatprep.subr.bf16.mxu0 %v1390
    %1817 = vmatpush1.bf16.msra.mxu0 %v1389
    %1818 = vmatprep.subr.bf16.mxu0 %v1394
    %1819 = vmatpush1.bf16.msra.mxu0 %v1393
    %1820 = vmatprep.subr.bf16.mxu0 %v1398
    %1821 = vmatpush1.bf16.msra.mxu0 %v1397
    %1822 = vmatprep.subr.bf16.mxu0 %v1402
    %1823 = vmatpush1.bf16.msra.mxu0 %v1401
    %1824 = vmatprep.subr.bf16.mxu0 %v1406
    %1825 = vmatpush1.bf16.msra.mxu0 %v1405
    %1826 = vmatprep.subr.bf16.mxu0 %v1410
    %1827 = vmatpush1.bf16.msra.mxu0 %v1409
    %1828 = vmatprep.subr.bf16.mxu0 %v1414
    %1829 = vmatpush1.bf16.msra.mxu0 %v1413
    %1830 = vmatprep.subr.bf16.mxu0 %v1418
    %1831 = vmatpush1.bf16.msra.mxu0 %v1417
    %1832 = vmatprep.mubr.bf16.mxu0 %v118
    %1833 = vmatmul.mubr.bf16.gmra.mrb[0].mxu0 %v117
    %v1834 = vpop.f32.mrb[0].mxu0
    %v1835 = vadd.f32 %v1794, %v1834
    %v1836 = vpop.f32.mrb[0].mxu0
    %v1837 = vadd.f32 %v1796, %v1836
    %v1838 = vpop.f32.mrb[0].mxu0
    %v1839 = vpop.f32.mrb[0].mxu0
    %1840 = vdwg.mxu0
    %1841 = vmatprep.subr.bf16.mxu0 %v1168
    %1842 = vmatpush1.bf16.msra.mxu0 %v1167
    %1843 = vmatprep.subr.bf16.mxu0 %v1172
    %1844 = vmatpush1.bf16.msra.mxu0 %v1171
    %1845 = vmatprep.subr.bf16.mxu0 %v1176
    %1846 = vmatpush1.bf16.msra.mxu0 %v1175
    %1847 = vmatprep.subr.bf16.mxu0 %v1180
    %1848 = vmatpush1.bf16.msra.mxu0 %v1179
    %1849 = vmatprep.subr.bf16.mxu0 %v1184
    %1850 = vmatpush1.bf16.msra.mxu0 %v1183
    %1851 = vmatprep.subr.bf16.mxu0 %v1188
    %1852 = vmatpush1.bf16.msra.mxu0 %v1187
    %1853 = vmatprep.subr.bf16.mxu0 %v1192
    %1854 = vmatpush1.bf16.msra.mxu0 %v1191
    %1855 = vmatprep.subr.bf16.mxu0 %v1196
    %1856 = vmatpush1.bf16.msra.mxu0 %v1195
    %1857 = vmatprep.subr.bf16.mxu0 %v1200
    %1858 = vmatpush1.bf16.msra.mxu0 %v1199
    %1859 = vmatprep.subr.bf16.mxu0 %v1204
    %1860 = vmatpush1.bf16.msra.mxu0 %v1203
    %1861 = vmatprep.subr.bf16.mxu0 %v1208
    %1862 = vmatpush1.bf16.msra.mxu0 %v1207
    %1863 = vmatprep.subr.bf16.mxu0 %v1212
    %1864 = vmatpush1.bf16.msra.mxu0 %v1211
    %1865 = vmatprep.subr.bf16.mxu0 %v1216
    %1866 = vmatpush1.bf16.msra.mxu0 %v1215
    %1867 = vmatprep.subr.bf16.mxu0 %v1220
    %1868 = vmatpush1.bf16.msra.mxu0 %v1219
    %1869 = vmatprep.subr.bf16.mxu0 %v1224
    %1870 = vmatpush1.bf16.msra.mxu0 %v1223
    %1871 = vmatprep.subr.bf16.mxu0 %v1228
    %1872 = vmatpush1.bf16.msra.mxu0 %v1227
    %1873 = vmatprep.mubr.bf16.mxu0 %v112
    %1874 = vmatmul.mubr.bf16.gmra.mrb[0].mxu0 %v111
    %v1875 = vpop.f32.mrb[0].mxu0
    %v1876 = vadd.f32 %v388, %v1875
    %v1877 = vpop.f32.mrb[0].mxu0
    %v1878 = vadd.f32 %v392, %v1877
    %v1879 = vpop.f32.mrb[0].mxu0
    %v1880 = vpop.f32.mrb[0].mxu0
    %1881 = vdwg.mxu0
    %1882 = vmatprep.subr.bf16.mxu0 %v1232
    %1883 = vmatpush1.bf16.msra.mxu0 %v1231
    %1884 = vmatprep.subr.bf16.mxu0 %v1236
    %1885 = vmatpush1.bf16.msra.mxu0 %v1235
    %1886 = vmatprep.subr.bf16.mxu0 %v1240
    %1887 = vmatpush1.bf16.msra.mxu0 %v1239
    %1888 = vmatprep.subr.bf16.mxu0 %v1244
    %1889 = vmatpush1.bf16.msra.mxu0 %v1243
    %1890 = vmatprep.subr.bf16.mxu0 %v1248
    %1891 = vmatpush1.bf16.msra.mxu0 %v1247
    %1892 = vmatprep.subr.bf16.mxu0 %v1252
    %1893 = vmatpush1.bf16.msra.mxu0 %v1251
    %1894 = vmatprep.subr.bf16.mxu0 %v1256
    %1895 = vmatpush1.bf16.msra.mxu0 %v1255
    %1896 = vmatprep.subr.bf16.mxu0 %v1260
    %1897 = vmatpush1.bf16.msra.mxu0 %v1259
    %1898 = vmatprep.subr.bf16.mxu0 %v1264
    %1899 = vmatpush1.bf16.msra.mxu0 %v1263
    %1900 = vmatprep.subr.bf16.mxu0 %v1268
    %1901 = vmatpush1.bf16.msra.mxu0 %v1267
    %1902 = vmatprep.subr.bf16.mxu0 %v1272
    %1903 = vmatpush1.bf16.msra.mxu0 %v1271
    %1904 = vmatprep.subr.bf16.mxu0 %v1276
    %1905 = vmatpush1.bf16.msra.mxu0 %v1275
    %1906 = vmatprep.subr.bf16.mxu0 %v1280
    %1907 = vmatpush1.bf16.msra.mxu0 %v1279
    %1908 = vmatprep.subr.bf16.mxu0 %v1284
    %1909 = vmatpush1.bf16.msra.mxu0 %v1283
    %1910 = vmatprep.subr.bf16.mxu0 %v1288
    %1911 = vmatpush1.bf16.msra.mxu0 %v1287
    %1912 = vmatprep.subr.bf16.mxu0 %v1292
    %1913 = vmatpush1.bf16.msra.mxu0 %v1291
    %1914 = vmatprep.mubr.bf16.mxu0 %v114
    %1915 = vmatmul.mubr.bf16.gmra.mrb[0].mxu0 %v113
    %v1916 = vpop.f32.mrb[0].mxu0
    %v1917 = vadd.f32 %v1876, %v1916
    %v1918 = vpop.f32.mrb[0].mxu0
    %v1919 = vadd.f32 %v1878, %v1918
    %v1920 = vpop.f32.mrb[0].mxu0
    %v1921 = vpop.f32.mrb[0].mxu0
    %1922 = vdwg.mxu0
    %1923 = vmatprep.subr.bf16.mxu0 %v1296
    %1924 = vmatpush1.bf16.msra.mxu0 %v1295
    %1925 = vmatprep.subr.bf16.mxu0 %v1300
    %1926 = vmatpush1.bf16.msra.mxu0 %v1299
    %1927 = vmatprep.subr.bf16.mxu0 %v1304
    %1928 = vmatpush1.bf16.msra.mxu0 %v1303
    %1929 = vmatprep.subr.bf16.mxu0 %v1308
    %1930 = vmatpush1.bf16.msra.mxu0 %v1307
    %1931 = vmatprep.subr.bf16.mxu0 %v1312
    %1932 = vmatpush1.bf16.msra.mxu0 %v1311
    %1933 = vmatprep.subr.bf16.mxu0 %v1316
    %1934 = vmatpush1.bf16.msra.mxu0 %v1315
    %1935 = vmatprep.subr.bf16.mxu0 %v1320
    %1936 = vmatpush1.bf16.msra.mxu0 %v1319
    %1937 = vmatprep.subr.bf16.mxu0 %v1324
    %1938 = vmatpush1.bf16.msra.mxu0 %v1323
    %1939 = vmatprep.subr.bf16.mxu0 %v1328
    %1940 = vmatpush1.bf16.msra.mxu0 %v1327
    %1941 = vmatprep.subr.bf16.mxu0 %v1332
    %1942 = vmatpush1.bf16.msra.mxu0 %v1331
    %1943 = vmatprep.subr.bf16.mxu0 %v1336
    %1944 = vmatpush1.bf16.msra.mxu0 %v1335
    %1945 = vmatprep.subr.bf16.mxu0 %v1340
    %1946 = vmatpush1.bf16.msra.mxu0 %v1339
    %1947 = vmatprep.subr.bf16.mxu0 %v1344
    %1948 = vmatpush1.bf16.msra.mxu0 %v1343
    %1949 = vmatprep.subr.bf16.mxu0 %v1348
    %1950 = vmatpush1.bf16.msra.mxu0 %v1347
    %1951 = vmatprep.subr.bf16.mxu0 %v1352
    %1952 = vmatpush1.bf16.msra.mxu0 %v1351
    %1953 = vmatprep.subr.bf16.mxu0 %v1356
    %1954 = vmatpush1.bf16.msra.mxu0 %v1355
    %1955 = vmatprep.mubr.bf16.mxu0 %v116
    %1956 = vmatmul.mubr.bf16.gmra.mrb[0].mxu0 %v115
    %v1957 = vpop.f32.mrb[0].mxu0
    %v1958 = vadd.f32 %v1917, %v1957
    %v1959 = vpop.f32.mrb[0].mxu0
    %v1960 = vadd.f32 %v1919, %v1959
    %v1961 = vpop.f32.mrb[0].mxu0
    %v1962 = vpop.f32.mrb[0].mxu0
    %1963 = vdwg.mxu0
    %1964 = vmatprep.subr.bf16.mxu0 %v1360
    %1965 = vmatpush1.bf16.msra.mxu0 %v1359
    %1966 = vmatprep.subr.bf16.mxu0 %v1364
    %1967 = vmatpush1.bf16.msra.mxu0 %v1363
    %1968 = vmatprep.subr.bf16.mxu0 %v1368
    %1969 = vmatpush1.bf16.msra.mxu0 %v1367
    %1970 = vmatprep.subr.bf16.mxu0 %v1372
    %1971 = vmatpush1.bf16.msra.mxu0 %v1371
    %1972 = vmatprep.subr.bf16.mxu0 %v1376
    %1973 = vmatpush1.bf16.msra.mxu0 %v1375
    %1974 = vmatprep.subr.bf16.mxu0 %v1380
    %1975 = vmatpush1.bf16.msra.mxu0 %v1379
    %1976 = vmatprep.subr.bf16.mxu0 %v1384
    %1977 = vmatpush1.bf16.msra.mxu0 %v1383
    %1978 = vmatprep.subr.bf16.mxu0 %v1388
    %1979 = vmatpush1.bf16.msra.mxu0 %v1387
    %1980 = vmatprep.subr.bf16.mxu0 %v1392
    %1981 = vmatpush1.bf16.msra.mxu0 %v1391
    %1982 = vmatprep.subr.bf16.mxu0 %v1396
    %1983 = vmatpush1.bf16.msra.mxu0 %v1395
    %1984 = vmatprep.subr.bf16.mxu0 %v1400
    %1985 = vmatpush1.bf16.msra.mxu0 %v1399
    %1986 = vmatprep.subr.bf16.mxu0 %v1404
    %1987 = vmatpush1.bf16.msra.mxu0 %v1403
    %1988 = vmatprep.subr.bf16.mxu0 %v1408
    %1989 = vmatpush1.bf16.msra.mxu0 %v1407
    %1990 = vmatprep.subr.bf16.mxu0 %v1412
    %1991 = vmatpush1.bf16.msra.mxu0 %v1411
    %1992 = vmatprep.subr.bf16.mxu0 %v1416
    %1993 = vmatpush1.bf16.msra.mxu0 %v1415
    %1994 = vmatprep.subr.bf16.mxu0 %v1420
    %1995 = vmatpush1.bf16.msra.mxu0 %v1419
    %1996 = vmatprep.mubr.bf16.mxu0 %v118
    %1997 = vmatmul.mubr.bf16.gmra.mrb[0].mxu0 %v117
    %v1998 = vpop.f32.mrb[0].mxu0
    %v1999 = vadd.f32 %v1958, %v1998
    %v2000 = vpop.f32.mrb[0].mxu0
    %v2001 = vadd.f32 %v1960, %v2000
    %v2002 = vpop.f32.mrb[0].mxu0
    %v2003 = vpop.f32.mrb[0].mxu0
    %2004 = vdwg.mxu0
    %v2005 = vxor.u32 %v1835, 2147483648
    %v2006 = vxor.u32 %v1837, 2147483648
    %v2007 = vxor.u32 %v1999, 2147483648
    %v2008 = vxor.u32 %v2001, 2147483648
    %v2009 = vmul.f32 %v2005, 1.442695
    %v2010 = vpow.pop %v2009
    %v2011 = vmul.f32 %v2006, 1.442695
    %v2012 = vpow.pop %v2011
    %v2013 = vmul.f32 %v2007, 1.442695
    %v2014 = vpow.pop %v2013
    %v2015 = vmul.f32 %v2008, 1.442695
    %v2016 = vpow.pop %v2015
    %v2017 = vadd.f32 %v2010, 1.0
    %v2018 = vadd.f32 %v2012, 1.0
    %v2019 = vadd.f32 %v2014, 1.0
    %v2020 = vadd.f32 %v2016, 1.0
    %v2021 = vrcp.pop %v2017
    %v2022 = vmul.f32 1.0, %v2021
    %v2023 = vrcp.pop %v2018
    %v2024 = vmul.f32 1.0, %v2023
    %v2025 = vrcp.pop %v2019
    %v2026 = vmul.f32 1.0, %v2025
    %v2027 = vrcp.pop %v2020
    %v2028 = vmul.f32 1.0, %v2027
    %v2029 = vpack.c.bf16 %v2022, %v2022
    %v2030 = vpack.c.bf16 %v2024, %v2024
    %v2031 = vpack.c.bf16 %v2026, %v2026
    %v2032 = vpack.c.bf16 %v2028, %v2028
    %v2033 = vld [vmem:[#allocation8] sm:$0xff]
    %v2034 = vld [vmem:[#allocation8 + $0x8] sm:$0xff]
    %v2035 = vld [vmem:[#allocation8 + $0x10] sm:$0xff]
    %v2036 = vld [vmem:[#allocation8 + $0x18] sm:$0xff]
    %v2037 = vld [vmem:[#allocation8 + $0x20] sm:$0xff]
    %v2038 = vld [vmem:[#allocation8 + $0x28] sm:$0xff]
    %v2039 = vld [vmem:[#allocation8 + $0x30] sm:$0xff]
    %v2040 = vld [vmem:[#allocation8 + $0x38] sm:$0xff]
    %v2041 = vld [vmem:[#allocation8 + $0x40] sm:$0xff]
    %v2042 = vld [vmem:[#allocation8 + $0x48] sm:$0xff]
    %v2043 = vld [vmem:[#allocation8 + $0x50] sm:$0xff]
    %v2044 = vld [vmem:[#allocation8 + $0x58] sm:$0xff]
    %v2045 = vld [vmem:[#allocation8 + $0x60] sm:$0xff]
    %v2046 = vld [vmem:[#allocation8 + $0x68] sm:$0xff]
    %v2047 = vld [vmem:[#allocation8 + $0x70] sm:$0xff]
    %v2048 = vld [vmem:[#allocation8 + $0x78] sm:$0xff]
    %v2049 = vld [vmem:[#allocation8 + $0x80] sm:$0xff]
    %v2050 = vld [vmem:[#allocation8 + $0x88] sm:$0xff]
    %v2051 = vld [vmem:[#allocation8 + $0x90] sm:$0xff]
    %v2052 = vld [vmem:[#allocation8 + $0x98] sm:$0xff]
    %v2053 = vld [vmem:[#allocation8 + $0xa0] sm:$0xff]
    %v2054 = vld [vmem:[#allocation8 + $0xa8] sm:$0xff]
    %v2055 = vld [vmem:[#allocation8 + $0xb0] sm:$0xff]
    %v2056 = vld [vmem:[#allocation8 + $0xb8] sm:$0xff]
    %v2057 = vld [vmem:[#allocation8 + $0xc0] sm:$0xff]
    %v2058 = vld [vmem:[#allocation8 + $0xc8] sm:$0xff]
    %v2059 = vld [vmem:[#allocation8 + $0xd0] sm:$0xff]
    %v2060 = vld [vmem:[#allocation8 + $0xd8] sm:$0xff]
    %v2061 = vld [vmem:[#allocation8 + $0xe0] sm:$0xff]
    %v2062 = vld [vmem:[#allocation8 + $0xe8] sm:$0xff]
    %v2063 = vld [vmem:[#allocation8 + $0xf0] sm:$0xff]
    %v2064 = vld [vmem:[#allocation8 + $0xf8] sm:$0xff]
    %v2065 = vld [vmem:[#allocation8 + $0x100] sm:$0xff]
    %v2066 = vld [vmem:[#allocation8 + $0x108] sm:$0xff]
    %v2067 = vld [vmem:[#allocation8 + $0x110] sm:$0xff]
    %v2068 = vld [vmem:[#allocation8 + $0x118] sm:$0xff]
    %v2069 = vld [vmem:[#allocation8 + $0x120] sm:$0xff]
    %v2070 = vld [vmem:[#allocation8 + $0x128] sm:$0xff]
    %v2071 = vld [vmem:[#allocation8 + $0x130] sm:$0xff]
    %v2072 = vld [vmem:[#allocation8 + $0x138] sm:$0xff]
    %v2073 = vld [vmem:[#allocation8 + $0x140] sm:$0xff]
    %v2074 = vld [vmem:[#allocation8 + $0x148] sm:$0xff]
    %v2075 = vld [vmem:[#allocation8 + $0x150] sm:$0xff]
    %v2076 = vld [vmem:[#allocation8 + $0x158] sm:$0xff]
    %v2077 = vld [vmem:[#allocation8 + $0x160] sm:$0xff]
    %v2078 = vld [vmem:[#allocation8 + $0x168] sm:$0xff]
    %v2079 = vld [vmem:[#allocation8 + $0x170] sm:$0xff]
    %v2080 = vld [vmem:[#allocation8 + $0x178] sm:$0xff]
    %v2081 = vld [vmem:[#allocation8 + $0x180] sm:$0xff]
    %v2082 = vld [vmem:[#allocation8 + $0x188] sm:$0xff]
    %v2083 = vld [vmem:[#allocation8 + $0x190] sm:$0xff]
    %v2084 = vld [vmem:[#allocation8 + $0x198] sm:$0xff]
    %v2085 = vld [vmem:[#allocation8 + $0x1a0] sm:$0xff]
    %v2086 = vld [vmem:[#allocation8 + $0x1a8] sm:$0xff]
    %v2087 = vld [vmem:[#allocation8 + $0x1b0] sm:$0xff]
    %v2088 = vld [vmem:[#allocation8 + $0x1b8] sm:$0xff]
    %v2089 = vld [vmem:[#allocation8 + $0x1c0] sm:$0xff]
    %v2090 = vld [vmem:[#allocation8 + $0x1c8] sm:$0xff]
    %v2091 = vld [vmem:[#allocation8 + $0x1d0] sm:$0xff]
    %v2092 = vld [vmem:[#allocation8 + $0x1d8] sm:$0xff]
    %v2093 = vld [vmem:[#allocation8 + $0x1e0] sm:$0xff]
    %v2094 = vld [vmem:[#allocation8 + $0x1e8] sm:$0xff]
    %v2095 = vld [vmem:[#allocation8 + $0x1f0] sm:$0xff]
    %v2096 = vld [vmem:[#allocation8 + $0x1f8] sm:$0xff]
    %v2097 = vld [vmem:[%s5] sm:$0x3]
    %v2099 = vlaneseq
    %v2100 = vshrl.u32 %v2099, 7
    %v2101 = vsub.s32 0, %v2100
    %v2102 = vrot.slane %v2097, %v2101
    %v2103 = vlaneseq
    %v2104 = vshrl.u32 %v2103, 7
    %v2105 = vsub.s32 1, %v2104
    %v2106 = vrot.slane %v2097, %v2105
    %v2173 = vunpack.c.l.b16 %v2033
    %v2174 = vunpack.c.h.b16 %v2033
    %v2175 = vunpack.c.l.b16 %v2034
    %v2176 = vunpack.c.h.b16 %v2034
    %v2177 = vunpack.c.l.b16 %v2035
    %v2178 = vunpack.c.h.b16 %v2035
    %v2179 = vunpack.c.l.b16 %v2036
    %v2180 = vunpack.c.h.b16 %v2036
    %v2181 = vunpack.c.l.b16 %v2037
    %v2182 = vunpack.c.h.b16 %v2037
    %v2183 = vunpack.c.l.b16 %v2038
    %v2184 = vunpack.c.h.b16 %v2038
    %v2185 = vunpack.c.l.b16 %v2039
    %v2186 = vunpack.c.h.b16 %v2039
    %v2187 = vunpack.c.l.b16 %v2040
    %v2188 = vunpack.c.h.b16 %v2040
    %v2189 = vunpack.c.l.b16 %v2041
    %v2190 = vunpack.c.h.b16 %v2041
    %v2191 = vunpack.c.l.b16 %v2042
    %v2192 = vunpack.c.h.b16 %v2042
    %v2193 = vunpack.c.l.b16 %v2043
    %v2194 = vunpack.c.h.b16 %v2043
    %v2195 = vunpack.c.l.b16 %v2044
    %v2196 = vunpack.c.h.b16 %v2044
    %v2197 = vunpack.c.l.b16 %v2045
    %v2198 = vunpack.c.h.b16 %v2045
    %v2199 = vunpack.c.l.b16 %v2046
    %v2200 = vunpack.c.h.b16 %v2046
    %v2201 = vunpack.c.l.b16 %v2047
    %v2202 = vunpack.c.h.b16 %v2047
    %v2203 = vunpack.c.l.b16 %v2048
    %v2204 = vunpack.c.h.b16 %v2048
    %v2205 = vunpack.c.l.b16 %v2049
    %v2206 = vunpack.c.h.b16 %v2049
    %v2207 = vunpack.c.l.b16 %v2050
    %v2208 = vunpack.c.h.b16 %v2050
    %v2209 = vunpack.c.l.b16 %v2051
    %v2210 = vunpack.c.h.b16 %v2051
    %v2211 = vunpack.c.l.b16 %v2052
    %v2212 = vunpack.c.h.b16 %v2052
    %v2213 = vunpack.c.l.b16 %v2053
    %v2214 = vunpack.c.h.b16 %v2053
    %v2215 = vunpack.c.l.b16 %v2054
    %v2216 = vunpack.c.h.b16 %v2054
    %v2217 = vunpack.c.l.b16 %v2055
    %v2218 = vunpack.c.h.b16 %v2055
    %v2219 = vunpack.c.l.b16 %v2056
    %v2220 = vunpack.c.h.b16 %v2056
    %v2221 = vunpack.c.l.b16 %v2057
    %v2222 = vunpack.c.h.b16 %v2057
    %v2223 = vunpack.c.l.b16 %v2058
    %v2224 = vunpack.c.h.b16 %v2058
    %v2225 = vunpack.c.l.b16 %v2059
    %v2226 = vunpack.c.h.b16 %v2059
    %v2227 = vunpack.c.l.b16 %v2060
    %v2228 = vunpack.c.h.b16 %v2060
    %v2229 = vunpack.c.l.b16 %v2061
    %v2230 = vunpack.c.h.b16 %v2061
    %v2231 = vunpack.c.l.b16 %v2062
    %v2232 = vunpack.c.h.b16 %v2062
    %v2233 = vunpack.c.l.b16 %v2063
    %v2234 = vunpack.c.h.b16 %v2063
    %v2235 = vunpack.c.l.b16 %v2064
    %v2236 = vunpack.c.h.b16 %v2064
    %v2237 = vunpack.c.l.b16 %v2065
    %v2238 = vunpack.c.h.b16 %v2065
    %v2239 = vunpack.c.l.b16 %v2066
    %v2240 = vunpack.c.h.b16 %v2066
    %v2241 = vunpack.c.l.b16 %v2067
    %v2242 = vunpack.c.h.b16 %v2067
    %v2243 = vunpack.c.l.b16 %v2068
    %v2244 = vunpack.c.h.b16 %v2068
    %v2245 = vunpack.c.l.b16 %v2069
    %v2246 = vunpack.c.h.b16 %v2069
    %v2247 = vunpack.c.l.b16 %v2070
    %v2248 = vunpack.c.h.b16 %v2070
    %v2249 = vunpack.c.l.b16 %v2071
    %v2250 = vunpack.c.h.b16 %v2071
    %v2251 = vunpack.c.l.b16 %v2072
    %v2252 = vunpack.c.h.b16 %v2072
    %v2253 = vunpack.c.l.b16 %v2073
    %v2254 = vunpack.c.h.b16 %v2073
    %v2255 = vunpack.c.l.b16 %v2074
    %v2256 = vunpack.c.h.b16 %v2074
    %v2257 = vunpack.c.l.b16 %v2075
    %v2258 = vunpack.c.h.b16 %v2075
    %v2259 = vunpack.c.l.b16 %v2076
    %v2260 = vunpack.c.h.b16 %v2076
    %v2261 = vunpack.c.l.b16 %v2077
    %v2262 = vunpack.c.h.b16 %v2077
    %v2263 = vunpack.c.l.b16 %v2078
    %v2264 = vunpack.c.h.b16 %v2078
    %v2265 = vunpack.c.l.b16 %v2079
    %v2266 = vunpack.c.h.b16 %v2079
    %v2267 = vunpack.c.l.b16 %v2080
    %v2268 = vunpack.c.h.b16 %v2080
    %v2269 = vunpack.c.l.b16 %v2081
    %v2270 = vunpack.c.h.b16 %v2081
    %v2271 = vunpack.c.l.b16 %v2082
    %v2272 = vunpack.c.h.b16 %v2082
    %v2273 = vunpack.c.l.b16 %v2083
    %v2274 = vunpack.c.h.b16 %v2083
    %v2275 = vunpack.c.l.b16 %v2084
    %v2276 = vunpack.c.h.b16 %v2084
    %v2277 = vunpack.c.l.b16 %v2085
    %v2278 = vunpack.c.h.b16 %v2085
    %v2279 = vunpack.c.l.b16 %v2086
    %v2280 = vunpack.c.h.b16 %v2086
    %v2281 = vunpack.c.l.b16 %v2087
    %v2282 = vunpack.c.h.b16 %v2087
    %v2283 = vunpack.c.l.b16 %v2088
    %v2284 = vunpack.c.h.b16 %v2088
    %v2285 = vunpack.c.l.b16 %v2089
    %v2286 = vunpack.c.h.b16 %v2089
    %v2287 = vunpack.c.l.b16 %v2090
    %v2288 = vunpack.c.h.b16 %v2090
    %v2289 = vunpack.c.l.b16 %v2091
    %v2290 = vunpack.c.h.b16 %v2091
    %v2291 = vunpack.c.l.b16 %v2092
    %v2292 = vunpack.c.h.b16 %v2092
    %v2293 = vunpack.c.l.b16 %v2093
    %v2294 = vunpack.c.h.b16 %v2093
    %v2295 = vunpack.c.l.b16 %v2094
    %v2296 = vunpack.c.h.b16 %v2094
    %v2297 = vunpack.c.l.b16 %v2095
    %v2298 = vunpack.c.h.b16 %v2095
    %v2299 = vunpack.c.l.b16 %v2096
    %v2300 = vunpack.c.h.b16 %v2096
    %v2301 = vpack.c.b16 %v2175, %v2173
    %v2302 = vpack.c.b16 %v2176, %v2174
    %v2303 = vpack.c.b16 %v2179, %v2177
    %v2304 = vpack.c.b16 %v2180, %v2178
    %v2305 = vpack.c.b16 %v2183, %v2181
    %v2306 = vpack.c.b16 %v2184, %v2182
    %v2307 = vpack.c.b16 %v2187, %v2185
    %v2308 = vpack.c.b16 %v2188, %v2186
    %v2309 = vpack.c.b16 %v2191, %v2189
    %v2310 = vpack.c.b16 %v2192, %v2190
    %v2311 = vpack.c.b16 %v2195, %v2193
    %v2312 = vpack.c.b16 %v2196, %v2194
    %v2313 = vpack.c.b16 %v2199, %v2197
    %v2314 = vpack.c.b16 %v2200, %v2198
    %v2315 = vpack.c.b16 %v2203, %v2201
    %v2316 = vpack.c.b16 %v2204, %v2202
    %v2317 = vpack.c.b16 %v2207, %v2205
    %v2318 = vpack.c.b16 %v2208, %v2206
    %v2319 = vpack.c.b16 %v2211, %v2209
    %v2320 = vpack.c.b16 %v2212, %v2210
    %v2321 = vpack.c.b16 %v2215, %v2213
    %v2322 = vpack.c.b16 %v2216, %v2214
    %v2323 = vpack.c.b16 %v2219, %v2217
    %v2324 = vpack.c.b16 %v2220, %v2218
    %v2325 = vpack.c.b16 %v2223, %v2221
    %v2326 = vpack.c.b16 %v2224, %v2222
    %v2327 = vpack.c.b16 %v2227, %v2225
    %v2328 = vpack.c.b16 %v2228, %v2226
    %v2329 = vpack.c.b16 %v2231, %v2229
    %v2330 = vpack.c.b16 %v2232, %v2230
    %v2331 = vpack.c.b16 %v2235, %v2233
    %v2332 = vpack.c.b16 %v2236, %v2234
    %v2333 = vpack.c.b16 %v2239, %v2237
    %v2334 = vpack.c.b16 %v2240, %v2238
    %v2335 = vpack.c.b16 %v2243, %v2241
    %v2336 = vpack.c.b16 %v2244, %v2242
    %v2337 = vpack.c.b16 %v2247, %v2245
    %v2338 = vpack.c.b16 %v2248, %v2246
    %v2339 = vpack.c.b16 %v2251, %v2249
    %v2340 = vpack.c.b16 %v2252, %v2250
    %v2341 = vpack.c.b16 %v2255, %v2253
    %v2342 = vpack.c.b16 %v2256, %v2254
    %v2343 = vpack.c.b16 %v2259, %v2257
    %v2344 = vpack.c.b16 %v2260, %v2258
    %v2345 = vpack.c.b16 %v2263, %v2261
    %v2346 = vpack.c.b16 %v2264, %v2262
    %v2347 = vpack.c.b16 %v2267, %v2265
    %v2348 = vpack.c.b16 %v2268, %v2266
    %v2349 = vpack.c.b16 %v2271, %v2269
    %v2350 = vpack.c.b16 %v2272, %v2270
    %v2351 = vpack.c.b16 %v2275, %v2273
    %v2352 = vpack.c.b16 %v2276, %v2274
    %v2353 = vpack.c.b16 %v2279, %v2277
    %v2354 = vpack.c.b16 %v2280, %v2278
    %v2355 = vpack.c.b16 %v2283, %v2281
    %v2356 = vpack.c.b16 %v2284, %v2282
    %v2357 = vpack.c.b16 %v2287, %v2285
    %v2358 = vpack.c.b16 %v2288, %v2286
    %v2359 = vpack.c.b16 %v2291, %v2289
    %v2360 = vpack.c.b16 %v2292, %v2290
    %v2361 = vpack.c.b16 %v2295, %v2293
    %v2362 = vpack.c.b16 %v2296, %v2294
    %v2363 = vpack.c.b16 %v2299, %v2297
    %v2364 = vpack.c.b16 %v2300, %v2298
    %2429 = vmatprep.subr.bf16.mxu0 %v2302
    %2430 = vmatpush1.bf16.msra.mxu0 %v2301
    %2431 = vmatprep.subr.bf16.mxu0 %v2304
    %2432 = vmatpush1.bf16.msra.mxu0 %v2303
    %2433 = vmatprep.subr.bf16.mxu0 %v2306
    %2434 = vmatpush1.bf16.msra.mxu0 %v2305
    %2435 = vmatprep.subr.bf16.mxu0 %v2308
    %2436 = vmatpush1.bf16.msra.mxu0 %v2307
    %2437 = vmatprep.subr.bf16.mxu0 %v2310
    %2438 = vmatpush1.bf16.msra.mxu0 %v2309
    %2439 = vmatprep.subr.bf16.mxu0 %v2312
    %2440 = vmatpush1.bf16.msra.mxu0 %v2311
    %2441 = vmatprep.subr.bf16.mxu0 %v2314
    %2442 = vmatpush1.bf16.msra.mxu0 %v2313
    %2443 = vmatprep.subr.bf16.mxu0 %v2316
    %2444 = vmatpush1.bf16.msra.mxu0 %v2315
    %2445 = vmatprep.subr.bf16.mxu0 %v2318
    %2446 = vmatpush1.bf16.msra.mxu0 %v2317
    %2447 = vmatprep.subr.bf16.mxu0 %v2320
    %2448 = vmatpush1.bf16.msra.mxu0 %v2319
    %2449 = vmatprep.subr.bf16.mxu0 %v2322
    %2450 = vmatpush1.bf16.msra.mxu0 %v2321
    %2451 = vmatprep.subr.bf16.mxu0 %v2324
    %2452 = vmatpush1.bf16.msra.mxu0 %v2323
    %2453 = vmatprep.subr.bf16.mxu0 %v2326
    %2454 = vmatpush1.bf16.msra.mxu0 %v2325
    %2455 = vmatprep.subr.bf16.mxu0 %v2328
    %2456 = vmatpush1.bf16.msra.mxu0 %v2327
    %2457 = vmatprep.subr.bf16.mxu0 %v2330
    %2458 = vmatpush1.bf16.msra.mxu0 %v2329
    %2459 = vmatprep.subr.bf16.mxu0 %v2332
    %2460 = vmatpush1.bf16.msra.mxu0 %v2331
    %2461 = vmatprep.mubr.bf16.mxu0 %v2030
    %2462 = vmatmul.mubr.bf16.gmra.mrb[0].mxu0 %v2029
    %v2463 = vpop.f32.mrb[0].mxu0
    %v2464 = vadd.f32 %v2102, %v2463
    %v2465 = vpop.f32.mrb[0].mxu0
    %v2466 = vadd.f32 %v2106, %v2465
    %v2467 = vpop.f32.mrb[0].mxu0
    %v2468 = vpop.f32.mrb[0].mxu0
    %2469 = vdwg.mxu0
    %2470 = vmatprep.subr.bf16.mxu0 %v2334
    %2471 = vmatpush1.bf16.msra.mxu0 %v2333
    %2472 = vmatprep.subr.bf16.mxu0 %v2336
    %2473 = vmatpush1.bf16.msra.mxu0 %v2335
    %2474 = vmatprep.subr.bf16.mxu0 %v2338
    %2475 = vmatpush1.bf16.msra.mxu0 %v2337
    %2476 = vmatprep.subr.bf16.mxu0 %v2340
    %2477 = vmatpush1.bf16.msra.mxu0 %v2339
    %2478 = vmatprep.subr.bf16.mxu0 %v2342
    %2479 = vmatpush1.bf16.msra.mxu0 %v2341
    %2480 = vmatprep.subr.bf16.mxu0 %v2344
    %2481 = vmatpush1.bf16.msra.mxu0 %v2343
    %2482 = vmatprep.subr.bf16.mxu0 %v2346
    %2483 = vmatpush1.bf16.msra.mxu0 %v2345
    %2484 = vmatprep.subr.bf16.mxu0 %v2348
    %2485 = vmatpush1.bf16.msra.mxu0 %v2347
    %2486 = vmatprep.subr.bf16.mxu0 %v2350
    %2487 = vmatpush1.bf16.msra.mxu0 %v2349
    %2488 = vmatprep.subr.bf16.mxu0 %v2352
    %2489 = vmatpush1.bf16.msra.mxu0 %v2351
    %2490 = vmatprep.subr.bf16.mxu0 %v2354
    %2491 = vmatpush1.bf16.msra.mxu0 %v2353
    %2492 = vmatprep.subr.bf16.mxu0 %v2356
    %2493 = vmatpush1.bf16.msra.mxu0 %v2355
    %2494 = vmatprep.subr.bf16.mxu0 %v2358
    %2495 = vmatpush1.bf16.msra.mxu0 %v2357
    %2496 = vmatprep.subr.bf16.mxu0 %v2360
    %2497 = vmatpush1.bf16.msra.mxu0 %v2359
    %2498 = vmatprep.subr.bf16.mxu0 %v2362
    %2499 = vmatpush1.bf16.msra.mxu0 %v2361
    %2500 = vmatprep.subr.bf16.mxu0 %v2364
    %2501 = vmatpush1.bf16.msra.mxu0 %v2363
    %2502 = vmatprep.mubr.bf16.mxu0 %v2032
    %2503 = vmatmul.mubr.bf16.gmra.mrb[0].mxu0 %v2031
    %v2504 = vpop.f32.mrb[0].mxu0
    %v2505 = vadd.f32 %v2464, %v2504
    %v2506 = vpop.f32.mrb[0].mxu0
    %v2507 = vadd.f32 %v2466, %v2506
    %v2508 = vpop.f32.mrb[0].mxu0
    %v2509 = vpop.f32.mrb[0].mxu0
    %2510 = vdwg.mxu0
    %v2511 = vxor.u32 %v2505, 2147483648
    %v2512 = vxor.u32 %v2507, 2147483648
    %v2513 = vmul.f32 %v2511, 1.442695
    %v2514 = vpow.pop %v2513
    %v2515 = vmul.f32 %v2512, 1.442695
    %v2516 = vpow.pop %v2515
    %v2517 = vadd.f32 %v2514, 1.0
    %v2518 = vadd.f32 %v2516, 1.0
    %v2519 = vrcp.pop %v2517
    %v2520 = vmul.f32 1.0, %v2519
    %v2521 = vrcp.pop %v2518
    %v2522 = vmul.f32 1.0, %v2521
    %s2523 = sld [smem:[#allocation2]]
    %v2524 = vstv %s2523
    %v2525 = vadd.f32 %v2520, %v2524
    %v2526 = vadd.f32 %v2522, %v2524
    %v2527 = vpack.c.bf16 %v2525, %v2525
    %v2528 = vpack.c.bf16 %v2526, %v2526
    %v2529 = vld [vmem:[#allocation9] sm:$0xff]
    %v2530 = vld [vmem:[#allocation9 + $0x8] sm:$0xff]
    %v2531 = vld [vmem:[#allocation9 + $0x10] sm:$0xff]
    %v2532 = vld [vmem:[#allocation9 + $0x18] sm:$0xff]
    %v2533 = vld [vmem:[#allocation9 + $0x20] sm:$0xff]
    %v2534 = vld [vmem:[#allocation9 + $0x28] sm:$0xff]
    %v2535 = vld [vmem:[#allocation9 + $0x30] sm:$0xff]
    %v2536 = vld [vmem:[#allocation9 + $0x38] sm:$0xff]
    %v2537 = vld [vmem:[#allocation9 + $0x40] sm:$0xff]
    %v2538 = vld [vmem:[#allocation9 + $0x48] sm:$0xff]
    %v2539 = vld [vmem:[#allocation9 + $0x50] sm:$0xff]
    %v2540 = vld [vmem:[#allocation9 + $0x58] sm:$0xff]
    %v2541 = vld [vmem:[#allocation9 + $0x60] sm:$0xff]
    %v2542 = vld [vmem:[#allocation9 + $0x68] sm:$0xff]
    %v2543 = vld [vmem:[#allocation9 + $0x70] sm:$0xff]
    %v2544 = vld [vmem:[#allocation9 + $0x78] sm:$0xff]
    %v2545 = vld [vmem:[#allocation9 + $0x80] sm:$0xff]
    %v2546 = vld [vmem:[#allocation9 + $0x88] sm:$0xff]
    %v2547 = vld [vmem:[#allocation9 + $0x90] sm:$0xff]
    %v2548 = vld [vmem:[#allocation9 + $0x98] sm:$0xff]
    %v2549 = vld [vmem:[#allocation9 + $0xa0] sm:$0xff]
    %v2550 = vld [vmem:[#allocation9 + $0xa8] sm:$0xff]
    %v2551 = vld [vmem:[#allocation9 + $0xb0] sm:$0xff]
    %v2552 = vld [vmem:[#allocation9 + $0xb8] sm:$0xff]
    %v2553 = vld [vmem:[#allocation9 + $0xc0] sm:$0xff]
    %v2554 = vld [vmem:[#allocation9 + $0xc8] sm:$0xff]
    %v2555 = vld [vmem:[#allocation9 + $0xd0] sm:$0xff]
    %v2556 = vld [vmem:[#allocation9 + $0xd8] sm:$0xff]
    %v2557 = vld [vmem:[#allocation9 + $0xe0] sm:$0xff]
    %v2558 = vld [vmem:[#allocation9 + $0xe8] sm:$0xff]
    %v2559 = vld [vmem:[#allocation9 + $0xf0] sm:$0xff]
    %v2560 = vld [vmem:[#allocation9 + $0xf8] sm:$0xff]
    %v2561 = vld [vmem:[#allocation9 + $0x100] sm:$0xff]
    %v2562 = vld [vmem:[#allocation9 + $0x108] sm:$0xff]
    %v2563 = vld [vmem:[#allocation9 + $0x110] sm:$0xff]
    %v2564 = vld [vmem:[#allocation9 + $0x118] sm:$0xff]
    %v2565 = vld [vmem:[#allocation9 + $0x120] sm:$0xff]
    %v2566 = vld [vmem:[#allocation9 + $0x128] sm:$0xff]
    %v2567 = vld [vmem:[#allocation9 + $0x130] sm:$0xff]
    %v2568 = vld [vmem:[#allocation9 + $0x138] sm:$0xff]
    %v2569 = vld [vmem:[#allocation9 + $0x140] sm:$0xff]
    %v2570 = vld [vmem:[#allocation9 + $0x148] sm:$0xff]
    %v2571 = vld [vmem:[#allocation9 + $0x150] sm:$0xff]
    %v2572 = vld [vmem:[#allocation9 + $0x158] sm:$0xff]
    %v2573 = vld [vmem:[#allocation9 + $0x160] sm:$0xff]
    %v2574 = vld [vmem:[#allocation9 + $0x168] sm:$0xff]
    %v2575 = vld [vmem:[#allocation9 + $0x170] sm:$0xff]
    %v2576 = vld [vmem:[#allocation9 + $0x178] sm:$0xff]
    %v2577 = vld [vmem:[#allocation9 + $0x180] sm:$0xff]
    %v2578 = vld [vmem:[#allocation9 + $0x188] sm:$0xff]
    %v2579 = vld [vmem:[#allocation9 + $0x190] sm:$0xff]
    %v2580 = vld [vmem:[#allocation9 + $0x198] sm:$0xff]
    %v2581 = vld [vmem:[#allocation9 + $0x1a0] sm:$0xff]
    %v2582 = vld [vmem:[#allocation9 + $0x1a8] sm:$0xff]
    %v2583 = vld [vmem:[#allocation9 + $0x1b0] sm:$0xff]
    %v2584 = vld [vmem:[#allocation9 + $0x1b8] sm:$0xff]
    %v2585 = vld [vmem:[#allocation9 + $0x1c0] sm:$0xff]
    %v2586 = vld [vmem:[#allocation9 + $0x1c8] sm:$0xff]
    %v2587 = vld [vmem:[#allocation9 + $0x1d0] sm:$0xff]
    %v2588 = vld [vmem:[#allocation9 + $0x1d8] sm:$0xff]
    %v2589 = vld [vmem:[#allocation9 + $0x1e0] sm:$0xff]
    %v2590 = vld [vmem:[#allocation9 + $0x1e8] sm:$0xff]
    %v2591 = vld [vmem:[#allocation9 + $0x1f0] sm:$0xff]
    %v2592 = vld [vmem:[#allocation9 + $0x1f8] sm:$0xff]
    %v2593 = vld [vmem:[%s7] sm:$0xf]
    %v2595 = vlaneseq
    %v2596 = vshrl.u32 %v2595, 7
    %v2597 = vsub.s32 0, %v2596
    %v2598 = vrot.slane %v2593, %v2597
    %v2599 = vlaneseq
    %v2600 = vshrl.u32 %v2599, 7
    %v2601 = vsub.s32 1, %v2600
    %v2602 = vrot.slane %v2593, %v2601
    %v2603 = vlaneseq
    %v2604 = vshrl.u32 %v2603, 7
    %v2605 = vsub.s32 2, %v2604
    %v2606 = vrot.slane %v2593, %v2605
    %v2607 = vlaneseq
    %v2608 = vshrl.u32 %v2607, 7
    %v2609 = vsub.s32 3, %v2608
    %v2610 = vrot.slane %v2593, %v2609
    %v2679 = vunpack.c.l.b16 %v2529
    %v2680 = vunpack.c.h.b16 %v2529
    %v2681 = vunpack.c.l.b16 %v2530
    %v2682 = vunpack.c.h.b16 %v2530
    %v2683 = vunpack.c.l.b16 %v2531
    %v2684 = vunpack.c.h.b16 %v2531
    %v2685 = vunpack.c.l.b16 %v2532
    %v2686 = vunpack.c.h.b16 %v2532
    %v2687 = vunpack.c.l.b16 %v2533
    %v2688 = vunpack.c.h.b16 %v2533
    %v2689 = vunpack.c.l.b16 %v2534
    %v2690 = vunpack.c.h.b16 %v2534
    %v2691 = vunpack.c.l.b16 %v2535
    %v2692 = vunpack.c.h.b16 %v2535
    %v2693 = vunpack.c.l.b16 %v2536
    %v2694 = vunpack.c.h.b16 %v2536
    %v2695 = vunpack.c.l.b16 %v2537
    %v2696 = vunpack.c.h.b16 %v2537
    %v2697 = vunpack.c.l.b16 %v2538
    %v2698 = vunpack.c.h.b16 %v2538
    %v2699 = vunpack.c.l.b16 %v2539
    %v2700 = vunpack.c.h.b16 %v2539
    %v2701 = vunpack.c.l.b16 %v2540
    %v2702 = vunpack.c.h.b16 %v2540
    %v2703 = vunpack.c.l.b16 %v2541
    %v2704 = vunpack.c.h.b16 %v2541
    %v2705 = vunpack.c.l.b16 %v2542
    %v2706 = vunpack.c.h.b16 %v2542
    %v2707 = vunpack.c.l.b16 %v2543
    %v2708 = vunpack.c.h.b16 %v2543
    %v2709 = vunpack.c.l.b16 %v2544
    %v2710 = vunpack.c.h.b16 %v2544
    %v2711 = vunpack.c.l.b16 %v2545
    %v2712 = vunpack.c.h.b16 %v2545
    %v2713 = vunpack.c.l.b16 %v2546
    %v2714 = vunpack.c.h.b16 %v2546
    %v2715 = vunpack.c.l.b16 %v2547
    %v2716 = vunpack.c.h.b16 %v2547
    %v2717 = vunpack.c.l.b16 %v2548
    %v2718 = vunpack.c.h.b16 %v2548
    %v2719 = vunpack.c.l.b16 %v2549
    %v2720 = vunpack.c.h.b16 %v2549
    %v2721 = vunpack.c.l.b16 %v2550
    %v2722 = vunpack.c.h.b16 %v2550
    %v2723 = vunpack.c.l.b16 %v2551
    %v2724 = vunpack.c.h.b16 %v2551
    %v2725 = vunpack.c.l.b16 %v2552
    %v2726 = vunpack.c.h.b16 %v2552
    %v2727 = vunpack.c.l.b16 %v2553
    %v2728 = vunpack.c.h.b16 %v2553
    %v2729 = vunpack.c.l.b16 %v2554
    %v2730 = vunpack.c.h.b16 %v2554
    %v2731 = vunpack.c.l.b16 %v2555
    %v2732 = vunpack.c.h.b16 %v2555
    %v2733 = vunpack.c.l.b16 %v2556
    %v2734 = vunpack.c.h.b16 %v2556
    %v2735 = vunpack.c.l.b16 %v2557
    %v2736 = vunpack.c.h.b16 %v2557
    %v2737 = vunpack.c.l.b16 %v2558
    %v2738 = vunpack.c.h.b16 %v2558
    %v2739 = vunpack.c.l.b16 %v2559
    %v2740 = vunpack.c.h.b16 %v2559
    %v2741 = vunpack.c.l.b16 %v2560
    %v2742 = vunpack.c.h.b16 %v2560
    %v2743 = vunpack.c.l.b16 %v2561
    %v2744 = vunpack.c.h.b16 %v2561
    %v2745 = vunpack.c.l.b16 %v2562
    %v2746 = vunpack.c.h.b16 %v2562
    %v2747 = vunpack.c.l.b16 %v2563
    %v2748 = vunpack.c.h.b16 %v2563
    %v2749 = vunpack.c.l.b16 %v2564
    %v2750 = vunpack.c.h.b16 %v2564
    %v2751 = vunpack.c.l.b16 %v2565
    %v2752 = vunpack.c.h.b16 %v2565
    %v2753 = vunpack.c.l.b16 %v2566
    %v2754 = vunpack.c.h.b16 %v2566
    %v2755 = vunpack.c.l.b16 %v2567
    %v2756 = vunpack.c.h.b16 %v2567
    %v2757 = vunpack.c.l.b16 %v2568
    %v2758 = vunpack.c.h.b16 %v2568
    %v2759 = vunpack.c.l.b16 %v2569
    %v2760 = vunpack.c.h.b16 %v2569
    %v2761 = vunpack.c.l.b16 %v2570
    %v2762 = vunpack.c.h.b16 %v2570
    %v2763 = vunpack.c.l.b16 %v2571
    %v2764 = vunpack.c.h.b16 %v2571
    %v2765 = vunpack.c.l.b16 %v2572
    %v2766 = vunpack.c.h.b16 %v2572
    %v2767 = vunpack.c.l.b16 %v2573
    %v2768 = vunpack.c.h.b16 %v2573
    %v2769 = vunpack.c.l.b16 %v2574
    %v2770 = vunpack.c.h.b16 %v2574
    %v2771 = vunpack.c.l.b16 %v2575
    %v2772 = vunpack.c.h.b16 %v2575
    %v2773 = vunpack.c.l.b16 %v2576
    %v2774 = vunpack.c.h.b16 %v2576
    %v2775 = vunpack.c.l.b16 %v2577
    %v2776 = vunpack.c.h.b16 %v2577
    %v2777 = vunpack.c.l.b16 %v2578
    %v2778 = vunpack.c.h.b16 %v2578
    %v2779 = vunpack.c.l.b16 %v2579
    %v2780 = vunpack.c.h.b16 %v2579
    %v2781 = vunpack.c.l.b16 %v2580
    %v2782 = vunpack.c.h.b16 %v2580
    %v2783 = vunpack.c.l.b16 %v2581
    %v2784 = vunpack.c.h.b16 %v2581
    %v2785 = vunpack.c.l.b16 %v2582
    %v2786 = vunpack.c.h.b16 %v2582
    %v2787 = vunpack.c.l.b16 %v2583
    %v2788 = vunpack.c.h.b16 %v2583
    %v2789 = vunpack.c.l.b16 %v2584
    %v2790 = vunpack.c.h.b16 %v2584
    %v2791 = vunpack.c.l.b16 %v2585
    %v2792 = vunpack.c.h.b16 %v2585
    %v2793 = vunpack.c.l.b16 %v2586
    %v2794 = vunpack.c.h.b16 %v2586
    %v2795 = vunpack.c.l.b16 %v2587
    %v2796 = vunpack.c.h.b16 %v2587
    %v2797 = vunpack.c.l.b16 %v2588
    %v2798 = vunpack.c.h.b16 %v2588
    %v2799 = vunpack.c.l.b16 %v2589
    %v2800 = vunpack.c.h.b16 %v2589
    %v2801 = vunpack.c.l.b16 %v2590
    %v2802 = vunpack.c.h.b16 %v2590
    %v2803 = vunpack.c.l.b16 %v2591
    %v2804 = vunpack.c.h.b16 %v2591
    %v2805 = vunpack.c.l.b16 %v2592
    %v2806 = vunpack.c.h.b16 %v2592
    %v2807 = vpack.c.b16 %v2683, %v2679
    %v2808 = vpack.c.b16 %v2684, %v2680
    %v2809 = vpack.c.b16 %v2685, %v2681
    %v2810 = vpack.c.b16 %v2686, %v2682
    %v2811 = vpack.c.b16 %v2691, %v2687
    %v2812 = vpack.c.b16 %v2692, %v2688
    %v2813 = vpack.c.b16 %v2693, %v2689
    %v2814 = vpack.c.b16 %v2694, %v2690
    %v2815 = vpack.c.b16 %v2699, %v2695
    %v2816 = vpack.c.b16 %v2700, %v2696
    %v2817 = vpack.c.b16 %v2701, %v2697
    %v2818 = vpack.c.b16 %v2702, %v2698
    %v2819 = vpack.c.b16 %v2707, %v2703
    %v2820 = vpack.c.b16 %v2708, %v2704
    %v2821 = vpack.c.b16 %v2709, %v2705
    %v2822 = vpack.c.b16 %v2710, %v2706
    %v2823 = vpack.c.b16 %v2715, %v2711
    %v2824 = vpack.c.b16 %v2716, %v2712
    %v2825 = vpack.c.b16 %v2717, %v2713
    %v2826 = vpack.c.b16 %v2718, %v2714
    %v2827 = vpack.c.b16 %v2723, %v2719
    %v2828 = vpack.c.b16 %v2724, %v2720
    %v2829 = vpack.c.b16 %v2725, %v2721
    %v2830 = vpack.c.b16 %v2726, %v2722
    %v2831 = vpack.c.b16 %v2731, %v2727
    %v2832 = vpack.c.b16 %v2732, %v2728
    %v2833 = vpack.c.b16 %v2733, %v2729
    %v2834 = vpack.c.b16 %v2734, %v2730
    %v2835 = vpack.c.b16 %v2739, %v2735
    %v2836 = vpack.c.b16 %v2740, %v2736
    %v2837 = vpack.c.b16 %v2741, %v2737
    %v2838 = vpack.c.b16 %v2742, %v2738
    %v2839 = vpack.c.b16 %v2747, %v2743
    %v2840 = vpack.c.b16 %v2748, %v2744
    %v2841 = vpack.c.b16 %v2749, %v2745
    %v2842 = vpack.c.b16 %v2750, %v2746
    %v2843 = vpack.c.b16 %v2755, %v2751
    %v2844 = vpack.c.b16 %v2756, %v2752
    %v2845 = vpack.c.b16 %v2757, %v2753
    %v2846 = vpack.c.b16 %v2758, %v2754
    %v2847 = vpack.c.b16 %v2763, %v2759
    %v2848 = vpack.c.b16 %v2764, %v2760
    %v2849 = vpack.c.b16 %v2765, %v2761
    %v2850 = vpack.c.b16 %v2766, %v2762
    %v2851 = vpack.c.b16 %v2771, %v2767
    %v2852 = vpack.c.b16 %v2772, %v2768
    %v2853 = vpack.c.b16 %v2773, %v2769
    %v2854 = vpack.c.b16 %v2774, %v2770
    %v2855 = vpack.c.b16 %v2779, %v2775
    %v2856 = vpack.c.b16 %v2780, %v2776
    %v2857 = vpack.c.b16 %v2781, %v2777
    %v2858 = vpack.c.b16 %v2782, %v2778
    %v2859 = vpack.c.b16 %v2787, %v2783
    %v2860 = vpack.c.b16 %v2788, %v2784
    %v2861 = vpack.c.b16 %v2789, %v2785
    %v2862 = vpack.c.b16 %v2790, %v2786
    %v2863 = vpack.c.b16 %v2795, %v2791
    %v2864 = vpack.c.b16 %v2796, %v2792
    %v2865 = vpack.c.b16 %v2797, %v2793
    %v2866 = vpack.c.b16 %v2798, %v2794
    %v2867 = vpack.c.b16 %v2803, %v2799
    %v2868 = vpack.c.b16 %v2804, %v2800
    %v2869 = vpack.c.b16 %v2805, %v2801
    %v2870 = vpack.c.b16 %v2806, %v2802
    %2935 = vmatprep.subr.bf16.mxu0 %v2808
    %2936 = vmatpush1.bf16.msra.mxu0 %v2807
    %2937 = vmatprep.subr.bf16.mxu0 %v2812
    %2938 = vmatpush1.bf16.msra.mxu0 %v2811
    %2939 = vmatprep.subr.bf16.mxu0 %v2816
    %2940 = vmatpush1.bf16.msra.mxu0 %v2815
    %2941 = vmatprep.subr.bf16.mxu0 %v2820
    %2942 = vmatpush1.bf16.msra.mxu0 %v2819
    %2943 = vmatprep.subr.bf16.mxu0 %v2824
    %2944 = vmatpush1.bf16.msra.mxu0 %v2823
    %2945 = vmatprep.subr.bf16.mxu0 %v2828
    %2946 = vmatpush1.bf16.msra.mxu0 %v2827
    %2947 = vmatprep.subr.bf16.mxu0 %v2832
    %2948 = vmatpush1.bf16.msra.mxu0 %v2831
    %2949 = vmatprep.subr.bf16.mxu0 %v2836
    %2950 = vmatpush1.bf16.msra.mxu0 %v2835
    %2951 = vmatprep.subr.bf16.mxu0 %v2840
    %2952 = vmatpush1.bf16.msra.mxu0 %v2839
    %2953 = vmatprep.subr.bf16.mxu0 %v2844
    %2954 = vmatpush1.bf16.msra.mxu0 %v2843
    %2955 = vmatprep.subr.bf16.mxu0 %v2848
    %2956 = vmatpush1.bf16.msra.mxu0 %v2847
    %2957 = vmatprep.subr.bf16.mxu0 %v2852
    %2958 = vmatpush1.bf16.msra.mxu0 %v2851
    %2959 = vmatprep.subr.bf16.mxu0 %v2856
    %2960 = vmatpush1.bf16.msra.mxu0 %v2855
    %2961 = vmatprep.subr.bf16.mxu0 %v2860
    %2962 = vmatpush1.bf16.msra.mxu0 %v2859
    %2963 = vmatprep.subr.bf16.mxu0 %v2864
    %2964 = vmatpush1.bf16.msra.mxu0 %v2863
    %2965 = vmatprep.subr.bf16.mxu0 %v2868
    %2966 = vmatpush1.bf16.msra.mxu0 %v2867
    %2967 = vmatprep.mubr.bf16.mxu0 %v2528
    %2968 = vmatmul.mubr.bf16.gmra.mrb[0].mxu0 %v2527
    %v2969 = vpop.f32.mrb[0].mxu0
    %v2970 = vadd.f32 %v2598, %v2969
    %v2971 = vpop.f32.mrb[0].mxu0
    %v2972 = vadd.f32 %v2602, %v2971
    %v2973 = vpop.f32.mrb[0].mxu0
    %v2974 = vpop.f32.mrb[0].mxu0
    %2975 = vdwg.mxu0
    %2976 = vmatprep.subr.bf16.mxu0 %v2810
    %2977 = vmatpush1.bf16.msra.mxu0 %v2809
    %2978 = vmatprep.subr.bf16.mxu0 %v2814
    %2979 = vmatpush1.bf16.msra.mxu0 %v2813
    %2980 = vmatprep.subr.bf16.mxu0 %v2818
    %2981 = vmatpush1.bf16.msra.mxu0 %v2817
    %2982 = vmatprep.subr.bf16.mxu0 %v2822
    %2983 = vmatpush1.bf16.msra.mxu0 %v2821
    %2984 = vmatprep.subr.bf16.mxu0 %v2826
    %2985 = vmatpush1.bf16.msra.mxu0 %v2825
    %2986 = vmatprep.subr.bf16.mxu0 %v2830
    %2987 = vmatpush1.bf16.msra.mxu0 %v2829
    %2988 = vmatprep.subr.bf16.mxu0 %v2834
    %2989 = vmatpush1.bf16.msra.mxu0 %v2833
    %2990 = vmatprep.subr.bf16.mxu0 %v2838
    %2991 = vmatpush1.bf16.msra.mxu0 %v2837
    %2992 = vmatprep.subr.bf16.mxu0 %v2842
    %2993 = vmatpush1.bf16.msra.mxu0 %v2841
    %2994 = vmatprep.subr.bf16.mxu0 %v2846
    %2995 = vmatpush1.bf16.msra.mxu0 %v2845
    %2996 = vmatprep.subr.bf16.mxu0 %v2850
    %2997 = vmatpush1.bf16.msra.mxu0 %v2849
    %2998 = vmatprep.subr.bf16.mxu0 %v2854
    %2999 = vmatpush1.bf16.msra.mxu0 %v2853
    %3000 = vmatprep.subr.bf16.mxu0 %v2858
    %3001 = vmatpush1.bf16.msra.mxu0 %v2857
    %3002 = vmatprep.subr.bf16.mxu0 %v2862
    %3003 = vmatpush1.bf16.msra.mxu0 %v2861
    %3004 = vmatprep.subr.bf16.mxu0 %v2866
    %3005 = vmatpush1.bf16.msra.mxu0 %v2865
    %3006 = vmatprep.subr.bf16.mxu0 %v2870
    %3007 = vmatpush1.bf16.msra.mxu0 %v2869
    %3008 = vmatprep.mubr.bf16.mxu0 %v2528
    %3009 = vmatmul.mubr.bf16.gmra.mrb[0].mxu0 %v2527
    %v3010 = vpop.f32.mrb[0].mxu0
    %v3011 = vadd.f32 %v2606, %v3010
    %v3012 = vpop.f32.mrb[0].mxu0
    %v3013 = vadd.f32 %v2610, %v3012
    %v3014 = vpop.f32.mrb[0].mxu0
    %v3015 = vpop.f32.mrb[0].mxu0
    %3016 = vdwg.mxu0
    %v3017 = vxor.u32 %v2970, 2147483648
    %v3018 = vxor.u32 %v2972, 2147483648
    %v3019 = vxor.u32 %v3011, 2147483648
    %v3020 = vxor.u32 %v3013, 2147483648
    %v3021 = vmul.f32 %v3017, 1.442695
    %v3022 = vpow.pop %v3021
    %v3023 = vmul.f32 %v3018, 1.442695
    %v3024 = vpow.pop %v3023
    %v3025 = vmul.f32 %v3019, 1.442695
    %v3026 = vpow.pop %v3025
    %v3027 = vmul.f32 %v3020, 1.442695
    %v3028 = vpow.pop %v3027
    %v3029 = vadd.f32 %v3022, 1.0
    %v3030 = vadd.f32 %v3024, 1.0
    %v3031 = vadd.f32 %v3026, 1.0
    %v3032 = vadd.f32 %v3028, 1.0
    %v3033 = vrcp.pop %v3029
    %v3034 = vmul.f32 1.0, %v3033
    %v3035 = vrcp.pop %v3030
    %v3036 = vmul.f32 1.0, %v3035
    %v3037 = vrcp.pop %v3031
    %v3038 = vmul.f32 1.0, %v3037
    %v3039 = vrcp.pop %v3032
    %v3040 = vmul.f32 1.0, %v3039
    %v3041 = vpack.c.bf16 %v3034, %v3034
    %v3042 = vpack.c.bf16 %v3036, %v3036
    %v3043 = vpack.c.bf16 %v3038, %v3038
    %v3044 = vpack.c.bf16 %v3040, %v3040
    %v3045 = vld [vmem:[#allocation11] sm:$0xff]
    %v3046 = vld [vmem:[#allocation11 + $0x8] sm:$0xff]
    %v3047 = vld [vmem:[#allocation11 + $0x10] sm:$0xff]
    %v3048 = vld [vmem:[#allocation11 + $0x18] sm:$0xff]
    %v3049 = vld [vmem:[#allocation11 + $0x20] sm:$0xff]
    %v3050 = vld [vmem:[#allocation11 + $0x28] sm:$0xff]
    %v3051 = vld [vmem:[#allocation11 + $0x30] sm:$0xff]
    %v3052 = vld [vmem:[#allocation11 + $0x38] sm:$0xff]
    %v3053 = vld [vmem:[#allocation11 + $0x40] sm:$0xff]
    %v3054 = vld [vmem:[#allocation11 + $0x48] sm:$0xff]
    %v3055 = vld [vmem:[#allocation11 + $0x50] sm:$0xff]
    %v3056 = vld [vmem:[#allocation11 + $0x58] sm:$0xff]
    %v3057 = vld [vmem:[#allocation11 + $0x60] sm:$0xff]
    %v3058 = vld [vmem:[#allocation11 + $0x68] sm:$0xff]
    %v3059 = vld [vmem:[#allocation11 + $0x70] sm:$0xff]
    %v3060 = vld [vmem:[#allocation11 + $0x78] sm:$0xff]
    %v3061 = vld [vmem:[#allocation11 + $0x80] sm:$0xff]
    %v3062 = vld [vmem:[#allocation11 + $0x88] sm:$0xff]
    %v3063 = vld [vmem:[#allocation11 + $0x90] sm:$0xff]
    %v3064 = vld [vmem:[#allocation11 + $0x98] sm:$0xff]
    %v3065 = vld [vmem:[#allocation11 + $0xa0] sm:$0xff]
    %v3066 = vld [vmem:[#allocation11 + $0xa8] sm:$0xff]
    %v3067 = vld [vmem:[#allocation11 + $0xb0] sm:$0xff]
    %v3068 = vld [vmem:[#allocation11 + $0xb8] sm:$0xff]
    %v3069 = vld [vmem:[#allocation11 + $0xc0] sm:$0xff]
    %v3070 = vld [vmem:[#allocation11 + $0xc8] sm:$0xff]
    %v3071 = vld [vmem:[#allocation11 + $0xd0] sm:$0xff]
    %v3072 = vld [vmem:[#allocation11 + $0xd8] sm:$0xff]
    %v3073 = vld [vmem:[#allocation11 + $0xe0] sm:$0xff]
    %v3074 = vld [vmem:[#allocation11 + $0xe8] sm:$0xff]
    %v3075 = vld [vmem:[#allocation11 + $0xf0] sm:$0xff]
    %v3076 = vld [vmem:[#allocation11 + $0xf8] sm:$0xff]
    %v3077 = vld [vmem:[#allocation11 + $0x100] sm:$0xff]
    %v3078 = vld [vmem:[#allocation11 + $0x108] sm:$0xff]
    %v3079 = vld [vmem:[#allocation11 + $0x110] sm:$0xff]
    %v3080 = vld [vmem:[#allocation11 + $0x118] sm:$0xff]
    %v3081 = vld [vmem:[#allocation11 + $0x120] sm:$0xff]
    %v3082 = vld [vmem:[#allocation11 + $0x128] sm:$0xff]
    %v3083 = vld [vmem:[#allocation11 + $0x130] sm:$0xff]
    %v3084 = vld [vmem:[#allocation11 + $0x138] sm:$0xff]
    %v3085 = vld [vmem:[#allocation11 + $0x140] sm:$0xff]
    %v3086 = vld [vmem:[#allocation11 + $0x148] sm:$0xff]
    %v3087 = vld [vmem:[#allocation11 + $0x150] sm:$0xff]
    %v3088 = vld [vmem:[#allocation11 + $0x158] sm:$0xff]
    %v3089 = vld [vmem:[#allocation11 + $0x160] sm:$0xff]
    %v3090 = vld [vmem:[#allocation11 + $0x168] sm:$0xff]
    %v3091 = vld [vmem:[#allocation11 + $0x170] sm:$0xff]
    %v3092 = vld [vmem:[#allocation11 + $0x178] sm:$0xff]
    %v3093 = vld [vmem:[#allocation11 + $0x180] sm:$0xff]
    %v3094 = vld [vmem:[#allocation11 + $0x188] sm:$0xff]
    %v3095 = vld [vmem:[#allocation11 + $0x190] sm:$0xff]
    %v3096 = vld [vmem:[#allocation11 + $0x198] sm:$0xff]
    %v3097 = vld [vmem:[#allocation11 + $0x1a0] sm:$0xff]
    %v3098 = vld [vmem:[#allocation11 + $0x1a8] sm:$0xff]
    %v3099 = vld [vmem:[#allocation11 + $0x1b0] sm:$0xff]
    %v3100 = vld [vmem:[#allocation11 + $0x1b8] sm:$0xff]
    %v3101 = vld [vmem:[#allocation11 + $0x1c0] sm:$0xff]
    %v3102 = vld [vmem:[#allocation11 + $0x1c8] sm:$0xff]
    %v3103 = vld [vmem:[#allocation11 + $0x1d0] sm:$0xff]
    %v3104 = vld [vmem:[#allocation11 + $0x1d8] sm:$0xff]
    %v3105 = vld [vmem:[#allocation11 + $0x1e0] sm:$0xff]
    %v3106 = vld [vmem:[#allocation11 + $0x1e8] sm:$0xff]
    %v3107 = vld [vmem:[#allocation11 + $0x1f0] sm:$0xff]
    %v3108 = vld [vmem:[#allocation11 + $0x1f8] sm:$0xff]
    %v3109 = vld [vmem:[#allocation11 + $0x200] sm:$0xff]
    %v3110 = vld [vmem:[#allocation11 + $0x208] sm:$0xff]
    %v3111 = vld [vmem:[#allocation11 + $0x210] sm:$0xff]
    %v3112 = vld [vmem:[#allocation11 + $0x218] sm:$0xff]
    %v3113 = vld [vmem:[#allocation11 + $0x220] sm:$0xff]
    %v3114 = vld [vmem:[#allocation11 + $0x228] sm:$0xff]
    %v3115 = vld [vmem:[#allocation11 + $0x230] sm:$0xff]
    %v3116 = vld [vmem:[#allocation11 + $0x238] sm:$0xff]
    %v3117 = vld [vmem:[#allocation11 + $0x240] sm:$0xff]
    %v3118 = vld [vmem:[#allocation11 + $0x248] sm:$0xff]
    %v3119 = vld [vmem:[#allocation11 + $0x250] sm:$0xff]
    %v3120 = vld [vmem:[#allocation11 + $0x258] sm:$0xff]
    %v3121 = vld [vmem:[#allocation11 + $0x260] sm:$0xff]
    %v3122 = vld [vmem:[#allocation11 + $0x268] sm:$0xff]
    %v3123 = vld [vmem:[#allocation11 + $0x270] sm:$0xff]
    %v3124 = vld [vmem:[#allocation11 + $0x278] sm:$0xff]
    %v3125 = vld [vmem:[#allocation11 + $0x280] sm:$0xff]
    %v3126 = vld [vmem:[#allocation11 + $0x288] sm:$0xff]
    %v3127 = vld [vmem:[#allocation11 + $0x290] sm:$0xff]
    %v3128 = vld [vmem:[#allocation11 + $0x298] sm:$0xff]
    %v3129 = vld [vmem:[#allocation11 + $0x2a0] sm:$0xff]
    %v3130 = vld [vmem:[#allocation11 + $0x2a8] sm:$0xff]
    %v3131 = vld [vmem:[#allocation11 + $0x2b0] sm:$0xff]
    %v3132 = vld [vmem:[#allocation11 + $0x2b8] sm:$0xff]
    %v3133 = vld [vmem:[#allocation11 + $0x2c0] sm:$0xff]
    %v3134 = vld [vmem:[#allocation11 + $0x2c8] sm:$0xff]
    %v3135 = vld [vmem:[#allocation11 + $0x2d0] sm:$0xff]
    %v3136 = vld [vmem:[#allocation11 + $0x2d8] sm:$0xff]
    %v3137 = vld [vmem:[#allocation11 + $0x2e0] sm:$0xff]
    %v3138 = vld [vmem:[#allocation11 + $0x2e8] sm:$0xff]
    %v3139 = vld [vmem:[#allocation11 + $0x2f0] sm:$0xff]
    %v3140 = vld [vmem:[#allocation11 + $0x2f8] sm:$0xff]
    %v3141 = vld [vmem:[#allocation11 + $0x300] sm:$0xff]
    %v3142 = vld [vmem:[#allocation11 + $0x308] sm:$0xff]
    %v3143 = vld [vmem:[#allocation11 + $0x310] sm:$0xff]
    %v3144 = vld [vmem:[#allocation11 + $0x318] sm:$0xff]
    %v3145 = vld [vmem:[#allocation11 + $0x320] sm:$0xff]
    %v3146 = vld [vmem:[#allocation11 + $0x328] sm:$0xff]
    %v3147 = vld [vmem:[#allocation11 + $0x330] sm:$0xff]
    %v3148 = vld [vmem:[#allocation11 + $0x338] sm:$0xff]
    %v3149 = vld [vmem:[#allocation11 + $0x340] sm:$0xff]
    %v3150 = vld [vmem:[#allocation11 + $0x348] sm:$0xff]
    %v3151 = vld [vmem:[#allocation11 + $0x350] sm:$0xff]
    %v3152 = vld [vmem:[#allocation11 + $0x358] sm:$0xff]
    %v3153 = vld [vmem:[#allocation11 + $0x360] sm:$0xff]
    %v3154 = vld [vmem:[#allocation11 + $0x368] sm:$0xff]
    %v3155 = vld [vmem:[#allocation11 + $0x370] sm:$0xff]
    %v3156 = vld [vmem:[#allocation11 + $0x378] sm:$0xff]
    %v3157 = vld [vmem:[#allocation11 + $0x380] sm:$0xff]
    %v3158 = vld [vmem:[#allocation11 + $0x388] sm:$0xff]
    %v3159 = vld [vmem:[#allocation11 + $0x390] sm:$0xff]
    %v3160 = vld [vmem:[#allocation11 + $0x398] sm:$0xff]
    %v3161 = vld [vmem:[#allocation11 + $0x3a0] sm:$0xff]
    %v3162 = vld [vmem:[#allocation11 + $0x3a8] sm:$0xff]
    %v3163 = vld [vmem:[#allocation11 + $0x3b0] sm:$0xff]
    %v3164 = vld [vmem:[#allocation11 + $0x3b8] sm:$0xff]
    %v3165 = vld [vmem:[#allocation11 + $0x3c0] sm:$0xff]
    %v3166 = vld [vmem:[#allocation11 + $0x3c8] sm:$0xff]
    %v3167 = vld [vmem:[#allocation11 + $0x3d0] sm:$0xff]
    %v3168 = vld [vmem:[#allocation11 + $0x3d8] sm:$0xff]
    %v3169 = vld [vmem:[#allocation11 + $0x3e0] sm:$0xff]
    %v3170 = vld [vmem:[#allocation11 + $0x3e8] sm:$0xff]
    %v3171 = vld [vmem:[#allocation11 + $0x3f0] sm:$0xff]
    %v3172 = vld [vmem:[#allocation11 + $0x3f8] sm:$0xff]
    %v3173 = vld [vmem:[#allocation11 + $0x400] sm:$0xff]
    %v3174 = vld [vmem:[#allocation11 + $0x408] sm:$0xff]
    %v3175 = vld [vmem:[#allocation11 + $0x410] sm:$0xff]
    %v3176 = vld [vmem:[#allocation11 + $0x418] sm:$0xff]
    %v3177 = vld [vmem:[#allocation11 + $0x420] sm:$0xff]
    %v3178 = vld [vmem:[#allocation11 + $0x428] sm:$0xff]
    %v3179 = vld [vmem:[#allocation11 + $0x430] sm:$0xff]
    %v3180 = vld [vmem:[#allocation11 + $0x438] sm:$0xff]
    %v3181 = vld [vmem:[#allocation11 + $0x440] sm:$0xff]
    %v3182 = vld [vmem:[#allocation11 + $0x448] sm:$0xff]
    %v3183 = vld [vmem:[#allocation11 + $0x450] sm:$0xff]
    %v3184 = vld [vmem:[#allocation11 + $0x458] sm:$0xff]
    %v3185 = vld [vmem:[#allocation11 + $0x460] sm:$0xff]
    %v3186 = vld [vmem:[#allocation11 + $0x468] sm:$0xff]
    %v3187 = vld [vmem:[#allocation11 + $0x470] sm:$0xff]
    %v3188 = vld [vmem:[#allocation11 + $0x478] sm:$0xff]
    %v3189 = vld [vmem:[#allocation11 + $0x480] sm:$0xff]
    %v3190 = vld [vmem:[#allocation11 + $0x488] sm:$0xff]
    %v3191 = vld [vmem:[#allocation11 + $0x490] sm:$0xff]
    %v3192 = vld [vmem:[#allocation11 + $0x498] sm:$0xff]
    %v3193 = vld [vmem:[#allocation11 + $0x4a0] sm:$0xff]
    %v3194 = vld [vmem:[#allocation11 + $0x4a8] sm:$0xff]
    %v3195 = vld [vmem:[#allocation11 + $0x4b0] sm:$0xff]
    %v3196 = vld [vmem:[#allocation11 + $0x4b8] sm:$0xff]
    %v3197 = vld [vmem:[#allocation11 + $0x4c0] sm:$0xff]
    %v3198 = vld [vmem:[#allocation11 + $0x4c8] sm:$0xff]
    %v3199 = vld [vmem:[#allocation11 + $0x4d0] sm:$0xff]
    %v3200 = vld [vmem:[#allocation11 + $0x4d8] sm:$0xff]
    %v3201 = vld [vmem:[#allocation11 + $0x4e0] sm:$0xff]
    %v3202 = vld [vmem:[#allocation11 + $0x4e8] sm:$0xff]
    %v3203 = vld [vmem:[#allocation11 + $0x4f0] sm:$0xff]
    %v3204 = vld [vmem:[#allocation11 + $0x4f8] sm:$0xff]
    %v3205 = vld [vmem:[#allocation11 + $0x500] sm:$0xff]
    %v3206 = vld [vmem:[#allocation11 + $0x508] sm:$0xff]
    %v3207 = vld [vmem:[#allocation11 + $0x510] sm:$0xff]
    %v3208 = vld [vmem:[#allocation11 + $0x518] sm:$0xff]
    %v3209 = vld [vmem:[#allocation11 + $0x520] sm:$0xff]
    %v3210 = vld [vmem:[#allocation11 + $0x528] sm:$0xff]
    %v3211 = vld [vmem:[#allocation11 + $0x530] sm:$0xff]
    %v3212 = vld [vmem:[#allocation11 + $0x538] sm:$0xff]
    %v3213 = vld [vmem:[#allocation11 + $0x540] sm:$0xff]
    %v3214 = vld [vmem:[#allocation11 + $0x548] sm:$0xff]
    %v3215 = vld [vmem:[#allocation11 + $0x550] sm:$0xff]
    %v3216 = vld [vmem:[#allocation11 + $0x558] sm:$0xff]
    %v3217 = vld [vmem:[#allocation11 + $0x560] sm:$0xff]
    %v3218 = vld [vmem:[#allocation11 + $0x568] sm:$0xff]
    %v3219 = vld [vmem:[#allocation11 + $0x570] sm:$0xff]
    %v3220 = vld [vmem:[#allocation11 + $0x578] sm:$0xff]
    %v3221 = vld [vmem:[#allocation11 + $0x580] sm:$0xff]
    %v3222 = vld [vmem:[#allocation11 + $0x588] sm:$0xff]
    %v3223 = vld [vmem:[#allocation11 + $0x590] sm:$0xff]
    %v3224 = vld [vmem:[#allocation11 + $0x598] sm:$0xff]
    %v3225 = vld [vmem:[#allocation11 + $0x5a0] sm:$0xff]
    %v3226 = vld [vmem:[#allocation11 + $0x5a8] sm:$0xff]
    %v3227 = vld [vmem:[#allocation11 + $0x5b0] sm:$0xff]
    %v3228 = vld [vmem:[#allocation11 + $0x5b8] sm:$0xff]
    %v3229 = vld [vmem:[#allocation11 + $0x5c0] sm:$0xff]
    %v3230 = vld [vmem:[#allocation11 + $0x5c8] sm:$0xff]
    %v3231 = vld [vmem:[#allocation11 + $0x5d0] sm:$0xff]
    %v3232 = vld [vmem:[#allocation11 + $0x5d8] sm:$0xff]
    %v3233 = vld [vmem:[#allocation11 + $0x5e0] sm:$0xff]
    %v3234 = vld [vmem:[#allocation11 + $0x5e8] sm:$0xff]
    %v3235 = vld [vmem:[#allocation11 + $0x5f0] sm:$0xff]
    %v3236 = vld [vmem:[#allocation11 + $0x5f8] sm:$0xff]
    %v3237 = vld [vmem:[#allocation11 + $0x600] sm:$0xff]
    %v3238 = vld [vmem:[#allocation11 + $0x608] sm:$0xff]
    %v3239 = vld [vmem:[#allocation11 + $0x610] sm:$0xff]
    %v3240 = vld [vmem:[#allocation11 + $0x618] sm:$0xff]
    %v3241 = vld [vmem:[#allocation11 + $0x620] sm:$0xff]
    %v3242 = vld [vmem:[#allocation11 + $0x628] sm:$0xff]
    %v3243 = vld [vmem:[#allocation11 + $0x630] sm:$0xff]
    %v3244 = vld [vmem:[#allocation11 + $0x638] sm:$0xff]
    %v3245 = vld [vmem:[#allocation11 + $0x640] sm:$0xff]
    %v3246 = vld [vmem:[#allocation11 + $0x648] sm:$0xff]
    %v3247 = vld [vmem:[#allocation11 + $0x650] sm:$0xff]
    %v3248 = vld [vmem:[#allocation11 + $0x658] sm:$0xff]
    %v3249 = vld [vmem:[#allocation11 + $0x660] sm:$0xff]
    %v3250 = vld [vmem:[#allocation11 + $0x668] sm:$0xff]
    %v3251 = vld [vmem:[#allocation11 + $0x670] sm:$0xff]
    %v3252 = vld [vmem:[#allocation11 + $0x678] sm:$0xff]
    %v3253 = vld [vmem:[#allocation11 + $0x680] sm:$0xff]
    %v3254 = vld [vmem:[#allocation11 + $0x688] sm:$0xff]
    %v3255 = vld [vmem:[#allocation11 + $0x690] sm:$0xff]
    %v3256 = vld [vmem:[#allocation11 + $0x698] sm:$0xff]
    %v3257 = vld [vmem:[#allocation11 + $0x6a0] sm:$0xff]
    %v3258 = vld [vmem:[#allocation11 + $0x6a8] sm:$0xff]
    %v3259 = vld [vmem:[#allocation11 + $0x6b0] sm:$0xff]
    %v3260 = vld [vmem:[#allocation11 + $0x6b8] sm:$0xff]
    %v3261 = vld [vmem:[#allocation11 + $0x6c0] sm:$0xff]
    %v3262 = vld [vmem:[#allocation11 + $0x6c8] sm:$0xff]
    %v3263 = vld [vmem:[#allocation11 + $0x6d0] sm:$0xff]
    %v3264 = vld [vmem:[#allocation11 + $0x6d8] sm:$0xff]
    %v3265 = vld [vmem:[#allocation11 + $0x6e0] sm:$0xff]
    %v3266 = vld [vmem:[#allocation11 + $0x6e8] sm:$0xff]
    %v3267 = vld [vmem:[#allocation11 + $0x6f0] sm:$0xff]
    %v3268 = vld [vmem:[#allocation11 + $0x6f8] sm:$0xff]
    %v3269 = vld [vmem:[#allocation11 + $0x700] sm:$0xff]
    %v3270 = vld [vmem:[#allocation11 + $0x708] sm:$0xff]
    %v3271 = vld [vmem:[#allocation11 + $0x710] sm:$0xff]
    %v3272 = vld [vmem:[#allocation11 + $0x718] sm:$0xff]
    %v3273 = vld [vmem:[#allocation11 + $0x720] sm:$0xff]
    %v3274 = vld [vmem:[#allocation11 + $0x728] sm:$0xff]
    %v3275 = vld [vmem:[#allocation11 + $0x730] sm:$0xff]
    %v3276 = vld [vmem:[#allocation11 + $0x738] sm:$0xff]
    %v3277 = vld [vmem:[#allocation11 + $0x740] sm:$0xff]
    %v3278 = vld [vmem:[#allocation11 + $0x748] sm:$0xff]
    %v3279 = vld [vmem:[#allocation11 + $0x750] sm:$0xff]
    %v3280 = vld [vmem:[#allocation11 + $0x758] sm:$0xff]
    %v3281 = vld [vmem:[#allocation11 + $0x760] sm:$0xff]
    %v3282 = vld [vmem:[#allocation11 + $0x768] sm:$0xff]
    %v3283 = vld [vmem:[#allocation11 + $0x770] sm:$0xff]
    %v3284 = vld [vmem:[#allocation11 + $0x778] sm:$0xff]
    %v3285 = vld [vmem:[#allocation11 + $0x780] sm:$0xff]
    %v3286 = vld [vmem:[#allocation11 + $0x788] sm:$0xff]
    %v3287 = vld [vmem:[#allocation11 + $0x790] sm:$0xff]
    %v3288 = vld [vmem:[#allocation11 + $0x798] sm:$0xff]
    %v3289 = vld [vmem:[#allocation11 + $0x7a0] sm:$0xff]
    %v3290 = vld [vmem:[#allocation11 + $0x7a8] sm:$0xff]
    %v3291 = vld [vmem:[#allocation11 + $0x7b0] sm:$0xff]
    %v3292 = vld [vmem:[#allocation11 + $0x7b8] sm:$0xff]
    %v3293 = vld [vmem:[#allocation11 + $0x7c0] sm:$0xff]
    %v3294 = vld [vmem:[#allocation11 + $0x7c8] sm:$0xff]
    %v3295 = vld [vmem:[#allocation11 + $0x7d0] sm:$0xff]
    %v3296 = vld [vmem:[#allocation11 + $0x7d8] sm:$0xff]
    %v3297 = vld [vmem:[#allocation11 + $0x7e0] sm:$0xff]
    %v3298 = vld [vmem:[#allocation11 + $0x7e8] sm:$0xff]
    %v3299 = vld [vmem:[#allocation11 + $0x7f0] sm:$0xff]
    %v3300 = vld [vmem:[#allocation11 + $0x7f8] sm:$0xff]
    %v3301 = vld [vmem:[%s9] sm:$0xff]
    %v3303 = vlaneseq
    %v3304 = vshrl.u32 %v3303, 7
    %v3305 = vsub.s32 0, %v3304
    %v3306 = vrot.slane %v3301, %v3305
    %v3307 = vlaneseq
    %v3308 = vshrl.u32 %v3307, 7
    %v3309 = vsub.s32 1, %v3308
    %v3310 = vrot.slane %v3301, %v3309
    %v3311 = vlaneseq
    %v3312 = vshrl.u32 %v3311, 7
    %v3313 = vsub.s32 2, %v3312
    %v3314 = vrot.slane %v3301, %v3313
    %v3315 = vlaneseq
    %v3316 = vshrl.u32 %v3315, 7
    %v3317 = vsub.s32 3, %v3316
    %v3318 = vrot.slane %v3301, %v3317
    %v3319 = vlaneseq
    %v3320 = vshrl.u32 %v3319, 7
    %v3321 = vsub.s32 4, %v3320
    %v3322 = vrot.slane %v3301, %v3321
    %v3323 = vlaneseq
    %v3324 = vshrl.u32 %v3323, 7
    %v3325 = vsub.s32 5, %v3324
    %v3326 = vrot.slane %v3301, %v3325
    %v3327 = vlaneseq
    %v3328 = vshrl.u32 %v3327, 7
    %v3329 = vsub.s32 6, %v3328
    %v3330 = vrot.slane %v3301, %v3329
    %v3331 = vlaneseq
    %v3332 = vshrl.u32 %v3331, 7
    %v3333 = vsub.s32 7, %v3332
    %v3334 = vrot.slane %v3301, %v3333
    %v3599 = vunpack.c.l.b16 %v3045
    %v3600 = vunpack.c.h.b16 %v3045
    %v3601 = vunpack.c.l.b16 %v3046
    %v3602 = vunpack.c.h.b16 %v3046
    %v3603 = vunpack.c.l.b16 %v3047
    %v3604 = vunpack.c.h.b16 %v3047
    %v3605 = vunpack.c.l.b16 %v3048
    %v3606 = vunpack.c.h.b16 %v3048
    %v3607 = vunpack.c.l.b16 %v3049
    %v3608 = vunpack.c.h.b16 %v3049
    %v3609 = vunpack.c.l.b16 %v3050
    %v3610 = vunpack.c.h.b16 %v3050
    %v3611 = vunpack.c.l.b16 %v3051
    %v3612 = vunpack.c.h.b16 %v3051
    %v3613 = vunpack.c.l.b16 %v3052
    %v3614 = vunpack.c.h.b16 %v3052
    %v3615 = vunpack.c.l.b16 %v3053
    %v3616 = vunpack.c.h.b16 %v3053
    %v3617 = vunpack.c.l.b16 %v3054
    %v3618 = vunpack.c.h.b16 %v3054
    %v3619 = vunpack.c.l.b16 %v3055
    %v3620 = vunpack.c.h.b16 %v3055
    %v3621 = vunpack.c.l.b16 %v3056
    %v3622 = vunpack.c.h.b16 %v3056
    %v3623 = vunpack.c.l.b16 %v3057
    %v3624 = vunpack.c.h.b16 %v3057
    %v3625 = vunpack.c.l.b16 %v3058
    %v3626 = vunpack.c.h.b16 %v3058
    %v3627 = vunpack.c.l.b16 %v3059
    %v3628 = vunpack.c.h.b16 %v3059
    %v3629 = vunpack.c.l.b16 %v3060
    %v3630 = vunpack.c.h.b16 %v3060
    %v3631 = vunpack.c.l.b16 %v3061
    %v3632 = vunpack.c.h.b16 %v3061
    %v3633 = vunpack.c.l.b16 %v3062
    %v3634 = vunpack.c.h.b16 %v3062
    %v3635 = vunpack.c.l.b16 %v3063
    %v3636 = vunpack.c.h.b16 %v3063
    %v3637 = vunpack.c.l.b16 %v3064
    %v3638 = vunpack.c.h.b16 %v3064
    %v3639 = vunpack.c.l.b16 %v3065
    %v3640 = vunpack.c.h.b16 %v3065
    %v3641 = vunpack.c.l.b16 %v3066
    %v3642 = vunpack.c.h.b16 %v3066
    %v3643 = vunpack.c.l.b16 %v3067
    %v3644 = vunpack.c.h.b16 %v3067
    %v3645 = vunpack.c.l.b16 %v3068
    %v3646 = vunpack.c.h.b16 %v3068
    %v3647 = vunpack.c.l.b16 %v3069
    %v3648 = vunpack.c.h.b16 %v3069
    %v3649 = vunpack.c.l.b16 %v3070
    %v3650 = vunpack.c.h.b16 %v3070
    %v3651 = vunpack.c.l.b16 %v3071
    %v3652 = vunpack.c.h.b16 %v3071
    %v3653 = vunpack.c.l.b16 %v3072
    %v3654 = vunpack.c.h.b16 %v3072
    %v3655 = vunpack.c.l.b16 %v3073
    %v3656 = vunpack.c.h.b16 %v3073
    %v3657 = vunpack.c.l.b16 %v3074
    %v3658 = vunpack.c.h.b16 %v3074
    %v3659 = vunpack.c.l.b16 %v3075
    %v3660 = vunpack.c.h.b16 %v3075
    %v3661 = vunpack.c.l.b16 %v3076
    %v3662 = vunpack.c.h.b16 %v3076
    %v3663 = vunpack.c.l.b16 %v3077
    %v3664 = vunpack.c.h.b16 %v3077
    %v3665 = vunpack.c.l.b16 %v3078
    %v3666 = vunpack.c.h.b16 %v3078
    %v3667 = vunpack.c.l.b16 %v3079
    %v3668 = vunpack.c.h.b16 %v3079
    %v3669 = vunpack.c.l.b16 %v3080
    %v3670 = vunpack.c.h.b16 %v3080
    %v3671 = vunpack.c.l.b16 %v3081
    %v3672 = vunpack.c.h.b16 %v3081
    %v3673 = vunpack.c.l.b16 %v3082
    %v3674 = vunpack.c.h.b16 %v3082
    %v3675 = vunpack.c.l.b16 %v3083
    %v3676 = vunpack.c.h.b16 %v3083
    %v3677 = vunpack.c.l.b16 %v3084
    %v3678 = vunpack.c.h.b16 %v3084
    %v3679 = vunpack.c.l.b16 %v3085
    %v3680 = vunpack.c.h.b16 %v3085
    %v3681 = vunpack.c.l.b16 %v3086
    %v3682 = vunpack.c.h.b16 %v3086
    %v3683 = vunpack.c.l.b16 %v3087
    %v3684 = vunpack.c.h.b16 %v3087
    %v3685 = vunpack.c.l.b16 %v3088
    %v3686 = vunpack.c.h.b16 %v3088
    %v3687 = vunpack.c.l.b16 %v3089
    %v3688 = vunpack.c.h.b16 %v3089
    %v3689 = vunpack.c.l.b16 %v3090
    %v3690 = vunpack.c.h.b16 %v3090
    %v3691 = vunpack.c.l.b16 %v3091
    %v3692 = vunpack.c.h.b16 %v3091
    %v3693 = vunpack.c.l.b16 %v3092
    %v3694 = vunpack.c.h.b16 %v3092
    %v3695 = vunpack.c.l.b16 %v3093
    %v3696 = vunpack.c.h.b16 %v3093
    %v3697 = vunpack.c.l.b16 %v3094
    %v3698 = vunpack.c.h.b16 %v3094
    %v3699 = vunpack.c.l.b16 %v3095
    %v3700 = vunpack.c.h.b16 %v3095
    %v3701 = vunpack.c.l.b16 %v3096
    %v3702 = vunpack.c.h.b16 %v3096
    %v3703 = vunpack.c.l.b16 %v3097
    %v3704 = vunpack.c.h.b16 %v3097
    %v3705 = vunpack.c.l.b16 %v3098
    %v3706 = vunpack.c.h.b16 %v3098
    %v3707 = vunpack.c.l.b16 %v3099
    %v3708 = vunpack.c.h.b16 %v3099
    %v3709 = vunpack.c.l.b16 %v3100
    %v3710 = vunpack.c.h.b16 %v3100
    %v3711 = vunpack.c.l.b16 %v3101
    %v3712 = vunpack.c.h.b16 %v3101
    %v3713 = vunpack.c.l.b16 %v3102
    %v3714 = vunpack.c.h.b16 %v3102
    %v3715 = vunpack.c.l.b16 %v3103
    %v3716 = vunpack.c.h.b16 %v3103
    %v3717 = vunpack.c.l.b16 %v3104
    %v3718 = vunpack.c.h.b16 %v3104
    %v3719 = vunpack.c.l.b16 %v3105
    %v3720 = vunpack.c.h.b16 %v3105
    %v3721 = vunpack.c.l.b16 %v3106
    %v3722 = vunpack.c.h.b16 %v3106
    %v3723 = vunpack.c.l.b16 %v3107
    %v3724 = vunpack.c.h.b16 %v3107
    %v3725 = vunpack.c.l.b16 %v3108
    %v3726 = vunpack.c.h.b16 %v3108
    %v3727 = vunpack.c.l.b16 %v3109
    %v3728 = vunpack.c.h.b16 %v3109
    %v3729 = vunpack.c.l.b16 %v3110
    %v3730 = vunpack.c.h.b16 %v3110
    %v3731 = vunpack.c.l.b16 %v3111
    %v3732 = vunpack.c.h.b16 %v3111
    %v3733 = vunpack.c.l.b16 %v3112
    %v3734 = vunpack.c.h.b16 %v3112
    %v3735 = vunpack.c.l.b16 %v3113
    %v3736 = vunpack.c.h.b16 %v3113
    %v3737 = vunpack.c.l.b16 %v3114
    %v3738 = vunpack.c.h.b16 %v3114
    %v3739 = vunpack.c.l.b16 %v3115
    %v3740 = vunpack.c.h.b16 %v3115
    %v3741 = vunpack.c.l.b16 %v3116
    %v3742 = vunpack.c.h.b16 %v3116
    %v3743 = vunpack.c.l.b16 %v3117
    %v3744 = vunpack.c.h.b16 %v3117
    %v3745 = vunpack.c.l.b16 %v3118
    %v3746 = vunpack.c.h.b16 %v3118
    %v3747 = vunpack.c.l.b16 %v3119
    %v3748 = vunpack.c.h.b16 %v3119
    %v3749 = vunpack.c.l.b16 %v3120
    %v3750 = vunpack.c.h.b16 %v3120
    %v3751 = vunpack.c.l.b16 %v3121
    %v3752 = vunpack.c.h.b16 %v3121
    %v3753 = vunpack.c.l.b16 %v3122
    %v3754 = vunpack.c.h.b16 %v3122
    %v3755 = vunpack.c.l.b16 %v3123
    %v3756 = vunpack.c.h.b16 %v3123
    %v3757 = vunpack.c.l.b16 %v3124
    %v3758 = vunpack.c.h.b16 %v3124
    %v3759 = vunpack.c.l.b16 %v3125
    %v3760 = vunpack.c.h.b16 %v3125
    %v3761 = vunpack.c.l.b16 %v3126
    %v3762 = vunpack.c.h.b16 %v3126
    %v3763 = vunpack.c.l.b16 %v3127
    %v3764 = vunpack.c.h.b16 %v3127
    %v3765 = vunpack.c.l.b16 %v3128
    %v3766 = vunpack.c.h.b16 %v3128
    %v3767 = vunpack.c.l.b16 %v3129
    %v3768 = vunpack.c.h.b16 %v3129
    %v3769 = vunpack.c.l.b16 %v3130
    %v3770 = vunpack.c.h.b16 %v3130
    %v3771 = vunpack.c.l.b16 %v3131
    %v3772 = vunpack.c.h.b16 %v3131
    %v3773 = vunpack.c.l.b16 %v3132
    %v3774 = vunpack.c.h.b16 %v3132
    %v3775 = vunpack.c.l.b16 %v3133
    %v3776 = vunpack.c.h.b16 %v3133
    %v3777 = vunpack.c.l.b16 %v3134
    %v3778 = vunpack.c.h.b16 %v3134
    %v3779 = vunpack.c.l.b16 %v3135
    %v3780 = vunpack.c.h.b16 %v3135
    %v3781 = vunpack.c.l.b16 %v3136
    %v3782 = vunpack.c.h.b16 %v3136
    %v3783 = vunpack.c.l.b16 %v3137
    %v3784 = vunpack.c.h.b16 %v3137
    %v3785 = vunpack.c.l.b16 %v3138
    %v3786 = vunpack.c.h.b16 %v3138
    %v3787 = vunpack.c.l.b16 %v3139
    %v3788 = vunpack.c.h.b16 %v3139
    %v3789 = vunpack.c.l.b16 %v3140
    %v3790 = vunpack.c.h.b16 %v3140
    %v3791 = vunpack.c.l.b16 %v3141
    %v3792 = vunpack.c.h.b16 %v3141
    %v3793 = vunpack.c.l.b16 %v3142
    %v3794 = vunpack.c.h.b16 %v3142
    %v3795 = vunpack.c.l.b16 %v3143
    %v3796 = vunpack.c.h.b16 %v3143
    %v3797 = vunpack.c.l.b16 %v3144
    %v3798 = vunpack.c.h.b16 %v3144
    %v3799 = vunpack.c.l.b16 %v3145
    %v3800 = vunpack.c.h.b16 %v3145
    %v3801 = vunpack.c.l.b16 %v3146
    %v3802 = vunpack.c.h.b16 %v3146
    %v3803 = vunpack.c.l.b16 %v3147
    %v3804 = vunpack.c.h.b16 %v3147
    %v3805 = vunpack.c.l.b16 %v3148
    %v3806 = vunpack.c.h.b16 %v3148
    %v3807 = vunpack.c.l.b16 %v3149
    %v3808 = vunpack.c.h.b16 %v3149
    %v3809 = vunpack.c.l.b16 %v3150
    %v3810 = vunpack.c.h.b16 %v3150
    %v3811 = vunpack.c.l.b16 %v3151
    %v3812 = vunpack.c.h.b16 %v3151
    %v3813 = vunpack.c.l.b16 %v3152
    %v3814 = vunpack.c.h.b16 %v3152
    %v3815 = vunpack.c.l.b16 %v3153
    %v3816 = vunpack.c.h.b16 %v3153
    %v3817 = vunpack.c.l.b16 %v3154
    %v3818 = vunpack.c.h.b16 %v3154
    %v3819 = vunpack.c.l.b16 %v3155
    %v3820 = vunpack.c.h.b16 %v3155
    %v3821 = vunpack.c.l.b16 %v3156
    %v3822 = vunpack.c.h.b16 %v3156
    %v3823 = vunpack.c.l.b16 %v3157
    %v3824 = vunpack.c.h.b16 %v3157
    %v3825 = vunpack.c.l.b16 %v3158
    %v3826 = vunpack.c.h.b16 %v3158
    %v3827 = vunpack.c.l.b16 %v3159
    %v3828 = vunpack.c.h.b16 %v3159
    %v3829 = vunpack.c.l.b16 %v3160
    %v3830 = vunpack.c.h.b16 %v3160
    %v3831 = vunpack.c.l.b16 %v3161
    %v3832 = vunpack.c.h.b16 %v3161
    %v3833 = vunpack.c.l.b16 %v3162
    %v3834 = vunpack.c.h.b16 %v3162
    %v3835 = vunpack.c.l.b16 %v3163
    %v3836 = vunpack.c.h.b16 %v3163
    %v3837 = vunpack.c.l.b16 %v3164
    %v3838 = vunpack.c.h.b16 %v3164
    %v3839 = vunpack.c.l.b16 %v3165
    %v3840 = vunpack.c.h.b16 %v3165
    %v3841 = vunpack.c.l.b16 %v3166
    %v3842 = vunpack.c.h.b16 %v3166
    %v3843 = vunpack.c.l.b16 %v3167
    %v3844 = vunpack.c.h.b16 %v3167
    %v3845 = vunpack.c.l.b16 %v3168
    %v3846 = vunpack.c.h.b16 %v3168
    %v3847 = vunpack.c.l.b16 %v3169
    %v3848 = vunpack.c.h.b16 %v3169
    %v3849 = vunpack.c.l.b16 %v3170
    %v3850 = vunpack.c.h.b16 %v3170
    %v3851 = vunpack.c.l.b16 %v3171
    %v3852 = vunpack.c.h.b16 %v3171
    %v3853 = vunpack.c.l.b16 %v3172
    %v3854 = vunpack.c.h.b16 %v3172
    %v3855 = vunpack.c.l.b16 %v3173
    %v3856 = vunpack.c.h.b16 %v3173
    %v3857 = vunpack.c.l.b16 %v3174
    %v3858 = vunpack.c.h.b16 %v3174
    %v3859 = vunpack.c.l.b16 %v3175
    %v3860 = vunpack.c.h.b16 %v3175
    %v3861 = vunpack.c.l.b16 %v3176
    %v3862 = vunpack.c.h.b16 %v3176
    %v3863 = vunpack.c.l.b16 %v3177
    %v3864 = vunpack.c.h.b16 %v3177
    %v3865 = vunpack.c.l.b16 %v3178
    %v3866 = vunpack.c.h.b16 %v3178
    %v3867 = vunpack.c.l.b16 %v3179
    %v3868 = vunpack.c.h.b16 %v3179
    %v3869 = vunpack.c.l.b16 %v3180
    %v3870 = vunpack.c.h.b16 %v3180
    %v3871 = vunpack.c.l.b16 %v3181
    %v3872 = vunpack.c.h.b16 %v3181
    %v3873 = vunpack.c.l.b16 %v3182
    %v3874 = vunpack.c.h.b16 %v3182
    %v3875 = vunpack.c.l.b16 %v3183
    %v3876 = vunpack.c.h.b16 %v3183
    %v3877 = vunpack.c.l.b16 %v3184
    %v3878 = vunpack.c.h.b16 %v3184
    %v3879 = vunpack.c.l.b16 %v3185
    %v3880 = vunpack.c.h.b16 %v3185
    %v3881 = vunpack.c.l.b16 %v3186
    %v3882 = vunpack.c.h.b16 %v3186
    %v3883 = vunpack.c.l.b16 %v3187
    %v3884 = vunpack.c.h.b16 %v3187
    %v3885 = vunpack.c.l.b16 %v3188
    %v3886 = vunpack.c.h.b16 %v3188
    %v3887 = vunpack.c.l.b16 %v3189
    %v3888 = vunpack.c.h.b16 %v3189
    %v3889 = vunpack.c.l.b16 %v3190
    %v3890 = vunpack.c.h.b16 %v3190
    %v3891 = vunpack.c.l.b16 %v3191
    %v3892 = vunpack.c.h.b16 %v3191
    %v3893 = vunpack.c.l.b16 %v3192
    %v3894 = vunpack.c.h.b16 %v3192
    %v3895 = vunpack.c.l.b16 %v3193
    %v3896 = vunpack.c.h.b16 %v3193
    %v3897 = vunpack.c.l.b16 %v3194
    %v3898 = vunpack.c.h.b16 %v3194
    %v3899 = vunpack.c.l.b16 %v3195
    %v3900 = vunpack.c.h.b16 %v3195
    %v3901 = vunpack.c.l.b16 %v3196
    %v3902 = vunpack.c.h.b16 %v3196
    %v3903 = vunpack.c.l.b16 %v3197
    %v3904 = vunpack.c.h.b16 %v3197
    %v3905 = vunpack.c.l.b16 %v3198
    %v3906 = vunpack.c.h.b16 %v3198
    %v3907 = vunpack.c.l.b16 %v3199
    %v3908 = vunpack.c.h.b16 %v3199
    %v3909 = vunpack.c.l.b16 %v3200
    %v3910 = vunpack.c.h.b16 %v3200
    %v3911 = vunpack.c.l.b16 %v3201
    %v3912 = vunpack.c.h.b16 %v3201
    %v3913 = vunpack.c.l.b16 %v3202
    %v3914 = vunpack.c.h.b16 %v3202
    %v3915 = vunpack.c.l.b16 %v3203
    %v3916 = vunpack.c.h.b16 %v3203
    %v3917 = vunpack.c.l.b16 %v3204
    %v3918 = vunpack.c.h.b16 %v3204
    %v3919 = vunpack.c.l.b16 %v3205
    %v3920 = vunpack.c.h.b16 %v3205
    %v3921 = vunpack.c.l.b16 %v3206
    %v3922 = vunpack.c.h.b16 %v3206
    %v3923 = vunpack.c.l.b16 %v3207
    %v3924 = vunpack.c.h.b16 %v3207
    %v3925 = vunpack.c.l.b16 %v3208
    %v3926 = vunpack.c.h.b16 %v3208
    %v3927 = vunpack.c.l.b16 %v3209
    %v3928 = vunpack.c.h.b16 %v3209
    %v3929 = vunpack.c.l.b16 %v3210
    %v3930 = vunpack.c.h.b16 %v3210
    %v3931 = vunpack.c.l.b16 %v3211
    %v3932 = vunpack.c.h.b16 %v3211
    %v3933 = vunpack.c.l.b16 %v3212
    %v3934 = vunpack.c.h.b16 %v3212
    %v3935 = vunpack.c.l.b16 %v3213
    %v3936 = vunpack.c.h.b16 %v3213
    %v3937 = vunpack.c.l.b16 %v3214
    %v3938 = vunpack.c.h.b16 %v3214
    %v3939 = vunpack.c.l.b16 %v3215
    %v3940 = vunpack.c.h.b16 %v3215
    %v3941 = vunpack.c.l.b16 %v3216
    %v3942 = vunpack.c.h.b16 %v3216
    %v3943 = vunpack.c.l.b16 %v3217
    %v3944 = vunpack.c.h.b16 %v3217
    %v3945 = vunpack.c.l.b16 %v3218
    %v3946 = vunpack.c.h.b16 %v3218
    %v3947 = vunpack.c.l.b16 %v3219
    %v3948 = vunpack.c.h.b16 %v3219
    %v3949 = vunpack.c.l.b16 %v3220
    %v3950 = vunpack.c.h.b16 %v3220
    %v3951 = vunpack.c.l.b16 %v3221
    %v3952 = vunpack.c.h.b16 %v3221
    %v3953 = vunpack.c.l.b16 %v3222
    %v3954 = vunpack.c.h.b16 %v3222
    %v3955 = vunpack.c.l.b16 %v3223
    %v3956 = vunpack.c.h.b16 %v3223
    %v3957 = vunpack.c.l.b16 %v3224
    %v3958 = vunpack.c.h.b16 %v3224
    %v3959 = vunpack.c.l.b16 %v3225
    %v3960 = vunpack.c.h.b16 %v3225
    %v3961 = vunpack.c.l.b16 %v3226
    %v3962 = vunpack.c.h.b16 %v3226
    %v3963 = vunpack.c.l.b16 %v3227
    %v3964 = vunpack.c.h.b16 %v3227
    %v3965 = vunpack.c.l.b16 %v3228
    %v3966 = vunpack.c.h.b16 %v3228
    %v3967 = vunpack.c.l.b16 %v3229
    %v3968 = vunpack.c.h.b16 %v3229
    %v3969 = vunpack.c.l.b16 %v3230
    %v3970 = vunpack.c.h.b16 %v3230
    %v3971 = vunpack.c.l.b16 %v3231
    %v3972 = vunpack.c.h.b16 %v3231
    %v3973 = vunpack.c.l.b16 %v3232
    %v3974 = vunpack.c.h.b16 %v3232
    %v3975 = vunpack.c.l.b16 %v3233
    %v3976 = vunpack.c.h.b16 %v3233
    %v3977 = vunpack.c.l.b16 %v3234
    %v3978 = vunpack.c.h.b16 %v3234
    %v3979 = vunpack.c.l.b16 %v3235
    %v3980 = vunpack.c.h.b16 %v3235
    %v3981 = vunpack.c.l.b16 %v3236
    %v3982 = vunpack.c.h.b16 %v3236
    %v3983 = vunpack.c.l.b16 %v3237
    %v3984 = vunpack.c.h.b16 %v3237
    %v3985 = vunpack.c.l.b16 %v3238
    %v3986 = vunpack.c.h.b16 %v3238
    %v3987 = vunpack.c.l.b16 %v3239
    %v3988 = vunpack.c.h.b16 %v3239
    %v3989 = vunpack.c.l.b16 %v3240
    %v3990 = vunpack.c.h.b16 %v3240
    %v3991 = vunpack.c.l.b16 %v3241
    %v3992 = vunpack.c.h.b16 %v3241
    %v3993 = vunpack.c.l.b16 %v3242
    %v3994 = vunpack.c.h.b16 %v3242
    %v3995 = vunpack.c.l.b16 %v3243
    %v3996 = vunpack.c.h.b16 %v3243
    %v3997 = vunpack.c.l.b16 %v3244
    %v3998 = vunpack.c.h.b16 %v3244
    %v3999 = vunpack.c.l.b16 %v3245
    %v4000 = vunpack.c.h.b16 %v3245
    %v4001 = vunpack.c.l.b16 %v3246
    %v4002 = vunpack.c.h.b16 %v3246
    %v4003 = vunpack.c.l.b16 %v3247
    %v4004 = vunpack.c.h.b16 %v3247
    %v4005 = vunpack.c.l.b16 %v3248
    %v4006 = vunpack.c.h.b16 %v3248
    %v4007 = vunpack.c.l.b16 %v3249
    %v4008 = vunpack.c.h.b16 %v3249
    %v4009 = vunpack.c.l.b16 %v3250
    %v4010 = vunpack.c.h.b16 %v3250
    %v4011 = vunpack.c.l.b16 %v3251
    %v4012 = vunpack.c.h.b16 %v3251
    %v4013 = vunpack.c.l.b16 %v3252
    %v4014 = vunpack.c.h.b16 %v3252
    %v4015 = vunpack.c.l.b16 %v3253
    %v4016 = vunpack.c.h.b16 %v3253
    %v4017 = vunpack.c.l.b16 %v3254
    %v4018 = vunpack.c.h.b16 %v3254
    %v4019 = vunpack.c.l.b16 %v3255
    %v4020 = vunpack.c.h.b16 %v3255
    %v4021 = vunpack.c.l.b16 %v3256
    %v4022 = vunpack.c.h.b16 %v3256
    %v4023 = vunpack.c.l.b16 %v3257
    %v4024 = vunpack.c.h.b16 %v3257
    %v4025 = vunpack.c.l.b16 %v3258
    %v4026 = vunpack.c.h.b16 %v3258
    %v4027 = vunpack.c.l.b16 %v3259
    %v4028 = vunpack.c.h.b16 %v3259
    %v4029 = vunpack.c.l.b16 %v3260
    %v4030 = vunpack.c.h.b16 %v3260
    %v4031 = vunpack.c.l.b16 %v3261
    %v4032 = vunpack.c.h.b16 %v3261
    %v4033 = vunpack.c.l.b16 %v3262
    %v4034 = vunpack.c.h.b16 %v3262
    %v4035 = vunpack.c.l.b16 %v3263
    %v4036 = vunpack.c.h.b16 %v3263
    %v4037 = vunpack.c.l.b16 %v3264
    %v4038 = vunpack.c.h.b16 %v3264
    %v4039 = vunpack.c.l.b16 %v3265
    %v4040 = vunpack.c.h.b16 %v3265
    %v4041 = vunpack.c.l.b16 %v3266
    %v4042 = vunpack.c.h.b16 %v3266
    %v4043 = vunpack.c.l.b16 %v3267
    %v4044 = vunpack.c.h.b16 %v3267
    %v4045 = vunpack.c.l.b16 %v3268
    %v4046 = vunpack.c.h.b16 %v3268
    %v4047 = vunpack.c.l.b16 %v3269
    %v4048 = vunpack.c.h.b16 %v3269
    %v4049 = vunpack.c.l.b16 %v3270
    %v4050 = vunpack.c.h.b16 %v3270
    %v4051 = vunpack.c.l.b16 %v3271
    %v4052 = vunpack.c.h.b16 %v3271
    %v4053 = vunpack.c.l.b16 %v3272
    %v4054 = vunpack.c.h.b16 %v3272
    %v4055 = vunpack.c.l.b16 %v3273
    %v4056 = vunpack.c.h.b16 %v3273
    %v4057 = vunpack.c.l.b16 %v3274
    %v4058 = vunpack.c.h.b16 %v3274
    %v4059 = vunpack.c.l.b16 %v3275
    %v4060 = vunpack.c.h.b16 %v3275
    %v4061 = vunpack.c.l.b16 %v3276
    %v4062 = vunpack.c.h.b16 %v3276
    %v4063 = vunpack.c.l.b16 %v3277
    %v4064 = vunpack.c.h.b16 %v3277
    %v4065 = vunpack.c.l.b16 %v3278
    %v4066 = vunpack.c.h.b16 %v3278
    %v4067 = vunpack.c.l.b16 %v3279
    %v4068 = vunpack.c.h.b16 %v3279
    %v4069 = vunpack.c.l.b16 %v3280
    %v4070 = vunpack.c.h.b16 %v3280
    %v4071 = vunpack.c.l.b16 %v3281
    %v4072 = vunpack.c.h.b16 %v3281
    %v4073 = vunpack.c.l.b16 %v3282
    %v4074 = vunpack.c.h.b16 %v3282
    %v4075 = vunpack.c.l.b16 %v3283
    %v4076 = vunpack.c.h.b16 %v3283
    %v4077 = vunpack.c.l.b16 %v3284
    %v4078 = vunpack.c.h.b16 %v3284
    %v4079 = vunpack.c.l.b16 %v3285
    %v4080 = vunpack.c.h.b16 %v3285
    %v4081 = vunpack.c.l.b16 %v3286
    %v4082 = vunpack.c.h.b16 %v3286
    %v4083 = vunpack.c.l.b16 %v3287
    %v4084 = vunpack.c.h.b16 %v3287
    %v4085 = vunpack.c.l.b16 %v3288
    %v4086 = vunpack.c.h.b16 %v3288
    %v4087 = vunpack.c.l.b16 %v3289
    %v4088 = vunpack.c.h.b16 %v3289
    %v4089 = vunpack.c.l.b16 %v3290
    %v4090 = vunpack.c.h.b16 %v3290
    %v4091 = vunpack.c.l.b16 %v3291
    %v4092 = vunpack.c.h.b16 %v3291
    %v4093 = vunpack.c.l.b16 %v3292
    %v4094 = vunpack.c.h.b16 %v3292
    %v4095 = vunpack.c.l.b16 %v3293
    %v4096 = vunpack.c.h.b16 %v3293
    %v4097 = vunpack.c.l.b16 %v3294
    %v4098 = vunpack.c.h.b16 %v3294
    %v4099 = vunpack.c.l.b16 %v3295
    %v4100 = vunpack.c.h.b16 %v3295
    %v4101 = vunpack.c.l.b16 %v3296
    %v4102 = vunpack.c.h.b16 %v3296
    %v4103 = vunpack.c.l.b16 %v3297
    %v4104 = vunpack.c.h.b16 %v3297
    %v4105 = vunpack.c.l.b16 %v3298
    %v4106 = vunpack.c.h.b16 %v3298
    %v4107 = vunpack.c.l.b16 %v3299
    %v4108 = vunpack.c.h.b16 %v3299
    %v4109 = vunpack.c.l.b16 %v3300
    %v4110 = vunpack.c.h.b16 %v3300
    %v4111 = vpack.c.b16 %v3607, %v3599
    %v4112 = vpack.c.b16 %v3608, %v3600
    %v4113 = vpack.c.b16 %v3609, %v3601
    %v4114 = vpack.c.b16 %v3610, %v3602
    %v4115 = vpack.c.b16 %v3611, %v3603
    %v4116 = vpack.c.b16 %v3612, %v3604
    %v4117 = vpack.c.b16 %v3613, %v3605
    %v4118 = vpack.c.b16 %v3614, %v3606
    %v4119 = vpack.c.b16 %v3623, %v3615
    %v4120 = vpack.c.b16 %v3624, %v3616
    %v4121 = vpack.c.b16 %v3625, %v3617
    %v4122 = vpack.c.b16 %v3626, %v3618
    %v4123 = vpack.c.b16 %v3627, %v3619
    %v4124 = vpack.c.b16 %v3628, %v3620
    %v4125 = vpack.c.b16 %v3629, %v3621
    %v4126 = vpack.c.b16 %v3630, %v3622
    %v4127 = vpack.c.b16 %v3639, %v3631
    %v4128 = vpack.c.b16 %v3640, %v3632
    %v4129 = vpack.c.b16 %v3641, %v3633
    %v4130 = vpack.c.b16 %v3642, %v3634
    %v4131 = vpack.c.b16 %v3643, %v3635
    %v4132 = vpack.c.b16 %v3644, %v3636
    %v4133 = vpack.c.b16 %v3645, %v3637
    %v4134 = vpack.c.b16 %v3646, %v3638
    %v4135 = vpack.c.b16 %v3655, %v3647
    %v4136 = vpack.c.b16 %v3656, %v3648
    %v4137 = vpack.c.b16 %v3657, %v3649
    %v4138 = vpack.c.b16 %v3658, %v3650
    %v4139 = vpack.c.b16 %v3659, %v3651
    %v4140 = vpack.c.b16 %v3660, %v3652
    %v4141 = vpack.c.b16 %v3661, %v3653
    %v4142 = vpack.c.b16 %v3662, %v3654
    %v4143 = vpack.c.b16 %v3671, %v3663
    %v4144 = vpack.c.b16 %v3672, %v3664
    %v4145 = vpack.c.b16 %v3673, %v3665
    %v4146 = vpack.c.b16 %v3674, %v3666
    %v4147 = vpack.c.b16 %v3675, %v3667
    %v4148 = vpack.c.b16 %v3676, %v3668
    %v4149 = vpack.c.b16 %v3677, %v3669
    %v4150 = vpack.c.b16 %v3678, %v3670
    %v4151 = vpack.c.b16 %v3687, %v3679
    %v4152 = vpack.c.b16 %v3688, %v3680
    %v4153 = vpack.c.b16 %v3689, %v3681
    %v4154 = vpack.c.b16 %v3690, %v3682
    %v4155 = vpack.c.b16 %v3691, %v3683
    %v4156 = vpack.c.b16 %v3692, %v3684
    %v4157 = vpack.c.b16 %v3693, %v3685
    %v4158 = vpack.c.b16 %v3694, %v3686
    %v4159 = vpack.c.b16 %v3703, %v3695
    %v4160 = vpack.c.b16 %v3704, %v3696
    %v4161 = vpack.c.b16 %v3705, %v3697
    %v4162 = vpack.c.b16 %v3706, %v3698
    %v4163 = vpack.c.b16 %v3707, %v3699
    %v4164 = vpack.c.b16 %v3708, %v3700
    %v4165 = vpack.c.b16 %v3709, %v3701
    %v4166 = vpack.c.b16 %v3710, %v3702
    %v4167 = vpack.c.b16 %v3719, %v3711
    %v4168 = vpack.c.b16 %v3720, %v3712
    %v4169 = vpack.c.b16 %v3721, %v3713
    %v4170 = vpack.c.b16 %v3722, %v3714
    %v4171 = vpack.c.b16 %v3723, %v3715
    %v4172 = vpack.c.b16 %v3724, %v3716
    %v4173 = vpack.c.b16 %v3725, %v3717
    %v4174 = vpack.c.b16 %v3726, %v3718
    %v4175 = vpack.c.b16 %v3735, %v3727
    %v4176 = vpack.c.b16 %v3736, %v3728
    %v4177 = vpack.c.b16 %v3737, %v3729
    %v4178 = vpack.c.b16 %v3738, %v3730
    %v4179 = vpack.c.b16 %v3739, %v3731
    %v4180 = vpack.c.b16 %v3740, %v3732
    %v4181 = vpack.c.b16 %v3741, %v3733
    %v4182 = vpack.c.b16 %v3742, %v3734
    %v4183 = vpack.c.b16 %v3751, %v3743
    %v4184 = vpack.c.b16 %v3752, %v3744
    %v4185 = vpack.c.b16 %v3753, %v3745
    %v4186 = vpack.c.b16 %v3754, %v3746
    %v4187 = vpack.c.b16 %v3755, %v3747
    %v4188 = vpack.c.b16 %v3756, %v3748
    %v4189 = vpack.c.b16 %v3757, %v3749
    %v4190 = vpack.c.b16 %v3758, %v3750
    %v4191 = vpack.c.b16 %v3767, %v3759
    %v4192 = vpack.c.b16 %v3768, %v3760
    %v4193 = vpack.c.b16 %v3769, %v3761
    %v4194 = vpack.c.b16 %v3770, %v3762
    %v4195 = vpack.c.b16 %v3771, %v3763
    %v4196 = vpack.c.b16 %v3772, %v3764
    %v4197 = vpack.c.b16 %v3773, %v3765
    %v4198 = vpack.c.b16 %v3774, %v3766
    %v4199 = vpack.c.b16 %v3783, %v3775
    %v4200 = vpack.c.b16 %v3784, %v3776
    %v4201 = vpack.c.b16 %v3785, %v3777
    %v4202 = vpack.c.b16 %v3786, %v3778
    %v4203 = vpack.c.b16 %v3787, %v3779
    %v4204 = vpack.c.b16 %v3788, %v3780
    %v4205 = vpack.c.b16 %v3789, %v3781
    %v4206 = vpack.c.b16 %v3790, %v3782
    %v4207 = vpack.c.b16 %v3799, %v3791
    %v4208 = vpack.c.b16 %v3800, %v3792
    %v4209 = vpack.c.b16 %v3801, %v3793
    %v4210 = vpack.c.b16 %v3802, %v3794
    %v4211 = vpack.c.b16 %v3803, %v3795
    %v4212 = vpack.c.b16 %v3804, %v3796
    %v4213 = vpack.c.b16 %v3805, %v3797
    %v4214 = vpack.c.b16 %v3806, %v3798
    %v4215 = vpack.c.b16 %v3815, %v3807
    %v4216 = vpack.c.b16 %v3816, %v3808
    %v4217 = vpack.c.b16 %v3817, %v3809
    %v4218 = vpack.c.b16 %v3818, %v3810
    %v4219 = vpack.c.b16 %v3819, %v3811
    %v4220 = vpack.c.b16 %v3820, %v3812
    %v4221 = vpack.c.b16 %v3821, %v3813
    %v4222 = vpack.c.b16 %v3822, %v3814
    %v4223 = vpack.c.b16 %v3831, %v3823
    %v4224 = vpack.c.b16 %v3832, %v3824
    %v4225 = vpack.c.b16 %v3833, %v3825
    %v4226 = vpack.c.b16 %v3834, %v3826
    %v4227 = vpack.c.b16 %v3835, %v3827
    %v4228 = vpack.c.b16 %v3836, %v3828
    %v4229 = vpack.c.b16 %v3837, %v3829
    %v4230 = vpack.c.b16 %v3838, %v3830
    %v4231 = vpack.c.b16 %v3847, %v3839
    %v4232 = vpack.c.b16 %v3848, %v3840
    %v4233 = vpack.c.b16 %v3849, %v3841
    %v4234 = vpack.c.b16 %v3850, %v3842
    %v4235 = vpack.c.b16 %v3851, %v3843
    %v4236 = vpack.c.b16 %v3852, %v3844
    %v4237 = vpack.c.b16 %v3853, %v3845
    %v4238 = vpack.c.b16 %v3854, %v3846
    %v4239 = vpack.c.b16 %v3863, %v3855
    %v4240 = vpack.c.b16 %v3864, %v3856
    %v4241 = vpack.c.b16 %v3865, %v3857
    %v4242 = vpack.c.b16 %v3866, %v3858
    %v4243 = vpack.c.b16 %v3867, %v3859
    %v4244 = vpack.c.b16 %v3868, %v3860
    %v4245 = vpack.c.b16 %v3869, %v3861
    %v4246 = vpack.c.b16 %v3870, %v3862
    %v4247 = vpack.c.b16 %v3879, %v3871
    %v4248 = vpack.c.b16 %v3880, %v3872
    %v4249 = vpack.c.b16 %v3881, %v3873
    %v4250 = vpack.c.b16 %v3882, %v3874
    %v4251 = vpack.c.b16 %v3883, %v3875
    %v4252 = vpack.c.b16 %v3884, %v3876
    %v4253 = vpack.c.b16 %v3885, %v3877
    %v4254 = vpack.c.b16 %v3886, %v3878
    %v4255 = vpack.c.b16 %v3895, %v3887
    %v4256 = vpack.c.b16 %v3896, %v3888
    %v4257 = vpack.c.b16 %v3897, %v3889
    %v4258 = vpack.c.b16 %v3898, %v3890
    %v4259 = vpack.c.b16 %v3899, %v3891
    %v4260 = vpack.c.b16 %v3900, %v3892
    %v4261 = vpack.c.b16 %v3901, %v3893
    %v4262 = vpack.c.b16 %v3902, %v3894
    %v4263 = vpack.c.b16 %v3911, %v3903
    %v4264 = vpack.c.b16 %v3912, %v3904
    %v4265 = vpack.c.b16 %v3913, %v3905
    %v4266 = vpack.c.b16 %v3914, %v3906
    %v4267 = vpack.c.b16 %v3915, %v3907
    %v4268 = vpack.c.b16 %v3916, %v3908
    %v4269 = vpack.c.b16 %v3917, %v3909
    %v4270 = vpack.c.b16 %v3918, %v3910
    %v4271 = vpack.c.b16 %v3927, %v3919
    %v4272 = vpack.c.b16 %v3928, %v3920
    %v4273 = vpack.c.b16 %v3929, %v3921
    %v4274 = vpack.c.b16 %v3930, %v3922
    %v4275 = vpack.c.b16 %v3931, %v3923
    %v4276 = vpack.c.b16 %v3932, %v3924
    %v4277 = vpack.c.b16 %v3933, %v3925
    %v4278 = vpack.c.b16 %v3934, %v3926
    %v4279 = vpack.c.b16 %v3943, %v3935
    %v4280 = vpack.c.b16 %v3944, %v3936
    %v4281 = vpack.c.b16 %v3945, %v3937
    %v4282 = vpack.c.b16 %v3946, %v3938
    %v4283 = vpack.c.b16 %v3947, %v3939
    %v4284 = vpack.c.b16 %v3948, %v3940
    %v4285 = vpack.c.b16 %v3949, %v3941
    %v4286 = vpack.c.b16 %v3950, %v3942
    %v4287 = vpack.c.b16 %v3959, %v3951
    %v4288 = vpack.c.b16 %v3960, %v3952
    %v4289 = vpack.c.b16 %v3961, %v3953
    %v4290 = vpack.c.b16 %v3962, %v3954
    %v4291 = vpack.c.b16 %v3963, %v3955
    %v4292 = vpack.c.b16 %v3964, %v3956
    %v4293 = vpack.c.b16 %v3965, %v3957
    %v4294 = vpack.c.b16 %v3966, %v3958
    %v4295 = vpack.c.b16 %v3975, %v3967
    %v4296 = vpack.c.b16 %v3976, %v3968
    %v4297 = vpack.c.b16 %v3977, %v3969
    %v4298 = vpack.c.b16 %v3978, %v3970
    %v4299 = vpack.c.b16 %v3979, %v3971
    %v4300 = vpack.c.b16 %v3980, %v3972
    %v4301 = vpack.c.b16 %v3981, %v3973
    %v4302 = vpack.c.b16 %v3982, %v3974
    %v4303 = vpack.c.b16 %v3991, %v3983
    %v4304 = vpack.c.b16 %v3992, %v3984
    %v4305 = vpack.c.b16 %v3993, %v3985
    %v4306 = vpack.c.b16 %v3994, %v3986
    %v4307 = vpack.c.b16 %v3995, %v3987
    %v4308 = vpack.c.b16 %v3996, %v3988
    %v4309 = vpack.c.b16 %v3997, %v3989
    %v4310 = vpack.c.b16 %v3998, %v3990
    %v4311 = vpack.c.b16 %v4007, %v3999
    %v4312 = vpack.c.b16 %v4008, %v4000
    %v4313 = vpack.c.b16 %v4009, %v4001
    %v4314 = vpack.c.b16 %v4010, %v4002
    %v4315 = vpack.c.b16 %v4011, %v4003
    %v4316 = vpack.c.b16 %v4012, %v4004
    %v4317 = vpack.c.b16 %v4013, %v4005
    %v4318 = vpack.c.b16 %v4014, %v4006
    %v4319 = vpack.c.b16 %v4023, %v4015
    %v4320 = vpack.c.b16 %v4024, %v4016
    %v4321 = vpack.c.b16 %v4025, %v4017
    %v4322 = vpack.c.b16 %v4026, %v4018
    %v4323 = vpack.c.b16 %v4027, %v4019
    %v4324 = vpack.c.b16 %v4028, %v4020
    %v4325 = vpack.c.b16 %v4029, %v4021
    %v4326 = vpack.c.b16 %v4030, %v4022
    %v4327 = vpack.c.b16 %v4039, %v4031
    %v4328 = vpack.c.b16 %v4040, %v4032
    %v4329 = vpack.c.b16 %v4041, %v4033
    %v4330 = vpack.c.b16 %v4042, %v4034
    %v4331 = vpack.c.b16 %v4043, %v4035
    %v4332 = vpack.c.b16 %v4044, %v4036
    %v4333 = vpack.c.b16 %v4045, %v4037
    %v4334 = vpack.c.b16 %v4046, %v4038
    %v4335 = vpack.c.b16 %v4055, %v4047
    %v4336 = vpack.c.b16 %v4056, %v4048
    %v4337 = vpack.c.b16 %v4057, %v4049
    %v4338 = vpack.c.b16 %v4058, %v4050
    %v4339 = vpack.c.b16 %v4059, %v4051
    %v4340 = vpack.c.b16 %v4060, %v4052
    %v4341 = vpack.c.b16 %v4061, %v4053
    %v4342 = vpack.c.b16 %v4062, %v4054
    %v4343 = vpack.c.b16 %v4071, %v4063
    %v4344 = vpack.c.b16 %v4072, %v4064
    %v4345 = vpack.c.b16 %v4073, %v4065
    %v4346 = vpack.c.b16 %v4074, %v4066
    %v4347 = vpack.c.b16 %v4075, %v4067
    %v4348 = vpack.c.b16 %v4076, %v4068
    %v4349 = vpack.c.b16 %v4077, %v4069
    %v4350 = vpack.c.b16 %v4078, %v4070
    %v4351 = vpack.c.b16 %v4087, %v4079
    %v4352 = vpack.c.b16 %v4088, %v4080
    %v4353 = vpack.c.b16 %v4089, %v4081
    %v4354 = vpack.c.b16 %v4090, %v4082
    %v4355 = vpack.c.b16 %v4091, %v4083
    %v4356 = vpack.c.b16 %v4092, %v4084
    %v4357 = vpack.c.b16 %v4093, %v4085
    %v4358 = vpack.c.b16 %v4094, %v4086
    %v4359 = vpack.c.b16 %v4103, %v4095
    %v4360 = vpack.c.b16 %v4104, %v4096
    %v4361 = vpack.c.b16 %v4105, %v4097
    %v4362 = vpack.c.b16 %v4106, %v4098
    %v4363 = vpack.c.b16 %v4107, %v4099
    %v4364 = vpack.c.b16 %v4108, %v4100
    %v4365 = vpack.c.b16 %v4109, %v4101
    %v4366 = vpack.c.b16 %v4110, %v4102
    %4623 = vmatprep.subr.bf16.mxu0 %v4112
    %4624 = vmatpush1.bf16.msra.mxu0 %v4111
    %4625 = vmatprep.subr.bf16.mxu0 %v4120
    %4626 = vmatpush1.bf16.msra.mxu0 %v4119
    %4627 = vmatprep.subr.bf16.mxu0 %v4128
    %4628 = vmatpush1.bf16.msra.mxu0 %v4127
    %4629 = vmatprep.subr.bf16.mxu0 %v4136
    %4630 = vmatpush1.bf16.msra.mxu0 %v4135
    %4631 = vmatprep.subr.bf16.mxu0 %v4144
    %4632 = vmatpush1.bf16.msra.mxu0 %v4143
    %4633 = vmatprep.subr.bf16.mxu0 %v4152
    %4634 = vmatpush1.bf16.msra.mxu0 %v4151
    %4635 = vmatprep.subr.bf16.mxu0 %v4160
    %4636 = vmatpush1.bf16.msra.mxu0 %v4159
    %4637 = vmatprep.subr.bf16.mxu0 %v4168
    %4638 = vmatpush1.bf16.msra.mxu0 %v4167
    %4639 = vmatprep.subr.bf16.mxu0 %v4176
    %4640 = vmatpush1.bf16.msra.mxu0 %v4175
    %4641 = vmatprep.subr.bf16.mxu0 %v4184
    %4642 = vmatpush1.bf16.msra.mxu0 %v4183
    %4643 = vmatprep.subr.bf16.mxu0 %v4192
    %4644 = vmatpush1.bf16.msra.mxu0 %v4191
    %4645 = vmatprep.subr.bf16.mxu0 %v4200
    %4646 = vmatpush1.bf16.msra.mxu0 %v4199
    %4647 = vmatprep.subr.bf16.mxu0 %v4208
    %4648 = vmatpush1.bf16.msra.mxu0 %v4207
    %4649 = vmatprep.subr.bf16.mxu0 %v4216
    %4650 = vmatpush1.bf16.msra.mxu0 %v4215
    %4651 = vmatprep.subr.bf16.mxu0 %v4224
    %4652 = vmatpush1.bf16.msra.mxu0 %v4223
    %4653 = vmatprep.subr.bf16.mxu0 %v4232
    %4654 = vmatpush1.bf16.msra.mxu0 %v4231
    %4655 = vmatprep.mubr.bf16.mxu0 %v3042
    %4656 = vmatmul.mubr.bf16.gmra.mrb[0].mxu0 %v3041
    %v4657 = vpop.f32.mrb[0].mxu0
    %v4658 = vadd.f32 %v3306, %v4657
    %v4659 = vpop.f32.mrb[0].mxu0
    %v4660 = vadd.f32 %v3310, %v4659
    %v4661 = vpop.f32.mrb[0].mxu0
    %v4662 = vpop.f32.mrb[0].mxu0
    %4663 = vdwg.mxu0
    %4664 = vmatprep.subr.bf16.mxu0 %v4240
    %4665 = vmatpush1.bf16.msra.mxu0 %v4239
    %4666 = vmatprep.subr.bf16.mxu0 %v4248
    %4667 = vmatpush1.bf16.msra.mxu0 %v4247
    %4668 = vmatprep.subr.bf16.mxu0 %v4256
    %4669 = vmatpush1.bf16.msra.mxu0 %v4255
    %4670 = vmatprep.subr.bf16.mxu0 %v4264
    %4671 = vmatpush1.bf16.msra.mxu0 %v4263
    %4672 = vmatprep.subr.bf16.mxu0 %v4272
    %4673 = vmatpush1.bf16.msra.mxu0 %v4271
    %4674 = vmatprep.subr.bf16.mxu0 %v4280
    %4675 = vmatpush1.bf16.msra.mxu0 %v4279
    %4676 = vmatprep.subr.bf16.mxu0 %v4288
    %4677 = vmatpush1.bf16.msra.mxu0 %v4287
    %4678 = vmatprep.subr.bf16.mxu0 %v4296
    %4679 = vmatpush1.bf16.msra.mxu0 %v4295
    %4680 = vmatprep.subr.bf16.mxu0 %v4304
    %4681 = vmatpush1.bf16.msra.mxu0 %v4303
    %4682 = vmatprep.subr.bf16.mxu0 %v4312
    %4683 = vmatpush1.bf16.msra.mxu0 %v4311
    %4684 = vmatprep.subr.bf16.mxu0 %v4320
    %4685 = vmatpush1.bf16.msra.mxu0 %v4319
    %4686 = vmatprep.subr.bf16.mxu0 %v4328
    %4687 = vmatpush1.bf16.msra.mxu0 %v4327
    %4688 = vmatprep.subr.bf16.mxu0 %v4336
    %4689 = vmatpush1.bf16.msra.mxu0 %v4335
    %4690 = vmatprep.subr.bf16.mxu0 %v4344
    %4691 = vmatpush1.bf16.msra.mxu0 %v4343
    %4692 = vmatprep.subr.bf16.mxu0 %v4352
    %4693 = vmatpush1.bf16.msra.mxu0 %v4351
    %4694 = vmatprep.subr.bf16.mxu0 %v4360
    %4695 = vmatpush1.bf16.msra.mxu0 %v4359
    %4696 = vmatprep.mubr.bf16.mxu0 %v3044
    %4697 = vmatmul.mubr.bf16.gmra.mrb[0].mxu0 %v3043
    %v4698 = vpop.f32.mrb[0].mxu0
    %v4699 = vadd.f32 %v4658, %v4698
    %v4700 = vpop.f32.mrb[0].mxu0
    %v4701 = vadd.f32 %v4660, %v4700
    %v4702 = vpop.f32.mrb[0].mxu0
    %v4703 = vpop.f32.mrb[0].mxu0
    %4704 = vdwg.mxu0
    %4705 = vmatprep.subr.bf16.mxu0 %v4114
    %4706 = vmatpush1.bf16.msra.mxu0 %v4113
    %4707 = vmatprep.subr.bf16.mxu0 %v4122
    %4708 = vmatpush1.bf16.msra.mxu0 %v4121
    %4709 = vmatprep.subr.bf16.mxu0 %v4130
    %4710 = vmatpush1.bf16.msra.mxu0 %v4129
    %4711 = vmatprep.subr.bf16.mxu0 %v4138
    %4712 = vmatpush1.bf16.msra.mxu0 %v4137
    %4713 = vmatprep.subr.bf16.mxu0 %v4146
    %4714 = vmatpush1.bf16.msra.mxu0 %v4145
    %4715 = vmatprep.subr.bf16.mxu0 %v4154
    %4716 = vmatpush1.bf16.msra.mxu0 %v4153
    %4717 = vmatprep.subr.bf16.mxu0 %v4162
    %4718 = vmatpush1.bf16.msra.mxu0 %v4161
    %4719 = vmatprep.subr.bf16.mxu0 %v4170
    %4720 = vmatpush1.bf16.msra.mxu0 %v4169
    %4721 = vmatprep.subr.bf16.mxu0 %v4178
    %4722 = vmatpush1.bf16.msra.mxu0 %v4177
    %4723 = vmatprep.subr.bf16.mxu0 %v4186
    %4724 = vmatpush1.bf16.msra.mxu0 %v4185
    %4725 = vmatprep.subr.bf16.mxu0 %v4194
    %4726 = vmatpush1.bf16.msra.mxu0 %v4193
    %4727 = vmatprep.subr.bf16.mxu0 %v4202
    %4728 = vmatpush1.bf16.msra.mxu0 %v4201
    %4729 = vmatprep.subr.bf16.mxu0 %v4210
    %4730 = vmatpush1.bf16.msra.mxu0 %v4209
    %4731 = vmatprep.subr.bf16.mxu0 %v4218
    %4732 = vmatpush1.bf16.msra.mxu0 %v4217
    %4733 = vmatprep.subr.bf16.mxu0 %v4226
    %4734 = vmatpush1.bf16.msra.mxu0 %v4225
    %4735 = vmatprep.subr.bf16.mxu0 %v4234
    %4736 = vmatpush1.bf16.msra.mxu0 %v4233
    %4737 = vmatprep.mubr.bf16.mxu0 %v3042
    %4738 = vmatmul.mubr.bf16.gmra.mrb[0].mxu0 %v3041
    %v4739 = vpop.f32.mrb[0].mxu0
    %v4740 = vadd.f32 %v3314, %v4739
    %v4741 = vpop.f32.mrb[0].mxu0
    %v4742 = vadd.f32 %v3318, %v4741
    %v4743 = vpop.f32.mrb[0].mxu0
    %v4744 = vpop.f32.mrb[0].mxu0
    %4745 = vdwg.mxu0
    %4746 = vmatprep.subr.bf16.mxu0 %v4242
    %4747 = vmatpush1.bf16.msra.mxu0 %v4241
    %4748 = vmatprep.subr.bf16.mxu0 %v4250
    %4749 = vmatpush1.bf16.msra.mxu0 %v4249
    %4750 = vmatprep.subr.bf16.mxu0 %v4258
    %4751 = vmatpush1.bf16.msra.mxu0 %v4257
    %4752 = vmatprep.subr.bf16.mxu0 %v4266
    %4753 = vmatpush1.bf16.msra.mxu0 %v4265
    %4754 = vmatprep.subr.bf16.mxu0 %v4274
    %4755 = vmatpush1.bf16.msra.mxu0 %v4273
    %4756 = vmatprep.subr.bf16.mxu0 %v4282
    %4757 = vmatpush1.bf16.msra.mxu0 %v4281
    %4758 = vmatprep.subr.bf16.mxu0 %v4290
    %4759 = vmatpush1.bf16.msra.mxu0 %v4289
    %4760 = vmatprep.subr.bf16.mxu0 %v4298
    %4761 = vmatpush1.bf16.msra.mxu0 %v4297
    %4762 = vmatprep.subr.bf16.mxu0 %v4306
    %4763 = vmatpush1.bf16.msra.mxu0 %v4305
    %4764 = vmatprep.subr.bf16.mxu0 %v4314
    %4765 = vmatpush1.bf16.msra.mxu0 %v4313
    %4766 = vmatprep.subr.bf16.mxu0 %v4322
    %4767 = vmatpush1.bf16.msra.mxu0 %v4321
    %4768 = vmatprep.subr.bf16.mxu0 %v4330
    %4769 = vmatpush1.bf16.msra.mxu0 %v4329
    %4770 = vmatprep.subr.bf16.mxu0 %v4338
    %4771 = vmatpush1.bf16.msra.mxu0 %v4337
    %4772 = vmatprep.subr.bf16.mxu0 %v4346
    %4773 = vmatpush1.bf16.msra.mxu0 %v4345
    %4774 = vmatprep.subr.bf16.mxu0 %v4354
    %4775 = vmatpush1.bf16.msra.mxu0 %v4353
    %4776 = vmatprep.subr.bf16.mxu0 %v4362
    %4777 = vmatpush1.bf16.msra.mxu0 %v4361
    %4778 = vmatprep.mubr.bf16.mxu0 %v3044
    %4779 = vmatmul.mubr.bf16.gmra.mrb[0].mxu0 %v3043
    %v4780 = vpop.f32.mrb[0].mxu0
    %v4781 = vadd.f32 %v4740, %v4780
    %v4782 = vpop.f32.mrb[0].mxu0
    %v4783 = vadd.f32 %v4742, %v4782
    %v4784 = vpop.f32.mrb[0].mxu0
    %v4785 = vpop.f32.mrb[0].mxu0
    %4786 = vdwg.mxu0
    %4787 = vmatprep.subr.bf16.mxu0 %v4116
    %4788 = vmatpush1.bf16.msra.mxu0 %v4115
    %4789 = vmatprep.subr.bf16.mxu0 %v4124
    %4790 = vmatpush1.bf16.msra.mxu0 %v4123
    %4791 = vmatprep.subr.bf16.mxu0 %v4132
    %4792 = vmatpush1.bf16.msra.mxu0 %v4131
    %4793 = vmatprep.subr.bf16.mxu0 %v4140
    %4794 = vmatpush1.bf16.msra.mxu0 %v4139
    %4795 = vmatprep.subr.bf16.mxu0 %v4148
    %4796 = vmatpush1.bf16.msra.mxu0 %v4147
    %4797 = vmatprep.subr.bf16.mxu0 %v4156
    %4798 = vmatpush1.bf16.msra.mxu0 %v4155
    %4799 = vmatprep.subr.bf16.mxu0 %v4164
    %4800 = vmatpush1.bf16.msra.mxu0 %v4163
    %4801 = vmatprep.subr.bf16.mxu0 %v4172
    %4802 = vmatpush1.bf16.msra.mxu0 %v4171
    %4803 = vmatprep.subr.bf16.mxu0 %v4180
    %4804 = vmatpush1.bf16.msra.mxu0 %v4179
    %4805 = vmatprep.subr.bf16.mxu0 %v4188
    %4806 = vmatpush1.bf16.msra.mxu0 %v4187
    %4807 = vmatprep.subr.bf16.mxu0 %v4196
    %4808 = vmatpush1.bf16.msra.mxu0 %v4195
    %4809 = vmatprep.subr.bf16.mxu0 %v4204
    %4810 = vmatpush1.bf16.msra.mxu0 %v4203
    %4811 = vmatprep.subr.bf16.mxu0 %v4212
    %4812 = vmatpush1.bf16.msra.mxu0 %v4211
    %4813 = vmatprep.subr.bf16.mxu0 %v4220
    %4814 = vmatpush1.bf16.msra.mxu0 %v4219
    %4815 = vmatprep.subr.bf16.mxu0 %v4228
    %4816 = vmatpush1.bf16.msra.mxu0 %v4227
    %4817 = vmatprep.subr.bf16.mxu0 %v4236
    %4818 = vmatpush1.bf16.msra.mxu0 %v4235
    %4819 = vmatprep.mubr.bf16.mxu0 %v3042
    %4820 = vmatmul.mubr.bf16.gmra.mrb[0].mxu0 %v3041
    %v4821 = vpop.f32.mrb[0].mxu0
    %v4822 = vadd.f32 %v3322, %v4821
    %v4823 = vpop.f32.mrb[0].mxu0
    %v4824 = vadd.f32 %v3326, %v4823
    %v4825 = vpop.f32.mrb[0].mxu0
    %v4826 = vpop.f32.mrb[0].mxu0
    %4827 = vdwg.mxu0
    %4828 = vmatprep.subr.bf16.mxu0 %v4244
    %4829 = vmatpush1.bf16.msra.mxu0 %v4243
    %4830 = vmatprep.subr.bf16.mxu0 %v4252
    %4831 = vmatpush1.bf16.msra.mxu0 %v4251
    %4832 = vmatprep.subr.bf16.mxu0 %v4260
    %4833 = vmatpush1.bf16.msra.mxu0 %v4259
    %4834 = vmatprep.subr.bf16.mxu0 %v4268
    %4835 = vmatpush1.bf16.msra.mxu0 %v4267
    %4836 = vmatprep.subr.bf16.mxu0 %v4276
    %4837 = vmatpush1.bf16.msra.mxu0 %v4275
    %4838 = vmatprep.subr.bf16.mxu0 %v4284
    %4839 = vmatpush1.bf16.msra.mxu0 %v4283
    %4840 = vmatprep.subr.bf16.mxu0 %v4292
    %4841 = vmatpush1.bf16.msra.mxu0 %v4291
    %4842 = vmatprep.subr.bf16.mxu0 %v4300
    %4843 = vmatpush1.bf16.msra.mxu0 %v4299
    %4844 = vmatprep.subr.bf16.mxu0 %v4308
    %4845 = vmatpush1.bf16.msra.mxu0 %v4307
    %4846 = vmatprep.subr.bf16.mxu0 %v4316
    %4847 = vmatpush1.bf16.msra.mxu0 %v4315
    %4848 = vmatprep.subr.bf16.mxu0 %v4324
    %4849 = vmatpush1.bf16.msra.mxu0 %v4323
    %4850 = vmatprep.subr.bf16.mxu0 %v4332
    %4851 = vmatpush1.bf16.msra.mxu0 %v4331
    %4852 = vmatprep.subr.bf16.mxu0 %v4340
    %4853 = vmatpush1.bf16.msra.mxu0 %v4339
    %4854 = vmatprep.subr.bf16.mxu0 %v4348
    %4855 = vmatpush1.bf16.msra.mxu0 %v4347
    %4856 = vmatprep.subr.bf16.mxu0 %v4356
    %4857 = vmatpush1.bf16.msra.mxu0 %v4355
    %4858 = vmatprep.subr.bf16.mxu0 %v4364
    %4859 = vmatpush1.bf16.msra.mxu0 %v4363
    %4860 = vmatprep.mubr.bf16.mxu0 %v3044
    %4861 = vmatmul.mubr.bf16.gmra.mrb[0].mxu0 %v3043
    %v4862 = vpop.f32.mrb[0].mxu0
    %v4863 = vadd.f32 %v4822, %v4862
    %v4864 = vpop.f32.mrb[0].mxu0
    %v4865 = vadd.f32 %v4824, %v4864
    %v4866 = vpop.f32.mrb[0].mxu0
    %v4867 = vpop.f32.mrb[0].mxu0
    %4868 = vdwg.mxu0
    %4869 = vmatprep.subr.bf16.mxu0 %v4118
    %4870 = vmatpush1.bf16.msra.mxu0 %v4117
    %4871 = vmatprep.subr.bf16.mxu0 %v4126
    %4872 = vmatpush1.bf16.msra.mxu0 %v4125
    %4873 = vmatprep.subr.bf16.mxu0 %v4134
    %4874 = vmatpush1.bf16.msra.mxu0 %v4133
    %4875 = vmatprep.subr.bf16.mxu0 %v4142
    %4876 = vmatpush1.bf16.msra.mxu0 %v4141
    %4877 = vmatprep.subr.bf16.mxu0 %v4150
    %4878 = vmatpush1.bf16.msra.mxu0 %v4149
    %4879 = vmatprep.subr.bf16.mxu0 %v4158
    %4880 = vmatpush1.bf16.msra.mxu0 %v4157
    %4881 = vmatprep.subr.bf16.mxu0 %v4166
    %4882 = vmatpush1.bf16.msra.mxu0 %v4165
    %4883 = vmatprep.subr.bf16.mxu0 %v4174
    %4884 = vmatpush1.bf16.msra.mxu0 %v4173
    %4885 = vmatprep.subr.bf16.mxu0 %v4182
    %4886 = vmatpush1.bf16.msra.mxu0 %v4181
    %4887 = vmatprep.subr.bf16.mxu0 %v4190
    %4888 = vmatpush1.bf16.msra.mxu0 %v4189
    %4889 = vmatprep.subr.bf16.mxu0 %v4198
    %4890 = vmatpush1.bf16.msra.mxu0 %v4197
    %4891 = vmatprep.subr.bf16.mxu0 %v4206
    %4892 = vmatpush1.bf16.msra.mxu0 %v4205
    %4893 = vmatprep.subr.bf16.mxu0 %v4214
    %4894 = vmatpush1.bf16.msra.mxu0 %v4213
    %4895 = vmatprep.subr.bf16.mxu0 %v4222
    %4896 = vmatpush1.bf16.msra.mxu0 %v4221
    %4897 = vmatprep.subr.bf16.mxu0 %v4230
    %4898 = vmatpush1.bf16.msra.mxu0 %v4229
    %4899 = vmatprep.subr.bf16.mxu0 %v4238
    %4900 = vmatpush1.bf16.msra.mxu0 %v4237
    %4901 = vmatprep.mubr.bf16.mxu0 %v3042
    %4902 = vmatmul.mubr.bf16.gmra.mrb[0].mxu0 %v3041
    %v4903 = vpop.f32.mrb[0].mxu0
    %v4904 = vadd.f32 %v3330, %v4903
    %v4905 = vpop.f32.mrb[0].mxu0
    %v4906 = vadd.f32 %v3334, %v4905
    %v4907 = vpop.f32.mrb[0].mxu0
    %v4908 = vpop.f32.mrb[0].mxu0
    %4909 = vdwg.mxu0
    %4910 = vmatprep.subr.bf16.mxu0 %v4246
    %4911 = vmatpush1.bf16.msra.mxu0 %v4245
    %4912 = vmatprep.subr.bf16.mxu0 %v4254
    %4913 = vmatpush1.bf16.msra.mxu0 %v4253
    %4914 = vmatprep.subr.bf16.mxu0 %v4262
    %4915 = vmatpush1.bf16.msra.mxu0 %v4261
    %4916 = vmatprep.subr.bf16.mxu0 %v4270
    %4917 = vmatpush1.bf16.msra.mxu0 %v4269
    %4918 = vmatprep.subr.bf16.mxu0 %v4278
    %4919 = vmatpush1.bf16.msra.mxu0 %v4277
    %4920 = vmatprep.subr.bf16.mxu0 %v4286
    %4921 = vmatpush1.bf16.msra.mxu0 %v4285
    %4922 = vmatprep.subr.bf16.mxu0 %v4294
    %4923 = vmatpush1.bf16.msra.mxu0 %v4293
    %4924 = vmatprep.subr.bf16.mxu0 %v4302
    %4925 = vmatpush1.bf16.msra.mxu0 %v4301
    %4926 = vmatprep.subr.bf16.mxu0 %v4310
    %4927 = vmatpush1.bf16.msra.mxu0 %v4309
    %4928 = vmatprep.subr.bf16.mxu0 %v4318
    %4929 = vmatpush1.bf16.msra.mxu0 %v4317
    %4930 = vmatprep.subr.bf16.mxu0 %v4326
    %4931 = vmatpush1.bf16.msra.mxu0 %v4325
    %4932 = vmatprep.subr.bf16.mxu0 %v4334
    %4933 = vmatpush1.bf16.msra.mxu0 %v4333
    %4934 = vmatprep.subr.bf16.mxu0 %v4342
    %4935 = vmatpush1.bf16.msra.mxu0 %v4341
    %4936 = vmatprep.subr.bf16.mxu0 %v4350
    %4937 = vmatpush1.bf16.msra.mxu0 %v4349
    %4938 = vmatprep.subr.bf16.mxu0 %v4358
    %4939 = vmatpush1.bf16.msra.mxu0 %v4357
    %4940 = vmatprep.subr.bf16.mxu0 %v4366
    %4941 = vmatpush1.bf16.msra.mxu0 %v4365
    %4942 = vmatprep.mubr.bf16.mxu0 %v3044
    %4943 = vmatmul.mubr.bf16.gmra.mrb[0].mxu0 %v3043
    %v4944 = vpop.f32.mrb[0].mxu0
    %v4945 = vadd.f32 %v4904, %v4944
    %v4946 = vpop.f32.mrb[0].mxu0
    %v4947 = vadd.f32 %v4906, %v4946
    %v4948 = vpop.f32.mrb[0].mxu0
    %v4949 = vpop.f32.mrb[0].mxu0
    %4950 = vdwg.mxu0
    %4951 = vst [vmem:[#allocation12] sm:$0xff] %v4699
    %4952 = vst [vmem:[#allocation12 + $0x8] sm:$0xff] %v4701
    %4953 = vst [vmem:[#allocation12 + $0x10] sm:$0xff] %v4781
    %4954 = vst [vmem:[#allocation12 + $0x18] sm:$0xff] %v4783
    %4955 = vst [vmem:[#allocation12 + $0x20] sm:$0xff] %v4863
    %4956 = vst [vmem:[#allocation12 + $0x28] sm:$0xff] %v4865
    %4957 = vst [vmem:[#allocation12 + $0x30] sm:$0xff] %v4945
    %4958 = vst [vmem:[#allocation12 + $0x38] sm:$0xff] %v4947
    // Predicated region
    $region62: #{tpu_custom_call.1} parent=1 // pred_check
      _
    $region63: #{tpu_custom_call.1} parent=1 // pred_check_branch
      %4960 = sbr.rel (0) target = $region65
    $region64: #{tpu_custom_call.1} parent=1 // pred_region
      %s4962 = ssub.s32 1024, 1024
      %4963 = vsyncadd [#allocation5], %s4962
      %s4965 = sshll.u32 [#allocation12], 4
      %s4966 = int_to_ptr.vmem [resolvable:$true] %s4965
      %4968 = dma.vmem_to_hbm [thread:$0]  %s4966, 1024, %s10, [#allocation5]
    $region65: #{tpu_custom_call.1} parent=1 // pred_fallthru
      _
    // Predicated region
    $region66: #{tpu_custom_call.1} parent=1 // pred_check
      _
    $region67: #{tpu_custom_call.1} parent=1 // pred_check_branch
      %4970 = sbr.rel (0) target = $region69
    $region68: #{tpu_custom_call.1} parent=1 // pred_region
      %4971 = dma.done [#allocation5], 1024
    $region69: #{tpu_custom_call.1} parent=1 // pred_fallthru
      _
    %4972 = vsyncpa [#allocation4], 1
    %4973 = vsyncpa [#allocation7], 1
    %4974 = vsyncpa [#allocation10], 1
    %4975 = vsyncpa [#allocation5], 1

// kernel: tpu_custom_call.1
$region0: #{tpu_custom_call.1}
  #allocation0 [shape = 'u32[]', space=smem, size = 0x4, offset = 0x4, fixed_abs, tag = 'smem constant byte address 0x4 - core index']
  #allocation1 [shape = 'u32[144,128]{1,0:T(1,128)}', space=vmem, size = 0x12000, scoped, tag = 'internal scratch']
  #allocation2 [shape = 'f32[1]{0:T(128)S(6)}', space=smem, size = 0x200, scoped, tag = 'scoped memory for tpu_custom_call.1']
  %s0 = inlined_call_operand.<no memory space> [shape: f32[1], index: 0, kind: input, shape index: {}]
  %s1 = inlined_call_operand.hbm [shape: f32[8,1024], index: 1, kind: input, shape index: {}]
  %s2 = inlined_call_operand.hbm [shape: bf16[1024,512], index: 2, kind: input, shape index: {}]
  %s3 = inlined_call_operand.vmem [shape: f32[1,512], index: 3, kind: input, shape index: {}]
  %s4 = inlined_call_operand.hbm [shape: bf16[512,256], index: 4, kind: input, shape index: {}]
  %s5 = inlined_call_operand.vmem [shape: f32[1,256], index: 5, kind: input, shape index: {}]
  %s6 = inlined_call_operand.hbm [shape: bf16[256,512], index: 6, kind: input, shape index: {}]
  %s7 = inlined_call_operand.vmem [shape: f32[1,512], index: 7, kind: input, shape index: {}]
  %s8 = inlined_call_operand.hbm [shape: bf16[512,1024], index: 8, kind: input, shape index: {}]
  %s9 = inlined_call_operand.vmem [shape: f32[1,1024], index: 9, kind: input, shape index: {}]
  %s10 = inlined_call_operand.hbm [shape: f32[8,1024], index: 10, kind: output, shape index: {}]
  %s11 = sld [smem:[#allocation0]]
  $region70: #{tpu_custom_call.1} parent=0
    _
  %s13 = ssub.s32 1, %s11
  %s14 = scalar_select 0, %s13, %s11
  %15 = sst [smem:[#allocation2]] %s0
  $region1: #{tpu_custom_call.1} parent=0
    #allocation3 [shape = 'u8[32768]{0}', space=vmem, size = 0x8000, scoped, tag = 'input window, operand 1, single buffered']
    #allocation4 [shape = 's32[1]{0}', space=sflag, size = 0x4, scoped, tag = 'scoped memory for tpu_custom_call.1']
    #allocation5 [shape = 's32[1]{0}', space=sflag, size = 0x4, scoped, tag = 'scoped memory for tpu_custom_call.1']
    #allocation6 [shape = 'u8[1048576]{0}', space=vmem, size = 0x100000, scoped, tag = 'input window, operand 2, single buffered']
    #allocation7 [shape = 's32[1]{0}', space=sflag, size = 0x4, scoped, tag = 'scoped memory for tpu_custom_call.1']
    #allocation8 [shape = 'u8[262144]{0}', space=vmem, size = 0x40000, scoped, tag = 'input window, operand 4, single buffered']
    #allocation9 [shape = 'u8[262144]{0}', space=vmem, size = 0x40000, scoped, tag = 'input window, operand 6, single buffered']
    #allocation10 [shape = 's32[1]{0}', space=sflag, size = 0x4, scoped, tag = 'scoped memory for tpu_custom_call.1']
    #allocation11 [shape = 'u8[1048576]{0}', space=vmem, size = 0x100000, scoped, tag = 'input window, operand 8, single buffered']
    #allocation12 [shape = 'u8[32768]{0}', space=vmem, size = 0x8000, scoped, tag = 'output window, operand 0, single buffered']
    %16 = vsyncpa [#allocation4], 0
    %17 = vsyncpa [#allocation7], 0
    %18 = vsyncpa [#allocation10], 0
    %19 = vsyncpa [#allocation5], 0
    // Predicated region
    $region2: #{tpu_custom_call.1} parent=1 // pred_check
      _
    $region3: #{tpu_custom_call.1} parent=1 // pred_check_branch
      %21 = sbr.rel (0) target = $region5
    $region4: #{tpu_custom_call.1} parent=1 // pred_region
      _
    $region5: #{tpu_custom_call.1} parent=1 // pred_fallthru
      _
    // Predicated region
    $region6: #{tpu_custom_call.1} parent=1 // pred_check
      _
    $region7: #{tpu_custom_call.1} parent=1 // pred_check_branch
      %23 = sbr.rel (0) target = $region9
    $region8: #{tpu_custom_call.1} parent=1 // pred_region
      %s25 = ssub.s32 1024, 1024
      %26 = vsyncadd [#allocation4], %s25
      %s28 = sshll.u32 [#allocation3], 4
      %s29 = int_to_ptr.vmem [resolvable:$true] %s28
      %31 = dma.hbm_to_vmem [thread:$0]  %s1, 1024, %s29, [#allocation4]
    $region9: #{tpu_custom_call.1} parent=1 // pred_fallthru
      _
    // Predicated region
    $region10: #{tpu_custom_call.1} parent=1 // pred_check
      _
    $region11: #{tpu_custom_call.1} parent=1 // pred_check_branch
      %33 = sbr.rel (0) target = $region13
    $region12: #{tpu_custom_call.1} parent=1 // pred_region
      %s35 = ssub.s32 32768, 32768
      %36 = vsyncadd [#allocation7], %s35
      %s37 = sshll.u32 [#allocation6], 4
      %s38 = int_to_ptr.vmem [resolvable:$true] %s37
      %43 = dma.hbm_to_vmem [thread:$0]  %s2, 32768, %s38, [#allocation7], 256, 256, 16
    $region13: #{tpu_custom_call.1} parent=1 // pred_fallthru
      _
    // Predicated region
    $region14: #{tpu_custom_call.1} parent=1 // pred_check
      _
    $region15: #{tpu_custom_call.1} parent=1 // pred_check_branch
      %45 = sbr.rel (0) target = $region17
    $region16: #{tpu_custom_call.1} parent=1 // pred_region
      _
    $region17: #{tpu_custom_call.1} parent=1 // pred_fallthru
      _
    // Predicated region
    $region18: #{tpu_custom_call.1} parent=1 // pred_check
      _
    $region19: #{tpu_custom_call.1} parent=1 // pred_check_branch
      %47 = sbr.rel (0) target = $region21
    $region20: #{tpu_custom_call.1} parent=1 // pred_region
      %s49 = ssub.s32 8192, 8192
      %50 = vsyncadd [#allocation7], %s49
      %s51 = sshll.u32 [#allocation8], 4
      %s52 = int_to_ptr.vmem [resolvable:$true] %s51
      %57 = dma.hbm_to_vmem [thread:$0]  %s4, 8192, %s52, [#allocation7], 128, 128, 8
    $region21: #{tpu_custom_call.1} parent=1 // pred_fallthru
      _
    // Predicated region
    $region22: #{tpu_custom_call.1} parent=1 // pred_check
      _
    $region23: #{tpu_custom_call.1} parent=1 // pred_check_branch
      %59 = sbr.rel (0) target = $region25
    $region24: #{tpu_custom_call.1} parent=1 // pred_region
      _
    $region25: #{tpu_custom_call.1} parent=1 // pred_fallthru
      _
    // Predicated region
    $region26: #{tpu_custom_call.1} parent=1 // pred_check
      _
    $region27: #{tpu_custom_call.1} parent=1 // pred_check_branch
      %61 = sbr.rel (0) target = $region29
    $region28: #{tpu_custom_call.1} parent=1 // pred_region
      %s63 = ssub.s32 8192, 8192
      %64 = vsyncadd [#allocation10], %s63
      %s65 = sshll.u32 [#allocation9], 4
      %s66 = int_to_ptr.vmem [resolvable:$true] %s65
      %71 = dma.hbm_to_vmem [thread:$0]  %s6, 8192, %s66, [#allocation10], 256, 256, 16
    $region29: #{tpu_custom_call.1} parent=1 // pred_fallthru
      _
    // Predicated region
    $region30: #{tpu_custom_call.1} parent=1 // pred_check
      _
    $region31: #{tpu_custom_call.1} parent=1 // pred_check_branch
      %73 = sbr.rel (0) target = $region33
    $region32: #{tpu_custom_call.1} parent=1 // pred_region
      _
    $region33: #{tpu_custom_call.1} parent=1 // pred_fallthru
      _
    // Predicated region
    $region34: #{tpu_custom_call.1} parent=1 // pred_check
      _
    $region35: #{tpu_custom_call.1} parent=1 // pred_check_branch
      %75 = sbr.rel (0) target = $region37
    $region36: #{tpu_custom_call.1} parent=1 // pred_region
      %s77 = ssub.s32 32768, 32768
      %78 = vsyncadd [#allocation10], %s77
      %s79 = sshll.u32 [#allocation11], 4
      %s80 = int_to_ptr.vmem [resolvable:$true] %s79
      %85 = dma.hbm_to_vmem [thread:$0]  %s8, 32768, %s80, [#allocation10], 512, 512, 32
    $region37: #{tpu_custom_call.1} parent=1 // pred_fallthru
      _
    // Predicated region
    $region38: #{tpu_custom_call.1} parent=1 // pred_check
      _
    $region39: #{tpu_custom_call.1} parent=1 // pred_check_branch
      %87 = sbr.rel (0) target = $region41
    $region40: #{tpu_custom_call.1} parent=1 // pred_region
      _
    $region41: #{tpu_custom_call.1} parent=1 // pred_fallthru
      _
    // Predicated region
    $region42: #{tpu_custom_call.1} parent=1 // pred_check
      _
    $region43: #{tpu_custom_call.1} parent=1 // pred_check_branch
      %89 = sbr.rel (0) target = $region45
    $region44: #{tpu_custom_call.1} parent=1 // pred_region
      %90 = dma.done [#allocation4], 1024
    $region45: #{tpu_custom_call.1} parent=1 // pred_fallthru
      _
    // Predicated region
    $region46: #{tpu_custom_call.1} parent=1 // pred_check
      _
    $region47: #{tpu_custom_call.1} parent=1 // pred_check_branch
      %92 = sbr.rel (0) target = $region49
    $region48: #{tpu_custom_call.1} parent=1 // pred_region
      %93 = dma.done [#allocation7], 32768
    $region49: #{tpu_custom_call.1} parent=1 // pred_fallthru
      _
    // Predicated region
    $region50: #{tpu_custom_call.1} parent=1 // pred_check
      _
    $region51: #{tpu_custom_call.1} parent=1 // pred_check_branch
      %95 = sbr.rel (0) target = $region53
    $region52: #{tpu_custom_call.1} parent=1 // pred_region
      %96 = dma.done [#allocation7], 8192
    $region53: #{tpu_custom_call.1} parent=1 // pred_fallthru
      _
    // Predicated region
    $region54: #{tpu_custom_call.1} parent=1 // pred_check
      _
    $region55: #{tpu_custom_call.1} parent=1 // pred_check_branch
      %98 = sbr.rel (0) target = $region57
    $region56: #{tpu_custom_call.1} parent=1 // pred_region
      %99 = dma.done [#allocation10], 8192
    $region57: #{tpu_custom_call.1} parent=1 // pred_fallthru
      _
    // Predicated region
    $region58: #{tpu_custom_call.1} parent=1 // pred_check
      _
    $region59: #{tpu_custom_call.1} parent=1 // pred_check_branch
      %101 = sbr.rel (0) target = $region61
    $region60: #{tpu_custom_call.1} parent=1 // pred_region
      %102 = dma.done [#allocation10], 32768
    $region61: #{tpu_custom_call.1} parent=1 // pred_fallthru
      _
    %v103 = vld [vmem:[#allocation3] sm:$0xff]
    %v104 = vld [vmem:[#allocation3 + $0x8] sm:$0xff]
    %v105 = vld [vmem:[#allocation3 + $0x10] sm:$0xff]
    %v106 = vld [vmem:[#allocation3 + $0x18] sm:$0xff]
    %v107 = vld [vmem:[#allocation3 + $0x20] sm:$0xff]
    %v108 = vld [vmem:[#allocation3 + $0x28] sm:$0xff]
    %v109 = vld [vmem:[#allocation3 + $0x30] sm:$0xff]
    %v110 = vld [vmem:[#allocation3 + $0x38] sm:$0xff]
    %v111 = vpack.c.bf16 %v103, %v103
    %v112 = vpack.c.bf16 %v104, %v104
    %v113 = vpack.c.bf16 %v105, %v105
    %v114 = vpack.c.bf16 %v106, %v106
    %v115 = vpack.c.bf16 %v107, %v107
    %v116 = vpack.c.bf16 %v108, %v108
    %v117 = vpack.c.bf16 %v109, %v109
    %v118 = vpack.c.bf16 %v110, %v110
    %v119 = vld [vmem:[#allocation6] sm:$0xff]
    %v120 = vld [vmem:[#allocation6 + $0x8] sm:$0xff]
    %v121 = vld [vmem:[#allocation6 + $0x10] sm:$0xff]
    %v122 = vld [vmem:[#allocation6 + $0x18] sm:$0xff]
    %v123 = vld [vmem:[#allocation6 + $0x20] sm:$0xff]
    %v124 = vld [vmem:[#allocation6 + $0x28] sm:$0xff]
    %v125 = vld [vmem:[#allocation6 + $0x30] sm:$0xff]
    %v126 = vld [vmem:[#allocation6 + $0x38] sm:$0xff]
    %v127 = vld [vmem:[#allocation6 + $0x40] sm:$0xff]
    %v128 = vld [vmem:[#allocation6 + $0x48] sm:$0xff]
    %v129 = vld [vmem:[#allocation6 + $0x50] sm:$0xff]
    %v130 = vld [vmem:[#allocation6 + $0x58] sm:$0xff]
    %v131 = vld [vmem:[#allocation6 + $0x60] sm:$0xff]
    %v132 = vld [vmem:[#allocation6 + $0x68] sm:$0xff]
    %v133 = vld [vmem:[#allocation6 + $0x70] sm:$0xff]
    %v134 = vld [vmem:[#allocation6 + $0x78] sm:$0xff]
    %v135 = vld [vmem:[#allocation6 + $0x80] sm:$0xff]
    %v136 = vld [vmem:[#allocation6 + $0x88] sm:$0xff]
    %v137 = vld [vmem:[#allocation6 + $0x90] sm:$0xff]
    %v138 = vld [vmem:[#allocation6 + $0x98] sm:$0xff]
    %v139 = vld [vmem:[#allocation6 + $0xa0] sm:$0xff]
    %v140 = vld [vmem:[#allocation6 + $0xa8] sm:$0xff]
    %v141 = vld [vmem:[#allocation6 + $0xb0] sm:$0xff]
    %v142 = vld [vmem:[#allocation6 + $0xb8] sm:$0xff]
    %v143 = vld [vmem:[#allocation6 + $0xc0] sm:$0xff]
    %v144 = vld [vmem:[#allocation6 + $0xc8] sm:$0xff]
    %v145 = vld [vmem:[#allocation6 + $0xd0] sm:$0xff]
    %v146 = vld [vmem:[#allocation6 + $0xd8] sm:$0xff]
    %v147 = vld [vmem:[#allocation6 + $0xe0] sm:$0xff]
    %v148 = vld [vmem:[#allocation6 + $0xe8] sm:$0xff]
    %v149 = vld [vmem:[#allocation6 + $0xf0] sm:$0xff]
    %v150 = vld [vmem:[#allocation6 + $0xf8] sm:$0xff]
    %v151 = vld [vmem:[#allocation6 + $0x100] sm:$0xff]
    %v152 = vld [vmem:[#allocation6 + $0x108] sm:$0xff]
    %v153 = vld [vmem:[#allocation6 + $0x110] sm:$0xff]
    %v154 = vld [vmem:[#allocation6 + $0x118] sm:$0xff]
    %v155 = vld [vmem:[#allocation6 + $0x120] sm:$0xff]
    %v156 = vld [vmem:[#allocation6 + $0x128] sm:$0xff]
    %v157 = vld [vmem:[#allocation6 + $0x130] sm:$0xff]
    %v158 = vld [vmem:[#allocation6 + $0x138] sm:$0xff]
    %v159 = vld [vmem:[#allocation6 + $0x140] sm:$0xff]
    %v160 = vld [vmem:[#allocation6 + $0x148] sm:$0xff]
    %v161 = vld [vmem:[#allocation6 + $0x150] sm:$0xff]
    %v162 = vld [vmem:[#allocation6 + $0x158] sm:$0xff]
    %v163 = vld [vmem:[#allocation6 + $0x160] sm:$0xff]
    %v164 = vld [vmem:[#allocation6 + $0x168] sm:$0xff]
    %v165 = vld [vmem:[#allocation6 + $0x170] sm:$0xff]
    %v166 = vld [vmem:[#allocation6 + $0x178] sm:$0xff]
    %v167 = vld [vmem:[#allocation6 + $0x180] sm:$0xff]
    %v168 = vld [vmem:[#allocation6 + $0x188] sm:$0xff]
    %v169 = vld [vmem:[#allocation6 + $0x190] sm:$0xff]
    %v170 = vld [vmem:[#allocation6 + $0x198] sm:$0xff]
    %v171 = vld [vmem:[#allocation6 + $0x1a0] sm:$0xff]
    %v172 = vld [vmem:[#allocation6 + $0x1a8] sm:$0xff]
    %v173 = vld [vmem:[#allocation6 + $0x1b0] sm:$0xff]
    %v174 = vld [vmem:[#allocation6 + $0x1b8] sm:$0xff]
    %v175 = vld [vmem:[#allocation6 + $0x1c0] sm:$0xff]
    %v176 = vld [vmem:[#allocation6 + $0x1c8] sm:$0xff]
    %v177 = vld [vmem:[#allocation6 + $0x1d0] sm:$0xff]
    %v178 = vld [vmem:[#allocation6 + $0x1d8] sm:$0xff]
    %v179 = vld [vmem:[#allocation6 + $0x1e0] sm:$0xff]
    %v180 = vld [vmem:[#allocation6 + $0x1e8] sm:$0xff]
    %v181 = vld [vmem:[#allocation6 + $0x1f0] sm:$0xff]
    %v182 = vld [vmem:[#allocation6 + $0x1f8] sm:$0xff]
    %v183 = vld [vmem:[#allocation6 + $0x200] sm:$0xff]
    %v184 = vld [vmem:[#allocation6 + $0x208] sm:$0xff]
    %v185 = vld [vmem:[#allocation6 + $0x210] sm:$0xff]
    %v186 = vld [vmem:[#allocation6 + $0x218] sm:$0xff]
    %v187 = vld [vmem:[#allocation6 + $0x220] sm:$0xff]
    %v188 = vld [vmem:[#allocation6 + $0x228] sm:$0xff]
    %v189 = vld [vmem:[#allocation6 + $0x230] sm:$0xff]
    %v190 = vld [vmem:[#allocation6 + $0x238] sm:$0xff]
    %v191 = vld [vmem:[#allocation6 + $0x240] sm:$0xff]
    %v192 = vld [vmem:[#allocation6 + $0x248] sm:$0xff]
    %v193 = vld [vmem:[#allocation6 + $0x250] sm:$0xff]
    %v194 = vld [vmem:[#allocation6 + $0x258] sm:$0xff]
    %v195 = vld [vmem:[#allocation6 + $0x260] sm:$0xff]
    %v196 = vld [vmem:[#allocation6 + $0x268] sm:$0xff]
    %v197 = vld [vmem:[#allocation6 + $0x270] sm:$0xff]
    %v198 = vld [vmem:[#allocation6 + $0x278] sm:$0xff]
    %v199 = vld [vmem:[#allocation6 + $0x280] sm:$0xff]
    %v200 = vld [vmem:[#allocation6 + $0x288] sm:$0xff]
    %v201 = vld [vmem:[#allocation6 + $0x290] sm:$0xff]
    %v202 = vld [vmem:[#allocation6 + $0x298] sm:$0xff]
    %v203 = vld [vmem:[#allocation6 + $0x2a0] sm:$0xff]
    %v204 = vld [vmem:[#allocation6 + $0x2a8] sm:$0xff]
    %v205 = vld [vmem:[#allocation6 + $0x2b0] sm:$0xff]
    %v206 = vld [vmem:[#allocation6 + $0x2b8] sm:$0xff]
    %v207 = vld [vmem:[#allocation6 + $0x2c0] sm:$0xff]
    %v208 = vld [vmem:[#allocation6 + $0x2c8] sm:$0xff]
    %v209 = vld [vmem:[#allocation6 + $0x2d0] sm:$0xff]
    %v210 = vld [vmem:[#allocation6 + $0x2d8] sm:$0xff]
    %v211 = vld [vmem:[#allocation6 + $0x2e0] sm:$0xff]
    %v212 = vld [vmem:[#allocation6 + $0x2e8] sm:$0xff]
    %v213 = vld [vmem:[#allocation6 + $0x2f0] sm:$0xff]
    %v214 = vld [vmem:[#allocation6 + $0x2f8] sm:$0xff]
    %v215 = vld [vmem:[#allocation6 + $0x300] sm:$0xff]
    %v216 = vld [vmem:[#allocation6 + $0x308] sm:$0xff]
    %v217 = vld [vmem:[#allocation6 + $0x310] sm:$0xff]
    %v218 = vld [vmem:[#allocation6 + $0x318] sm:$0xff]
    %v219 = vld [vmem:[#allocation6 + $0x320] sm:$0xff]
    %v220 = vld [vmem:[#allocation6 + $0x328] sm:$0xff]
    %v221 = vld [vmem:[#allocation6 + $0x330] sm:$0xff]
    %v222 = vld [vmem:[#allocation6 + $0x338] sm:$0xff]
    %v223 = vld [vmem:[#allocation6 + $0x340] sm:$0xff]
    %v224 = vld [vmem:[#allocation6 + $0x348] sm:$0xff]
    %v225 = vld [vmem:[#allocation6 + $0x350] sm:$0xff]
    %v226 = vld [vmem:[#allocation6 + $0x358] sm:$0xff]
    %v227 = vld [vmem:[#allocation6 + $0x360] sm:$0xff]
    %v228 = vld [vmem:[#allocation6 + $0x368] sm:$0xff]
    %v229 = vld [vmem:[#allocation6 + $0x370] sm:$0xff]
    %v230 = vld [vmem:[#allocation6 + $0x378] sm:$0xff]
    %v231 = vld [vmem:[#allocation6 + $0x380] sm:$0xff]
    %v232 = vld [vmem:[#allocation6 + $0x388] sm:$0xff]
    %v233 = vld [vmem:[#allocation6 + $0x390] sm:$0xff]
    %v234 = vld [vmem:[#allocation6 + $0x398] sm:$0xff]
    %v235 = vld [vmem:[#allocation6 + $0x3a0] sm:$0xff]
    %v236 = vld [vmem:[#allocation6 + $0x3a8] sm:$0xff]
    %v237 = vld [vmem:[#allocation6 + $0x3b0] sm:$0xff]
    %v238 = vld [vmem:[#allocation6 + $0x3b8] sm:$0xff]
    %v239 = vld [vmem:[#allocation6 + $0x3c0] sm:$0xff]
    %v240 = vld [vmem:[#allocation6 + $0x3c8] sm:$0xff]
    %v241 = vld [vmem:[#allocation6 + $0x3d0] sm:$0xff]
    %v242 = vld [vmem:[#allocation6 + $0x3d8] sm:$0xff]
    %v243 = vld [vmem:[#allocation6 + $0x3e0] sm:$0xff]
    %v244 = vld [vmem:[#allocation6 + $0x3e8] sm:$0xff]
    %v245 = vld [vmem:[#allocation6 + $0x3f0] sm:$0xff]
    %v246 = vld [vmem:[#allocation6 + $0x3f8] sm:$0xff]
    %v247 = vld [vmem:[#allocation6 + $0x400] sm:$0xff]
    %v248 = vld [vmem:[#allocation6 + $0x408] sm:$0xff]
    %v249 = vld [vmem:[#allocation6 + $0x410] sm:$0xff]
    %v250 = vld [vmem:[#allocation6 + $0x418] sm:$0xff]
    %v251 = vld [vmem:[#allocation6 + $0x420] sm:$0xff]
    %v252 = vld [vmem:[#allocation6 + $0x428] sm:$0xff]
    %v253 = vld [vmem:[#allocation6 + $0x430] sm:$0xff]
    %v254 = vld [vmem:[#allocation6 + $0x438] sm:$0xff]
    %v255 = vld [vmem:[#allocation6 + $0x440] sm:$0xff]
    %v256 = vld [vmem:[#allocation6 + $0x448] sm:$0xff]
    %v257 = vld [vmem:[#allocation6 + $0x450] sm:$0xff]
    %v258 = vld [vmem:[#allocation6 + $0x458] sm:$0xff]
    %v259 = vld [vmem:[#allocation6 + $0x460] sm:$0xff]
    %v260 = vld [vmem:[#allocation6 + $0x468] sm:$0xff]
    %v261 = vld [vmem:[#allocation6 + $0x470] sm:$0xff]
    %v262 = vld [vmem:[#allocation6 + $0x478] sm:$0xff]
    %v263 = vld [vmem:[#allocation6 + $0x480] sm:$0xff]
    %v264 = vld [vmem:[#allocation6 + $0x488] sm:$0xff]
    %v265 = vld [vmem:[#allocation6 + $0x490] sm:$0xff]
    %v266 = vld [vmem:[#allocation6 + $0x498] sm:$0xff]
    %v267 = vld [vmem:[#allocation6 + $0x4a0] sm:$0xff]
    %v268 = vld [vmem:[#allocation6 + $0x4a8] sm:$0xff]
    %v269 = vld [vmem:[#allocation6 + $0x4b0] sm:$0xff]
    %v270 = vld [vmem:[#allocation6 + $0x4b8] sm:$0xff]
    %v271 = vld [vmem:[#allocation6 + $0x4c0] sm:$0xff]
    %v272 = vld [vmem:[#allocation6 + $0x4c8] sm:$0xff]
    %v273 = vld [vmem:[#allocation6 + $0x4d0] sm:$0xff]
    %v274 = vld [vmem:[#allocation6 + $0x4d8] sm:$0xff]
    %v275 = vld [vmem:[#allocation6 + $0x4e0] sm:$0xff]
    %v276 = vld [vmem:[#allocation6 + $0x4e8] sm:$0xff]
    %v277 = vld [vmem:[#allocation6 + $0x4f0] sm:$0xff]
    %v278 = vld [vmem:[#allocation6 + $0x4f8] sm:$0xff]
    %v279 = vld [vmem:[#allocation6 + $0x500] sm:$0xff]
    %v280 = vld [vmem:[#allocation6 + $0x508] sm:$0xff]
    %v281 = vld [vmem:[#allocation6 + $0x510] sm:$0xff]
    %v282 = vld [vmem:[#allocation6 + $0x518] sm:$0xff]
    %v283 = vld [vmem:[#allocation6 + $0x520] sm:$0xff]
    %v284 = vld [vmem:[#allocation6 + $0x528] sm:$0xff]
    %v285 = vld [vmem:[#allocation6 + $0x530] sm:$0xff]
    %v286 = vld [vmem:[#allocation6 + $0x538] sm:$0xff]
    %v287 = vld [vmem:[#allocation6 + $0x540] sm:$0xff]
    %v288 = vld [vmem:[#allocation6 + $0x548] sm:$0xff]
    %v289 = vld [vmem:[#allocation6 + $0x550] sm:$0xff]
    %v290 = vld [vmem:[#allocation6 + $0x558] sm:$0xff]
    %v291 = vld [vmem:[#allocation6 + $0x560] sm:$0xff]
    %v292 = vld [vmem:[#allocation6 + $0x568] sm:$0xff]
    %v293 = vld [vmem:[#allocation6 + $0x570] sm:$0xff]
    %v294 = vld [vmem:[#allocation6 + $0x578] sm:$0xff]
    %v295 = vld [vmem:[#allocation6 + $0x580] sm:$0xff]
    %v296 = vld [vmem:[#allocation6 + $0x588] sm:$0xff]
    %v297 = vld [vmem:[#allocation6 + $0x590] sm:$0xff]
    %v298 = vld [vmem:[#allocation6 + $0x598] sm:$0xff]
    %v299 = vld [vmem:[#allocation6 + $0x5a0] sm:$0xff]
    %v300 = vld [vmem:[#allocation6 + $0x5a8] sm:$0xff]
    %v301 = vld [vmem:[#allocation6 + $0x5b0] sm:$0xff]
    %v302 = vld [vmem:[#allocation6 + $0x5b8] sm:$0xff]
    %v303 = vld [vmem:[#allocation6 + $0x5c0] sm:$0xff]
    %v304 = vld [vmem:[#allocation6 + $0x5c8] sm:$0xff]
    %v305 = vld [vmem:[#allocation6 + $0x5d0] sm:$0xff]
    %v306 = vld [vmem:[#allocation6 + $0x5d8] sm:$0xff]
    %v307 = vld [vmem:[#allocation6 + $0x5e0] sm:$0xff]
    %v308 = vld [vmem:[#allocation6 + $0x5e8] sm:$0xff]
    %v309 = vld [vmem:[#allocation6 + $0x5f0] sm:$0xff]
    %v310 = vld [vmem:[#allocation6 + $0x5f8] sm:$0xff]
    %v311 = vld [vmem:[#allocation6 + $0x600] sm:$0xff]
    %v312 = vld [vmem:[#allocation6 + $0x608] sm:$0xff]
    %v313 = vld [vmem:[#allocation6 + $0x610] sm:$0xff]
    %v314 = vld [vmem:[#allocation6 + $0x618] sm:$0xff]
    %v315 = vld [vmem:[#allocation6 + $0x620] sm:$0xff]
    %v316 = vld [vmem:[#allocation6 + $0x628] sm:$0xff]
    %v317 = vld [vmem:[#allocation6 + $0x630] sm:$0xff]
    %v318 = vld [vmem:[#allocation6 + $0x638] sm:$0xff]
    %v319 = vld [vmem:[#allocation6 + $0x640] sm:$0xff]
    %v320 = vld [vmem:[#allocation6 + $0x648] sm:$0xff]
    %v321 = vld [vmem:[#allocation6 + $0x650] sm:$0xff]
    %v322 = vld [vmem:[#allocation6 + $0x658] sm:$0xff]
    %v323 = vld [vmem:[#allocation6 + $0x660] sm:$0xff]
    %v324 = vld [vmem:[#allocation6 + $0x668] sm:$0xff]
    %v325 = vld [vmem:[#allocation6 + $0x670] sm:$0xff]
    %v326 = vld [vmem:[#allocation6 + $0x678] sm:$0xff]
    %v327 = vld [vmem:[#allocation6 + $0x680] sm:$0xff]
    %v328 = vld [vmem:[#allocation6 + $0x688] sm:$0xff]
    %v329 = vld [vmem:[#allocation6 + $0x690] sm:$0xff]
    %v330 = vld [vmem:[#allocation6 + $0x698] sm:$0xff]
    %v331 = vld [vmem:[#allocation6 + $0x6a0] sm:$0xff]
    %v332 = vld [vmem:[#allocation6 + $0x6a8] sm:$0xff]
    %v333 = vld [vmem:[#allocation6 + $0x6b0] sm:$0xff]
    %v334 = vld [vmem:[#allocation6 + $0x6b8] sm:$0xff]
    %v335 = vld [vmem:[#allocation6 + $0x6c0] sm:$0xff]
    %v336 = vld [vmem:[#allocation6 + $0x6c8] sm:$0xff]
    %v337 = vld [vmem:[#allocation6 + $0x6d0] sm:$0xff]
    %v338 = vld [vmem:[#allocation6 + $0x6d8] sm:$0xff]
    %v339 = vld [vmem:[#allocation6 + $0x6e0] sm:$0xff]
    %v340 = vld [vmem:[#allocation6 + $0x6e8] sm:$0xff]
    %v341 = vld [vmem:[#allocation6 + $0x6f0] sm:$0xff]
    %v342 = vld [vmem:[#allocation6 + $0x6f8] sm:$0xff]
    %v343 = vld [vmem:[#allocation6 + $0x700] sm:$0xff]
    %v344 = vld [vmem:[#allocation6 + $0x708] sm:$0xff]
    %v345 = vld [vmem:[#allocation6 + $0x710] sm:$0xff]
    %v346 = vld [vmem:[#allocation6 + $0x718] sm:$0xff]
    %v347 = vld [vmem:[#allocation6 + $0x720] sm:$0xff]
    %v348 = vld [vmem:[#allocation6 + $0x728] sm:$0xff]
    %v349 = vld [vmem:[#allocation6 + $0x730] sm:$0xff]
    %v350 = vld [vmem:[#allocation6 + $0x738] sm:$0xff]
    %v351 = vld [vmem:[#allocation6 + $0x740] sm:$0xff]
    %v352 = vld [vmem:[#allocation6 + $0x748] sm:$0xff]
    %v353 = vld [vmem:[#allocation6 + $0x750] sm:$0xff]
    %v354 = vld [vmem:[#allocation6 + $0x758] sm:$0xff]
    %v355 = vld [vmem:[#allocation6 + $0x760] sm:$0xff]
    %v356 = vld [vmem:[#allocation6 + $0x768] sm:$0xff]
    %v357 = vld [vmem:[#allocation6 + $0x770] sm:$0xff]
    %v358 = vld [vmem:[#allocation6 + $0x778] sm:$0xff]
    %v359 = vld [vmem:[#allocation6 + $0x780] sm:$0xff]
    %v360 = vld [vmem:[#allocation6 + $0x788] sm:$0xff]
    %v361 = vld [vmem:[#allocation6 + $0x790] sm:$0xff]
    %v362 = vld [vmem:[#allocation6 + $0x798] sm:$0xff]
    %v363 = vld [vmem:[#allocation6 + $0x7a0] sm:$0xff]
    %v364 = vld [vmem:[#allocation6 + $0x7a8] sm:$0xff]
    %v365 = vld [vmem:[#allocation6 + $0x7b0] sm:$0xff]
    %v366 = vld [vmem:[#allocation6 + $0x7b8] sm:$0xff]
    %v367 = vld [vmem:[#allocation6 + $0x7c0] sm:$0xff]
    %v368 = vld [vmem:[#allocation6 + $0x7c8] sm:$0xff]
    %v369 = vld [vmem:[#allocation6 + $0x7d0] sm:$0xff]
    %v370 = vld [vmem:[#allocation6 + $0x7d8] sm:$0xff]
    %v371 = vld [vmem:[#allocation6 + $0x7e0] sm:$0xff]
    %v372 = vld [vmem:[#allocation6 + $0x7e8] sm:$0xff]
    %v373 = vld [vmem:[#allocation6 + $0x7f0] sm:$0xff]
    %v374 = vld [vmem:[#allocation6 + $0x7f8] sm:$0xff]
    %v375 = vld [vmem:[%s3] sm:$0xf]
    %v377 = vlaneseq
    %v378 = vshrl.u32 %v377, 7
    %v379 = vsub.s32 0, %v378
    %v380 = vrot.slane %v375, %v379
    %v381 = vlaneseq
    %v382 = vshrl.u32 %v381, 7
    %v383 = vsub.s32 1, %v382
    %v384 = vrot.slane %v375, %v383
    %v385 = vlaneseq
    %v386 = vshrl.u32 %v385, 7
    %v387 = vsub.s32 2, %v386
    %v388 = vrot.slane %v375, %v387
    %v389 = vlaneseq
    %v390 = vshrl.u32 %v389, 7
    %v391 = vsub.s32 3, %v390
    %v392 = vrot.slane %v375, %v391
    %v653 = vunpack.c.l.b16 %v119
    %v654 = vunpack.c.h.b16 %v119
    %v655 = vunpack.c.l.b16 %v120
    %v656 = vunpack.c.h.b16 %v120
    %v657 = vunpack.c.l.b16 %v121
    %v658 = vunpack.c.h.b16 %v121
    %v659 = vunpack.c.l.b16 %v122
    %v660 = vunpack.c.h.b16 %v122
    %v661 = vunpack.c.l.b16 %v123
    %v662 = vunpack.c.h.b16 %v123
    %v663 = vunpack.c.l.b16 %v124
    %v664 = vunpack.c.h.b16 %v124
    %v665 = vunpack.c.l.b16 %v125
    %v666 = vunpack.c.h.b16 %v125
    %v667 = vunpack.c.l.b16 %v126
    %v668 = vunpack.c.h.b16 %v126
    %v669 = vunpack.c.l.b16 %v127
    %v670 = vunpack.c.h.b16 %v127
    %v671 = vunpack.c.l.b16 %v128
    %v672 = vunpack.c.h.b16 %v128
    %v673 = vunpack.c.l.b16 %v129
    %v674 = vunpack.c.h.b16 %v129
    %v675 = vunpack.c.l.b16 %v130
    %v676 = vunpack.c.h.b16 %v130
    %v677 = vunpack.c.l.b16 %v131
    %v678 = vunpack.c.h.b16 %v131
    %v679 = vunpack.c.l.b16 %v132
    %v680 = vunpack.c.h.b16 %v132
    %v681 = vunpack.c.l.b16 %v133
    %v682 = vunpack.c.h.b16 %v133
    %v683 = vunpack.c.l.b16 %v134
    %v684 = vunpack.c.h.b16 %v134
    %v685 = vunpack.c.l.b16 %v135
    %v686 = vunpack.c.h.b16 %v135
    %v687 = vunpack.c.l.b16 %v136
    %v688 = vunpack.c.h.b16 %v136
    %v689 = vunpack.c.l.b16 %v137
    %v690 = vunpack.c.h.b16 %v137
    %v691 = vunpack.c.l.b16 %v138
    %v692 = vunpack.c.h.b16 %v138
    %v693 = vunpack.c.l.b16 %v139
    %v694 = vunpack.c.h.b16 %v139
    %v695 = vunpack.c.l.b16 %v140
    %v696 = vunpack.c.h.b16 %v140
    %v697 = vunpack.c.l.b16 %v141
    %v698 = vunpack.c.h.b16 %v141
    %v699 = vunpack.c.l.b16 %v142
    %v700 = vunpack.c.h.b16 %v142
    %v701 = vunpack.c.l.b16 %v143
    %v702 = vunpack.c.h.b16 %v143
    %v703 = vunpack.c.l.b16 %v144
    %v704 = vunpack.c.h.b16 %v144
    %v705 = vunpack.c.l.b16 %v145
    %v706 = vunpack.c.h.b16 %v145
    %v707 = vunpack.c.l.b16 %v146
    %v708 = vunpack.c.h.b16 %v146
    %v709 = vunpack.c.l.b16 %v147
    %v710 = vunpack.c.h.b16 %v147
    %v711 = vunpack.c.l.b16 %v148
    %v712 = vunpack.c.h.b16 %v148
    %v713 = vunpack.c.l.b16 %v149
    %v714 = vunpack.c.h.b16 %v149
    %v715 = vunpack.c.l.b16 %v150
    %v716 = vunpack.c.h.b16 %v150
    %v717 = vunpack.c.l.b16 %v151
    %v718 = vunpack.c.h.b16 %v151
    %v719 = vunpack.c.l.b16 %v152
    %v720 = vunpack.c.h.b16 %v152
    %v721 = vunpack.c.l.b16 %v153
    %v722 = vunpack.c.h.b16 %v153
    %v723 = vunpack.c.l.b16 %v154
    %v724 = vunpack.c.h.b16 %v154
    %v725 = vunpack.c.l.b16 %v155
    %v726 = vunpack.c.h.b16 %v155
    %v727 = vunpack.c.l.b16 %v156
    %v728 = vunpack.c.h.b16 %v156
    %v729 = vunpack.c.l.b16 %v157
    %v730 = vunpack.c.h.b16 %v157
    %v731 = vunpack.c.l.b16 %v158
    %v732 = vunpack.c.h.b16 %v158
    %v733 = vunpack.c.l.b16 %v159
    %v734 = vunpack.c.h.b16 %v159
    %v735 = vunpack.c.l.b16 %v160
    %v736 = vunpack.c.h.b16 %v160
    %v737 = vunpack.c.l.b16 %v161
    %v738 = vunpack.c.h.b16 %v161
    %v739 = vunpack.c.l.b16 %v162
    %v740 = vunpack.c.h.b16 %v162
    %v741 = vunpack.c.l.b16 %v163
    %v742 = vunpack.c.h.b16 %v163
    %v743 = vunpack.c.l.b16 %v164
    %v744 = vunpack.c.h.b16 %v164
    %v745 = vunpack.c.l.b16 %v165
    %v746 = vunpack.c.h.b16 %v165
    %v747 = vunpack.c.l.b16 %v166
    %v748 = vunpack.c.h.b16 %v166
    %v749 = vunpack.c.l.b16 %v167
    %v750 = vunpack.c.h.b16 %v167
    %v751 = vunpack.c.l.b16 %v168
    %v752 = vunpack.c.h.b16 %v168
    %v753 = vunpack.c.l.b16 %v169
    %v754 = vunpack.c.h.b16 %v169
    %v755 = vunpack.c.l.b16 %v170
    %v756 = vunpack.c.h.b16 %v170
    %v757 = vunpack.c.l.b16 %v171
    %v758 = vunpack.c.h.b16 %v171
    %v759 = vunpack.c.l.b16 %v172
    %v760 = vunpack.c.h.b16 %v172
    %v761 = vunpack.c.l.b16 %v173
    %v762 = vunpack.c.h.b16 %v173
    %v763 = vunpack.c.l.b16 %v174
    %v764 = vunpack.c.h.b16 %v174
    %v765 = vunpack.c.l.b16 %v175
    %v766 = vunpack.c.h.b16 %v175
    %v767 = vunpack.c.l.b16 %v176
    %v768 = vunpack.c.h.b16 %v176
    %v769 = vunpack.c.l.b16 %v177
    %v770 = vunpack.c.h.b16 %v177
    %v771 = vunpack.c.l.b16 %v178
    %v772 = vunpack.c.h.b16 %v178
    %v773 = vunpack.c.l.b16 %v179
    %v774 = vunpack.c.h.b16 %v179
    %v775 = vunpack.c.l.b16 %v180
    %v776 = vunpack.c.h.b16 %v180
    %v777 = vunpack.c.l.b16 %v181
    %v778 = vunpack.c.h.b16 %v181
    %v779 = vunpack.c.l.b16 %v182
    %v780 = vunpack.c.h.b16 %v182
    %v781 = vunpack.c.l.b16 %v183
    %v782 = vunpack.c.h.b16 %v183
    %v783 = vunpack.c.l.b16 %v184
    %v784 = vunpack.c.h.b16 %v184
    %v785 = vunpack.c.l.b16 %v185
    %v786 = vunpack.c.h.b16 %v185
    %v787 = vunpack.c.l.b16 %v186
    %v788 = vunpack.c.h.b16 %v186
    %v789 = vunpack.c.l.b16 %v187
    %v790 = vunpack.c.h.b16 %v187
    %v791 = vunpack.c.l.b16 %v188
    %v792 = vunpack.c.h.b16 %v188
    %v793 = vunpack.c.l.b16 %v189
    %v794 = vunpack.c.h.b16 %v189
    %v795 = vunpack.c.l.b16 %v190
    %v796 = vunpack.c.h.b16 %v190
    %v797 = vunpack.c.l.b16 %v191
    %v798 = vunpack.c.h.b16 %v191
    %v799 = vunpack.c.l.b16 %v192
    %v800 = vunpack.c.h.b16 %v192
    %v801 = vunpack.c.l.b16 %v193
    %v802 = vunpack.c.h.b16 %v193
    %v803 = vunpack.c.l.b16 %v194
    %v804 = vunpack.c.h.b16 %v194
    %v805 = vunpack.c.l.b16 %v195
    %v806 = vunpack.c.h.b16 %v195
    %v807 = vunpack.c.l.b16 %v196
    %v808 = vunpack.c.h.b16 %v196
    %v809 = vunpack.c.l.b16 %v197
    %v810 = vunpack.c.h.b16 %v197
    %v811 = vunpack.c.l.b16 %v198
    %v812 = vunpack.c.h.b16 %v198
    %v813 = vunpack.c.l.b16 %v199
    %v814 = vunpack.c.h.b16 %v199
    %v815 = vunpack.c.l.b16 %v200
    %v816 = vunpack.c.h.b16 %v200
    %v817 = vunpack.c.l.b16 %v201
    %v818 = vunpack.c.h.b16 %v201
    %v819 = vunpack.c.l.b16 %v202
    %v820 = vunpack.c.h.b16 %v202
    %v821 = vunpack.c.l.b16 %v203
    %v822 = vunpack.c.h.b16 %v203
    %v823 = vunpack.c.l.b16 %v204
    %v824 = vunpack.c.h.b16 %v204
    %v825 = vunpack.c.l.b16 %v205
    %v826 = vunpack.c.h.b16 %v205
    %v827 = vunpack.c.l.b16 %v206
    %v828 = vunpack.c.h.b16 %v206
    %v829 = vunpack.c.l.b16 %v207
    %v830 = vunpack.c.h.b16 %v207
    %v831 = vunpack.c.l.b16 %v208
    %v832 = vunpack.c.h.b16 %v208
    %v833 = vunpack.c.l.b16 %v209
    %v834 = vunpack.c.h.b16 %v209
    %v835 = vunpack.c.l.b16 %v210
    %v836 = vunpack.c.h.b16 %v210
    %v837 = vunpack.c.l.b16 %v211
    %v838 = vunpack.c.h.b16 %v211
    %v839 = vunpack.c.l.b16 %v212
    %v840 = vunpack.c.h.b16 %v212
    %v841 = vunpack.c.l.b16 %v213
    %v842 = vunpack.c.h.b16 %v213
    %v843 = vunpack.c.l.b16 %v214
    %v844 = vunpack.c.h.b16 %v214
    %v845 = vunpack.c.l.b16 %v215
    %v846 = vunpack.c.h.b16 %v215
    %v847 = vunpack.c.l.b16 %v216
    %v848 = vunpack.c.h.b16 %v216
    %v849 = vunpack.c.l.b16 %v217
    %v850 = vunpack.c.h.b16 %v217
    %v851 = vunpack.c.l.b16 %v218
    %v852 = vunpack.c.h.b16 %v218
    %v853 = vunpack.c.l.b16 %v219
    %v854 = vunpack.c.h.b16 %v219
    %v855 = vunpack.c.l.b16 %v220
    %v856 = vunpack.c.h.b16 %v220
    %v857 = vunpack.c.l.b16 %v221
    %v858 = vunpack.c.h.b16 %v221
    %v859 = vunpack.c.l.b16 %v222
    %v860 = vunpack.c.h.b16 %v222
    %v861 = vunpack.c.l.b16 %v223
    %v862 = vunpack.c.h.b16 %v223
    %v863 = vunpack.c.l.b16 %v224
    %v864 = vunpack.c.h.b16 %v224
    %v865 = vunpack.c.l.b16 %v225
    %v866 = vunpack.c.h.b16 %v225
    %v867 = vunpack.c.l.b16 %v226
    %v868 = vunpack.c.h.b16 %v226
    %v869 = vunpack.c.l.b16 %v227
    %v870 = vunpack.c.h.b16 %v227
    %v871 = vunpack.c.l.b16 %v228
    %v872 = vunpack.c.h.b16 %v228
    %v873 = vunpack.c.l.b16 %v229
    %v874 = vunpack.c.h.b16 %v229
    %v875 = vunpack.c.l.b16 %v230
    %v876 = vunpack.c.h.b16 %v230
    %v877 = vunpack.c.l.b16 %v231
    %v878 = vunpack.c.h.b16 %v231
    %v879 = vunpack.c.l.b16 %v232
    %v880 = vunpack.c.h.b16 %v232
    %v881 = vunpack.c.l.b16 %v233
    %v882 = vunpack.c.h.b16 %v233
    %v883 = vunpack.c.l.b16 %v234
    %v884 = vunpack.c.h.b16 %v234
    %v885 = vunpack.c.l.b16 %v235
    %v886 = vunpack.c.h.b16 %v235
    %v887 = vunpack.c.l.b16 %v236
    %v888 = vunpack.c.h.b16 %v236
    %v889 = vunpack.c.l.b16 %v237
    %v890 = vunpack.c.h.b16 %v237
    %v891 = vunpack.c.l.b16 %v238
    %v892 = vunpack.c.h.b16 %v238
    %v893 = vunpack.c.l.b16 %v239
    %v894 = vunpack.c.h.b16 %v239
    %v895 = vunpack.c.l.b16 %v240
    %v896 = vunpack.c.h.b16 %v240
    %v897 = vunpack.c.l.b16 %v241
    %v898 = vunpack.c.h.b16 %v241
    %v899 = vunpack.c.l.b16 %v242
    %v900 = vunpack.c.h.b16 %v242
    %v901 = vunpack.c.l.b16 %v243
    %v902 = vunpack.c.h.b16 %v243
    %v903 = vunpack.c.l.b16 %v244
    %v904 = vunpack.c.h.b16 %v244
    %v905 = vunpack.c.l.b16 %v245
    %v906 = vunpack.c.h.b16 %v245
    %v907 = vunpack.c.l.b16 %v246
    %v908 = vunpack.c.h.b16 %v246
    %v909 = vunpack.c.l.b16 %v247
    %v910 = vunpack.c.h.b16 %v247
    %v911 = vunpack.c.l.b16 %v248
    %v912 = vunpack.c.h.b16 %v248
    %v913 = vunpack.c.l.b16 %v249
    %v914 = vunpack.c.h.b16 %v249
    %v915 = vunpack.c.l.b16 %v250
    %v916 = vunpack.c.h.b16 %v250
    %v917 = vunpack.c.l.b16 %v251
    %v918 = vunpack.c.h.b16 %v251
    %v919 = vunpack.c.l.b16 %v252
    %v920 = vunpack.c.h.b16 %v252
    %v921 = vunpack.c.l.b16 %v253
    %v922 = vunpack.c.h.b16 %v253
    %v923 = vunpack.c.l.b16 %v254
    %v924 = vunpack.c.h.b16 %v254
    %v925 = vunpack.c.l.b16 %v255
    %v926 = vunpack.c.h.b16 %v255
    %v927 = vunpack.c.l.b16 %v256
    %v928 = vunpack.c.h.b16 %v256
    %v929 = vunpack.c.l.b16 %v257
    %v930 = vunpack.c.h.b16 %v257
    %v931 = vunpack.c.l.b16 %v258
    %v932 = vunpack.c.h.b16 %v258
    %v933 = vunpack.c.l.b16 %v259
    %v934 = vunpack.c.h.b16 %v259
    %v935 = vunpack.c.l.b16 %v260
    %v936 = vunpack.c.h.b16 %v260
    %v937 = vunpack.c.l.b16 %v261
    %v938 = vunpack.c.h.b16 %v261
    %v939 = vunpack.c.l.b16 %v262
    %v940 = vunpack.c.h.b16 %v262
    %v941 = vunpack.c.l.b16 %v263
    %v942 = vunpack.c.h.b16 %v263
    %v943 = vunpack.c.l.b16 %v264
    %v944 = vunpack.c.h.b16 %v264
    %v945 = vunpack.c.l.b16 %v265
    %v946 = vunpack.c.h.b16 %v265
    %v947 = vunpack.c.l.b16 %v266
    %v948 = vunpack.c.h.b16 %v266
    %v949 = vunpack.c.l.b16 %v267
    %v950 = vunpack.c.h.b16 %v267
    %v951 = vunpack.c.l.b16 %v268
    %v952 = vunpack.c.h.b16 %v268
    %v953 = vunpack.c.l.b16 %v269
    %v954 = vunpack.c.h.b16 %v269
    %v955 = vunpack.c.l.b16 %v270
    %v956 = vunpack.c.h.b16 %v270
    %v957 = vunpack.c.l.b16 %v271
    %v958 = vunpack.c.h.b16 %v271
    %v959 = vunpack.c.l.b16 %v272
    %v960 = vunpack.c.h.b16 %v272
    %v961 = vunpack.c.l.b16 %v273
    %v962 = vunpack.c.h.b16 %v273
    %v963 = vunpack.c.l.b16 %v274
    %v964 = vunpack.c.h.b16 %v274
    %v965 = vunpack.c.l.b16 %v275
    %v966 = vunpack.c.h.b16 %v275
    %v967 = vunpack.c.l.b16 %v276
    %v968 = vunpack.c.h.b16 %v276
    %v969 = vunpack.c.l.b16 %v277
    %v970 = vunpack.c.h.b16 %v277
    %v971 = vunpack.c.l.b16 %v278
    %v972 = vunpack.c.h.b16 %v278
    %v973 = vunpack.c.l.b16 %v279
    %v974 = vunpack.c.h.b16 %v279
    %v975 = vunpack.c.l.b16 %v280
    %v976 = vunpack.c.h.b16 %v280
    %v977 = vunpack.c.l.b16 %v281
    %v978 = vunpack.c.h.b16 %v281
    %v979 = vunpack.c.l.b16 %v282
    %v980 = vunpack.c.h.b16 %v282
    %v981 = vunpack.c.l.b16 %v283
    %v982 = vunpack.c.h.b16 %v283
    %v983 = vunpack.c.l.b16 %v284
    %v984 = vunpack.c.h.b16 %v284
    %v985 = vunpack.c.l.b16 %v285
    %v986 = vunpack.c.h.b16 %v285
    %v987 = vunpack.c.l.b16 %v286
    %v988 = vunpack.c.h.b16 %v286
    %v989 = vunpack.c.l.b16 %v287
    %v990 = vunpack.c.h.b16 %v287
    %v991 = vunpack.c.l.b16 %v288
    %v992 = vunpack.c.h.b16 %v288
    %v993 = vunpack.c.l.b16 %v289
    %v994 = vunpack.c.h.b16 %v289
    %v995 = vunpack.c.l.b16 %v290
    %v996 = vunpack.c.h.b16 %v290
    %v997 = vunpack.c.l.b16 %v291
    %v998 = vunpack.c.h.b16 %v291
    %v999 = vunpack.c.l.b16 %v292
    %v1000 = vunpack.c.h.b16 %v292
    %v1001 = vunpack.c.l.b16 %v293
    %v1002 = vunpack.c.h.b16 %v293
    %v1003 = vunpack.c.l.b16 %v294
    %v1004 = vunpack.c.h.b16 %v294
    %v1005 = vunpack.c.l.b16 %v295
    %v1006 = vunpack.c.h.b16 %v295
    %v1007 = vunpack.c.l.b16 %v296
    %v1008 = vunpack.c.h.b16 %v296
    %v1009 = vunpack.c.l.b16 %v297
    %v1010 = vunpack.c.h.b16 %v297
    %v1011 = vunpack.c.l.b16 %v298
    %v1012 = vunpack.c.h.b16 %v298
    %v1013 = vunpack.c.l.b16 %v299
    %v1014 = vunpack.c.h.b16 %v299
    %v1015 = vunpack.c.l.b16 %v300
    %v1016 = vunpack.c.h.b16 %v300
    %v1017 = vunpack.c.l.b16 %v301
    %v1018 = vunpack.c.h.b16 %v301
    %v1019 = vunpack.c.l.b16 %v302
    %v1020 = vunpack.c.h.b16 %v302
    %v1021 = vunpack.c.l.b16 %v303
    %v1022 = vunpack.c.h.b16 %v303
    %v1023 = vunpack.c.l.b16 %v304
    %v1024 = vunpack.c.h.b16 %v304
    %v1025 = vunpack.c.l.b16 %v305
    %v1026 = vunpack.c.h.b16 %v305
    %v1027 = vunpack.c.l.b16 %v306
    %v1028 = vunpack.c.h.b16 %v306
    %v1029 = vunpack.c.l.b16 %v307
    %v1030 = vunpack.c.h.b16 %v307
    %v1031 = vunpack.c.l.b16 %v308
    %v1032 = vunpack.c.h.b16 %v308
    %v1033 = vunpack.c.l.b16 %v309
    %v1034 = vunpack.c.h.b16 %v309
    %v1035 = vunpack.c.l.b16 %v310
    %v1036 = vunpack.c.h.b16 %v310
    %v1037 = vunpack.c.l.b16 %v311
    %v1038 = vunpack.c.h.b16 %v311
    %v1039 = vunpack.c.l.b16 %v312
    %v1040 = vunpack.c.h.b16 %v312
    %v1041 = vunpack.c.l.b16 %v313
    %v1042 = vunpack.c.h.b16 %v313
    %v1043 = vunpack.c.l.b16 %v314
    %v1044 = vunpack.c.h.b16 %v314
    %v1045 = vunpack.c.l.b16 %v315
    %v1046 = vunpack.c.h.b16 %v315
    %v1047 = vunpack.c.l.b16 %v316
    %v1048 = vunpack.c.h.b16 %v316
    %v1049 = vunpack.c.l.b16 %v317
    %v1050 = vunpack.c.h.b16 %v317
    %v1051 = vunpack.c.l.b16 %v318
    %v1052 = vunpack.c.h.b16 %v318
    %v1053 = vunpack.c.l.b16 %v319
    %v1054 = vunpack.c.h.b16 %v319
    %v1055 = vunpack.c.l.b16 %v320
    %v1056 = vunpack.c.h.b16 %v320
    %v1057 = vunpack.c.l.b16 %v321
    %v1058 = vunpack.c.h.b16 %v321
    %v1059 = vunpack.c.l.b16 %v322
    %v1060 = vunpack.c.h.b16 %v322
    %v1061 = vunpack.c.l.b16 %v323
    %v1062 = vunpack.c.h.b16 %v323
    %v1063 = vunpack.c.l.b16 %v324
    %v1064 = vunpack.c.h.b16 %v324
    %v1065 = vunpack.c.l.b16 %v325
    %v1066 = vunpack.c.h.b16 %v325
    %v1067 = vunpack.c.l.b16 %v326
    %v1068 = vunpack.c.h.b16 %v326
    %v1069 = vunpack.c.l.b16 %v327
    %v1070 = vunpack.c.h.b16 %v327
    %v1071 = vunpack.c.l.b16 %v328
    %v1072 = vunpack.c.h.b16 %v328
    %v1073 = vunpack.c.l.b16 %v329
    %v1074 = vunpack.c.h.b16 %v329
    %v1075 = vunpack.c.l.b16 %v330
    %v1076 = vunpack.c.h.b16 %v330
    %v1077 = vunpack.c.l.b16 %v331
    %v1078 = vunpack.c.h.b16 %v331
    %v1079 = vunpack.c.l.b16 %v332
    %v1080 = vunpack.c.h.b16 %v332
    %v1081 = vunpack.c.l.b16 %v333
    %v1082 = vunpack.c.h.b16 %v333
    %v1083 = vunpack.c.l.b16 %v334
    %v1084 = vunpack.c.h.b16 %v334
    %v1085 = vunpack.c.l.b16 %v335
    %v1086 = vunpack.c.h.b16 %v335
    %v1087 = vunpack.c.l.b16 %v336
    %v1088 = vunpack.c.h.b16 %v336
    %v1089 = vunpack.c.l.b16 %v337
    %v1090 = vunpack.c.h.b16 %v337
    %v1091 = vunpack.c.l.b16 %v338
    %v1092 = vunpack.c.h.b16 %v338
    %v1093 = vunpack.c.l.b16 %v339
    %v1094 = vunpack.c.h.b16 %v339
    %v1095 = vunpack.c.l.b16 %v340
    %v1096 = vunpack.c.h.b16 %v340
    %v1097 = vunpack.c.l.b16 %v341
    %v1098 = vunpack.c.h.b16 %v341
    %v1099 = vunpack.c.l.b16 %v342
    %v1100 = vunpack.c.h.b16 %v342
    %v1101 = vunpack.c.l.b16 %v343
    %v1102 = vunpack.c.h.b16 %v343
    %v1103 = vunpack.c.l.b16 %v344
    %v1104 = vunpack.c.h.b16 %v344
    %v1105 = vunpack.c.l.b16 %v345
    %v1106 = vunpack.c.h.b16 %v345
    %v1107 = vunpack.c.l.b16 %v346
    %v1108 = vunpack.c.h.b16 %v346
    %v1109 = vunpack.c.l.b16 %v347
    %v1110 = vunpack.c.h.b16 %v347
    %v1111 = vunpack.c.l.b16 %v348
    %v1112 = vunpack.c.h.b16 %v348
    %v1113 = vunpack.c.l.b16 %v349
    %v1114 = vunpack.c.h.b16 %v349
    %v1115 = vunpack.c.l.b16 %v350
    %v1116 = vunpack.c.h.b16 %v350
    %v1117 = vunpack.c.l.b16 %v351
    %v1118 = vunpack.c.h.b16 %v351
    %v1119 = vunpack.c.l.b16 %v352
    %v1120 = vunpack.c.h.b16 %v352
    %v1121 = vunpack.c.l.b16 %v353
    %v1122 = vunpack.c.h.b16 %v353
    %v1123 = vunpack.c.l.b16 %v354
    %v1124 = vunpack.c.h.b16 %v354
    %v1125 = vunpack.c.l.b16 %v355
    %v1126 = vunpack.c.h.b16 %v355
    %v1127 = vunpack.c.l.b16 %v356
    %v1128 = vunpack.c.h.b16 %v356
    %v1129 = vunpack.c.l.b16 %v357
    %v1130 = vunpack.c.h.b16 %v357
    %v1131 = vunpack.c.l.b16 %v358
    %v1132 = vunpack.c.h.b16 %v358
    %v1133 = vunpack.c.l.b16 %v359
    %v1134 = vunpack.c.h.b16 %v359
    %v1135 = vunpack.c.l.b16 %v360
    %v1136 = vunpack.c.h.b16 %v360
    %v1137 = vunpack.c.l.b16 %v361
    %v1138 = vunpack.c.h.b16 %v361
    %v1139 = vunpack.c.l.b16 %v362
    %v1140 = vunpack.c.h.b16 %v362
    %v1141 = vunpack.c.l.b16 %v363
    %v1142 = vunpack.c.h.b16 %v363
    %v1143 = vunpack.c.l.b16 %v364
    %v1144 = vunpack.c.h.b16 %v364
    %v1145 = vunpack.c.l.b16 %v365
    %v1146 = vunpack.c.h.b16 %v365
    %v1147 = vunpack.c.l.b16 %v366
    %v1148 = vunpack.c.h.b16 %v366
    %v1149 = vunpack.c.l.b16 %v367
    %v1150 = vunpack.c.h.b16 %v367
    %v1151 = vunpack.c.l.b16 %v368
    %v1152 = vunpack.c.h.b16 %v368
    %v1153 = vunpack.c.l.b16 %v369
    %v1154 = vunpack.c.h.b16 %v369
    %v1155 = vunpack.c.l.b16 %v370
    %v1156 = vunpack.c.h.b16 %v370
    %v1157 = vunpack.c.l.b16 %v371
    %v1158 = vunpack.c.h.b16 %v371
    %v1159 = vunpack.c.l.b16 %v372
    %v1160 = vunpack.c.h.b16 %v372
    %v1161 = vunpack.c.l.b16 %v373
    %v1162 = vunpack.c.h.b16 %v373
    %v1163 = vunpack.c.l.b16 %v374
    %v1164 = vunpack.c.h.b16 %v374
    %v1165 = vpack.c.b16 %v657, %v653
    %v1166 = vpack.c.b16 %v658, %v654
    %v1167 = vpack.c.b16 %v659, %v655
    %v1168 = vpack.c.b16 %v660, %v656
    %v1169 = vpack.c.b16 %v665, %v661
    %v1170 = vpack.c.b16 %v666, %v662
    %v1171 = vpack.c.b16 %v667, %v663
    %v1172 = vpack.c.b16 %v668, %v664
    %v1173 = vpack.c.b16 %v673, %v669
    %v1174 = vpack.c.b16 %v674, %v670
    %v1175 = vpack.c.b16 %v675, %v671
    %v1176 = vpack.c.b16 %v676, %v672
    %v1177 = vpack.c.b16 %v681, %v677
    %v1178 = vpack.c.b16 %v682, %v678
    %v1179 = vpack.c.b16 %v683, %v679
    %v1180 = vpack.c.b16 %v684, %v680
    %v1181 = vpack.c.b16 %v689, %v685
    %v1182 = vpack.c.b16 %v690, %v686
    %v1183 = vpack.c.b16 %v691, %v687
    %v1184 = vpack.c.b16 %v692, %v688
    %v1185 = vpack.c.b16 %v697, %v693
    %v1186 = vpack.c.b16 %v698, %v694
    %v1187 = vpack.c.b16 %v699, %v695
    %v1188 = vpack.c.b16 %v700, %v696
    %v1189 = vpack.c.b16 %v705, %v701
    %v1190 = vpack.c.b16 %v706, %v702
    %v1191 = vpack.c.b16 %v707, %v703
    %v1192 = vpack.c.b16 %v708, %v704
    %v1193 = vpack.c.b16 %v713, %v709
    %v1194 = vpack.c.b16 %v714, %v710
    %v1195 = vpack.c.b16 %v715, %v711
    %v1196 = vpack.c.b16 %v716, %v712
    %v1197 = vpack.c.b16 %v721, %v717
    %v1198 = vpack.c.b16 %v722, %v718
    %v1199 = vpack.c.b16 %v723, %v719
    %v1200 = vpack.c.b16 %v724, %v720
    %v1201 = vpack.c.b16 %v729, %v725
    %v1202 = vpack.c.b16 %v730, %v726
    %v1203 = vpack.c.b16 %v731, %v727
    %v1204 = vpack.c.b16 %v732, %v728
    %v1205 = vpack.c.b16 %v737, %v733
    %v1206 = vpack.c.b16 %v738, %v734
    %v1207 = vpack.c.b16 %v739, %v735
    %v1208 = vpack.c.b16 %v740, %v736
    %v1209 = vpack.c.b16 %v745, %v741
    %v1210 = vpack.c.b16 %v746, %v742
    %v1211 = vpack.c.b16 %v747, %v743
    %v1212 = vpack.c.b16 %v748, %v744
    %v1213 = vpack.c.b16 %v753, %v749
    %v1214 = vpack.c.b16 %v754, %v750
    %v1215 = vpack.c.b16 %v755, %v751
    %v1216 = vpack.c.b16 %v756, %v752
    %v1217 = vpack.c.b16 %v761, %v757
    %v1218 = vpack.c.b16 %v762, %v758
    %v1219 = vpack.c.b16 %v763, %v759
    %v1220 = vpack.c.b16 %v764, %v760
    %v1221 = vpack.c.b16 %v769, %v765
    %v1222 = vpack.c.b16 %v770, %v766
    %v1223 = vpack.c.b16 %v771, %v767
    %v1224 = vpack.c.b16 %v772, %v768
    %v1225 = vpack.c.b16 %v777, %v773
    %v1226 = vpack.c.b16 %v778, %v774
    %v1227 = vpack.c.b16 %v779, %v775
    %v1228 = vpack.c.b16 %v780, %v776
    %v1229 = vpack.c.b16 %v785, %v781
    %v1230 = vpack.c.b16 %v786, %v782
    %v1231 = vpack.c.b16 %v787, %v783
    %v1232 = vpack.c.b16 %v788, %v784
    %v1233 = vpack.c.b16 %v793, %v789
    %v1234 = vpack.c.b16 %v794, %v790
    %v1235 = vpack.c.b16 %v795, %v791
    %v1236 = vpack.c.b16 %v796, %v792
    %v1237 = vpack.c.b16 %v801, %v797
    %v1238 = vpack.c.b16 %v802, %v798
    %v1239 = vpack.c.b16 %v803, %v799
    %v1240 = vpack.c.b16 %v804, %v800
    %v1241 = vpack.c.b16 %v809, %v805
    %v1242 = vpack.c.b16 %v810, %v806
    %v1243 = vpack.c.b16 %v811, %v807
    %v1244 = vpack.c.b16 %v812, %v808
    %v1245 = vpack.c.b16 %v817, %v813
    %v1246 = vpack.c.b16 %v818, %v814
    %v1247 = vpack.c.b16 %v819, %v815
    %v1248 = vpack.c.b16 %v820, %v816
    %v1249 = vpack.c.b16 %v825, %v821
    %v1250 = vpack.c.b16 %v826, %v822
    %v1251 = vpack.c.b16 %v827, %v823
    %v1252 = vpack.c.b16 %v828, %v824
    %v1253 = vpack.c.b16 %v833, %v829
    %v1254 = vpack.c.b16 %v834, %v830
    %v1255 = vpack.c.b16 %v835, %v831
    %v1256 = vpack.c.b16 %v836, %v832
    %v1257 = vpack.c.b16 %v841, %v837
    %v1258 = vpack.c.b16 %v842, %v838
    %v1259 = vpack.c.b16 %v843, %v839
    %v1260 = vpack.c.b16 %v844, %v840
    %v1261 = vpack.c.b16 %v849, %v845
    %v1262 = vpack.c.b16 %v850, %v846
    %v1263 = vpack.c.b16 %v851, %v847
    %v1264 = vpack.c.b16 %v852, %v848
    %v1265 = vpack.c.b16 %v857, %v853
    %v1266 = vpack.c.b16 %v858, %v854
    %v1267 = vpack.c.b16 %v859, %v855
    %v1268 = vpack.c.b16 %v860, %v856
    %v1269 = vpack.c.b16 %v865, %v861
    %v1270 = vpack.c.b16 %v866, %v862
    %v1271 = vpack.c.b16 %v867, %v863
    %v1272 = vpack.c.b16 %v868, %v864
    %v1273 = vpack.c.b16 %v873, %v869
    %v1274 = vpack.c.b16 %v874, %v870
    %v1275 = vpack.c.b16 %v875, %v871
    %v1276 = vpack.c.b16 %v876, %v872
    %v1277 = vpack.c.b16 %v881, %v877
    %v1278 = vpack.c.b16 %v882, %v878
    %v1279 = vpack.c.b16 %v883, %v879
    %v1280 = vpack.c.b16 %v884, %v880
    %v1281 = vpack.c.b16 %v889, %v885
    %v1282 = vpack.c.b16 %v890, %v886
    %v1283 = vpack.c.b16 %v891, %v887
    %v1284 = vpack.c.b16 %v892, %v888
    %v1285 = vpack.c.b16 %v897, %v893
    %v1286 = vpack.c.b16 %v898, %v894
    %v1287 = vpack.c.b16 %v899, %v895
    %v1288 = vpack.c.b16 %v900, %v896
    %v1289 = vpack.c.b16 %v905, %v901
    %v1290 = vpack.c.b16 %v906, %v902
    %v1291 = vpack.c.b16 %v907, %v903
    %v1292 = vpack.c.b16 %v908, %v904
    %v1293 = vpack.c.b16 %v913, %v909
    %v1294 = vpack.c.b16 %v914, %v910
    %v1295 = vpack.c.b16 %v915, %v911
    %v1296 = vpack.c.b16 %v916, %v912
    %v1297 = vpack.c.b16 %v921, %v917
    %v1298 = vpack.c.b16 %v922, %v918
    %v1299 = vpack.c.b16 %v923, %v919
    %v1300 = vpack.c.b16 %v924, %v920
    %v1301 = vpack.c.b16 %v929, %v925
    %v1302 = vpack.c.b16 %v930, %v926
    %v1303 = vpack.c.b16 %v931, %v927
    %v1304 = vpack.c.b16 %v932, %v928
    %v1305 = vpack.c.b16 %v937, %v933
    %v1306 = vpack.c.b16 %v938, %v934
    %v1307 = vpack.c.b16 %v939, %v935
    %v1308 = vpack.c.b16 %v940, %v936
    %v1309 = vpack.c.b16 %v945, %v941
    %v1310 = vpack.c.b16 %v946, %v942
    %v1311 = vpack.c.b16 %v947, %v943
    %v1312 = vpack.c.b16 %v948, %v944
    %v1313 = vpack.c.b16 %v953, %v949
    %v1314 = vpack.c.b16 %v954, %v950
    %v1315 = vpack.c.b16 %v955, %v951
    %v1316 = vpack.c.b16 %v956, %v952
    %v1317 = vpack.c.b16 %v961, %v957
    %v1318 = vpack.c.b16 %v962, %v958
    %v1319 = vpack.c.b16 %v963, %v959
    %v1320 = vpack.c.b16 %v964, %v960
    %v1321 = vpack.c.b16 %v969, %v965
    %v1322 = vpack.c.b16 %v970, %v966
    %v1323 = vpack.c.b16 %v971, %v967
    %v1324 = vpack.c.b16 %v972, %v968
    %v1325 = vpack.c.b16 %v977, %v973
    %v1326 = vpack.c.b16 %v978, %v974
    %v1327 = vpack.c.b16 %v979, %v975
    %v1328 = vpack.c.b16 %v980, %v976
    %v1329 = vpack.c.b16 %v985, %v981
    %v1330 = vpack.c.b16 %v986, %v982
    %v1331 = vpack.c.b16 %v987, %v983
    %v1332 = vpack.c.b16 %v988, %v984
    %v1333 = vpack.c.b16 %v993, %v989
    %v1334 = vpack.c.b16 %v994, %v990
    %v1335 = vpack.c.b16 %v995, %v991
    %v1336 = vpack.c.b16 %v996, %v992
    %v1337 = vpack.c.b16 %v1001, %v997
    %v1338 = vpack.c.b16 %v1002, %v998
    %v1339 = vpack.c.b16 %v1003, %v999
    %v1340 = vpack.c.b16 %v1004, %v1000
    %v1341 = vpack.c.b16 %v1009, %v1005
    %v1342 = vpack.c.b16 %v1010, %v1006
    %v1343 = vpack.c.b16 %v1011, %v1007
    %v1344 = vpack.c.b16 %v1012, %v1008
    %v1345 = vpack.c.b16 %v1017, %v1013
    %v1346 = vpack.c.b16 %v1018, %v1014
    %v1347 = vpack.c.b16 %v1019, %v1015
    %v1348 = vpack.c.b16 %v1020, %v1016
    %v1349 = vpack.c.b16 %v1025, %v1021
    %v1350 = vpack.c.b16 %v1026, %v1022
    %v1351 = vpack.c.b16 %v1027, %v1023
    %v1352 = vpack.c.b16 %v1028, %v1024
    %v1353 = vpack.c.b16 %v1033, %v1029
    %v1354 = vpack.c.b16 %v1034, %v1030
    %v1355 = vpack.c.b16 %v1035, %v1031
    %v1356 = vpack.c.b16 %v1036, %v1032
    %v1357 = vpack.c.b16 %v1041, %v1037
    %v1358 = vpack.c.b16 %v1042, %v1038
    %v1359 = vpack.c.b16 %v1043, %v1039
    %v1360 = vpack.c.b16 %v1044, %v1040
    %v1361 = vpack.c.b16 %v1049, %v1045
    %v1362 = vpack.c.b16 %v1050, %v1046
    %v1363 = vpack.c.b16 %v1051, %v1047
    %v1364 = vpack.c.b16 %v1052, %v1048
    %v1365 = vpack.c.b16 %v1057, %v1053
    %v1366 = vpack.c.b16 %v1058, %v1054
    %v1367 = vpack.c.b16 %v1059, %v1055
    %v1368 = vpack.c.b16 %v1060, %v1056
    %v1369 = vpack.c.b16 %v1065, %v1061
    %v1370 = vpack.c.b16 %v1066, %v1062
    %v1371 = vpack.c.b16 %v1067, %v1063
    %v1372 = vpack.c.b16 %v1068, %v1064
    %v1373 = vpack.c.b16 %v1073, %v1069
    %v1374 = vpack.c.b16 %v1074, %v1070
    %v1375 = vpack.c.b16 %v1075, %v1071
    %v1376 = vpack.c.b16 %v1076, %v1072
    %v1377 = vpack.c.b16 %v1081, %v1077
    %v1378 = vpack.c.b16 %v1082, %v1078
    %v1379 = vpack.c.b16 %v1083, %v1079
    %v1380 = vpack.c.b16 %v1084, %v1080
    %v1381 = vpack.c.b16 %v1089, %v1085
    %v1382 = vpack.c.b16 %v1090, %v1086
    %v1383 = vpack.c.b16 %v1091, %v1087
    %v1384 = vpack.c.b16 %v1092, %v1088
    %v1385 = vpack.c.b16 %v1097, %v1093
    %v1386 = vpack.c.b16 %v1098, %v1094
    %v1387 = vpack.c.b16 %v1099, %v1095
    %v1388 = vpack.c.b16 %v1100, %v1096
    %v1389 = vpack.c.b16 %v1105, %v1101
    %v1390 = vpack.c.b16 %v1106, %v1102
    %v1391 = vpack.c.b16 %v1107, %v1103
    %v1392 = vpack.c.b16 %v1108, %v1104
    %v1393 = vpack.c.b16 %v1113, %v1109
    %v1394 = vpack.c.b16 %v1114, %v1110
    %v1395 = vpack.c.b16 %v1115, %v1111
    %v1396 = vpack.c.b16 %v1116, %v1112
    %v1397 = vpack.c.b16 %v1121, %v1117
    %v1398 = vpack.c.b16 %v1122, %v1118
    %v1399 = vpack.c.b16 %v1123, %v1119
    %v1400 = vpack.c.b16 %v1124, %v1120
    %v1401 = vpack.c.b16 %v1129, %v1125
    %v1402 = vpack.c.b16 %v1130, %v1126
    %v1403 = vpack.c.b16 %v1131, %v1127
    %v1404 = vpack.c.b16 %v1132, %v1128
    %v1405 = vpack.c.b16 %v1137, %v1133
    %v1406 = vpack.c.b16 %v1138, %v1134
    %v1407 = vpack.c.b16 %v1139, %v1135
    %v1408 = vpack.c.b16 %v1140, %v1136
    %v1409 = vpack.c.b16 %v1145, %v1141
    %v1410 = vpack.c.b16 %v1146, %v1142
    %v1411 = vpack.c.b16 %v1147, %v1143
    %v1412 = vpack.c.b16 %v1148, %v1144
    %v1413 = vpack.c.b16 %v1153, %v1149
    %v1414 = vpack.c.b16 %v1154, %v1150
    %v1415 = vpack.c.b16 %v1155, %v1151
    %v1416 = vpack.c.b16 %v1156, %v1152
    %v1417 = vpack.c.b16 %v1161, %v1157
    %v1418 = vpack.c.b16 %v1162, %v1158
    %v1419 = vpack.c.b16 %v1163, %v1159
    %v1420 = vpack.c.b16 %v1164, %v1160
    %1677 = vmatprep.subr.bf16.mxu0 %v1166
    %1678 = vmatpush1.bf16.msra.mxu0 %v1165
    %1679 = vmatprep.subr.bf16.mxu0 %v1170
    %1680 = vmatpush1.bf16.msra.mxu0 %v1169
    %1681 = vmatprep.subr.bf16.mxu0 %v1174
    %1682 = vmatpush1.bf16.msra.mxu0 %v1173
    %1683 = vmatprep.subr.bf16.mxu0 %v1178
    %1684 = vmatpush1.bf16.msra.mxu0 %v1177
    %1685 = vmatprep.subr.bf16.mxu0 %v1182
    %1686 = vmatpush1.bf16.msra.mxu0 %v1181
    %1687 = vmatprep.subr.bf16.mxu0 %v1186
    %1688 = vmatpush1.bf16.msra.mxu0 %v1185
    %1689 = vmatprep.subr.bf16.mxu0 %v1190
    %1690 = vmatpush1.bf16.msra.mxu0 %v1189
    %1691 = vmatprep.subr.bf16.mxu0 %v1194
    %1692 = vmatpush1.bf16.msra.mxu0 %v1193
    %1693 = vmatprep.subr.bf16.mxu0 %v1198
    %1694 = vmatpush1.bf16.msra.mxu0 %v1197
    %1695 = vmatprep.subr.bf16.mxu0 %v1202
    %1696 = vmatpush1.bf16.msra.mxu0 %v1201
    %1697 = vmatprep.subr.bf16.mxu0 %v1206
    %1698 = vmatpush1.bf16.msra.mxu0 %v1205
    %1699 = vmatprep.subr.bf16.mxu0 %v1210
    %1700 = vmatpush1.bf16.msra.mxu0 %v1209
    %1701 = vmatprep.subr.bf16.mxu0 %v1214
    %1702 = vmatpush1.bf16.msra.mxu0 %v1213
    %1703 = vmatprep.subr.bf16.mxu0 %v1218
    %1704 = vmatpush1.bf16.msra.mxu0 %v1217
    %1705 = vmatprep.subr.bf16.mxu0 %v1222
    %1706 = vmatpush1.bf16.msra.mxu0 %v1221
    %1707 = vmatprep.subr.bf16.mxu0 %v1226
    %1708 = vmatpush1.bf16.msra.mxu0 %v1225
    %1709 = vmatprep.mubr.bf16.mxu0 %v112
    %1710 = vmatmul.mubr.bf16.gmra.mrb[0].mxu0 %v111
    %v1711 = vpop.f32.mrb[0].mxu0
    %v1712 = vadd.f32 %v380, %v1711
    %v1713 = vpop.f32.mrb[0].mxu0
    %v1714 = vadd.f32 %v384, %v1713
    %v1715 = vpop.f32.mrb[0].mxu0
    %v1716 = vpop.f32.mrb[0].mxu0
    %1717 = vdwg.mxu0
    %1718 = vmatprep.subr.bf16.mxu0 %v1230
    %1719 = vmatpush1.bf16.msra.mxu0 %v1229
    %1720 = vmatprep.subr.bf16.mxu0 %v1234
    %1721 = vmatpush1.bf16.msra.mxu0 %v1233
    %1722 = vmatprep.subr.bf16.mxu0 %v1238
    %1723 = vmatpush1.bf16.msra.mxu0 %v1237
    %1724 = vmatprep.subr.bf16.mxu0 %v1242
    %1725 = vmatpush1.bf16.msra.mxu0 %v1241
    %1726 = vmatprep.subr.bf16.mxu0 %v1246
    %1727 = vmatpush1.bf16.msra.mxu0 %v1245
    %1728 = vmatprep.subr.bf16.mxu0 %v1250
    %1729 = vmatpush1.bf16.msra.mxu0 %v1249
    %1730 = vmatprep.subr.bf16.mxu0 %v1254
    %1731 = vmatpush1.bf16.msra.mxu0 %v1253
    %1732 = vmatprep.subr.bf16.mxu0 %v1258
    %1733 = vmatpush1.bf16.msra.mxu0 %v1257
    %1734 = vmatprep.subr.bf16.mxu0 %v1262
    %1735 = vmatpush1.bf16.msra.mxu0 %v1261
    %1736 = vmatprep.subr.bf16.mxu0 %v1266
    %1737 = vmatpush1.bf16.msra.mxu0 %v1265
    %1738 = vmatprep.subr.bf16.mxu0 %v1270
    %1739 = vmatpush1.bf16.msra.mxu0 %v1269
    %1740 = vmatprep.subr.bf16.mxu0 %v1274
    %1741 = vmatpush1.bf16.msra.mxu0 %v1273
    %1742 = vmatprep.subr.bf16.mxu0 %v1278
    %1743 = vmatpush1.bf16.msra.mxu0 %v1277
    %1744 = vmatprep.subr.bf16.mxu0 %v1282
    %1745 = vmatpush1.bf16.msra.mxu0 %v1281
    %1746 = vmatprep.subr.bf16.mxu0 %v1286
    %1747 = vmatpush1.bf16.msra.mxu0 %v1285
    %1748 = vmatprep.subr.bf16.mxu0 %v1290
    %1749 = vmatpush1.bf16.msra.mxu0 %v1289
    %1750 = vmatprep.mubr.bf16.mxu0 %v114
    %1751 = vmatmul.mubr.bf16.gmra.mrb[0].mxu0 %v113
    %v1752 = vpop.f32.mrb[0].mxu0
    %v1753 = vadd.f32 %v1712, %v1752
    %v1754 = vpop.f32.mrb[0].mxu0
    %v1755 = vadd.f32 %v1714, %v1754
    %v1756 = vpop.f32.mrb[0].mxu0
    %v1757 = vpop.f32.mrb[0].mxu0
    %1758 = vdwg.mxu0
    %1759 = vmatprep.subr.bf16.mxu0 %v1294
    %1760 = vmatpush1.bf16.msra.mxu0 %v1293
    %1761 = vmatprep.subr.bf16.mxu0 %v1298
    %1762 = vmatpush1.bf16.msra.mxu0 %v1297
    %1763 = vmatprep.subr.bf16.mxu0 %v1302
    %1764 = vmatpush1.bf16.msra.mxu0 %v1301
    %1765 = vmatprep.subr.bf16.mxu0 %v1306
    %1766 = vmatpush1.bf16.msra.mxu0 %v1305
    %1767 = vmatprep.subr.bf16.mxu0 %v1310
    %1768 = vmatpush1.bf16.msra.mxu0 %v1309
    %1769 = vmatprep.subr.bf16.mxu0 %v1314
    %1770 = vmatpush1.bf16.msra.mxu0 %v1313
    %1771 = vmatprep.subr.bf16.mxu0 %v1318
    %1772 = vmatpush1.bf16.msra.mxu0 %v1317
    %1773 = vmatprep.subr.bf16.mxu0 %v1322
    %1774 = vmatpush1.bf16.msra.mxu0 %v1321
    %1775 = vmatprep.subr.bf16.mxu0 %v1326
    %1776 = vmatpush1.bf16.msra.mxu0 %v1325
    %1777 = vmatprep.subr.bf16.mxu0 %v1330
    %1778 = vmatpush1.bf16.msra.mxu0 %v1329
    %1779 = vmatprep.subr.bf16.mxu0 %v1334
    %1780 = vmatpush1.bf16.msra.mxu0 %v1333
    %1781 = vmatprep.subr.bf16.mxu0 %v1338
    %1782 = vmatpush1.bf16.msra.mxu0 %v1337
    %1783 = vmatprep.subr.bf16.mxu0 %v1342
    %1784 = vmatpush1.bf16.msra.mxu0 %v1341
    %1785 = vmatprep.subr.bf16.mxu0 %v1346
    %1786 = vmatpush1.bf16.msra.mxu0 %v1345
    %1787 = vmatprep.subr.bf16.mxu0 %v1350
    %1788 = vmatpush1.bf16.msra.mxu0 %v1349
    %1789 = vmatprep.subr.bf16.mxu0 %v1354
    %1790 = vmatpush1.bf16.msra.mxu0 %v1353
    %1791 = vmatprep.mubr.bf16.mxu0 %v116
    %1792 = vmatmul.mubr.bf16.gmra.mrb[0].mxu0 %v115
    %v1793 = vpop.f32.mrb[0].mxu0
    %v1794 = vadd.f32 %v1753, %v1793
    %v1795 = vpop.f32.mrb[0].mxu0
    %v1796 = vadd.f32 %v1755, %v1795
    %v1797 = vpop.f32.mrb[0].mxu0
    %v1798 = vpop.f32.mrb[0].mxu0
    %1799 = vdwg.mxu0
    %1800 = vmatprep.subr.bf16.mxu0 %v1358
    %1801 = vmatpush1.bf16.msra.mxu0 %v1357
    %1802 = vmatprep.subr.bf16.mxu0 %v1362
    %1803 = vmatpush1.bf16.msra.mxu0 %v1361
    %1804 = vmatprep.subr.bf16.mxu0 %v1366
    %1805 = vmatpush1.bf16.msra.mxu0 %v1365
    %1806 = vmatprep.subr.bf16.mxu0 %v1370
    %1807 = vmatpush1.bf16.msra.mxu0 %v1369
    %1808 = vmatprep.subr.bf16.mxu0 %v1374
    %1809 = vmatpush1.bf16.msra.mxu0 %v1373
    %1810 = vmatprep.subr.bf16.mxu0 %v1378
    %1811 = vmatpush1.bf16.msra.mxu0 %v1377
    %1812 = vmatprep.subr.bf16.mxu0 %v1382
    %1813 = vmatpush1.bf16.msra.mxu0 %v1381
    %1814 = vmatprep.subr.bf16.mxu0 %v1386
    %1815 = vmatpush1.bf16.msra.mxu0 %v1385
    %1816 = vmatprep.subr.bf16.mxu0 %v1390
    %1817 = vmatpush1.bf16.msra.mxu0 %v1389
    %1818 = vmatprep.subr.bf16.mxu0 %v1394
    %1819 = vmatpush1.bf16.msra.mxu0 %v1393
    %1820 = vmatprep.subr.bf16.mxu0 %v1398
    %1821 = vmatpush1.bf16.msra.mxu0 %v1397
    %1822 = vmatprep.subr.bf16.mxu0 %v1402
    %1823 = vmatpush1.bf16.msra.mxu0 %v1401
    %1824 = vmatprep.subr.bf16.mxu0 %v1406
    %1825 = vmatpush1.bf16.msra.mxu0 %v1405
    %1826 = vmatprep.subr.bf16.mxu0 %v1410
    %1827 = vmatpush1.bf16.msra.mxu0 %v1409
    %1828 = vmatprep.subr.bf16.mxu0 %v1414
    %1829 = vmatpush1.bf16.msra.mxu0 %v1413
    %1830 = vmatprep.subr.bf16.mxu0 %v1418
    %1831 = vmatpush1.bf16.msra.mxu0 %v1417
    %1832 = vmatprep.mubr.bf16.mxu0 %v118
    %1833 = vmatmul.mubr.bf16.gmra.mrb[0].mxu0 %v117
    %v1834 = vpop.f32.mrb[0].mxu0
    %v1835 = vadd.f32 %v1794, %v1834
    %v1836 = vpop.f32.mrb[0].mxu0
    %v1837 = vadd.f32 %v1796, %v1836
    %v1838 = vpop.f32.mrb[0].mxu0
    %v1839 = vpop.f32.mrb[0].mxu0
    %1840 = vdwg.mxu0
    %1841 = vmatprep.subr.bf16.mxu0 %v1168
    %1842 = vmatpush1.bf16.msra.mxu0 %v1167
    %1843 = vmatprep.subr.bf16.mxu0 %v1172
    %1844 = vmatpush1.bf16.msra.mxu0 %v1171
    %1845 = vmatprep.subr.bf16.mxu0 %v1176
    %1846 = vmatpush1.bf16.msra.mxu0 %v1175
    %1847 = vmatprep.subr.bf16.mxu0 %v1180
    %1848 = vmatpush1.bf16.msra.mxu0 %v1179
    %1849 = vmatprep.subr.bf16.mxu0 %v1184
    %1850 = vmatpush1.bf16.msra.mxu0 %v1183
    %1851 = vmatprep.subr.bf16.mxu0 %v1188
    %1852 = vmatpush1.bf16.msra.mxu0 %v1187
    %1853 = vmatprep.subr.bf16.mxu0 %v1192
    %1854 = vmatpush1.bf16.msra.mxu0 %v1191
    %1855 = vmatprep.subr.bf16.mxu0 %v1196
    %1856 = vmatpush1.bf16.msra.mxu0 %v1195
    %1857 = vmatprep.subr.bf16.mxu0 %v1200
    %1858 = vmatpush1.bf16.msra.mxu0 %v1199
    %1859 = vmatprep.subr.bf16.mxu0 %v1204
    %1860 = vmatpush1.bf16.msra.mxu0 %v1203
    %1861 = vmatprep.subr.bf16.mxu0 %v1208
    %1862 = vmatpush1.bf16.msra.mxu0 %v1207
    %1863 = vmatprep.subr.bf16.mxu0 %v1212
    %1864 = vmatpush1.bf16.msra.mxu0 %v1211
    %1865 = vmatprep.subr.bf16.mxu0 %v1216
    %1866 = vmatpush1.bf16.msra.mxu0 %v1215
    %1867 = vmatprep.subr.bf16.mxu0 %v1220
    %1868 = vmatpush1.bf16.msra.mxu0 %v1219
    %1869 = vmatprep.subr.bf16.mxu0 %v1224
    %1870 = vmatpush1.bf16.msra.mxu0 %v1223
    %1871 = vmatprep.subr.bf16.mxu0 %v1228
    %1872 = vmatpush1.bf16.msra.mxu0 %v1227
    %1873 = vmatprep.mubr.bf16.mxu0 %v112
    %1874 = vmatmul.mubr.bf16.gmra.mrb[0].mxu0 %v111
    %v1875 = vpop.f32.mrb[0].mxu0
    %v1876 = vadd.f32 %v388, %v1875
    %v1877 = vpop.f32.mrb[0].mxu0
    %v1878 = vadd.f32 %v392, %v1877
    %v1879 = vpop.f32.mrb[0].mxu0
    %v1880 = vpop.f32.mrb[0].mxu0
    %1881 = vdwg.mxu0
    %1882 = vmatprep.subr.bf16.mxu0 %v1232
    %1883 = vmatpush1.bf16.msra.mxu0 %v1231
    %1884 = vmatprep.subr.bf16.mxu0 %v1236
    %1885 = vmatpush1.bf16.msra.mxu0 %v1235
    %1886 = vmatprep.subr.bf16.mxu0 %v1240
    %1887 = vmatpush1.bf16.msra.mxu0 %v1239
    %1888 = vmatprep.subr.bf16.mxu0 %v1244
    %1889 = vmatpush1.bf16.msra.mxu0 %v1243
    %1890 = vmatprep.subr.bf16.mxu0 %v1248
    %1891 = vmatpush1.bf16.msra.mxu0 %v1247
    %1892 = vmatprep.subr.bf16.mxu0 %v1252
    %1893 = vmatpush1.bf16.msra.mxu0 %v1251
    %1894 = vmatprep.subr.bf16.mxu0 %v1256
    %1895 = vmatpush1.bf16.msra.mxu0 %v1255
    %1896 = vmatprep.subr.bf16.mxu0 %v1260
    %1897 = vmatpush1.bf16.msra.mxu0 %v1259
    %1898 = vmatprep.subr.bf16.mxu0 %v1264
    %1899 = vmatpush1.bf16.msra.mxu0 %v1263
    %1900 = vmatprep.subr.bf16.mxu0 %v1268
    %1901 = vmatpush1.bf16.msra.mxu0 %v1267
    %1902 = vmatprep.subr.bf16.mxu0 %v1272
    %1903 = vmatpush1.bf16.msra.mxu0 %v1271
    %1904 = vmatprep.subr.bf16.mxu0 %v1276
    %1905 = vmatpush1.bf16.msra.mxu0 %v1275
    %1906 = vmatprep.subr.bf16.mxu0 %v1280
    %1907 = vmatpush1.bf16.msra.mxu0 %v1279
    %1908 = vmatprep.subr.bf16.mxu0 %v1284
    %1909 = vmatpush1.bf16.msra.mxu0 %v1283
    %1910 = vmatprep.subr.bf16.mxu0 %v1288
    %1911 = vmatpush1.bf16.msra.mxu0 %v1287
    %1912 = vmatprep.subr.bf16.mxu0 %v1292
    %1913 = vmatpush1.bf16.msra.mxu0 %v1291
    %1914 = vmatprep.mubr.bf16.mxu0 %v114
    %1915 = vmatmul.mubr.bf16.gmra.mrb[0].mxu0 %v113
    %v1916 = vpop.f32.mrb[0].mxu0
    %v1917 = vadd.f32 %v1876, %v1916
    %v1918 = vpop.f32.mrb[0].mxu0
    %v1919 = vadd.f32 %v1878, %v1918
    %v1920 = vpop.f32.mrb[0].mxu0
    %v1921 = vpop.f32.mrb[0].mxu0
    %1922 = vdwg.mxu0
    %1923 = vmatprep.subr.bf16.mxu0 %v1296
    %1924 = vmatpush1.bf16.msra.mxu0 %v1295
    %1925 = vmatprep.subr.bf16.mxu0 %v1300
    %1926 = vmatpush1.bf16.msra.mxu0 %v1299
    %1927 = vmatprep.subr.bf16.mxu0 %v1304
    %1928 = vmatpush1.bf16.msra.mxu0 %v1303
    %1929 = vmatprep.subr.bf16.mxu0 %v1308
    %1930 = vmatpush1.bf16.msra.mxu0 %v1307
    %1931 = vmatprep.subr.bf16.mxu0 %v1312
    %1932 = vmatpush1.bf16.msra.mxu0 %v1311
    %1933 = vmatprep.subr.bf16.mxu0 %v1316
    %1934 = vmatpush1.bf16.msra.mxu0 %v1315
    %1935 = vmatprep.subr.bf16.mxu0 %v1320
    %1936 = vmatpush1.bf16.msra.mxu0 %v1319
    %1937 = vmatprep.subr.bf16.mxu0 %v1324
    %1938 = vmatpush1.bf16.msra.mxu0 %v1323
    %1939 = vmatprep.subr.bf16.mxu0 %v1328
    %1940 = vmatpush1.bf16.msra.mxu0 %v1327
    %1941 = vmatprep.subr.bf16.mxu0 %v1332
    %1942 = vmatpush1.bf16.msra.mxu0 %v1331
    %1943 = vmatprep.subr.bf16.mxu0 %v1336
    %1944 = vmatpush1.bf16.msra.mxu0 %v1335
    %1945 = vmatprep.subr.bf16.mxu0 %v1340
    %1946 = vmatpush1.bf16.msra.mxu0 %v1339
    %1947 = vmatprep.subr.bf16.mxu0 %v1344
    %1948 = vmatpush1.bf16.msra.mxu0 %v1343
    %1949 = vmatprep.subr.bf16.mxu0 %v1348
    %1950 = vmatpush1.bf16.msra.mxu0 %v1347
    %1951 = vmatprep.subr.bf16.mxu0 %v1352
    %1952 = vmatpush1.bf16.msra.mxu0 %v1351
    %1953 = vmatprep.subr.bf16.mxu0 %v1356
    %1954 = vmatpush1.bf16.msra.mxu0 %v1355
    %1955 = vmatprep.mubr.bf16.mxu0 %v116
    %1956 = vmatmul.mubr.bf16.gmra.mrb[0].mxu0 %v115
    %v1957 = vpop.f32.mrb[0].mxu0
    %v1958 = vadd.f32 %v1917, %v1957
    %v1959 = vpop.f32.mrb[0].mxu0
    %v1960 = vadd.f32 %v1919, %v1959
    %v1961 = vpop.f32.mrb[0].mxu0
    %v1962 = vpop.f32.mrb[0].mxu0
    %1963 = vdwg.mxu0
    %1964 = vmatprep.subr.bf16.mxu0 %v1360
    %1965 = vmatpush1.bf16.msra.mxu0 %v1359
    %1966 = vmatprep.subr.bf16.mxu0 %v1364
    %1967 = vmatpush1.bf16.msra.mxu0 %v1363
    %1968 = vmatprep.subr.bf16.mxu0 %v1368
    %1969 = vmatpush1.bf16.msra.mxu0 %v1367
    %1970 = vmatprep.subr.bf16.mxu0 %v1372
    %1971 = vmatpush1.bf16.msra.mxu0 %v1371
    %1972 = vmatprep.subr.bf16.mxu0 %v1376
    %1973 = vmatpush1.bf16.msra.mxu0 %v1375
    %1974 = vmatprep.subr.bf16.mxu0 %v1380
    %1975 = vmatpush1.bf16.msra.mxu0 %v1379
    %1976 = vmatprep.subr.bf16.mxu0 %v1384
    %1977 = vmatpush1.bf16.msra.mxu0 %v1383
    %1978 = vmatprep.subr.bf16.mxu0 %v1388
    %1979 = vmatpush1.bf16.msra.mxu0 %v1387
    %1980 = vmatprep.subr.bf16.mxu0 %v1392
    %1981 = vmatpush1.bf16.msra.mxu0 %v1391
    %1982 = vmatprep.subr.bf16.mxu0 %v1396
    %1983 = vmatpush1.bf16.msra.mxu0 %v1395
    %1984 = vmatprep.subr.bf16.mxu0 %v1400
    %1985 = vmatpush1.bf16.msra.mxu0 %v1399
    %1986 = vmatprep.subr.bf16.mxu0 %v1404
    %1987 = vmatpush1.bf16.msra.mxu0 %v1403
    %1988 = vmatprep.subr.bf16.mxu0 %v1408
    %1989 = vmatpush1.bf16.msra.mxu0 %v1407
    %1990 = vmatprep.subr.bf16.mxu0 %v1412
    %1991 = vmatpush1.bf16.msra.mxu0 %v1411
    %1992 = vmatprep.subr.bf16.mxu0 %v1416
    %1993 = vmatpush1.bf16.msra.mxu0 %v1415
    %1994 = vmatprep.subr.bf16.mxu0 %v1420
    %1995 = vmatpush1.bf16.msra.mxu0 %v1419
    %1996 = vmatprep.mubr.bf16.mxu0 %v118
    %1997 = vmatmul.mubr.bf16.gmra.mrb[0].mxu0 %v117
    %v1998 = vpop.f32.mrb[0].mxu0
    %v1999 = vadd.f32 %v1958, %v1998
    %v2000 = vpop.f32.mrb[0].mxu0
    %v2001 = vadd.f32 %v1960, %v2000
    %v2002 = vpop.f32.mrb[0].mxu0
    %v2003 = vpop.f32.mrb[0].mxu0
    %2004 = vdwg.mxu0
    %v2005 = vxor.u32 %v1835, 2147483648
    %v2006 = vxor.u32 %v1837, 2147483648
    %v2007 = vxor.u32 %v1999, 2147483648
    %v2008 = vxor.u32 %v2001, 2147483648
    %v2009 = vmul.f32 %v2005, 1.442695
    %v2010 = vpow.pop %v2009
    %v2011 = vmul.f32 %v2006, 1.442695
    %v2012 = vpow.pop %v2011
    %v2013 = vmul.f32 %v2007, 1.442695
    %v2014 = vpow.pop %v2013
    %v2015 = vmul.f32 %v2008, 1.442695
    %v2016 = vpow.pop %v2015
    %v2017 = vadd.f32 %v2010, 1.0
    %v2018 = vadd.f32 %v2012, 1.0
    %v2019 = vadd.f32 %v2014, 1.0
    %v2020 = vadd.f32 %v2016, 1.0
    %v2021 = vrcp.pop %v2017
    %v2022 = vmul.f32 1.0, %v2021
    %v2023 = vrcp.pop %v2018
    %v2024 = vmul.f32 1.0, %v2023
    %v2025 = vrcp.pop %v2019
    %v2026 = vmul.f32 1.0, %v2025
    %v2027 = vrcp.pop %v2020
    %v2028 = vmul.f32 1.0, %v2027
    %v2029 = vpack.c.bf16 %v2022, %v2022
    %v2030 = vpack.c.bf16 %v2024, %v2024
    %v2031 = vpack.c.bf16 %v2026, %v2026
    %v2032 = vpack.c.bf16 %v2028, %v2028
    %v2033 = vld [vmem:[#allocation8] sm:$0xff]
    %v2034 = vld [vmem:[#allocation8 + $0x8] sm:$0xff]
    %v2035 = vld [vmem:[#allocation8 + $0x10] sm:$0xff]
    %v2036 = vld [vmem:[#allocation8 + $0x18] sm:$0xff]
    %v2037 = vld [vmem:[#allocation8 + $0x20] sm:$0xff]
    %v2038 = vld [vmem:[#allocation8 + $0x28] sm:$0xff]
    %v2039 = vld [vmem:[#allocation8 + $0x30] sm:$0xff]
    %v2040 = vld [vmem:[#allocation8 + $0x38] sm:$0xff]
    %v2041 = vld [vmem:[#allocation8 + $0x40] sm:$0xff]
    %v2042 = vld [vmem:[#allocation8 + $0x48] sm:$0xff]
    %v2043 = vld [vmem:[#allocation8 + $0x50] sm:$0xff]
    %v2044 = vld [vmem:[#allocation8 + $0x58] sm:$0xff]
    %v2045 = vld [vmem:[#allocation8 + $0x60] sm:$0xff]
    %v2046 = vld [vmem:[#allocation8 + $0x68] sm:$0xff]
    %v2047 = vld [vmem:[#allocation8 + $0x70] sm:$0xff]
    %v2048 = vld [vmem:[#allocation8 + $0x78] sm:$0xff]
    %v2049 = vld [vmem:[#allocation8 + $0x80] sm:$0xff]
    %v2050 = vld [vmem:[#allocation8 + $0x88] sm:$0xff]
    %v2051 = vld [vmem:[#allocation8 + $0x90] sm:$0xff]
    %v2052 = vld [vmem:[#allocation8 + $0x98] sm:$0xff]
    %v2053 = vld [vmem:[#allocation8 + $0xa0] sm:$0xff]
    %v2054 = vld [vmem:[#allocation8 + $0xa8] sm:$0xff]
    %v2055 = vld [vmem:[#allocation8 + $0xb0] sm:$0xff]
    %v2056 = vld [vmem:[#allocation8 + $0xb8] sm:$0xff]
    %v2057 = vld [vmem:[#allocation8 + $0xc0] sm:$0xff]
    %v2058 = vld [vmem:[#allocation8 + $0xc8] sm:$0xff]
    %v2059 = vld [vmem:[#allocation8 + $0xd0] sm:$0xff]
    %v2060 = vld [vmem:[#allocation8 + $0xd8] sm:$0xff]
    %v2061 = vld [vmem:[#allocation8 + $0xe0] sm:$0xff]
    %v2062 = vld [vmem:[#allocation8 + $0xe8] sm:$0xff]
    %v2063 = vld [vmem:[#allocation8 + $0xf0] sm:$0xff]
    %v2064 = vld [vmem:[#allocation8 + $0xf8] sm:$0xff]
    %v2065 = vld [vmem:[#allocation8 + $0x100] sm:$0xff]
    %v2066 = vld [vmem:[#allocation8 + $0x108] sm:$0xff]
    %v2067 = vld [vmem:[#allocation8 + $0x110] sm:$0xff]
    %v2068 = vld [vmem:[#allocation8 + $0x118] sm:$0xff]
    %v2069 = vld [vmem:[#allocation8 + $0x120] sm:$0xff]
    %v2070 = vld [vmem:[#allocation8 + $0x128] sm:$0xff]
    %v2071 = vld [vmem:[#allocation8 + $0x130] sm:$0xff]
    %v2072 = vld [vmem:[#allocation8 + $0x138] sm:$0xff]
    %v2073 = vld [vmem:[#allocation8 + $0x140] sm:$0xff]
    %v2074 = vld [vmem:[#allocation8 + $0x148] sm:$0xff]
    %v2075 = vld [vmem:[#allocation8 + $0x150] sm:$0xff]
    %v2076 = vld [vmem:[#allocation8 + $0x158] sm:$0xff]
    %v2077 = vld [vmem:[#allocation8 + $0x160] sm:$0xff]
    %v2078 = vld [vmem:[#allocation8 + $0x168] sm:$0xff]
    %v2079 = vld [vmem:[#allocation8 + $0x170] sm:$0xff]
    %v2080 = vld [vmem:[#allocation8 + $0x178] sm:$0xff]
    %v2081 = vld [vmem:[#allocation8 + $0x180] sm:$0xff]
    %v2082 = vld [vmem:[#allocation8 + $0x188] sm:$0xff]
    %v2083 = vld [vmem:[#allocation8 + $0x190] sm:$0xff]
    %v2084 = vld [vmem:[#allocation8 + $0x198] sm:$0xff]
    %v2085 = vld [vmem:[#allocation8 + $0x1a0] sm:$0xff]
    %v2086 = vld [vmem:[#allocation8 + $0x1a8] sm:$0xff]
    %v2087 = vld [vmem:[#allocation8 + $0x1b0] sm:$0xff]
    %v2088 = vld [vmem:[#allocation8 + $0x1b8] sm:$0xff]
    %v2089 = vld [vmem:[#allocation8 + $0x1c0] sm:$0xff]
    %v2090 = vld [vmem:[#allocation8 + $0x1c8] sm:$0xff]
    %v2091 = vld [vmem:[#allocation8 + $0x1d0] sm:$0xff]
    %v2092 = vld [vmem:[#allocation8 + $0x1d8] sm:$0xff]
    %v2093 = vld [vmem:[#allocation8 + $0x1e0] sm:$0xff]
    %v2094 = vld [vmem:[#allocation8 + $0x1e8] sm:$0xff]
    %v2095 = vld [vmem:[#allocation8 + $0x1f0] sm:$0xff]
    %v2096 = vld [vmem:[#allocation8 + $0x1f8] sm:$0xff]
    %v2097 = vld [vmem:[%s5] sm:$0x3]
    %v2099 = vlaneseq
    %v2100 = vshrl.u32 %v2099, 7
    %v2101 = vsub.s32 0, %v2100
    %v2102 = vrot.slane %v2097, %v2101
    %v2103 = vlaneseq
    %v2104 = vshrl.u32 %v2103, 7
    %v2105 = vsub.s32 1, %v2104
    %v2106 = vrot.slane %v2097, %v2105
    %v2173 = vunpack.c.l.b16 %v2033
    %v2174 = vunpack.c.h.b16 %v2033
    %v2175 = vunpack.c.l.b16 %v2034
    %v2176 = vunpack.c.h.b16 %v2034
    %v2177 = vunpack.c.l.b16 %v2035
    %v2178 = vunpack.c.h.b16 %v2035
    %v2179 = vunpack.c.l.b16 %v2036
    %v2180 = vunpack.c.h.b16 %v2036
    %v2181 = vunpack.c.l.b16 %v2037
    %v2182 = vunpack.c.h.b16 %v2037
    %v2183 = vunpack.c.l.b16 %v2038
    %v2184 = vunpack.c.h.b16 %v2038
    %v2185 = vunpack.c.l.b16 %v2039
    %v2186 = vunpack.c.h.b16 %v2039
    %v2187 = vunpack.c.l.b16 %v2040
    %v2188 = vunpack.c.h.b16 %v2040
    %v2189 = vunpack.c.l.b16 %v2041
    %v2190 = vunpack.c.h.b16 %v2041
    %v2191 = vunpack.c.l.b16 %v2042
    %v2192 = vunpack.c.h.b16 %v2042
    %v2193 = vunpack.c.l.b16 %v2043
    %v2194 = vunpack.c.h.b16 %v2043
    %v2195 = vunpack.c.l.b16 %v2044
    %v2196 = vunpack.c.h.b16 %v2044
    %v2197 = vunpack.c.l.b16 %v2045
    %v2198 = vunpack.c.h.b16 %v2045
    %v2199 = vunpack.c.l.b16 %v2046
    %v2200 = vunpack.c.h.b16 %v2046
    %v2201 = vunpack.c.l.b16 %v2047
    %v2202 = vunpack.c.h.b16 %v2047
    %v2203 = vunpack.c.l.b16 %v2048
    %v2204 = vunpack.c.h.b16 %v2048
    %v2205 = vunpack.c.l.b16 %v2049
    %v2206 = vunpack.c.h.b16 %v2049
    %v2207 = vunpack.c.l.b16 %v2050
    %v2208 = vunpack.c.h.b16 %v2050
    %v2209 = vunpack.c.l.b16 %v2051
    %v2210 = vunpack.c.h.b16 %v2051
    %v2211 = vunpack.c.l.b16 %v2052
    %v2212 = vunpack.c.h.b16 %v2052
    %v2213 = vunpack.c.l.b16 %v2053
    %v2214 = vunpack.c.h.b16 %v2053
    %v2215 = vunpack.c.l.b16 %v2054
    %v2216 = vunpack.c.h.b16 %v2054
    %v2217 = vunpack.c.l.b16 %v2055
    %v2218 = vunpack.c.h.b16 %v2055
    %v2219 = vunpack.c.l.b16 %v2056
    %v2220 = vunpack.c.h.b16 %v2056
    %v2221 = vunpack.c.l.b16 %v2057
    %v2222 = vunpack.c.h.b16 %v2057
    %v2223 = vunpack.c.l.b16 %v2058
    %v2224 = vunpack.c.h.b16 %v2058
    %v2225 = vunpack.c.l.b16 %v2059
    %v2226 = vunpack.c.h.b16 %v2059
    %v2227 = vunpack.c.l.b16 %v2060
    %v2228 = vunpack.c.h.b16 %v2060
    %v2229 = vunpack.c.l.b16 %v2061
    %v2230 = vunpack.c.h.b16 %v2061
    %v2231 = vunpack.c.l.b16 %v2062
    %v2232 = vunpack.c.h.b16 %v2062
    %v2233 = vunpack.c.l.b16 %v2063
    %v2234 = vunpack.c.h.b16 %v2063
    %v2235 = vunpack.c.l.b16 %v2064
    %v2236 = vunpack.c.h.b16 %v2064
    %v2237 = vunpack.c.l.b16 %v2065
    %v2238 = vunpack.c.h.b16 %v2065
    %v2239 = vunpack.c.l.b16 %v2066
    %v2240 = vunpack.c.h.b16 %v2066
    %v2241 = vunpack.c.l.b16 %v2067
    %v2242 = vunpack.c.h.b16 %v2067
    %v2243 = vunpack.c.l.b16 %v2068
    %v2244 = vunpack.c.h.b16 %v2068
    %v2245 = vunpack.c.l.b16 %v2069
    %v2246 = vunpack.c.h.b16 %v2069
    %v2247 = vunpack.c.l.b16 %v2070
    %v2248 = vunpack.c.h.b16 %v2070
    %v2249 = vunpack.c.l.b16 %v2071
    %v2250 = vunpack.c.h.b16 %v2071
    %v2251 = vunpack.c.l.b16 %v2072
    %v2252 = vunpack.c.h.b16 %v2072
    %v2253 = vunpack.c.l.b16 %v2073
    %v2254 = vunpack.c.h.b16 %v2073
    %v2255 = vunpack.c.l.b16 %v2074
    %v2256 = vunpack.c.h.b16 %v2074
    %v2257 = vunpack.c.l.b16 %v2075
    %v2258 = vunpack.c.h.b16 %v2075
    %v2259 = vunpack.c.l.b16 %v2076
    %v2260 = vunpack.c.h.b16 %v2076
    %v2261 = vunpack.c.l.b16 %v2077
    %v2262 = vunpack.c.h.b16 %v2077
    %v2263 = vunpack.c.l.b16 %v2078
    %v2264 = vunpack.c.h.b16 %v2078
    %v2265 = vunpack.c.l.b16 %v2079
    %v2266 = vunpack.c.h.b16 %v2079
    %v2267 = vunpack.c.l.b16 %v2080
    %v2268 = vunpack.c.h.b16 %v2080
    %v2269 = vunpack.c.l.b16 %v2081
    %v2270 = vunpack.c.h.b16 %v2081
    %v2271 = vunpack.c.l.b16 %v2082
    %v2272 = vunpack.c.h.b16 %v2082
    %v2273 = vunpack.c.l.b16 %v2083
    %v2274 = vunpack.c.h.b16 %v2083
    %v2275 = vunpack.c.l.b16 %v2084
    %v2276 = vunpack.c.h.b16 %v2084
    %v2277 = vunpack.c.l.b16 %v2085
    %v2278 = vunpack.c.h.b16 %v2085
    %v2279 = vunpack.c.l.b16 %v2086
    %v2280 = vunpack.c.h.b16 %v2086
    %v2281 = vunpack.c.l.b16 %v2087
    %v2282 = vunpack.c.h.b16 %v2087
    %v2283 = vunpack.c.l.b16 %v2088
    %v2284 = vunpack.c.h.b16 %v2088
    %v2285 = vunpack.c.l.b16 %v2089
    %v2286 = vunpack.c.h.b16 %v2089
    %v2287 = vunpack.c.l.b16 %v2090
    %v2288 = vunpack.c.h.b16 %v2090
    %v2289 = vunpack.c.l.b16 %v2091
    %v2290 = vunpack.c.h.b16 %v2091
    %v2291 = vunpack.c.l.b16 %v2092
    %v2292 = vunpack.c.h.b16 %v2092
    %v2293 = vunpack.c.l.b16 %v2093
    %v2294 = vunpack.c.h.b16 %v2093
    %v2295 = vunpack.c.l.b16 %v2094
    %v2296 = vunpack.c.h.b16 %v2094
    %v2297 = vunpack.c.l.b16 %v2095
    %v2298 = vunpack.c.h.b16 %v2095
    %v2299 = vunpack.c.l.b16 %v2096
    %v2300 = vunpack.c.h.b16 %v2096
    %v2301 = vpack.c.b16 %v2175, %v2173
    %v2302 = vpack.c.b16 %v2176, %v2174
    %v2303 = vpack.c.b16 %v2179, %v2177
    %v2304 = vpack.c.b16 %v2180, %v2178
    %v2305 = vpack.c.b16 %v2183, %v2181
    %v2306 = vpack.c.b16 %v2184, %v2182
    %v2307 = vpack.c.b16 %v2187, %v2185
    %v2308 = vpack.c.b16 %v2188, %v2186
    %v2309 = vpack.c.b16 %v2191, %v2189
    %v2310 = vpack.c.b16 %v2192, %v2190
    %v2311 = vpack.c.b16 %v2195, %v2193
    %v2312 = vpack.c.b16 %v2196, %v2194
    %v2313 = vpack.c.b16 %v2199, %v2197
    %v2314 = vpack.c.b16 %v2200, %v2198
    %v2315 = vpack.c.b16 %v2203, %v2201
    %v2316 = vpack.c.b16 %v2204, %v2202
    %v2317 = vpack.c.b16 %v2207, %v2205
    %v2318 = vpack.c.b16 %v2208, %v2206
    %v2319 = vpack.c.b16 %v2211, %v2209
    %v2320 = vpack.c.b16 %v2212, %v2210
    %v2321 = vpack.c.b16 %v2215, %v2213
    %v2322 = vpack.c.b16 %v2216, %v2214
    %v2323 = vpack.c.b16 %v2219, %v2217
    %v2324 = vpack.c.b16 %v2220, %v2218
    %v2325 = vpack.c.b16 %v2223, %v2221
    %v2326 = vpack.c.b16 %v2224, %v2222
    %v2327 = vpack.c.b16 %v2227, %v2225
    %v2328 = vpack.c.b16 %v2228, %v2226
    %v2329 = vpack.c.b16 %v2231, %v2229
    %v2330 = vpack.c.b16 %v2232, %v2230
    %v2331 = vpack.c.b16 %v2235, %v2233
    %v2332 = vpack.c.b16 %v2236, %v2234
    %v2333 = vpack.c.b16 %v2239, %v2237
    %v2334 = vpack.c.b16 %v2240, %v2238
    %v2335 = vpack.c.b16 %v2243, %v2241
    %v2336 = vpack.c.b16 %v2244, %v2242
    %v2337 = vpack.c.b16 %v2247, %v2245
    %v2338 = vpack.c.b16 %v2248, %v2246
    %v2339 = vpack.c.b16 %v2251, %v2249
    %v2340 = vpack.c.b16 %v2252, %v2250
    %v2341 = vpack.c.b16 %v2255, %v2253
    %v2342 = vpack.c.b16 %v2256, %v2254
    %v2343 = vpack.c.b16 %v2259, %v2257
    %v2344 = vpack.c.b16 %v2260, %v2258
    %v2345 = vpack.c.b16 %v2263, %v2261
    %v2346 = vpack.c.b16 %v2264, %v2262
    %v2347 = vpack.c.b16 %v2267, %v2265
    %v2348 = vpack.c.b16 %v2268, %v2266
    %v2349 = vpack.c.b16 %v2271, %v2269
    %v2350 = vpack.c.b16 %v2272, %v2270
    %v2351 = vpack.c.b16 %v2275, %v2273
    %v2352 = vpack.c.b16 %v2276, %v2274
    %v2353 = vpack.c.b16 %v2279, %v2277
    %v2354 = vpack.c.b16 %v2280, %v2278
    %v2355 = vpack.c.b16 %v2283, %v2281
    %v2356 = vpack.c.b16 %v2284, %v2282
    %v2357 = vpack.c.b16 %v2287, %v2285
    %v2358 = vpack.c.b16 %v2288, %v2286
    %v2359 = vpack.c.b16 %v2291, %v2289
    %v2360 = vpack.c.b16 %v2292, %v2290
    %v2361 = vpack.c.b16 %v2295, %v2293
    %v2362 = vpack.c.b16 %v2296, %v2294
    %v2363 = vpack.c.b16 %v2299, %v2297
    %v2364 = vpack.c.b16 %v2300, %v2298
    %2429 = vmatprep.subr.bf16.mxu0 %v2302
    %2430 = vmatpush1.bf16.msra.mxu0 %v2301
    %2431 = vmatprep.subr.bf16.mxu0 %v2304
    %2432 = vmatpush1.bf16.msra.mxu0 %v2303
    %2433 = vmatprep.subr.bf16.mxu0 %v2306
    %2434 = vmatpush1.bf16.msra.mxu0 %v2305
    %2435 = vmatprep.subr.bf16.mxu0 %v2308
    %2436 = vmatpush1.bf16.msra.mxu0 %v2307
    %2437 = vmatprep.subr.bf16.mxu0 %v2310
    %2438 = vmatpush1.bf16.msra.mxu0 %v2309
    %2439 = vmatprep.subr.bf16.mxu0 %v2312
    %2440 = vmatpush1.bf16.msra.mxu0 %v2311
    %2441 = vmatprep.subr.bf16.mxu0 %v2314
    %2442 = vmatpush1.bf16.msra.mxu0 %v2313
    %2443 = vmatprep.subr.bf16.mxu0 %v2316
    %2444 = vmatpush1.bf16.msra.mxu0 %v2315
    %2445 = vmatprep.subr.bf16.mxu0 %v2318
    %2446 = vmatpush1.bf16.msra.mxu0 %v2317
    %2447 = vmatprep.subr.bf16.mxu0 %v2320
    %2448 = vmatpush1.bf16.msra.mxu0 %v2319
    %2449 = vmatprep.subr.bf16.mxu0 %v2322
    %2450 = vmatpush1.bf16.msra.mxu0 %v2321
    %2451 = vmatprep.subr.bf16.mxu0 %v2324
    %2452 = vmatpush1.bf16.msra.mxu0 %v2323
    %2453 = vmatprep.subr.bf16.mxu0 %v2326
    %2454 = vmatpush1.bf16.msra.mxu0 %v2325
    %2455 = vmatprep.subr.bf16.mxu0 %v2328
    %2456 = vmatpush1.bf16.msra.mxu0 %v2327
    %2457 = vmatprep.subr.bf16.mxu0 %v2330
    %2458 = vmatpush1.bf16.msra.mxu0 %v2329
    %2459 = vmatprep.subr.bf16.mxu0 %v2332
    %2460 = vmatpush1.bf16.msra.mxu0 %v2331
    %2461 = vmatprep.mubr.bf16.mxu0 %v2030
    %2462 = vmatmul.mubr.bf16.gmra.mrb[0].mxu0 %v2029
    %v2463 = vpop.f32.mrb[0].mxu0
    %v2464 = vadd.f32 %v2102, %v2463
    %v2465 = vpop.f32.mrb[0].mxu0
    %v2466 = vadd.f32 %v2106, %v2465
    %v2467 = vpop.f32.mrb[0].mxu0
    %v2468 = vpop.f32.mrb[0].mxu0
    %2469 = vdwg.mxu0
    %2470 = vmatprep.subr.bf16.mxu0 %v2334
    %2471 = vmatpush1.bf16.msra.mxu0 %v2333
    %2472 = vmatprep.subr.bf16.mxu0 %v2336
    %2473 = vmatpush1.bf16.msra.mxu0 %v2335
    %2474 = vmatprep.subr.bf16.mxu0 %v2338
    %2475 = vmatpush1.bf16.msra.mxu0 %v2337
    %2476 = vmatprep.subr.bf16.mxu0 %v2340
    %2477 = vmatpush1.bf16.msra.mxu0 %v2339
    %2478 = vmatprep.subr.bf16.mxu0 %v2342
    %2479 = vmatpush1.bf16.msra.mxu0 %v2341
    %2480 = vmatprep.subr.bf16.mxu0 %v2344
    %2481 = vmatpush1.bf16.msra.mxu0 %v2343
    %2482 = vmatprep.subr.bf16.mxu0 %v2346
    %2483 = vmatpush1.bf16.msra.mxu0 %v2345
    %2484 = vmatprep.subr.bf16.mxu0 %v2348
    %2485 = vmatpush1.bf16.msra.mxu0 %v2347
    %2486 = vmatprep.subr.bf16.mxu0 %v2350
    %2487 = vmatpush1.bf16.msra.mxu0 %v2349
    %2488 = vmatprep.subr.bf16.mxu0 %v2352
    %2489 = vmatpush1.bf16.msra.mxu0 %v2351
    %2490 = vmatprep.subr.bf16.mxu0 %v2354
    %2491 = vmatpush1.bf16.msra.mxu0 %v2353
    %2492 = vmatprep.subr.bf16.mxu0 %v2356
    %2493 = vmatpush1.bf16.msra.mxu0 %v2355
    %2494 = vmatprep.subr.bf16.mxu0 %v2358
    %2495 = vmatpush1.bf16.msra.mxu0 %v2357
    %2496 = vmatprep.subr.bf16.mxu0 %v2360
    %2497 = vmatpush1.bf16.msra.mxu0 %v2359
    %2498 = vmatprep.subr.bf16.mxu0 %v2362
    %2499 = vmatpush1.bf16.msra.mxu0 %v2361
    %2500 = vmatprep.subr.bf16.mxu0 %v2364
    %2501 = vmatpush1.bf16.msra.mxu0 %v2363
    %2502 = vmatprep.mubr.bf16.mxu0 %v2032
    %2503 = vmatmul.mubr.bf16.gmra.mrb[0].mxu0 %v2031
    %v2504 = vpop.f32.mrb[0].mxu0
    %v2505 = vadd.f32 %v2464, %v2504
    %v2506 = vpop.f32.mrb[0].mxu0
    %v2507 = vadd.f32 %v2466, %v2506
    %v2508 = vpop.f32.mrb[0].mxu0
    %v2509 = vpop.f32.mrb[0].mxu0
    %2510 = vdwg.mxu0
    %v2511 = vxor.u32 %v2505, 2147483648
    %v2512 = vxor.u32 %v2507, 2147483648
    %v2513 = vmul.f32 %v2511, 1.442695
    %v2514 = vpow.pop %v2513
    %v2515 = vmul.f32 %v2512, 1.442695
    %v2516 = vpow.pop %v2515
    %v2517 = vadd.f32 %v2514, 1.0
    %v2518 = vadd.f32 %v2516, 1.0
    %v2519 = vrcp.pop %v2517
    %v2520 = vmul.f32 1.0, %v2519
    %v2521 = vrcp.pop %v2518
    %v2522 = vmul.f32 1.0, %v2521
    %s2523 = sld [smem:[#allocation2]]
    %v2524 = vstv %s2523
    %v2525 = vadd.f32 %v2520, %v2524
    %v2526 = vadd.f32 %v2522, %v2524
    %v2527 = vpack.c.bf16 %v2525, %v2525
    %v2528 = vpack.c.bf16 %v2526, %v2526
    %v2529 = vld [vmem:[#allocation9] sm:$0xff]
    %v2530 = vld [vmem:[#allocation9 + $0x8] sm:$0xff]
    %v2531 = vld [vmem:[#allocation9 + $0x10] sm:$0xff]
    %v2532 = vld [vmem:[#allocation9 + $0x18] sm:$0xff]
    %v2533 = vld [vmem:[#allocation9 + $0x20] sm:$0xff]
    %v2534 = vld [vmem:[#allocation9 + $0x28] sm:$0xff]
    %v2535 = vld [vmem:[#allocation9 + $0x30] sm:$0xff]
    %v2536 = vld [vmem:[#allocation9 + $0x38] sm:$0xff]
    %v2537 = vld [vmem:[#allocation9 + $0x40] sm:$0xff]
    %v2538 = vld [vmem:[#allocation9 + $0x48] sm:$0xff]
    %v2539 = vld [vmem:[#allocation9 + $0x50] sm:$0xff]
    %v2540 = vld [vmem:[#allocation9 + $0x58] sm:$0xff]
    %v2541 = vld [vmem:[#allocation9 + $0x60] sm:$0xff]
    %v2542 = vld [vmem:[#allocation9 + $0x68] sm:$0xff]
    %v2543 = vld [vmem:[#allocation9 + $0x70] sm:$0xff]
    %v2544 = vld [vmem:[#allocation9 + $0x78] sm:$0xff]
    %v2545 = vld [vmem:[#allocation9 + $0x80] sm:$0xff]
    %v2546 = vld [vmem:[#allocation9 + $0x88] sm:$0xff]
    %v2547 = vld [vmem:[#allocation9 + $0x90] sm:$0xff]
    %v2548 = vld [vmem:[#allocation9 + $0x98] sm:$0xff]
    %v2549 = vld [vmem:[#allocation9 + $0xa0] sm:$0xff]
    %v2550 = vld [vmem:[#allocation9 + $0xa8] sm:$0xff]
    %v2551 = vld [vmem:[#allocation9 + $0xb0] sm:$0xff]
    %v2552 = vld [vmem:[#allocation9 + $0xb8] sm:$0xff]
    %v2553 = vld [vmem:[#allocation9 + $0xc0] sm:$0xff]
    %v2554 = vld [vmem:[#allocation9 + $0xc8] sm:$0xff]
    %v2555 = vld [vmem:[#allocation9 + $0xd0] sm:$0xff]
    %v2556 = vld [vmem:[#allocation9 + $0xd8] sm:$0xff]
    %v2557 = vld [vmem:[#allocation9 + $0xe0] sm:$0xff]
    %v2558 = vld [vmem:[#allocation9 + $0xe8] sm:$0xff]
    %v2559 = vld [vmem:[#allocation9 + $0xf0] sm:$0xff]
    %v2560 = vld [vmem:[#allocation9 + $0xf8] sm:$0xff]
    %v2561 = vld [vmem:[#allocation9 + $0x100] sm:$0xff]
    %v2562 = vld [vmem:[#allocation9 + $0x108] sm:$0xff]
    %v2563 = vld [vmem:[#allocation9 + $0x110] sm:$0xff]
    %v2564 = vld [vmem:[#allocation9 + $0x118] sm:$0xff]
    %v2565 = vld [vmem:[#allocation9 + $0x120] sm:$0xff]
    %v2566 = vld [vmem:[#allocation9 + $0x128] sm:$0xff]
    %v2567 = vld [vmem:[#allocation9 + $0x130] sm:$0xff]
    %v2568 = vld [vmem:[#allocation9 + $0x138] sm:$0xff]
    %v2569 = vld [vmem:[#allocation9 + $0x140] sm:$0xff]
    %v2570 = vld [vmem:[#allocation9 + $0x148] sm:$0xff]
    %v2571 = vld [vmem:[#allocation9 + $0x150] sm:$0xff]
    %v2572 = vld [vmem:[#allocation9 + $0x158] sm:$0xff]
    %v2573 = vld [vmem:[#allocation9 + $0x160] sm:$0xff]
    %v2574 = vld [vmem:[#allocation9 + $0x168] sm:$0xff]
    %v2575 = vld [vmem:[#allocation9 + $0x170] sm:$0xff]
    %v2576 = vld [vmem:[#allocation9 + $0x178] sm:$0xff]
    %v2577 = vld [vmem:[#allocation9 + $0x180] sm:$0xff]
    %v2578 = vld [vmem:[#allocation9 + $0x188] sm:$0xff]
    %v2579 = vld [vmem:[#allocation9 + $0x190] sm:$0xff]
    %v2580 = vld [vmem:[#allocation9 + $0x198] sm:$0xff]
    %v2581 = vld [vmem:[#allocation9 + $0x1a0] sm:$0xff]
    %v2582 = vld [vmem:[#allocation9 + $0x1a8] sm:$0xff]
    %v2583 = vld [vmem:[#allocation9 + $0x1b0] sm:$0xff]
    %v2584 = vld [vmem:[#allocation9 + $0x1b8] sm:$0xff]
    %v2585 = vld [vmem:[#allocation9 + $0x1c0] sm:$0xff]
    %v2586 = vld [vmem:[#allocation9 + $0x1c8] sm:$0xff]
    %v2587 = vld [vmem:[#allocation9 + $0x1d0] sm:$0xff]
    %v2588 = vld [vmem:[#allocation9 + $0x1d8] sm:$0xff]
    %v2589 = vld [vmem:[#allocation9 + $0x1e0] sm:$0xff]
    %v2590 = vld [vmem:[#allocation9 + $0x1e8] sm:$0xff]
    %v2591 = vld [vmem:[#allocation9 + $0x1f0] sm:$0xff]
    %v2592 = vld [vmem:[#allocation9 + $0x1f8] sm:$0xff]
    %v2593 = vld [vmem:[%s7] sm:$0xf]
    %v2595 = vlaneseq
    %v2596 = vshrl.u32 %v2595, 7
    %v2597 = vsub.s32 0, %v2596
    %v2598 = vrot.slane %v2593, %v2597
    %v2599 = vlaneseq
    %v2600 = vshrl.u32 %v2599, 7
    %v2601 = vsub.s32 1, %v2600
    %v2602 = vrot.slane %v2593, %v2601
    %v2603 = vlaneseq
    %v2604 = vshrl.u32 %v2603, 7
    %v2605 = vsub.s32 2, %v2604
    %v2606 = vrot.slane %v2593, %v2605
    %v2607 = vlaneseq
    %v2608 = vshrl.u32 %v2607, 7
    %v2609 = vsub.s32 3, %v2608
    %v2610 = vrot.slane %v2593, %v2609
    %v2679 = vunpack.c.l.b16 %v2529
    %v2680 = vunpack.c.h.b16 %v2529
    %v2681 = vunpack.c.l.b16 %v2530
    %v2682 = vunpack.c.h.b16 %v2530
    %v2683 = vunpack.c.l.b16 %v2531
    %v2684 = vunpack.c.h.b16 %v2531
    %v2685 = vunpack.c.l.b16 %v2532
    %v2686 = vunpack.c.h.b16 %v2532
    %v2687 = vunpack.c.l.b16 %v2533
    %v2688 = vunpack.c.h.b16 %v2533
    %v2689 = vunpack.c.l.b16 %v2534
    %v2690 = vunpack.c.h.b16 %v2534
    %v2691 = vunpack.c.l.b16 %v2535
    %v2692 = vunpack.c.h.b16 %v2535
    %v2693 = vunpack.c.l.b16 %v2536
    %v2694 = vunpack.c.h.b16 %v2536
    %v2695 = vunpack.c.l.b16 %v2537
    %v2696 = vunpack.c.h.b16 %v2537
    %v2697 = vunpack.c.l.b16 %v2538
    %v2698 = vunpack.c.h.b16 %v2538
    %v2699 = vunpack.c.l.b16 %v2539
    %v2700 = vunpack.c.h.b16 %v2539
    %v2701 = vunpack.c.l.b16 %v2540
    %v2702 = vunpack.c.h.b16 %v2540
    %v2703 = vunpack.c.l.b16 %v2541
    %v2704 = vunpack.c.h.b16 %v2541
    %v2705 = vunpack.c.l.b16 %v2542
    %v2706 = vunpack.c.h.b16 %v2542
    %v2707 = vunpack.c.l.b16 %v2543
    %v2708 = vunpack.c.h.b16 %v2543
    %v2709 = vunpack.c.l.b16 %v2544
    %v2710 = vunpack.c.h.b16 %v2544
    %v2711 = vunpack.c.l.b16 %v2545
    %v2712 = vunpack.c.h.b16 %v2545
    %v2713 = vunpack.c.l.b16 %v2546
    %v2714 = vunpack.c.h.b16 %v2546
    %v2715 = vunpack.c.l.b16 %v2547
    %v2716 = vunpack.c.h.b16 %v2547
    %v2717 = vunpack.c.l.b16 %v2548
    %v2718 = vunpack.c.h.b16 %v2548
    %v2719 = vunpack.c.l.b16 %v2549
    %v2720 = vunpack.c.h.b16 %v2549
    %v2721 = vunpack.c.l.b16 %v2550
    %v2722 = vunpack.c.h.b16 %v2550
    %v2723 = vunpack.c.l.b16 %v2551
    %v2724 = vunpack.c.h.b16 %v2551
    %v2725 = vunpack.c.l.b16 %v2552
    %v2726 = vunpack.c.h.b16 %v2552
    %v2727 = vunpack.c.l.b16 %v2553
    %v2728 = vunpack.c.h.b16 %v2553
    %v2729 = vunpack.c.l.b16 %v2554
    %v2730 = vunpack.c.h.b16 %v2554
    %v2731 = vunpack.c.l.b16 %v2555
    %v2732 = vunpack.c.h.b16 %v2555
    %v2733 = vunpack.c.l.b16 %v2556
    %v2734 = vunpack.c.h.b16 %v2556
    %v2735 = vunpack.c.l.b16 %v2557
    %v2736 = vunpack.c.h.b16 %v2557
    %v2737 = vunpack.c.l.b16 %v2558
    %v2738 = vunpack.c.h.b16 %v2558
    %v2739 = vunpack.c.l.b16 %v2559
    %v2740 = vunpack.c.h.b16 %v2559
    %v2741 = vunpack.c.l.b16 %v2560
    %v2742 = vunpack.c.h.b16 %v2560
    %v2743 = vunpack.c.l.b16 %v2561
    %v2744 = vunpack.c.h.b16 %v2561
    %v2745 = vunpack.c.l.b16 %v2562
    %v2746 = vunpack.c.h.b16 %v2562
    %v2747 = vunpack.c.l.b16 %v2563
    %v2748 = vunpack.c.h.b16 %v2563
    %v2749 = vunpack.c.l.b16 %v2564
    %v2750 = vunpack.c.h.b16 %v2564
    %v2751 = vunpack.c.l.b16 %v2565
    %v2752 = vunpack.c.h.b16 %v2565
    %v2753 = vunpack.c.l.b16 %v2566
    %v2754 = vunpack.c.h.b16 %v2566
    %v2755 = vunpack.c.l.b16 %v2567
    %v2756 = vunpack.c.h.b16 %v2567
    %v2757 = vunpack.c.l.b16 %v2568
    %v2758 = vunpack.c.h.b16 %v2568
    %v2759 = vunpack.c.l.b16 %v2569
    %v2760 = vunpack.c.h.b16 %v2569
    %v2761 = vunpack.c.l.b16 %v2570
    %v2762 = vunpack.c.h.b16 %v2570
    %v2763 = vunpack.c.l.b16 %v2571
    %v2764 = vunpack.c.h.b16 %v2571
    %v2765 = vunpack.c.l.b16 %v2572
    %v2766 = vunpack.c.h.b16 %v2572
    %v2767 = vunpack.c.l.b16 %v2573
    %v2768 = vunpack.c.h.b16 %v2573
    %v2769 = vunpack.c.l.b16 %v2574
    %v2770 = vunpack.c.h.b16 %v2574
    %v2771 = vunpack.c.l.b16 %v2575
    %v2772 = vunpack.c.h.b16 %v2575
    %v2773 = vunpack.c.l.b16 %v2576
    %v2774 = vunpack.c.h.b16 %v2576
    %v2775 = vunpack.c.l.b16 %v2577
    %v2776 = vunpack.c.h.b16 %v2577
    %v2777 = vunpack.c.l.b16 %v2578
    %v2778 = vunpack.c.h.b16 %v2578
    %v2779 = vunpack.c.l.b16 %v2579
    %v2780 = vunpack.c.h.b16 %v2579
    %v2781 = vunpack.c.l.b16 %v2580
    %v2782 = vunpack.c.h.b16 %v2580
    %v2783 = vunpack.c.l.b16 %v2581
    %v2784 = vunpack.c.h.b16 %v2581
    %v2785 = vunpack.c.l.b16 %v2582
    %v2786 = vunpack.c.h.b16 %v2582
    %v2787 = vunpack.c.l.b16 %v2583
    %v2788 = vunpack.c.h.b16 %v2583
    %v2789 = vunpack.c.l.b16 %v2584
    %v2790 = vunpack.c.h.b16 %v2584
    %v2791 = vunpack.c.l.b16 %v2585
    %v2792 = vunpack.c.h.b16 %v2585
    %v2793 = vunpack.c.l.b16 %v2586
    %v2794 = vunpack.c.h.b16 %v2586
    %v2795 = vunpack.c.l.b16 %v2587
    %v2796 = vunpack.c.h.b16 %v2587
    %v2797 = vunpack.c.l.b16 %v2588
    %v2798 = vunpack.c.h.b16 %v2588
    %v2799 = vunpack.c.l.b16 %v2589
    %v2800 = vunpack.c.h.b16 %v2589
    %v2801 = vunpack.c.l.b16 %v2590
    %v2802 = vunpack.c.h.b16 %v2590
    %v2803 = vunpack.c.l.b16 %v2591
    %v2804 = vunpack.c.h.b16 %v2591
    %v2805 = vunpack.c.l.b16 %v2592
    %v2806 = vunpack.c.h.b16 %v2592
    %v2807 = vpack.c.b16 %v2683, %v2679
    %v2808 = vpack.c.b16 %v2684, %v2680
    %v2809 = vpack.c.b16 %v2685, %v2681
    %v2810 = vpack.c.b16 %v2686, %v2682
    %v2811 = vpack.c.b16 %v2691, %v2687
    %v2812 = vpack.c.b16 %v2692, %v2688
    %v2813 = vpack.c.b16 %v2693, %v2689
    %v2814 = vpack.c.b16 %v2694, %v2690
    %v2815 = vpack.c.b16 %v2699, %v2695
    %v2816 = vpack.c.b16 %v2700, %v2696
    %v2817 = vpack.c.b16 %v2701, %v2697
    %v2818 = vpack.c.b16 %v2702, %v2698
    %v2819 = vpack.c.b16 %v2707, %v2703
    %v2820 = vpack.c.b16 %v2708, %v2704
    %v2821 = vpack.c.b16 %v2709, %v2705
    %v2822 = vpack.c.b16 %v2710, %v2706
    %v2823 = vpack.c.b16 %v2715, %v2711
    %v2824 = vpack.c.b16 %v2716, %v2712
    %v2825 = vpack.c.b16 %v2717, %v2713
    %v2826 = vpack.c.b16 %v2718, %v2714
    %v2827 = vpack.c.b16 %v2723, %v2719
    %v2828 = vpack.c.b16 %v2724, %v2720
    %v2829 = vpack.c.b16 %v2725, %v2721
    %v2830 = vpack.c.b16 %v2726, %v2722
    %v2831 = vpack.c.b16 %v2731, %v2727
    %v2832 = vpack.c.b16 %v2732, %v2728
    %v2833 = vpack.c.b16 %v2733, %v2729
    %v2834 = vpack.c.b16 %v2734, %v2730
    %v2835 = vpack.c.b16 %v2739, %v2735
    %v2836 = vpack.c.b16 %v2740, %v2736
    %v2837 = vpack.c.b16 %v2741, %v2737
    %v2838 = vpack.c.b16 %v2742, %v2738
    %v2839 = vpack.c.b16 %v2747, %v2743
    %v2840 = vpack.c.b16 %v2748, %v2744
    %v2841 = vpack.c.b16 %v2749, %v2745
    %v2842 = vpack.c.b16 %v2750, %v2746
    %v2843 = vpack.c.b16 %v2755, %v2751
    %v2844 = vpack.c.b16 %v2756, %v2752
    %v2845 = vpack.c.b16 %v2757, %v2753
    %v2846 = vpack.c.b16 %v2758, %v2754
    %v2847 = vpack.c.b16 %v2763, %v2759
    %v2848 = vpack.c.b16 %v2764, %v2760
    %v2849 = vpack.c.b16 %v2765, %v2761
    %v2850 = vpack.c.b16 %v2766, %v2762
    %v2851 = vpack.c.b16 %v2771, %v2767
    %v2852 = vpack.c.b16 %v2772, %v2768
    %v2853 = vpack.c.b16 %v2773, %v2769
    %v2854 = vpack.c.b16 %v2774, %v2770
    %v2855 = vpack.c.b16 %v2779, %v2775
    %v2856 = vpack.c.b16 %v2780, %v2776
    %v2857 = vpack.c.b16 %v2781, %v2777
    %v2858 = vpack.c.b16 %v2782, %v2778
    %v2859 = vpack.c.b16 %v2787, %v2783
    %v2860 = vpack.c.b16 %v2788, %v2784
    %v2861 = vpack.c.b16 %v2789, %v2785
    %v2862 = vpack.c.b16 %v2790, %v2786
    %v2863 = vpack.c.b16 %v2795, %v2791
    %v2864 = vpack.c.b16 %v2796, %v2792
    %v2865 = vpack.c.b16 %v2797, %v2793
    %v2866 = vpack.c.b16 %v2798, %v2794
    %v2867 = vpack.c.b16 %v2803, %v2799
    %v2868 = vpack.c.b16 %v2804, %v2800
    %v2869 = vpack.c.b16 %v2805, %v2801
    %v2870 = vpack.c.b16 %v2806, %v2802
    %2935 = vmatprep.subr.bf16.mxu0 %v2808
    %2936 = vmatpush1.bf16.msra.mxu0 %v2807
    %2937 = vmatprep.subr.bf16.mxu0 %v2812
    %2938 = vmatpush1.bf16.msra.mxu0 %v2811
    %2939 = vmatprep.subr.bf16.mxu0 %v2816
    %2940 = vmatpush1.bf16.msra.mxu0 %v2815
    %2941 = vmatprep.subr.bf16.mxu0 %v2820
    %2942 = vmatpush1.bf16.msra.mxu0 %v2819
    %2943 = vmatprep.subr.bf16.mxu0 %v2824
    %2944 = vmatpush1.bf16.msra.mxu0 %v2823
    %2945 = vmatprep.subr.bf16.mxu0 %v2828
    %2946 = vmatpush1.bf16.msra.mxu0 %v2827
    %2947 = vmatprep.subr.bf16.mxu0 %v2832
    %2948 = vmatpush1.bf16.msra.mxu0 %v2831
    %2949 = vmatprep.subr.bf16.mxu0 %v2836
    %2950 = vmatpush1.bf16.msra.mxu0 %v2835
    %2951 = vmatprep.subr.bf16.mxu0 %v2840
    %2952 = vmatpush1.bf16.msra.mxu0 %v2839
    %2953 = vmatprep.subr.bf16.mxu0 %v2844
    %2954 = vmatpush1.bf16.msra.mxu0 %v2843
    %2955 = vmatprep.subr.bf16.mxu0 %v2848
    %2956 = vmatpush1.bf16.msra.mxu0 %v2847
    %2957 = vmatprep.subr.bf16.mxu0 %v2852
    %2958 = vmatpush1.bf16.msra.mxu0 %v2851
    %2959 = vmatprep.subr.bf16.mxu0 %v2856
    %2960 = vmatpush1.bf16.msra.mxu0 %v2855
    %2961 = vmatprep.subr.bf16.mxu0 %v2860
    %2962 = vmatpush1.bf16.msra.mxu0 %v2859
    %2963 = vmatprep.subr.bf16.mxu0 %v2864
    %2964 = vmatpush1.bf16.msra.mxu0 %v2863
    %2965 = vmatprep.subr.bf16.mxu0 %v2868
    %2966 = vmatpush1.bf16.msra.mxu0 %v2867
    %2967 = vmatprep.mubr.bf16.mxu0 %v2528
    %2968 = vmatmul.mubr.bf16.gmra.mrb[0].mxu0 %v2527
    %v2969 = vpop.f32.mrb[0].mxu0
    %v2970 = vadd.f32 %v2598, %v2969
    %v2971 = vpop.f32.mrb[0].mxu0
    %v2972 = vadd.f32 %v2602, %v2971
    %v2973 = vpop.f32.mrb[0].mxu0
    %v2974 = vpop.f32.mrb[0].mxu0
    %2975 = vdwg.mxu0
    %2976 = vmatprep.subr.bf16.mxu0 %v2810
    %2977 = vmatpush1.bf16.msra.mxu0 %v2809
    %2978 = vmatprep.subr.bf16.mxu0 %v2814
    %2979 = vmatpush1.bf16.msra.mxu0 %v2813
    %2980 = vmatprep.subr.bf16.mxu0 %v2818
    %2981 = vmatpush1.bf16.msra.mxu0 %v2817
    %2982 = vmatprep.subr.bf16.mxu0 %v2822
    %2983 = vmatpush1.bf16.msra.mxu0 %v2821
    %2984 = vmatprep.subr.bf16.mxu0 %v2826
    %2985 = vmatpush1.bf16.msra.mxu0 %v2825
    %2986 = vmatprep.subr.bf16.mxu0 %v2830
    %2987 = vmatpush1.bf16.msra.mxu0 %v2829
    %2988 = vmatprep.subr.bf16.mxu0 %v2834
    %2989 = vmatpush1.bf16.msra.mxu0 %v2833
    %2990 = vmatprep.subr.bf16.mxu0 %v2838
    %2991 = vmatpush1.bf16.msra.mxu0 %v2837
    %2992 = vmatprep.subr.bf16.mxu0 %v2842
    %2993 = vmatpush1.bf16.msra.mxu0 %v2841
    %2994 = vmatprep.subr.bf16.mxu0 %v2846
    %2995 = vmatpush1.bf16.msra.mxu0 %v2845
    %2996 = vmatprep.subr.bf16.mxu0 %v2850
    %2997 = vmatpush1.bf16.msra.mxu0 %v2849
    %2998 = vmatprep.subr.bf16.mxu0 %v2854
    %2999 = vmatpush1.bf16.msra.mxu0 %v2853
    %3000 = vmatprep.subr.bf16.mxu0 %v2858
    %3001 = vmatpush1.bf16.msra.mxu0 %v2857
    %3002 = vmatprep.subr.bf16.mxu0 %v2862
    %3003 = vmatpush1.bf16.msra.mxu0 %v2861
    %3004 = vmatprep.subr.bf16.mxu0 %v2866
    %3005 = vmatpush1.bf16.msra.mxu0 %v2865
    %3006 = vmatprep.subr.bf16.mxu0 %v2870
    %3007 = vmatpush1.bf16.msra.mxu0 %v2869
    %3008 = vmatprep.mubr.bf16.mxu0 %v2528
    %3009 = vmatmul.mubr.bf16.gmra.mrb[0].mxu0 %v2527
    %v3010 = vpop.f32.mrb[0].mxu0
    %v3011 = vadd.f32 %v2606, %v3010
    %v3012 = vpop.f32.mrb[0].mxu0
    %v3013 = vadd.f32 %v2610, %v3012
    %v3014 = vpop.f32.mrb[0].mxu0
    %v3015 = vpop.f32.mrb[0].mxu0
    %3016 = vdwg.mxu0
    %v3017 = vxor.u32 %v2970, 2147483648
    %v3018 = vxor.u32 %v2972, 2147483648
    %v3019 = vxor.u32 %v3011, 2147483648
    %v3020 = vxor.u32 %v3013, 2147483648
    %v3021 = vmul.f32 %v3017, 1.442695
    %v3022 = vpow.pop %v3021
    %v3023 = vmul.f32 %v3018, 1.442695
    %v3024 = vpow.pop %v3023
    %v3025 = vmul.f32 %v3019, 1.442695
    %v3026 = vpow.pop %v3025
    %v3027 = vmul.f32 %v3020, 1.442695
    %v3028 = vpow.pop %v3027
    %v3029 = vadd.f32 %v3022, 1.0
    %v3030 = vadd.f32 %v3024, 1.0
    %v3031 = vadd.f32 %v3026, 1.0
    %v3032 = vadd.f32 %v3028, 1.0
    %v3033 = vrcp.pop %v3029
    %v3034 = vmul.f32 1.0, %v3033
    %v3035 = vrcp.pop %v3030
    %v3036 = vmul.f32 1.0, %v3035
    %v3037 = vrcp.pop %v3031
    %v3038 = vmul.f32 1.0, %v3037
    %v3039 = vrcp.pop %v3032
    %v3040 = vmul.f32 1.0, %v3039
    %v3041 = vpack.c.bf16 %v3034, %v3034
    %v3042 = vpack.c.bf16 %v3036, %v3036
    %v3043 = vpack.c.bf16 %v3038, %v3038
    %v3044 = vpack.c.bf16 %v3040, %v3040
    %v3045 = vld [vmem:[#allocation11] sm:$0xff]
    %v3046 = vld [vmem:[#allocation11 + $0x8] sm:$0xff]
    %v3047 = vld [vmem:[#allocation11 + $0x10] sm:$0xff]
    %v3048 = vld [vmem:[#allocation11 + $0x18] sm:$0xff]
    %v3049 = vld [vmem:[#allocation11 + $0x20] sm:$0xff]
    %v3050 = vld [vmem:[#allocation11 + $0x28] sm:$0xff]
    %v3051 = vld [vmem:[#allocation11 + $0x30] sm:$0xff]
    %v3052 = vld [vmem:[#allocation11 + $0x38] sm:$0xff]
    %v3053 = vld [vmem:[#allocation11 + $0x40] sm:$0xff]
    %v3054 = vld [vmem:[#allocation11 + $0x48] sm:$0xff]
    %v3055 = vld [vmem:[#allocation11 + $0x50] sm:$0xff]
    %v3056 = vld [vmem:[#allocation11 + $0x58] sm:$0xff]
    %v3057 = vld [vmem:[#allocation11 + $0x60] sm:$0xff]
    %v3058 = vld [vmem:[#allocation11 + $0x68] sm:$0xff]
    %v3059 = vld [vmem:[#allocation11 + $0x70] sm:$0xff]
    %v3060 = vld [vmem:[#allocation11 + $0x78] sm:$0xff]
    %v3061 = vld [vmem:[#allocation11 + $0x80] sm:$0xff]
    %v3062 = vld [vmem:[#allocation11 + $0x88] sm:$0xff]
    %v3063 = vld [vmem:[#allocation11 + $0x90] sm:$0xff]
    %v3064 = vld [vmem:[#allocation11 + $0x98] sm:$0xff]
    %v3065 = vld [vmem:[#allocation11 + $0xa0] sm:$0xff]
    %v3066 = vld [vmem:[#allocation11 + $0xa8] sm:$0xff]
    %v3067 = vld [vmem:[#allocation11 + $0xb0] sm:$0xff]
    %v3068 = vld [vmem:[#allocation11 + $0xb8] sm:$0xff]
    %v3069 = vld [vmem:[#allocation11 + $0xc0] sm:$0xff]
    %v3070 = vld [vmem:[#allocation11 + $0xc8] sm:$0xff]
    %v3071 = vld [vmem:[#allocation11 + $0xd0] sm:$0xff]
    %v3072 = vld [vmem:[#allocation11 + $0xd8] sm:$0xff]
    %v3073 = vld [vmem:[#allocation11 + $0xe0] sm:$0xff]
    %v3074 = vld [vmem:[#allocation11 + $0xe8] sm:$0xff]
    %v3075 = vld [vmem:[#allocation11 + $0xf0] sm:$0xff]
    %v3076 = vld [vmem:[#allocation11 + $0xf8] sm:$0xff]
    %v3077 = vld [vmem:[#allocation11 + $0x100] sm:$0xff]
    %v3078 = vld [vmem:[#allocation11 + $0x108] sm:$0xff]
    %v3079 = vld [vmem:[#allocation11 + $0x110] sm:$0xff]
    %v3080 = vld [vmem:[#allocation11 + $0x118] sm:$0xff]
    %v3081 = vld [vmem:[#allocation11 + $0x120] sm:$0xff]
    %v3082 = vld [vmem:[#allocation11 + $0x128] sm:$0xff]
    %v3083 = vld [vmem:[#allocation11 + $0x130] sm:$0xff]
    %v3084 = vld [vmem:[#allocation11 + $0x138] sm:$0xff]
    %v3085 = vld [vmem:[#allocation11 + $0x140] sm:$0xff]
    %v3086 = vld [vmem:[#allocation11 + $0x148] sm:$0xff]
    %v3087 = vld [vmem:[#allocation11 + $0x150] sm:$0xff]
    %v3088 = vld [vmem:[#allocation11 + $0x158] sm:$0xff]
    %v3089 = vld [vmem:[#allocation11 + $0x160] sm:$0xff]
    %v3090 = vld [vmem:[#allocation11 + $0x168] sm:$0xff]
    %v3091 = vld [vmem:[#allocation11 + $0x170] sm:$0xff]
    %v3092 = vld [vmem:[#allocation11 + $0x178] sm:$0xff]
    %v3093 = vld [vmem:[#allocation11 + $0x180] sm:$0xff]
    %v3094 = vld [vmem:[#allocation11 + $0x188] sm:$0xff]
    %v3095 = vld [vmem:[#allocation11 + $0x190] sm:$0xff]
    %v3096 = vld [vmem:[#allocation11 + $0x198] sm:$0xff]
    %v3097 = vld [vmem:[#allocation11 + $0x1a0] sm:$0xff]
    %v3098 = vld [vmem:[#allocation11 + $0x1a8] sm:$0xff]
    %v3099 = vld [vmem:[#allocation11 + $0x1b0] sm:$0xff]
    %v3100 = vld [vmem:[#allocation11 + $0x1b8] sm:$0xff]
    %v3101 = vld [vmem:[#allocation11 + $0x1c0] sm:$0xff]
    %v3102 = vld [vmem:[#allocation11 + $0x1c8] sm:$0xff]
    %v3103 = vld [vmem:[#allocation11 + $0x1d0] sm:$0xff]
    %v3104 = vld [vmem:[#allocation11 + $0x1d8] sm:$0xff]
    %v3105 = vld [vmem:[#allocation11 + $0x1e0] sm:$0xff]
    %v3106 = vld [vmem:[#allocation11 + $0x1e8] sm:$0xff]
    %v3107 = vld [vmem:[#allocation11 + $0x1f0] sm:$0xff]
    %v3108 = vld [vmem:[#allocation11 + $0x1f8] sm:$0xff]
    %v3109 = vld [vmem:[#allocation11 + $0x200] sm:$0xff]
    %v3110 = vld [vmem:[#allocation11 + $0x208] sm:$0xff]
    %v3111 = vld [vmem:[#allocation11 + $0x210] sm:$0xff]
    %v3112 = vld [vmem:[#allocation11 + $0x218] sm:$0xff]
    %v3113 = vld [vmem:[#allocation11 + $0x220] sm:$0xff]
    %v3114 = vld [vmem:[#allocation11 + $0x228] sm:$0xff]
    %v3115 = vld [vmem:[#allocation11 + $0x230] sm:$0xff]
    %v3116 = vld [vmem:[#allocation11 + $0x238] sm:$0xff]
    %v3117 = vld [vmem:[#allocation11 + $0x240] sm:$0xff]
    %v3118 = vld [vmem:[#allocation11 + $0x248] sm:$0xff]
    %v3119 = vld [vmem:[#allocation11 + $0x250] sm:$0xff]
    %v3120 = vld [vmem:[#allocation11 + $0x258] sm:$0xff]
    %v3121 = vld [vmem:[#allocation11 + $0x260] sm:$0xff]
    %v3122 = vld [vmem:[#allocation11 + $0x268] sm:$0xff]
    %v3123 = vld [vmem:[#allocation11 + $0x270] sm:$0xff]
    %v3124 = vld [vmem:[#allocation11 + $0x278] sm:$0xff]
    %v3125 = vld [vmem:[#allocation11 + $0x280] sm:$0xff]
    %v3126 = vld [vmem:[#allocation11 + $0x288] sm:$0xff]
    %v3127 = vld [vmem:[#allocation11 + $0x290] sm:$0xff]
    %v3128 = vld [vmem:[#allocation11 + $0x298] sm:$0xff]
    %v3129 = vld [vmem:[#allocation11 + $0x2a0] sm:$0xff]
    %v3130 = vld [vmem:[#allocation11 + $0x2a8] sm:$0xff]
    %v3131 = vld [vmem:[#allocation11 + $0x2b0] sm:$0xff]
    %v3132 = vld [vmem:[#allocation11 + $0x2b8] sm:$0xff]
    %v3133 = vld [vmem:[#allocation11 + $0x2c0] sm:$0xff]
    %v3134 = vld [vmem:[#allocation11 + $0x2c8] sm:$0xff]
    %v3135 = vld [vmem:[#allocation11 + $0x2d0] sm:$0xff]
    %v3136 = vld [vmem:[#allocation11 + $0x2d8] sm:$0xff]
    %v3137 = vld [vmem:[#allocation11 + $0x2e0] sm:$0xff]
    %v3138 = vld [vmem:[#allocation11 + $0x2e8] sm:$0xff]
    %v3139 = vld [vmem:[#allocation11 + $0x2f0] sm:$0xff]
    %v3140 = vld [vmem:[#allocation11 + $0x2f8] sm:$0xff]
    %v3141 = vld [vmem:[#allocation11 + $0x300] sm:$0xff]
    %v3142 = vld [vmem:[#allocation11 + $0x308] sm:$0xff]
    %v3143 = vld [vmem:[#allocation11 + $0x310] sm:$0xff]
    %v3144 = vld [vmem:[#allocation11 + $0x318] sm:$0xff]
    %v3145 = vld [vmem:[#allocation11 + $0x320] sm:$0xff]
    %v3146 = vld [vmem:[#allocation11 + $0x328] sm:$0xff]
    %v3147 = vld [vmem:[#allocation11 + $0x330] sm:$0xff]
    %v3148 = vld [vmem:[#allocation11 + $0x338] sm:$0xff]
    %v3149 = vld [vmem:[#allocation11 + $0x340] sm:$0xff]
    %v3150 = vld [vmem:[#allocation11 + $0x348] sm:$0xff]
    %v3151 = vld [vmem:[#allocation11 + $0x350] sm:$0xff]
    %v3152 = vld [vmem:[#allocation11 + $0x358] sm:$0xff]
    %v3153 = vld [vmem:[#allocation11 + $0x360] sm:$0xff]
    %v3154 = vld [vmem:[#allocation11 + $0x368] sm:$0xff]
    %v3155 = vld [vmem:[#allocation11 + $0x370] sm:$0xff]
    %v3156 = vld [vmem:[#allocation11 + $0x378] sm:$0xff]
    %v3157 = vld [vmem:[#allocation11 + $0x380] sm:$0xff]
    %v3158 = vld [vmem:[#allocation11 + $0x388] sm:$0xff]
    %v3159 = vld [vmem:[#allocation11 + $0x390] sm:$0xff]
    %v3160 = vld [vmem:[#allocation11 + $0x398] sm:$0xff]
    %v3161 = vld [vmem:[#allocation11 + $0x3a0] sm:$0xff]
    %v3162 = vld [vmem:[#allocation11 + $0x3a8] sm:$0xff]
    %v3163 = vld [vmem:[#allocation11 + $0x3b0] sm:$0xff]
    %v3164 = vld [vmem:[#allocation11 + $0x3b8] sm:$0xff]
    %v3165 = vld [vmem:[#allocation11 + $0x3c0] sm:$0xff]
    %v3166 = vld [vmem:[#allocation11 + $0x3c8] sm:$0xff]
    %v3167 = vld [vmem:[#allocation11 + $0x3d0] sm:$0xff]
    %v3168 = vld [vmem:[#allocation11 + $0x3d8] sm:$0xff]
    %v3169 = vld [vmem:[#allocation11 + $0x3e0] sm:$0xff]
    %v3170 = vld [vmem:[#allocation11 + $0x3e8] sm:$0xff]
    %v3171 = vld [vmem:[#allocation11 + $0x3f0] sm:$0xff]
    %v3172 = vld [vmem:[#allocation11 + $0x3f8] sm:$0xff]
    %v3173 = vld [vmem:[#allocation11 + $0x400] sm:$0xff]
    %v3174 = vld [vmem:[#allocation11 + $0x408] sm:$0xff]
    %v3175 = vld [vmem:[#allocation11 + $0x410] sm:$0xff]
    %v3176 = vld [vmem:[#allocation11 + $0x418] sm:$0xff]
    %v3177 = vld [vmem:[#allocation11 + $0x420] sm:$0xff]
    %v3178 = vld [vmem:[#allocation11 + $0x428] sm:$0xff]
    %v3179 = vld [vmem:[#allocation11 + $0x430] sm:$0xff]
    %v3180 = vld [vmem:[#allocation11 + $0x438] sm:$0xff]
    %v3181 = vld [vmem:[#allocation11 + $0x440] sm:$0xff]
    %v3182 = vld [vmem:[#allocation11 + $0x448] sm:$0xff]
    %v3183 = vld [vmem:[#allocation11 + $0x450] sm:$0xff]
    %v3184 = vld [vmem:[#allocation11 + $0x458] sm:$0xff]
    %v3185 = vld [vmem:[#allocation11 + $0x460] sm:$0xff]
    %v3186 = vld [vmem:[#allocation11 + $0x468] sm:$0xff]
    %v3187 = vld [vmem:[#allocation11 + $0x470] sm:$0xff]
    %v3188 = vld [vmem:[#allocation11 + $0x478] sm:$0xff]
    %v3189 = vld [vmem:[#allocation11 + $0x480] sm:$0xff]
    %v3190 = vld [vmem:[#allocation11 + $0x488] sm:$0xff]
    %v3191 = vld [vmem:[#allocation11 + $0x490] sm:$0xff]
    %v3192 = vld [vmem:[#allocation11 + $0x498] sm:$0xff]
    %v3193 = vld [vmem:[#allocation11 + $0x4a0] sm:$0xff]
    %v3194 = vld [vmem:[#allocation11 + $0x4a8] sm:$0xff]
    %v3195 = vld [vmem:[#allocation11 + $0x4b0] sm:$0xff]
    %v3196 = vld [vmem:[#allocation11 + $0x4b8] sm:$0xff]
    %v3197 = vld [vmem:[#allocation11 + $0x4c0] sm:$0xff]
    %v3198 = vld [vmem:[#allocation11 + $0x4c8] sm:$0xff]
    %v3199 = vld [vmem:[#allocation11 + $0x4d0] sm:$0xff]
    %v3200 = vld [vmem:[#allocation11 + $0x4d8] sm:$0xff]
    %v3201 = vld [vmem:[#allocation11 + $0x4e0] sm:$0xff]
    %v3202 = vld [vmem:[#allocation11 + $0x4e8] sm:$0xff]
    %v3203 = vld [vmem:[#allocation11 + $0x4f0] sm:$0xff]
    %v3204 = vld [vmem:[#allocation11 + $0x4f8] sm:$0xff]
    %v3205 = vld [vmem:[#allocation11 + $0x500] sm:$0xff]
    %v3206 = vld [vmem:[#allocation11 + $0x508] sm:$0xff]
    %v3207 = vld [vmem:[#allocation11 + $0x510] sm:$0xff]
    %v3208 = vld [vmem:[#allocation11 + $0x518] sm:$0xff]
    %v3209 = vld [vmem:[#allocation11 + $0x520] sm:$0xff]
    %v3210 = vld [vmem:[#allocation11 + $0x528] sm:$0xff]
    %v3211 = vld [vmem:[#allocation11 + $0x530] sm:$0xff]
    %v3212 = vld [vmem:[#allocation11 + $0x538] sm:$0xff]
    %v3213 = vld [vmem:[#allocation11 + $0x540] sm:$0xff]
    %v3214 = vld [vmem:[#allocation11 + $0x548] sm:$0xff]
    %v3215 = vld [vmem:[#allocation11 + $0x550] sm:$0xff]
    %v3216 = vld [vmem:[#allocation11 + $0x558] sm:$0xff]
    %v3217 = vld [vmem:[#allocation11 + $0x560] sm:$0xff]
    %v3218 = vld [vmem:[#allocation11 + $0x568] sm:$0xff]
    %v3219 = vld [vmem:[#allocation11 + $0x570] sm:$0xff]
    %v3220 = vld [vmem:[#allocation11 + $0x578] sm:$0xff]
    %v3221 = vld [vmem:[#allocation11 + $0x580] sm:$0xff]
    %v3222 = vld [vmem:[#allocation11 + $0x588] sm:$0xff]
    %v3223 = vld [vmem:[#allocation11 + $0x590] sm:$0xff]
    %v3224 = vld [vmem:[#allocation11 + $0x598] sm:$0xff]
    %v3225 = vld [vmem:[#allocation11 + $0x5a0] sm:$0xff]
    %v3226 = vld [vmem:[#allocation11 + $0x5a8] sm:$0xff]
    %v3227 = vld [vmem:[#allocation11 + $0x5b0] sm:$0xff]
    %v3228 = vld [vmem:[#allocation11 + $0x5b8] sm:$0xff]
    %v3229 = vld [vmem:[#allocation11 + $0x5c0] sm:$0xff]
    %v3230 = vld [vmem:[#allocation11 + $0x5c8] sm:$0xff]
    %v3231 = vld [vmem:[#allocation11 + $0x5d0] sm:$0xff]
    %v3232 = vld [vmem:[#allocation11 + $0x5d8] sm:$0xff]
    %v3233 = vld [vmem:[#allocation11 + $0x5e0] sm:$0xff]
    %v3234 = vld [vmem:[#allocation11 + $0x5e8] sm:$0xff]
    %v3235 = vld [vmem:[#allocation11 + $0x5f0] sm:$0xff]
    %v3236 = vld [vmem:[#allocation11 + $0x5f8] sm:$0xff]
    %v3237 = vld [vmem:[#allocation11 + $0x600] sm:$0xff]
    %v3238 = vld [vmem:[#allocation11 + $0x608] sm:$0xff]
    %v3239 = vld [vmem:[#allocation11 + $0x610] sm:$0xff]
    %v3240 = vld [vmem:[#allocation11 + $0x618] sm:$0xff]
    %v3241 = vld [vmem:[#allocation11 + $0x620] sm:$0xff]
    %v3242 = vld [vmem:[#allocation11 + $0x628] sm:$0xff]
    %v3243 = vld [vmem:[#allocation11 + $0x630] sm:$0xff]
    %v3244 = vld [vmem:[#allocation11 + $0x638] sm:$0xff]
    %v3245 = vld [vmem:[#allocation11 + $0x640] sm:$0xff]
    %v3246 = vld [vmem:[#allocation11 + $0x648] sm:$0xff]
    %v3247 = vld [vmem:[#allocation11 + $0x650] sm:$0xff]
    %v3248 = vld [vmem:[#allocation11 + $0x658] sm:$0xff]
    %v3249 = vld [vmem:[#allocation11 + $0x660] sm:$0xff]
    %v3250 = vld [vmem:[#allocation11 + $0x668] sm:$0xff]
    %v3251 = vld [vmem:[#allocation11 + $0x670] sm:$0xff]
    %v3252 = vld [vmem:[#allocation11 + $0x678] sm:$0xff]
    %v3253 = vld [vmem:[#allocation11 + $0x680] sm:$0xff]
    %v3254 = vld [vmem:[#allocation11 + $0x688] sm:$0xff]
    %v3255 = vld [vmem:[#allocation11 + $0x690] sm:$0xff]
    %v3256 = vld [vmem:[#allocation11 + $0x698] sm:$0xff]
    %v3257 = vld [vmem:[#allocation11 + $0x6a0] sm:$0xff]
    %v3258 = vld [vmem:[#allocation11 + $0x6a8] sm:$0xff]
    %v3259 = vld [vmem:[#allocation11 + $0x6b0] sm:$0xff]
    %v3260 = vld [vmem:[#allocation11 + $0x6b8] sm:$0xff]
    %v3261 = vld [vmem:[#allocation11 + $0x6c0] sm:$0xff]
    %v3262 = vld [vmem:[#allocation11 + $0x6c8] sm:$0xff]
    %v3263 = vld [vmem:[#allocation11 + $0x6d0] sm:$0xff]
    %v3264 = vld [vmem:[#allocation11 + $0x6d8] sm:$0xff]
    %v3265 = vld [vmem:[#allocation11 + $0x6e0] sm:$0xff]
    %v3266 = vld [vmem:[#allocation11 + $0x6e8] sm:$0xff]
    %v3267 = vld [vmem:[#allocation11 + $0x6f0] sm:$0xff]
    %v3268 = vld [vmem:[#allocation11 + $0x6f8] sm:$0xff]
    %v3269 = vld [vmem:[#allocation11 + $0x700] sm:$0xff]
    %v3270 = vld [vmem:[#allocation11 + $0x708] sm:$0xff]
    %v3271 = vld [vmem:[#allocation11 + $0x710] sm:$0xff]
    %v3272 = vld [vmem:[#allocation11 + $0x718] sm:$0xff]
    %v3273 = vld [vmem:[#allocation11 + $0x720] sm:$0xff]
    %v3274 = vld [vmem:[#allocation11 + $0x728] sm:$0xff]
    %v3275 = vld [vmem:[#allocation11 + $0x730] sm:$0xff]
    %v3276 = vld [vmem:[#allocation11 + $0x738] sm:$0xff]
    %v3277 = vld [vmem:[#allocation11 + $0x740] sm:$0xff]
    %v3278 = vld [vmem:[#allocation11 + $0x748] sm:$0xff]
    %v3279 = vld [vmem:[#allocation11 + $0x750] sm:$0xff]
    %v3280 = vld [vmem:[#allocation11 + $0x758] sm:$0xff]
    %v3281 = vld [vmem:[#allocation11 + $0x760] sm:$0xff]
    %v3282 = vld [vmem:[#allocation11 + $0x768] sm:$0xff]
    %v3283 = vld [vmem:[#allocation11 + $0x770] sm:$0xff]
    %v3284 = vld [vmem:[#allocation11 + $0x778] sm:$0xff]
    %v3285 = vld [vmem:[#allocation11 + $0x780] sm:$0xff]
    %v3286 = vld [vmem:[#allocation11 + $0x788] sm:$0xff]
    %v3287 = vld [vmem:[#allocation11 + $0x790] sm:$0xff]
    %v3288 = vld [vmem:[#allocation11 + $0x798] sm:$0xff]
    %v3289 = vld [vmem:[#allocation11 + $0x7a0] sm:$0xff]
    %v3290 = vld [vmem:[#allocation11 + $0x7a8] sm:$0xff]
    %v3291 = vld [vmem:[#allocation11 + $0x7b0] sm:$0xff]
    %v3292 = vld [vmem:[#allocation11 + $0x7b8] sm:$0xff]
    %v3293 = vld [vmem:[#allocation11 + $0x7c0] sm:$0xff]
    %v3294 = vld [vmem:[#allocation11 + $0x7c8] sm:$0xff]
    %v3295 = vld [vmem:[#allocation11 + $0x7d0] sm:$0xff]
    %v3296 = vld [vmem:[#allocation11 + $0x7d8] sm:$0xff]
    %v3297 = vld [vmem:[#allocation11 + $0x7e0] sm:$0xff]
    %v3298 = vld [vmem:[#allocation11 + $0x7e8] sm:$0xff]
    %v3299 = vld [vmem:[#allocation11 + $0x7f0] sm:$0xff]
    %v3300 = vld [vmem:[#allocation11 + $0x7f8] sm:$0xff]
    %v3301 = vld [vmem:[%s9] sm:$0xff]
    %v3303 = vlaneseq
    %v3304 = vshrl.u32 %v3303, 7
    %v3305 = vsub.s32 0, %v3304
    %v3306 = vrot.slane %v3301, %v3305
    %v3307 = vlaneseq
    %v3308 = vshrl.u32 %v3307, 7
    %v3309 = vsub.s32 1, %v3308
    %v3310 = vrot.slane %v3301, %v3309
    %v3311 = vlaneseq
    %v3312 = vshrl.u32 %v3311, 7
    %v3313 = vsub.s32 2, %v3312
    %v3314 = vrot.slane %v3301, %v3313
    %v3315 = vlaneseq
    %v3316 = vshrl.u32 %v3315, 7
    %v3317 = vsub.s32 3, %v3316
    %v3318 = vrot.slane %v3301, %v3317
    %v3319 = vlaneseq
    %v3320 = vshrl.u32 %v3319, 7
    %v3321 = vsub.s32 4, %v3320
    %v3322 = vrot.slane %v3301, %v3321
    %v3323 = vlaneseq
    %v3324 = vshrl.u32 %v3323, 7
    %v3325 = vsub.s32 5, %v3324
    %v3326 = vrot.slane %v3301, %v3325
    %v3327 = vlaneseq
    %v3328 = vshrl.u32 %v3327, 7
    %v3329 = vsub.s32 6, %v3328
    %v3330 = vrot.slane %v3301, %v3329
    %v3331 = vlaneseq
    %v3332 = vshrl.u32 %v3331, 7
    %v3333 = vsub.s32 7, %v3332
    %v3334 = vrot.slane %v3301, %v3333
    %v3599 = vunpack.c.l.b16 %v3045
    %v3600 = vunpack.c.h.b16 %v3045
    %v3601 = vunpack.c.l.b16 %v3046
    %v3602 = vunpack.c.h.b16 %v3046
    %v3603 = vunpack.c.l.b16 %v3047
    %v3604 = vunpack.c.h.b16 %v3047
    %v3605 = vunpack.c.l.b16 %v3048
    %v3606 = vunpack.c.h.b16 %v3048
    %v3607 = vunpack.c.l.b16 %v3049
    %v3608 = vunpack.c.h.b16 %v3049
    %v3609 = vunpack.c.l.b16 %v3050
    %v3610 = vunpack.c.h.b16 %v3050
    %v3611 = vunpack.c.l.b16 %v3051
    %v3612 = vunpack.c.h.b16 %v3051
    %v3613 = vunpack.c.l.b16 %v3052
    %v3614 = vunpack.c.h.b16 %v3052
    %v3615 = vunpack.c.l.b16 %v3053
    %v3616 = vunpack.c.h.b16 %v3053
    %v3617 = vunpack.c.l.b16 %v3054
    %v3618 = vunpack.c.h.b16 %v3054
    %v3619 = vunpack.c.l.b16 %v3055
    %v3620 = vunpack.c.h.b16 %v3055
    %v3621 = vunpack.c.l.b16 %v3056
    %v3622 = vunpack.c.h.b16 %v3056
    %v3623 = vunpack.c.l.b16 %v3057
    %v3624 = vunpack.c.h.b16 %v3057
    %v3625 = vunpack.c.l.b16 %v3058
    %v3626 = vunpack.c.h.b16 %v3058
    %v3627 = vunpack.c.l.b16 %v3059
    %v3628 = vunpack.c.h.b16 %v3059
    %v3629 = vunpack.c.l.b16 %v3060
    %v3630 = vunpack.c.h.b16 %v3060
    %v3631 = vunpack.c.l.b16 %v3061
    %v3632 = vunpack.c.h.b16 %v3061
    %v3633 = vunpack.c.l.b16 %v3062
    %v3634 = vunpack.c.h.b16 %v3062
    %v3635 = vunpack.c.l.b16 %v3063
    %v3636 = vunpack.c.h.b16 %v3063
    %v3637 = vunpack.c.l.b16 %v3064
    %v3638 = vunpack.c.h.b16 %v3064
    %v3639 = vunpack.c.l.b16 %v3065
    %v3640 = vunpack.c.h.b16 %v3065
    %v3641 = vunpack.c.l.b16 %v3066
    %v3642 = vunpack.c.h.b16 %v3066
    %v3643 = vunpack.c.l.b16 %v3067
    %v3644 = vunpack.c.h.b16 %v3067
    %v3645 = vunpack.c.l.b16 %v3068
    %v3646 = vunpack.c.h.b16 %v3068
    %v3647 = vunpack.c.l.b16 %v3069
    %v3648 = vunpack.c.h.b16 %v3069
    %v3649 = vunpack.c.l.b16 %v3070
    %v3650 = vunpack.c.h.b16 %v3070
    %v3651 = vunpack.c.l.b16 %v3071
    %v3652 = vunpack.c.h.b16 %v3071
    %v3653 = vunpack.c.l.b16 %v3072
    %v3654 = vunpack.c.h.b16 %v3072
    %v3655 = vunpack.c.l.b16 %v3073
    %v3656 = vunpack.c.h.b16 %v3073
    %v3657 = vunpack.c.l.b16 %v3074
    %v3658 = vunpack.c.h.b16 %v3074
    %v3659 = vunpack.c.l.b16 %v3075
    %v3660 = vunpack.c.h.b16 %v3075
    %v3661 = vunpack.c.l.b16 %v3076
    %v3662 = vunpack.c.h.b16 %v3076
    %v3663 = vunpack.c.l.b16 %v3077
    %v3664 = vunpack.c.h.b16 %v3077
    %v3665 = vunpack.c.l.b16 %v3078
    %v3666 = vunpack.c.h.b16 %v3078
    %v3667 = vunpack.c.l.b16 %v3079
    %v3668 = vunpack.c.h.b16 %v3079
    %v3669 = vunpack.c.l.b16 %v3080
    %v3670 = vunpack.c.h.b16 %v3080
    %v3671 = vunpack.c.l.b16 %v3081
    %v3672 = vunpack.c.h.b16 %v3081
    %v3673 = vunpack.c.l.b16 %v3082
    %v3674 = vunpack.c.h.b16 %v3082
    %v3675 = vunpack.c.l.b16 %v3083
    %v3676 = vunpack.c.h.b16 %v3083
    %v3677 = vunpack.c.l.b16 %v3084
    %v3678 = vunpack.c.h.b16 %v3084
    %v3679 = vunpack.c.l.b16 %v3085
    %v3680 = vunpack.c.h.b16 %v3085
    %v3681 = vunpack.c.l.b16 %v3086
    %v3682 = vunpack.c.h.b16 %v3086
    %v3683 = vunpack.c.l.b16 %v3087
    %v3684 = vunpack.c.h.b16 %v3087
    %v3685 = vunpack.c.l.b16 %v3088
    %v3686 = vunpack.c.h.b16 %v3088
    %v3687 = vunpack.c.l.b16 %v3089
    %v3688 = vunpack.c.h.b16 %v3089
    %v3689 = vunpack.c.l.b16 %v3090
    %v3690 = vunpack.c.h.b16 %v3090
    %v3691 = vunpack.c.l.b16 %v3091
    %v3692 = vunpack.c.h.b16 %v3091
    %v3693 = vunpack.c.l.b16 %v3092
    %v3694 = vunpack.c.h.b16 %v3092
    %v3695 = vunpack.c.l.b16 %v3093
    %v3696 = vunpack.c.h.b16 %v3093
    %v3697 = vunpack.c.l.b16 %v3094
    %v3698 = vunpack.c.h.b16 %v3094
    %v3699 = vunpack.c.l.b16 %v3095
    %v3700 = vunpack.c.h.b16 %v3095
    %v3701 = vunpack.c.l.b16 %v3096
    %v3702 = vunpack.c.h.b16 %v3096
    %v3703 = vunpack.c.l.b16 %v3097
    %v3704 = vunpack.c.h.b16 %v3097
    %v3705 = vunpack.c.l.b16 %v3098
    %v3706 = vunpack.c.h.b16 %v3098
    %v3707 = vunpack.c.l.b16 %v3099
    %v3708 = vunpack.c.h.b16 %v3099
    %v3709 = vunpack.c.l.b16 %v3100
    %v3710 = vunpack.c.h.b16 %v3100
    %v3711 = vunpack.c.l.b16 %v3101
    %v3712 = vunpack.c.h.b16 %v3101
    %v3713 = vunpack.c.l.b16 %v3102
    %v3714 = vunpack.c.h.b16 %v3102
    %v3715 = vunpack.c.l.b16 %v3103
    %v3716 = vunpack.c.h.b16 %v3103
    %v3717 = vunpack.c.l.b16 %v3104
    %v3718 = vunpack.c.h.b16 %v3104
    %v3719 = vunpack.c.l.b16 %v3105
    %v3720 = vunpack.c.h.b16 %v3105
    %v3721 = vunpack.c.l.b16 %v3106
    %v3722 = vunpack.c.h.b16 %v3106
    %v3723 = vunpack.c.l.b16 %v3107
    %v3724 = vunpack.c.h.b16 %v3107
    %v3725 = vunpack.c.l.b16 %v3108
    %v3726 = vunpack.c.h.b16 %v3108
    %v3727 = vunpack.c.l.b16 %v3109
    %v3728 = vunpack.c.h.b16 %v3109
    %v3729 = vunpack.c.l.b16 %v3110
    %v3730 = vunpack.c.h.b16 %v3110
    %v3731 = vunpack.c.l.b16 %v3111
    %v3732 = vunpack.c.h.b16 %v3111
    %v3733 = vunpack.c.l.b16 %v3112
    %v3734 = vunpack.c.h.b16 %v3112
    %v3735 = vunpack.c.l.b16 %v3113
    %v3736 = vunpack.c.h.b16 %v3113
    %v3737 = vunpack.c.l.b16 %v3114
    %v3738 = vunpack.c.h.b16 %v3114
    %v3739 = vunpack.c.l.b16 %v3115
    %v3740 = vunpack.c.h.b16 %v3115
    %v3741 = vunpack.c.l.b16 %v3116
    %v3742 = vunpack.c.h.b16 %v3116
    %v3743 = vunpack.c.l.b16 %v3117
    %v3744 = vunpack.c.h.b16 %v3117
    %v3745 = vunpack.c.l.b16 %v3118
    %v3746 = vunpack.c.h.b16 %v3118
    %v3747 = vunpack.c.l.b16 %v3119
    %v3748 = vunpack.c.h.b16 %v3119
    %v3749 = vunpack.c.l.b16 %v3120
    %v3750 = vunpack.c.h.b16 %v3120
    %v3751 = vunpack.c.l.b16 %v3121
    %v3752 = vunpack.c.h.b16 %v3121
    %v3753 = vunpack.c.l.b16 %v3122
    %v3754 = vunpack.c.h.b16 %v3122
    %v3755 = vunpack.c.l.b16 %v3123
    %v3756 = vunpack.c.h.b16 %v3123
    %v3757 = vunpack.c.l.b16 %v3124
    %v3758 = vunpack.c.h.b16 %v3124
    %v3759 = vunpack.c.l.b16 %v3125
    %v3760 = vunpack.c.h.b16 %v3125
    %v3761 = vunpack.c.l.b16 %v3126
    %v3762 = vunpack.c.h.b16 %v3126
    %v3763 = vunpack.c.l.b16 %v3127
    %v3764 = vunpack.c.h.b16 %v3127
    %v3765 = vunpack.c.l.b16 %v3128
    %v3766 = vunpack.c.h.b16 %v3128
    %v3767 = vunpack.c.l.b16 %v3129
    %v3768 = vunpack.c.h.b16 %v3129
    %v3769 = vunpack.c.l.b16 %v3130
    %v3770 = vunpack.c.h.b16 %v3130
    %v3771 = vunpack.c.l.b16 %v3131
    %v3772 = vunpack.c.h.b16 %v3131
    %v3773 = vunpack.c.l.b16 %v3132
    %v3774 = vunpack.c.h.b16 %v3132
    %v3775 = vunpack.c.l.b16 %v3133
    %v3776 = vunpack.c.h.b16 %v3133
    %v3777 = vunpack.c.l.b16 %v3134
    %v3778 = vunpack.c.h.b16 %v3134
    %v3779 = vunpack.c.l.b16 %v3135
    %v3780 = vunpack.c.h.b16 %v3135
    %v3781 = vunpack.c.l.b16 %v3136
    %v3782 = vunpack.c.h.b16 %v3136
    %v3783 = vunpack.c.l.b16 %v3137
    %v3784 = vunpack.c.h.b16 %v3137
    %v3785 = vunpack.c.l.b16 %v3138
    %v3786 = vunpack.c.h.b16 %v3138
    %v3787 = vunpack.c.l.b16 %v3139
    %v3788 = vunpack.c.h.b16 %v3139
    %v3789 = vunpack.c.l.b16 %v3140
    %v3790 = vunpack.c.h.b16 %v3140
    %v3791 = vunpack.c.l.b16 %v3141
    %v3792 = vunpack.c.h.b16 %v3141
    %v3793 = vunpack.c.l.b16 %v3142
    %v3794 = vunpack.c.h.b16 %v3142
    %v3795 = vunpack.c.l.b16 %v3143
    %v3796 = vunpack.c.h.b16 %v3143
    %v3797 = vunpack.c.l.b16 %v3144
    %v3798 = vunpack.c.h.b16 %v3144
    %v3799 = vunpack.c.l.b16 %v3145
    %v3800 = vunpack.c.h.b16 %v3145
    %v3801 = vunpack.c.l.b16 %v3146
    %v3802 = vunpack.c.h.b16 %v3146
    %v3803 = vunpack.c.l.b16 %v3147
    %v3804 = vunpack.c.h.b16 %v3147
    %v3805 = vunpack.c.l.b16 %v3148
    %v3806 = vunpack.c.h.b16 %v3148
    %v3807 = vunpack.c.l.b16 %v3149
    %v3808 = vunpack.c.h.b16 %v3149
    %v3809 = vunpack.c.l.b16 %v3150
    %v3810 = vunpack.c.h.b16 %v3150
    %v3811 = vunpack.c.l.b16 %v3151
    %v3812 = vunpack.c.h.b16 %v3151
    %v3813 = vunpack.c.l.b16 %v3152
    %v3814 = vunpack.c.h.b16 %v3152
    %v3815 = vunpack.c.l.b16 %v3153
    %v3816 = vunpack.c.h.b16 %v3153
    %v3817 = vunpack.c.l.b16 %v3154
    %v3818 = vunpack.c.h.b16 %v3154
    %v3819 = vunpack.c.l.b16 %v3155
    %v3820 = vunpack.c.h.b16 %v3155
    %v3821 = vunpack.c.l.b16 %v3156
    %v3822 = vunpack.c.h.b16 %v3156
    %v3823 = vunpack.c.l.b16 %v3157
    %v3824 = vunpack.c.h.b16 %v3157
    %v3825 = vunpack.c.l.b16 %v3158
    %v3826 = vunpack.c.h.b16 %v3158
    %v3827 = vunpack.c.l.b16 %v3159
    %v3828 = vunpack.c.h.b16 %v3159
    %v3829 = vunpack.c.l.b16 %v3160
    %v3830 = vunpack.c.h.b16 %v3160
    %v3831 = vunpack.c.l.b16 %v3161
    %v3832 = vunpack.c.h.b16 %v3161
    %v3833 = vunpack.c.l.b16 %v3162
    %v3834 = vunpack.c.h.b16 %v3162
    %v3835 = vunpack.c.l.b16 %v3163
    %v3836 = vunpack.c.h.b16 %v3163
    %v3837 = vunpack.c.l.b16 %v3164
    %v3838 = vunpack.c.h.b16 %v3164
    %v3839 = vunpack.c.l.b16 %v3165
    %v3840 = vunpack.c.h.b16 %v3165
    %v3841 = vunpack.c.l.b16 %v3166
    %v3842 = vunpack.c.h.b16 %v3166
    %v3843 = vunpack.c.l.b16 %v3167
    %v3844 = vunpack.c.h.b16 %v3167
    %v3845 = vunpack.c.l.b16 %v3168
    %v3846 = vunpack.c.h.b16 %v3168
    %v3847 = vunpack.c.l.b16 %v3169
    %v3848 = vunpack.c.h.b16 %v3169
    %v3849 = vunpack.c.l.b16 %v3170
    %v3850 = vunpack.c.h.b16 %v3170
    %v3851 = vunpack.c.l.b16 %v3171
    %v3852 = vunpack.c.h.b16 %v3171
    %v3853 = vunpack.c.l.b16 %v3172
    %v3854 = vunpack.c.h.b16 %v3172
    %v3855 = vunpack.c.l.b16 %v3173
    %v3856 = vunpack.c.h.b16 %v3173
    %v3857 = vunpack.c.l.b16 %v3174
    %v3858 = vunpack.c.h.b16 %v3174
    %v3859 = vunpack.c.l.b16 %v3175
    %v3860 = vunpack.c.h.b16 %v3175
    %v3861 = vunpack.c.l.b16 %v3176
    %v3862 = vunpack.c.h.b16 %v3176
    %v3863 = vunpack.c.l.b16 %v3177
    %v3864 = vunpack.c.h.b16 %v3177
    %v3865 = vunpack.c.l.b16 %v3178
    %v3866 = vunpack.c.h.b16 %v3178
    %v3867 = vunpack.c.l.b16 %v3179
    %v3868 = vunpack.c.h.b16 %v3179
    %v3869 = vunpack.c.l.b16 %v3180
    %v3870 = vunpack.c.h.b16 %v3180
    %v3871 = vunpack.c.l.b16 %v3181
    %v3872 = vunpack.c.h.b16 %v3181
    %v3873 = vunpack.c.l.b16 %v3182
    %v3874 = vunpack.c.h.b16 %v3182
    %v3875 = vunpack.c.l.b16 %v3183
    %v3876 = vunpack.c.h.b16 %v3183
    %v3877 = vunpack.c.l.b16 %v3184
    %v3878 = vunpack.c.h.b16 %v3184
    %v3879 = vunpack.c.l.b16 %v3185
    %v3880 = vunpack.c.h.b16 %v3185
    %v3881 = vunpack.c.l.b16 %v3186
    %v3882 = vunpack.c.h.b16 %v3186
    %v3883 = vunpack.c.l.b16 %v3187
    %v3884 = vunpack.c.h.b16 %v3187
    %v3885 = vunpack.c.l.b16 %v3188
    %v3886 = vunpack.c.h.b16 %v3188
    %v3887 = vunpack.c.l.b16 %v3189
    %v3888 = vunpack.c.h.b16 %v3189
    %v3889 = vunpack.c.l.b16 %v3190
    %v3890 = vunpack.c.h.b16 %v3190
    %v3891 = vunpack.c.l.b16 %v3191
    %v3892 = vunpack.c.h.b16 %v3191
    %v3893 = vunpack.c.l.b16 %v3192
    %v3894 = vunpack.c.h.b16 %v3192
    %v3895 = vunpack.c.l.b16 %v3193
    %v3896 = vunpack.c.h.b16 %v3193
    %v3897 = vunpack.c.l.b16 %v3194
    %v3898 = vunpack.c.h.b16 %v3194
    %v3899 = vunpack.c.l.b16 %v3195
    %v3900 = vunpack.c.h.b16 %v3195
    %v3901 = vunpack.c.l.b16 %v3196
    %v3902 = vunpack.c.h.b16 %v3196
    %v3903 = vunpack.c.l.b16 %v3197
    %v3904 = vunpack.c.h.b16 %v3197
    %v3905 = vunpack.c.l.b16 %v3198
    %v3906 = vunpack.c.h.b16 %v3198
    %v3907 = vunpack.c.l.b16 %v3199
    %v3908 = vunpack.c.h.b16 %v3199
    %v3909 = vunpack.c.l.b16 %v3200
    %v3910 = vunpack.c.h.b16 %v3200
    %v3911 = vunpack.c.l.b16 %v3201
    %v3912 = vunpack.c.h.b16 %v3201
    %v3913 = vunpack.c.l.b16 %v3202
    %v3914 = vunpack.c.h.b16 %v3202
    %v3915 = vunpack.c.l.b16 %v3203
    %v3916 = vunpack.c.h.b16 %v3203
    %v3917 = vunpack.c.l.b16 %v3204
    %v3918 = vunpack.c.h.b16 %v3204
    %v3919 = vunpack.c.l.b16 %v3205
    %v3920 = vunpack.c.h.b16 %v3205
    %v3921 = vunpack.c.l.b16 %v3206
    %v3922 = vunpack.c.h.b16 %v3206
    %v3923 = vunpack.c.l.b16 %v3207
    %v3924 = vunpack.c.h.b16 %v3207
    %v3925 = vunpack.c.l.b16 %v3208
    %v3926 = vunpack.c.h.b16 %v3208
    %v3927 = vunpack.c.l.b16 %v3209
    %v3928 = vunpack.c.h.b16 %v3209
    %v3929 = vunpack.c.l.b16 %v3210
    %v3930 = vunpack.c.h.b16 %v3210
    %v3931 = vunpack.c.l.b16 %v3211
    %v3932 = vunpack.c.h.b16 %v3211
    %v3933 = vunpack.c.l.b16 %v3212
    %v3934 = vunpack.c.h.b16 %v3212
    %v3935 = vunpack.c.l.b16 %v3213
    %v3936 = vunpack.c.h.b16 %v3213
    %v3937 = vunpack.c.l.b16 %v3214
    %v3938 = vunpack.c.h.b16 %v3214
    %v3939 = vunpack.c.l.b16 %v3215
    %v3940 = vunpack.c.h.b16 %v3215
    %v3941 = vunpack.c.l.b16 %v3216
    %v3942 = vunpack.c.h.b16 %v3216
    %v3943 = vunpack.c.l.b16 %v3217
    %v3944 = vunpack.c.h.b16 %v3217
    %v3945 = vunpack.c.l.b16 %v3218
    %v3946 = vunpack.c.h.b16 %v3218
    %v3947 = vunpack.c.l.b16 %v3219
    %v3948 = vunpack.c.h.b16 %v3219
    %v3949 = vunpack.c.l.b16 %v3220
    %v3950 = vunpack.c.h.b16 %v3220
    %v3951 = vunpack.c.l.b16 %v3221
    %v3952 = vunpack.c.h.b16 %v3221
    %v3953 = vunpack.c.l.b16 %v3222
    %v3954 = vunpack.c.h.b16 %v3222
    %v3955 = vunpack.c.l.b16 %v3223
    %v3956 = vunpack.c.h.b16 %v3223
    %v3957 = vunpack.c.l.b16 %v3224
    %v3958 = vunpack.c.h.b16 %v3224
    %v3959 = vunpack.c.l.b16 %v3225
    %v3960 = vunpack.c.h.b16 %v3225
    %v3961 = vunpack.c.l.b16 %v3226
    %v3962 = vunpack.c.h.b16 %v3226
    %v3963 = vunpack.c.l.b16 %v3227
    %v3964 = vunpack.c.h.b16 %v3227
    %v3965 = vunpack.c.l.b16 %v3228
    %v3966 = vunpack.c.h.b16 %v3228
    %v3967 = vunpack.c.l.b16 %v3229
    %v3968 = vunpack.c.h.b16 %v3229
    %v3969 = vunpack.c.l.b16 %v3230
    %v3970 = vunpack.c.h.b16 %v3230
    %v3971 = vunpack.c.l.b16 %v3231
    %v3972 = vunpack.c.h.b16 %v3231
    %v3973 = vunpack.c.l.b16 %v3232
    %v3974 = vunpack.c.h.b16 %v3232
    %v3975 = vunpack.c.l.b16 %v3233
    %v3976 = vunpack.c.h.b16 %v3233
    %v3977 = vunpack.c.l.b16 %v3234
    %v3978 = vunpack.c.h.b16 %v3234
    %v3979 = vunpack.c.l.b16 %v3235
    %v3980 = vunpack.c.h.b16 %v3235
    %v3981 = vunpack.c.l.b16 %v3236
    %v3982 = vunpack.c.h.b16 %v3236
    %v3983 = vunpack.c.l.b16 %v3237
    %v3984 = vunpack.c.h.b16 %v3237
    %v3985 = vunpack.c.l.b16 %v3238
    %v3986 = vunpack.c.h.b16 %v3238
    %v3987 = vunpack.c.l.b16 %v3239
    %v3988 = vunpack.c.h.b16 %v3239
    %v3989 = vunpack.c.l.b16 %v3240
    %v3990 = vunpack.c.h.b16 %v3240
    %v3991 = vunpack.c.l.b16 %v3241
    %v3992 = vunpack.c.h.b16 %v3241
    %v3993 = vunpack.c.l.b16 %v3242
    %v3994 = vunpack.c.h.b16 %v3242
    %v3995 = vunpack.c.l.b16 %v3243
    %v3996 = vunpack.c.h.b16 %v3243
    %v3997 = vunpack.c.l.b16 %v3244
    %v3998 = vunpack.c.h.b16 %v3244
    %v3999 = vunpack.c.l.b16 %v3245
    %v4000 = vunpack.c.h.b16 %v3245
    %v4001 = vunpack.c.l.b16 %v3246
    %v4002 = vunpack.c.h.b16 %v3246
    %v4003 = vunpack.c.l.b16 %v3247
    %v4004 = vunpack.c.h.b16 %v3247
    %v4005 = vunpack.c.l.b16 %v3248
    %v4006 = vunpack.c.h.b16 %v3248
    %v4007 = vunpack.c.l.b16 %v3249
    %v4008 = vunpack.c.h.b16 %v3249
    %v4009 = vunpack.c.l.b16 %v3250
    %v4010 = vunpack.c.h.b16 %v3250
    %v4011 = vunpack.c.l.b16 %v3251
    %v4012 = vunpack.c.h.b16 %v3251
    %v4013 = vunpack.c.l.b16 %v3252
    %v4014 = vunpack.c.h.b16 %v3252
    %v4015 = vunpack.c.l.b16 %v3253
    %v4016 = vunpack.c.h.b16 %v3253
    %v4017 = vunpack.c.l.b16 %v3254
    %v4018 = vunpack.c.h.b16 %v3254
    %v4019 = vunpack.c.l.b16 %v3255
    %v4020 = vunpack.c.h.b16 %v3255
    %v4021 = vunpack.c.l.b16 %v3256
    %v4022 = vunpack.c.h.b16 %v3256
    %v4023 = vunpack.c.l.b16 %v3257
    %v4024 = vunpack.c.h.b16 %v3257
    %v4025 = vunpack.c.l.b16 %v3258
    %v4026 = vunpack.c.h.b16 %v3258
    %v4027 = vunpack.c.l.b16 %v3259
    %v4028 = vunpack.c.h.b16 %v3259
    %v4029 = vunpack.c.l.b16 %v3260
    %v4030 = vunpack.c.h.b16 %v3260
    %v4031 = vunpack.c.l.b16 %v3261
    %v4032 = vunpack.c.h.b16 %v3261
    %v4033 = vunpack.c.l.b16 %v3262
    %v4034 = vunpack.c.h.b16 %v3262
    %v4035 = vunpack.c.l.b16 %v3263
    %v4036 = vunpack.c.h.b16 %v3263
    %v4037 = vunpack.c.l.b16 %v3264
    %v4038 = vunpack.c.h.b16 %v3264
    %v4039 = vunpack.c.l.b16 %v3265
    %v4040 = vunpack.c.h.b16 %v3265
    %v4041 = vunpack.c.l.b16 %v3266
    %v4042 = vunpack.c.h.b16 %v3266
    %v4043 = vunpack.c.l.b16 %v3267
    %v4044 = vunpack.c.h.b16 %v3267
    %v4045 = vunpack.c.l.b16 %v3268
    %v4046 = vunpack.c.h.b16 %v3268
    %v4047 = vunpack.c.l.b16 %v3269
    %v4048 = vunpack.c.h.b16 %v3269
    %v4049 = vunpack.c.l.b16 %v3270
    %v4050 = vunpack.c.h.b16 %v3270
    %v4051 = vunpack.c.l.b16 %v3271
    %v4052 = vunpack.c.h.b16 %v3271
    %v4053 = vunpack.c.l.b16 %v3272
    %v4054 = vunpack.c.h.b16 %v3272
    %v4055 = vunpack.c.l.b16 %v3273
    %v4056 = vunpack.c.h.b16 %v3273
    %v4057 = vunpack.c.l.b16 %v3274
    %v4058 = vunpack.c.h.b16 %v3274
    %v4059 = vunpack.c.l.b16 %v3275
    %v4060 = vunpack.c.h.b16 %v3275
    %v4061 = vunpack.c.l.b16 %v3276
    %v4062 = vunpack.c.h.b16 %v3276
    %v4063 = vunpack.c.l.b16 %v3277
    %v4064 = vunpack.c.h.b16 %v3277
    %v4065 = vunpack.c.l.b16 %v3278
    %v4066 = vunpack.c.h.b16 %v3278
    %v4067 = vunpack.c.l.b16 %v3279
    %v4068 = vunpack.c.h.b16 %v3279
    %v4069 = vunpack.c.l.b16 %v3280
    %v4070 = vunpack.c.h.b16 %v3280
    %v4071 = vunpack.c.l.b16 %v3281
    %v4072 = vunpack.c.h.b16 %v3281
    %v4073 = vunpack.c.l.b16 %v3282
    %v4074 = vunpack.c.h.b16 %v3282
    %v4075 = vunpack.c.l.b16 %v3283
    %v4076 = vunpack.c.h.b16 %v3283
    %v4077 = vunpack.c.l.b16 %v3284
    %v4078 = vunpack.c.h.b16 %v3284
    %v4079 = vunpack.c.l.b16 %v3285
    %v4080 = vunpack.c.h.b16 %v3285
    %v4081 = vunpack.c.l.b16 %v3286
    %v4082 = vunpack.c.h.b16 %v3286
    %v4083 = vunpack.c.l.b16 %v3287
    %v4084 = vunpack.c.h.b16 %v3287
    %v4085 = vunpack.c.l.b16 %v3288
    %v4086 = vunpack.c.h.b16 %v3288
    %v4087 = vunpack.c.l.b16 %v3289
    %v4088 = vunpack.c.h.b16 %v3289
    %v4089 = vunpack.c.l.b16 %v3290
    %v4090 = vunpack.c.h.b16 %v3290
    %v4091 = vunpack.c.l.b16 %v3291
    %v4092 = vunpack.c.h.b16 %v3291
    %v4093 = vunpack.c.l.b16 %v3292
    %v4094 = vunpack.c.h.b16 %v3292
    %v4095 = vunpack.c.l.b16 %v3293
    %v4096 = vunpack.c.h.b16 %v3293
    %v4097 = vunpack.c.l.b16 %v3294
    %v4098 = vunpack.c.h.b16 %v3294
    %v4099 = vunpack.c.l.b16 %v3295
    %v4100 = vunpack.c.h.b16 %v3295
    %v4101 = vunpack.c.l.b16 %v3296
    %v4102 = vunpack.c.h.b16 %v3296
    %v4103 = vunpack.c.l.b16 %v3297
    %v4104 = vunpack.c.h.b16 %v3297
    %v4105 = vunpack.c.l.b16 %v3298
    %v4106 = vunpack.c.h.b16 %v3298
    %v4107 = vunpack.c.l.b16 %v3299
    %v4108 = vunpack.c.h.b16 %v3299
    %v4109 = vunpack.c.l.b16 %v3300
    %v4110 = vunpack.c.h.b16 %v3300
    %v4111 = vpack.c.b16 %v3607, %v3599
    %v4112 = vpack.c.b16 %v3608, %v3600
    %v4113 = vpack.c.b16 %v3609, %v3601
    %v4114 = vpack.c.b16 %v3610, %v3602
    %v4115 = vpack.c.b16 %v3611, %v3603
    %v4116 = vpack.c.b16 %v3612, %v3604
    %v4117 = vpack.c.b16 %v3613, %v3605
    %v4118 = vpack.c.b16 %v3614, %v3606
    %v4119 = vpack.c.b16 %v3623, %v3615
    %v4120 = vpack.c.b16 %v3624, %v3616
    %v4121 = vpack.c.b16 %v3625, %v3617
    %v4122 = vpack.c.b16 %v3626, %v3618
    %v4123 = vpack.c.b16 %v3627, %v3619
    %v4124 = vpack.c.b16 %v3628, %v3620
    %v4125 = vpack.c.b16 %v3629, %v3621
    %v4126 = vpack.c.b16 %v3630, %v3622
    %v4127 = vpack.c.b16 %v3639, %v3631
    %v4128 = vpack.c.b16 %v3640, %v3632
    %v4129 = vpack.c.b16 %v3641, %v3633
    %v4130 = vpack.c.b16 %v3642, %v3634
    %v4131 = vpack.c.b16 %v3643, %v3635
    %v4132 = vpack.c.b16 %v3644, %v3636
    %v4133 = vpack.c.b16 %v3645, %v3637
    %v4134 = vpack.c.b16 %v3646, %v3638
    %v4135 = vpack.c.b16 %v3655, %v3647
    %v4136 = vpack.c.b16 %v3656, %v3648
    %v4137 = vpack.c.b16 %v3657, %v3649
    %v4138 = vpack.c.b16 %v3658, %v3650
    %v4139 = vpack.c.b16 %v3659, %v3651
    %v4140 = vpack.c.b16 %v3660, %v3652
    %v4141 = vpack.c.b16 %v3661, %v3653
    %v4142 = vpack.c.b16 %v3662, %v3654
    %v4143 = vpack.c.b16 %v3671, %v3663
    %v4144 = vpack.c.b16 %v3672, %v3664
    %v4145 = vpack.c.b16 %v3673, %v3665
    %v4146 = vpack.c.b16 %v3674, %v3666
    %v4147 = vpack.c.b16 %v3675, %v3667
    %v4148 = vpack.c.b16 %v3676, %v3668
    %v4149 = vpack.c.b16 %v3677, %v3669
    %v4150 = vpack.c.b16 %v3678, %v3670
    %v4151 = vpack.c.b16 %v3687, %v3679
    %v4152 = vpack.c.b16 %v3688, %v3680
    %v4153 = vpack.c.b16 %v3689, %v3681
    %v4154 = vpack.c.b16 %v3690, %v3682
    %v4155 = vpack.c.b16 %v3691, %v3683
    %v4156 = vpack.c.b16 %v3692, %v3684
    %v4157 = vpack.c.b16 %v3693, %v3685
    %v4158 = vpack.c.b16 %v3694, %v3686
    %v4159 = vpack.c.b16 %v3703, %v3695
    %v4160 = vpack.c.b16 %v3704, %v3696
    %v4161 = vpack.c.b16 %v3705, %v3697
    %v4162 = vpack.c.b16 %v3706, %v3698
    %v4163 = vpack.c.b16 %v3707, %v3699
    %v4164 = vpack.c.b16 %v3708, %v3700
    %v4165 = vpack.c.b16 %v3709, %v3701
    %v4166 = vpack.c.b16 %v3710, %v3702
    %v4167 = vpack.c.b16 %v3719, %v3711
    %v4168 = vpack.c.b16 %v3720, %v3712
    %v4169 = vpack.c.b16 %v3721, %v3713
    %v4170 = vpack.c.b16 %v3722, %v3714
    %v4171 = vpack.c.b16 %v3723, %v3715
    %v4172 = vpack.c.b16 %v3724, %v3716
    %v4173 = vpack.c.b16 %v3725, %v3717
    %v4174 = vpack.c.b16 %v3726, %v3718
    %v4175 = vpack.c.b16 %v3735, %v3727
    %v4176 = vpack.c.b16 %v3736, %v3728
    %v4177 = vpack.c.b16 %v3737, %v3729
    %v4178 = vpack.c.b16 %v3738, %v3730
    %v4179 = vpack.c.b16 %v3739, %v3731
    %v4180 = vpack.c.b16 %v3740, %v3732
    %v4181 = vpack.c.b16 %v3741, %v3733
    %v4182 = vpack.c.b16 %v3742, %v3734
    %v4183 = vpack.c.b16 %v3751, %v3743
    %v4184 = vpack.c.b16 %v3752, %v3744
    %v4185 = vpack.c.b16 %v3753, %v3745
    %v4186 = vpack.c.b16 %v3754, %v3746
    %v4187 = vpack.c.b16 %v3755, %v3747
    %v4188 = vpack.c.b16 %v3756, %v3748
    %v4189 = vpack.c.b16 %v3757, %v3749
    %v4190 = vpack.c.b16 %v3758, %v3750
    %v4191 = vpack.c.b16 %v3767, %v3759
    %v4192 = vpack.c.b16 %v3768, %v3760
    %v4193 = vpack.c.b16 %v3769, %v3761
    %v4194 = vpack.c.b16 %v3770, %v3762
    %v4195 = vpack.c.b16 %v3771, %v3763
    %v4196 = vpack.c.b16 %v3772, %v3764
    %v4197 = vpack.c.b16 %v3773, %v3765
    %v4198 = vpack.c.b16 %v3774, %v3766
    %v4199 = vpack.c.b16 %v3783, %v3775
    %v4200 = vpack.c.b16 %v3784, %v3776
    %v4201 = vpack.c.b16 %v3785, %v3777
    %v4202 = vpack.c.b16 %v3786, %v3778
    %v4203 = vpack.c.b16 %v3787, %v3779
    %v4204 = vpack.c.b16 %v3788, %v3780
    %v4205 = vpack.c.b16 %v3789, %v3781
    %v4206 = vpack.c.b16 %v3790, %v3782
    %v4207 = vpack.c.b16 %v3799, %v3791
    %v4208 = vpack.c.b16 %v3800, %v3792
    %v4209 = vpack.c.b16 %v3801, %v3793
    %v4210 = vpack.c.b16 %v3802, %v3794
    %v4211 = vpack.c.b16 %v3803, %v3795
    %v4212 = vpack.c.b16 %v3804, %v3796
    %v4213 = vpack.c.b16 %v3805, %v3797
    %v4214 = vpack.c.b16 %v3806, %v3798
    %v4215 = vpack.c.b16 %v3815, %v3807
    %v4216 = vpack.c.b16 %v3816, %v3808
    %v4217 = vpack.c.b16 %v3817, %v3809
    %v4218 = vpack.c.b16 %v3818, %v3810
    %v4219 = vpack.c.b16 %v3819, %v3811
    %v4220 = vpack.c.b16 %v3820, %v3812
    %v4221 = vpack.c.b16 %v3821, %v3813
    %v4222 = vpack.c.b16 %v3822, %v3814
    %v4223 = vpack.c.b16 %v3831, %v3823
    %v4224 = vpack.c.b16 %v3832, %v3824
    %v4225 = vpack.c.b16 %v3833, %v3825
    %v4226 = vpack.c.b16 %v3834, %v3826
    %v4227 = vpack.c.b16 %v3835, %v3827
    %v4228 = vpack.c.b16 %v3836, %v3828
    %v4229 = vpack.c.b16 %v3837, %v3829
    %v4230 = vpack.c.b16 %v3838, %v3830
    %v4231 = vpack.c.b16 %v3847, %v3839
    %v4232 = vpack.c.b16 %v3848, %v3840
    %v4233 = vpack.c.b16 %v3849, %v3841
    %v4234 = vpack.c.b16 %v3850, %v3842
    %v4235 = vpack.c.b16 %v3851, %v3843
    %v4236 = vpack.c.b16 %v3852, %v3844
    %v4237 = vpack.c.b16 %v3853, %v3845
    %v4238 = vpack.c.b16 %v3854, %v3846
    %v4239 = vpack.c.b16 %v3863, %v3855
    %v4240 = vpack.c.b16 %v3864, %v3856
    %v4241 = vpack.c.b16 %v3865, %v3857
    %v4242 = vpack.c.b16 %v3866, %v3858
    %v4243 = vpack.c.b16 %v3867, %v3859
    %v4244 = vpack.c.b16 %v3868, %v3860
    %v4245 = vpack.c.b16 %v3869, %v3861
    %v4246 = vpack.c.b16 %v3870, %v3862
    %v4247 = vpack.c.b16 %v3879, %v3871
    %v4248 = vpack.c.b16 %v3880, %v3872
    %v4249 = vpack.c.b16 %v3881, %v3873
    %v4250 = vpack.c.b16 %v3882, %v3874
    %v4251 = vpack.c.b16 %v3883, %v3875
    %v4252 = vpack.c.b16 %v3884, %v3876
    %v4253 = vpack.c.b16 %v3885, %v3877
    %v4254 = vpack.c.b16 %v3886, %v3878
    %v4255 = vpack.c.b16 %v3895, %v3887
    %v4256 = vpack.c.b16 %v3896, %v3888
    %v4257 = vpack.c.b16 %v3897, %v3889
    %v4258 = vpack.c.b16 %v3898, %v3890
    %v4259 = vpack.c.b16 %v3899, %v3891
    %v4260 = vpack.c.b16 %v3900, %v3892
    %v4261 = vpack.c.b16 %v3901, %v3893
    %v4262 = vpack.c.b16 %v3902, %v3894
    %v4263 = vpack.c.b16 %v3911, %v3903
    %v4264 = vpack.c.b16 %v3912, %v3904
    %v4265 = vpack.c.b16 %v3913, %v3905
    %v4266 = vpack.c.b16 %v3914, %v3906
    %v4267 = vpack.c.b16 %v3915, %v3907
    %v4268 = vpack.c.b16 %v3916, %v3908
    %v4269 = vpack.c.b16 %v3917, %v3909
    %v4270 = vpack.c.b16 %v3918, %v3910
    %v4271 = vpack.c.b16 %v3927, %v3919
    %v4272 = vpack.c.b16 %v3928, %v3920
    %v4273 = vpack.c.b16 %v3929, %v3921
    %v4274 = vpack.c.b16 %v3930, %v3922
    %v4275 = vpack.c.b16 %v3931, %v3923
    %v4276 = vpack.c.b16 %v3932, %v3924
    %v4277 = vpack.c.b16 %v3933, %v3925
    %v4278 = vpack.c.b16 %v3934, %v3926
    %v4279 = vpack.c.b16 %v3943, %v3935
    %v4280 = vpack.c.b16 %v3944, %v3936
    %v4281 = vpack.c.b16 %v3945, %v3937
    %v4282 = vpack.c.b16 %v3946, %v3938
    %v4283 = vpack.c.b16 %v3947, %v3939
    %v4284 = vpack.c.b16 %v3948, %v3940
    %v4285 = vpack.c.b16 %v3949, %v3941
    %v4286 = vpack.c.b16 %v3950, %v3942
    %v4287 = vpack.c.b16 %v3959, %v3951
    %v4288 = vpack.c.b16 %v3960, %v3952
    %v4289 = vpack.c.b16 %v3961, %v3953
    %v4290 = vpack.c.b16 %v3962, %v3954
    %v4291 = vpack.c.b16 %v3963, %v3955
    %v4292 = vpack.c.b16 %v3964, %v3956
    %v4293 = vpack.c.b16 %v3965, %v3957
    %v4294 = vpack.c.b16 %v3966, %v3958
    %v4295 = vpack.c.b16 %v3975, %v3967
    %v4296 = vpack.c.b16 %v3976, %v3968
    %v4297 = vpack.c.b16 %v3977, %v3969
    %v4298 = vpack.c.b16 %v3978, %v3970
    %v4299 = vpack.c.b16 %v3979, %v3971
    %v4300 = vpack.c.b16 %v3980, %v3972
    %v4301 = vpack.c.b16 %v3981, %v3973
    %v4302 = vpack.c.b16 %v3982, %v3974
    %v4303 = vpack.c.b16 %v3991, %v3983
    %v4304 = vpack.c.b16 %v3992, %v3984
    %v4305 = vpack.c.b16 %v3993, %v3985
    %v4306 = vpack.c.b16 %v3994, %v3986
    %v4307 = vpack.c.b16 %v3995, %v3987
    %v4308 = vpack.c.b16 %v3996, %v3988
    %v4309 = vpack.c.b16 %v3997, %v3989
    %v4310 = vpack.c.b16 %v3998, %v3990
    %v4311 = vpack.c.b16 %v4007, %v3999
    %v4312 = vpack.c.b16 %v4008, %v4000
    %v4313 = vpack.c.b16 %v4009, %v4001
    %v4314 = vpack.c.b16 %v4010, %v4002
    %v4315 = vpack.c.b16 %v4011, %v4003
    %v4316 = vpack.c.b16 %v4012, %v4004
    %v4317 = vpack.c.b16 %v4013, %v4005
    %v4318 = vpack.c.b16 %v4014, %v4006
    %v4319 = vpack.c.b16 %v4023, %v4015
    %v4320 = vpack.c.b16 %v4024, %v4016
    %v4321 = vpack.c.b16 %v4025, %v4017
    %v4322 = vpack.c.b16 %v4026, %v4018
    %v4323 = vpack.c.b16 %v4027, %v4019
    %v4324 = vpack.c.b16 %v4028, %v4020
    %v4325 = vpack.c.b16 %v4029, %v4021
    %v4326 = vpack.c.b16 %v4030, %v4022
    %v4327 = vpack.c.b16 %v4039, %v4031
    %v4328 = vpack.c.b16 %v4040, %v4032
    %v4329 = vpack.c.b16 %v4041, %v4033
    %v4330 = vpack.c.b16 %v4042, %v4034
    %v4331 = vpack.c.b16 %v4043, %v4035
    %v4332 = vpack.c.b16 %v4044, %v4036
    %v4333 = vpack.c.b16 %v4045, %v4037
    %v4334 = vpack.c.b16 %v4046, %v4038
    %v4335 = vpack.c.b16 %v4055, %v4047
    %v4336 = vpack.c.b16 %v4056, %v4048
    %v4337 = vpack.c.b16 %v4057, %v4049
    %v4338 = vpack.c.b16 %v4058, %v4050
    %v4339 = vpack.c.b16 %v4059, %v4051
    %v4340 = vpack.c.b16 %v4060, %v4052
    %v4341 = vpack.c.b16 %v4061, %v4053
    %v4342 = vpack.c.b16 %v4062, %v4054
    %v4343 = vpack.c.b16 %v4071, %v4063
    %v4344 = vpack.c.b16 %v4072, %v4064
    %v4345 = vpack.c.b16 %v4073, %v4065
    %v4346 = vpack.c.b16 %v4074, %v4066
    %v4347 = vpack.c.b16 %v4075, %v4067
    %v4348 = vpack.c.b16 %v4076, %v4068
    %v4349 = vpack.c.b16 %v4077, %v4069
    %v4350 = vpack.c.b16 %v4078, %v4070
    %v4351 = vpack.c.b16 %v4087, %v4079
    %v4352 = vpack.c.b16 %v4088, %v4080
    %v4353 = vpack.c.b16 %v4089, %v4081
    %v4354 = vpack.c.b16 %v4090, %v4082
    %v4355 = vpack.c.b16 %v4091, %v4083
    %v4356 = vpack.c.b16 %v4092, %v4084
    %v4357 = vpack.c.b16 %v4093, %v4085
    %v4358 = vpack.c.b16 %v4094, %v4086
    %v4359 = vpack.c.b16 %v4103, %v4095
    %v4360 = vpack.c.b16 %v4104, %v4096
    %v4361 = vpack.c.b16 %v4105, %v4097
    %v4362 = vpack.c.b16 %v4106, %v4098
    %v4363 = vpack.c.b16 %v4107, %v4099
    %v4364 = vpack.c.b16 %v4108, %v4100
    %v4365 = vpack.c.b16 %v4109, %v4101
    %v4366 = vpack.c.b16 %v4110, %v4102
    %4623 = vmatprep.subr.bf16.mxu0 %v4112
    %4624 = vmatpush1.bf16.msra.mxu0 %v4111
    %4625 = vmatprep.subr.bf16.mxu0 %v4120
    %4626 = vmatpush1.bf16.msra.mxu0 %v4119
    %4627 = vmatprep.subr.bf16.mxu0 %v4128
    %4628 = vmatpush1.bf16.msra.mxu0 %v4127
    %4629 = vmatprep.subr.bf16.mxu0 %v4136
    %4630 = vmatpush1.bf16.msra.mxu0 %v4135
    %4631 = vmatprep.subr.bf16.mxu0 %v4144
    %4632 = vmatpush1.bf16.msra.mxu0 %v4143
    %4633 = vmatprep.subr.bf16.mxu0 %v4152
    %4634 = vmatpush1.bf16.msra.mxu0 %v4151
    %4635 = vmatprep.subr.bf16.mxu0 %v4160
    %4636 = vmatpush1.bf16.msra.mxu0 %v4159
    %4637 = vmatprep.subr.bf16.mxu0 %v4168
    %4638 = vmatpush1.bf16.msra.mxu0 %v4167
    %4639 = vmatprep.subr.bf16.mxu0 %v4176
    %4640 = vmatpush1.bf16.msra.mxu0 %v4175
    %4641 = vmatprep.subr.bf16.mxu0 %v4184
    %4642 = vmatpush1.bf16.msra.mxu0 %v4183
    %4643 = vmatprep.subr.bf16.mxu0 %v4192
    %4644 = vmatpush1.bf16.msra.mxu0 %v4191
    %4645 = vmatprep.subr.bf16.mxu0 %v4200
    %4646 = vmatpush1.bf16.msra.mxu0 %v4199
    %4647 = vmatprep.subr.bf16.mxu0 %v4208
    %4648 = vmatpush1.bf16.msra.mxu0 %v4207
    %4649 = vmatprep.subr.bf16.mxu0 %v4216
    %4650 = vmatpush1.bf16.msra.mxu0 %v4215
    %4651 = vmatprep.subr.bf16.mxu0 %v4224
    %4652 = vmatpush1.bf16.msra.mxu0 %v4223
    %4653 = vmatprep.subr.bf16.mxu0 %v4232
    %4654 = vmatpush1.bf16.msra.mxu0 %v4231
    %4655 = vmatprep.mubr.bf16.mxu0 %v3042
    %4656 = vmatmul.mubr.bf16.gmra.mrb[0].mxu0 %v3041
    %v4657 = vpop.f32.mrb[0].mxu0
    %v4658 = vadd.f32 %v3306, %v4657
    %v4659 = vpop.f32.mrb[0].mxu0
    %v4660 = vadd.f32 %v3310, %v4659
    %v4661 = vpop.f32.mrb[0].mxu0
    %v4662 = vpop.f32.mrb[0].mxu0
    %4663 = vdwg.mxu0
    %4664 = vmatprep.subr.bf16.mxu0 %v4240
    %4665 = vmatpush1.bf16.msra.mxu0 %v4239
    %4666 = vmatprep.subr.bf16.mxu0 %v4248
    %4667 = vmatpush1.bf16.msra.mxu0 %v4247
    %4668 = vmatprep.subr.bf16.mxu0 %v4256
    %4669 = vmatpush1.bf16.msra.mxu0 %v4255
    %4670 = vmatprep.subr.bf16.mxu0 %v4264
    %4671 = vmatpush1.bf16.msra.mxu0 %v4263
    %4672 = vmatprep.subr.bf16.mxu0 %v4272
    %4673 = vmatpush1.bf16.msra.mxu0 %v4271
    %4674 = vmatprep.subr.bf16.mxu0 %v4280
    %4675 = vmatpush1.bf16.msra.mxu0 %v4279
    %4676 = vmatprep.subr.bf16.mxu0 %v4288
    %4677 = vmatpush1.bf16.msra.mxu0 %v4287
    %4678 = vmatprep.subr.bf16.mxu0 %v4296
    %4679 = vmatpush1.bf16.msra.mxu0 %v4295
    %4680 = vmatprep.subr.bf16.mxu0 %v4304
    %4681 = vmatpush1.bf16.msra.mxu0 %v4303
    %4682 = vmatprep.subr.bf16.mxu0 %v4312
    %4683 = vmatpush1.bf16.msra.mxu0 %v4311
    %4684 = vmatprep.subr.bf16.mxu0 %v4320
    %4685 = vmatpush1.bf16.msra.mxu0 %v4319
    %4686 = vmatprep.subr.bf16.mxu0 %v4328
    %4687 = vmatpush1.bf16.msra.mxu0 %v4327
    %4688 = vmatprep.subr.bf16.mxu0 %v4336
    %4689 = vmatpush1.bf16.msra.mxu0 %v4335
    %4690 = vmatprep.subr.bf16.mxu0 %v4344
    %4691 = vmatpush1.bf16.msra.mxu0 %v4343
    %4692 = vmatprep.subr.bf16.mxu0 %v4352
    %4693 = vmatpush1.bf16.msra.mxu0 %v4351
    %4694 = vmatprep.subr.bf16.mxu0 %v4360
    %4695 = vmatpush1.bf16.msra.mxu0 %v4359
    %4696 = vmatprep.mubr.bf16.mxu0 %v3044
    %4697 = vmatmul.mubr.bf16.gmra.mrb[0].mxu0 %v3043
    %v4698 = vpop.f32.mrb[0].mxu0
    %v4699 = vadd.f32 %v4658, %v4698
    %v4700 = vpop.f32.mrb[0].mxu0
    %v4701 = vadd.f32 %v4660, %v4700
    %v4702 = vpop.f32.mrb[0].mxu0
    %v4703 = vpop.f32.mrb[0].mxu0
    %4704 = vdwg.mxu0
    %4705 = vmatprep.subr.bf16.mxu0 %v4114
    %4706 = vmatpush1.bf16.msra.mxu0 %v4113
    %4707 = vmatprep.subr.bf16.mxu0 %v4122
    %4708 = vmatpush1.bf16.msra.mxu0 %v4121
    %4709 = vmatprep.subr.bf16.mxu0 %v4130
    %4710 = vmatpush1.bf16.msra.mxu0 %v4129
    %4711 = vmatprep.subr.bf16.mxu0 %v4138
    %4712 = vmatpush1.bf16.msra.mxu0 %v4137
    %4713 = vmatprep.subr.bf16.mxu0 %v4146
    %4714 = vmatpush1.bf16.msra.mxu0 %v4145
    %4715 = vmatprep.subr.bf16.mxu0 %v4154
    %4716 = vmatpush1.bf16.msra.mxu0 %v4153
    %4717 = vmatprep.subr.bf16.mxu0 %v4162
    %4718 = vmatpush1.bf16.msra.mxu0 %v4161
    %4719 = vmatprep.subr.bf16.mxu0 %v4170
    %4720 = vmatpush1.bf16.msra.mxu0 %v4169
    %4721 = vmatprep.subr.bf16.mxu0 %v4178
    %4722 = vmatpush1.bf16.msra.mxu0 %v4177
    %4723 = vmatprep.subr.bf16.mxu0 %v4186
    %4724 = vmatpush1.bf16.msra.mxu0 %v4185
    %4725 = vmatprep.subr.bf16.mxu0 %v4194
    %4726 = vmatpush1.bf16.msra.mxu0 %v4193
    %4727 = vmatprep.subr.bf16.mxu0 %v4202
    %4728 = vmatpush1.bf16.msra.mxu0 %v4201
    %4729 = vmatprep.subr.bf16.mxu0 %v4210
    %4730 = vmatpush1.bf16.msra.mxu0 %v4209
    %4731 = vmatprep.subr.bf16.mxu0 %v4218
    %4732 = vmatpush1.bf16.msra.mxu0 %v4217
    %4733 = vmatprep.subr.bf16.mxu0 %v4226
    %4734 = vmatpush1.bf16.msra.mxu0 %v4225
    %4735 = vmatprep.subr.bf16.mxu0 %v4234
    %4736 = vmatpush1.bf16.msra.mxu0 %v4233
    %4737 = vmatprep.mubr.bf16.mxu0 %v3042
    %4738 = vmatmul.mubr.bf16.gmra.mrb[0].mxu0 %v3041
    %v4739 = vpop.f32.mrb[0].mxu0
    %v4740 = vadd.f32 %v3314, %v4739
    %v4741 = vpop.f32.mrb[0].mxu0
    %v4742 = vadd.f32 %v3318, %v4741
    %v4743 = vpop.f32.mrb[0].mxu0
    %v4744 = vpop.f32.mrb[0].mxu0
    %4745 = vdwg.mxu0
    %4746 = vmatprep.subr.bf16.mxu0 %v4242
    %4747 = vmatpush1.bf16.msra.mxu0 %v4241
    %4748 = vmatprep.subr.bf16.mxu0 %v4250
    %4749 = vmatpush1.bf16.msra.mxu0 %v4249
    %4750 = vmatprep.subr.bf16.mxu0 %v4258
    %4751 = vmatpush1.bf16.msra.mxu0 %v4257
    %4752 = vmatprep.subr.bf16.mxu0 %v4266
    %4753 = vmatpush1.bf16.msra.mxu0 %v4265
    %4754 = vmatprep.subr.bf16.mxu0 %v4274
    %4755 = vmatpush1.bf16.msra.mxu0 %v4273
    %4756 = vmatprep.subr.bf16.mxu0 %v4282
    %4757 = vmatpush1.bf16.msra.mxu0 %v4281
    %4758 = vmatprep.subr.bf16.mxu0 %v4290
    %4759 = vmatpush1.bf16.msra.mxu0 %v4289
    %4760 = vmatprep.subr.bf16.mxu0 %v4298
    %4761 = vmatpush1.bf16.msra.mxu0 %v4297
    %4762 = vmatprep.subr.bf16.mxu0 %v4306
    %4763 = vmatpush1.bf16.msra.mxu0 %v4305
    %4764 = vmatprep.subr.bf16.mxu0 %v4314
    %4765 = vmatpush1.bf16.msra.mxu0 %v4313
    %4766 = vmatprep.subr.bf16.mxu0 %v4322
    %4767 = vmatpush1.bf16.msra.mxu0 %v4321
    %4768 = vmatprep.subr.bf16.mxu0 %v4330
    %4769 = vmatpush1.bf16.msra.mxu0 %v4329
    %4770 = vmatprep.subr.bf16.mxu0 %v4338
    %4771 = vmatpush1.bf16.msra.mxu0 %v4337
    %4772 = vmatprep.subr.bf16.mxu0 %v4346
    %4773 = vmatpush1.bf16.msra.mxu0 %v4345
    %4774 = vmatprep.subr.bf16.mxu0 %v4354
    %4775 = vmatpush1.bf16.msra.mxu0 %v4353
    %4776 = vmatprep.subr.bf16.mxu0 %v4362
    %4777 = vmatpush1.bf16.msra.mxu0 %v4361
    %4778 = vmatprep.mubr.bf16.mxu0 %v3044
    %4779 = vmatmul.mubr.bf16.gmra.mrb[0].mxu0 %v3043
    %v4780 = vpop.f32.mrb[0].mxu0
    %v4781 = vadd.f32 %v4740, %v4780
    %v4782 = vpop.f32.mrb[0].mxu0
    %v4783 = vadd.f32 %v4742, %v4782
    %v4784 = vpop.f32.mrb[0].mxu0
    %v4785 = vpop.f32.mrb[0].mxu0
    %4786 = vdwg.mxu0
    %4787 = vmatprep.subr.bf16.mxu0 %v4116
    %4788 = vmatpush1.bf16.msra.mxu0 %v4115
    %4789 = vmatprep.subr.bf16.mxu0 %v4124
    %4790 = vmatpush1.bf16.msra.mxu0 %v4123
    %4791 = vmatprep.subr.bf16.mxu0 %v4132
    %4792 = vmatpush1.bf16.msra.mxu0 %v4131
    %4793 = vmatprep.subr.bf16.mxu0 %v4140
    %4794 = vmatpush1.bf16.msra.mxu0 %v4139
    %4795 = vmatprep.subr.bf16.mxu0 %v4148
    %4796 = vmatpush1.bf16.msra.mxu0 %v4147
    %4797 = vmatprep.subr.bf16.mxu0 %v4156
    %4798 = vmatpush1.bf16.msra.mxu0 %v4155
    %4799 = vmatprep.subr.bf16.mxu0 %v4164
    %4800 = vmatpush1.bf16.msra.mxu0 %v4163
    %4801 = vmatprep.subr.bf16.mxu0 %v4172
    %4802 = vmatpush1.bf16.msra.mxu0 %v4171
    %4803 = vmatprep.subr.bf16.mxu0 %v4180
    %4804 = vmatpush1.bf16.msra.mxu0 %v4179
    %4805 = vmatprep.subr.bf16.mxu0 %v4188
    %4806 = vmatpush1.bf16.msra.mxu0 %v4187
    %4807 = vmatprep.subr.bf16.mxu0 %v4196
    %4808 = vmatpush1.bf16.msra.mxu0 %v4195
    %4809 = vmatprep.subr.bf16.mxu0 %v4204
    %4810 = vmatpush1.bf16.msra.mxu0 %v4203
    %4811 = vmatprep.subr.bf16.mxu0 %v4212
    %4812 = vmatpush1.bf16.msra.mxu0 %v4211
    %4813 = vmatprep.subr.bf16.mxu0 %v4220
    %4814 = vmatpush1.bf16.msra.mxu0 %v4219
    %4815 = vmatprep.subr.bf16.mxu0 %v4228
    %4816 = vmatpush1.bf16.msra.mxu0 %v4227
    %4817 = vmatprep.subr.bf16.mxu0 %v4236
    %4818 = vmatpush1.bf16.msra.mxu0 %v4235
    %4819 = vmatprep.mubr.bf16.mxu0 %v3042
    %4820 = vmatmul.mubr.bf16.gmra.mrb[0].mxu0 %v3041
    %v4821 = vpop.f32.mrb[0].mxu0
    %v4822 = vadd.f32 %v3322, %v4821
    %v4823 = vpop.f32.mrb[0].mxu0
    %v4824 = vadd.f32 %v3326, %v4823
    %v4825 = vpop.f32.mrb[0].mxu0
    %v4826 = vpop.f32.mrb[0].mxu0
    %4827 = vdwg.mxu0
    %4828 = vmatprep.subr.bf16.mxu0 %v4244
    %4829 = vmatpush1.bf16.msra.mxu0 %v4243
    %4830 = vmatprep.subr.bf16.mxu0 %v4252
    %4831 = vmatpush1.bf16.msra.mxu0 %v4251
    %4832 = vmatprep.subr.bf16.mxu0 %v4260
    %4833 = vmatpush1.bf16.msra.mxu0 %v4259
    %4834 = vmatprep.subr.bf16.mxu0 %v4268
    %4835 = vmatpush1.bf16.msra.mxu0 %v4267
    %4836 = vmatprep.subr.bf16.mxu0 %v4276
    %4837 = vmatpush1.bf16.msra.mxu0 %v4275
    %4838 = vmatprep.subr.bf16.mxu0 %v4284
    %4839 = vmatpush1.bf16.msra.mxu0 %v4283
    %4840 = vmatprep.subr.bf16.mxu0 %v4292
    %4841 = vmatpush1.bf16.msra.mxu0 %v4291
    %4842 = vmatprep.subr.bf16.mxu0 %v4300
    %4843 = vmatpush1.bf16.msra.mxu0 %v4299
    %4844 = vmatprep.subr.bf16.mxu0 %v4308
    %4845 = vmatpush1.bf16.msra.mxu0 %v4307
    %4846 = vmatprep.subr.bf16.mxu0 %v4316
    %4847 = vmatpush1.bf16.msra.mxu0 %v4315
    %4848 = vmatprep.subr.bf16.mxu0 %v4324
    %4849 = vmatpush1.bf16.msra.mxu0 %v4323
    %4850 = vmatprep.subr.bf16.mxu0 %v4332
    %4851 = vmatpush1.bf16.msra.mxu0 %v4331
    %4852 = vmatprep.subr.bf16.mxu0 %v4340
    %4853 = vmatpush1.bf16.msra.mxu0 %v4339
    %4854 = vmatprep.subr.bf16.mxu0 %v4348
    %4855 = vmatpush1.bf16.msra.mxu0 %v4347
    %4856 = vmatprep.subr.bf16.mxu0 %v4356
    %4857 = vmatpush1.bf16.msra.mxu0 %v4355
    %4858 = vmatprep.subr.bf16.mxu0 %v4364
    %4859 = vmatpush1.bf16.msra.mxu0 %v4363
    %4860 = vmatprep.mubr.bf16.mxu0 %v3044
    %4861 = vmatmul.mubr.bf16.gmra.mrb[0].mxu0 %v3043
    %v4862 = vpop.f32.mrb[0].mxu0
    %v4863 = vadd.f32 %v4822, %v4862
    %v4864 = vpop.f32.mrb[0].mxu0
    %v4865 = vadd.f32 %v4824, %v4864
    %v4866 = vpop.f32.mrb[0].mxu0
    %v4867 = vpop.f32.mrb[0].mxu0
    %4868 = vdwg.mxu0
    %4869 = vmatprep.subr.bf16.mxu0 %v4118
    %4870 = vmatpush1.bf16.msra.mxu0 %v4117
    %4871 = vmatprep.subr.bf16.mxu0 %v4126
    %4872 = vmatpush1.bf16.msra.mxu0 %v4125
    %4873 = vmatprep.subr.bf16.mxu0 %v4134
    %4874 = vmatpush1.bf16.msra.mxu0 %v4133
    %4875 = vmatprep.subr.bf16.mxu0 %v4142
    %4876 = vmatpush1.bf16.msra.mxu0 %v4141
    %4877 = vmatprep.subr.bf16.mxu0 %v4150
    %4878 = vmatpush1.bf16.msra.mxu0 %v4149
    %4879 = vmatprep.subr.bf16.mxu0 %v4158
    %4880 = vmatpush1.bf16.msra.mxu0 %v4157
    %4881 = vmatprep.subr.bf16.mxu0 %v4166
    %4882 = vmatpush1.bf16.msra.mxu0 %v4165
    %4883 = vmatprep.subr.bf16.mxu0 %v4174
    %4884 = vmatpush1.bf16.msra.mxu0 %v4173
    %4885 = vmatprep.subr.bf16.mxu0 %v4182
    %4886 = vmatpush1.bf16.msra.mxu0 %v4181
    %4887 = vmatprep.subr.bf16.mxu0 %v4190
    %4888 = vmatpush1.bf16.msra.mxu0 %v4189
    %4889 = vmatprep.subr.bf16.mxu0 %v4198
    %4890 = vmatpush1.bf16.msra.mxu0 %v4197
    %4891 = vmatprep.subr.bf16.mxu0 %v4206
    %4892 = vmatpush1.bf16.msra.mxu0 %v4205
    %4893 = vmatprep.subr.bf16.mxu0 %v4214
    %4894 = vmatpush1.bf16.msra.mxu0 %v4213
    %4895 = vmatprep.subr.bf16.mxu0 %v4222
    %4896 = vmatpush1.bf16.msra.mxu0 %v4221
    %4897 = vmatprep.subr.bf16.mxu0 %v4230
    %4898 = vmatpush1.bf16.msra.mxu0 %v4229
    %4899 = vmatprep.subr.bf16.mxu0 %v4238
    %4900 = vmatpush1.bf16.msra.mxu0 %v4237
    %4901 = vmatprep.mubr.bf16.mxu0 %v3042
    %4902 = vmatmul.mubr.bf16.gmra.mrb[0].mxu0 %v3041
    %v4903 = vpop.f32.mrb[0].mxu0
    %v4904 = vadd.f32 %v3330, %v4903
    %v4905 = vpop.f32.mrb[0].mxu0
    %v4906 = vadd.f32 %v3334, %v4905
    %v4907 = vpop.f32.mrb[0].mxu0
    %v4908 = vpop.f32.mrb[0].mxu0
    %4909 = vdwg.mxu0
    %4910 = vmatprep.subr.bf16.mxu0 %v4246
    %4911 = vmatpush1.bf16.msra.mxu0 %v4245
    %4912 = vmatprep.subr.bf16.mxu0 %v4254
    %4913 = vmatpush1.bf16.msra.mxu0 %v4253
    %4914 = vmatprep.subr.bf16.mxu0 %v4262
    %4915 = vmatpush1.bf16.msra.mxu0 %v4261
    %4916 = vmatprep.subr.bf16.mxu0 %v4270
    %4917 = vmatpush1.bf16.msra.mxu0 %v4269
    %4918 = vmatprep.subr.bf16.mxu0 %v4278
    %4919 = vmatpush1.bf16.msra.mxu0 %v4277
    %4920 = vmatprep.subr.bf16.mxu0 %v4286
    %4921 = vmatpush1.bf16.msra.mxu0 %v4285
    %4922 = vmatprep.subr.bf16.mxu0 %v4294
    %4923 = vmatpush1.bf16.msra.mxu0 %v4293
    %4924 = vmatprep.subr.bf16.mxu0 %v4302
    %4925 = vmatpush1.bf16.msra.mxu0 %v4301
    %4926 = vmatprep.subr.bf16.mxu0 %v4310
    %4927 = vmatpush1.bf16.msra.mxu0 %v4309
    %4928 = vmatprep.subr.bf16.mxu0 %v4318
    %4929 = vmatpush1.bf16.msra.mxu0 %v4317
    %4930 = vmatprep.subr.bf16.mxu0 %v4326
    %4931 = vmatpush1.bf16.msra.mxu0 %v4325
    %4932 = vmatprep.subr.bf16.mxu0 %v4334
    %4933 = vmatpush1.bf16.msra.mxu0 %v4333
    %4934 = vmatprep.subr.bf16.mxu0 %v4342
    %4935 = vmatpush1.bf16.msra.mxu0 %v4341
    %4936 = vmatprep.subr.bf16.mxu0 %v4350
    %4937 = vmatpush1.bf16.msra.mxu0 %v4349
    %4938 = vmatprep.subr.bf16.mxu0 %v4358
    %4939 = vmatpush1.bf16.msra.mxu0 %v4357
    %4940 = vmatprep.subr.bf16.mxu0 %v4366
    %4941 = vmatpush1.bf16.msra.mxu0 %v4365
    %4942 = vmatprep.mubr.bf16.mxu0 %v3044
    %4943 = vmatmul.mubr.bf16.gmra.mrb[0].mxu0 %v3043
    %v4944 = vpop.f32.mrb[0].mxu0
    %v4945 = vadd.f32 %v4904, %v4944
    %v4946 = vpop.f32.mrb[0].mxu0
    %v4947 = vadd.f32 %v4906, %v4946
    %v4948 = vpop.f32.mrb[0].mxu0
    %v4949 = vpop.f32.mrb[0].mxu0
    %4950 = vdwg.mxu0
    %4951 = vst [vmem:[#allocation12] sm:$0xff] %v4699
    %4952 = vst [vmem:[#allocation12 + $0x8] sm:$0xff] %v4701
    %4953 = vst [vmem:[#allocation12 + $0x10] sm:$0xff] %v4781
    %4954 = vst [vmem:[#allocation12 + $0x18] sm:$0xff] %v4783
    %4955 = vst [vmem:[#allocation12 + $0x20] sm:$0xff] %v4863
    %4956 = vst [vmem:[#allocation12 + $0x28] sm:$0xff] %v4865
    %4957 = vst [vmem:[#allocation12 + $0x30] sm:$0xff] %v4945
    %4958 = vst [vmem:[#allocation12 + $0x38] sm:$0xff] %v4947
    // Predicated region
    $region62: #{tpu_custom_call.1} parent=1 // pred_check
      _
    $region63: #{tpu_custom_call.1} parent=1 // pred_check_branch
      %4960 = sbr.rel (0) target = $region65
    $region64: #{tpu_custom_call.1} parent=1 // pred_region
      %s4962 = ssub.s32 1024, 1024
      %4963 = vsyncadd [#allocation5], %s4962
      %s4965 = sshll.u32 [#allocation12], 4
      %s4966 = int_to_ptr.vmem [resolvable:$true] %s4965
      %4968 = dma.vmem_to_hbm [thread:$0]  %s4966, 1024, %s10, [#allocation5]
    $region65: #{tpu_custom_call.1} parent=1 // pred_fallthru
      _
    // Predicated region
    $region66: #{tpu_custom_call.1} parent=1 // pred_check
      _
    $region67: #{tpu_custom_call.1} parent=1 // pred_check_branch
      %4970 = sbr.rel (0) target = $region69
    $region68: #{tpu_custom_call.1} parent=1 // pred_region
      %4971 = dma.done [#allocation5], 1024
    $region69: #{tpu_custom_call.1} parent=1 // pred_fallthru
      _
    %4972 = vsyncpa [#allocation4], 1
    %4973 = vsyncpa [#allocation7], 1
    %4974 = vsyncpa [#allocation10], 1
    %4975 = vsyncpa [#allocation5], 1

</llo_original>
